<compile_context>
chip_gen: v7x
topology: tpu7x:2x2x1
jax: 0.10.0
libtpu: 0.0.40
codegen_flags: <defaults>
</compile_context>

<pallas_src>
import functools

import numpy as np
import jax
import jax.numpy as jnp
from jax.experimental import pallas as pl
from jax.experimental.pallas import tpu as pltpu


# ----------------------------------------------------------------------------
# Fused kernel: grid = (sample-block,)
# Row layout everywhere: rows = (sample-in-block, h), lanes = (expert, c, w).
# ----------------------------------------------------------------------------
def _defemmoe_kernel(x_ref, csh_ref, cwb_ref, swb_ref, cwbe_ref, swbe_ref,
                     wfb_ref, web_ref, sumh_ref, sumwc_ref, sumef_ref,
                     spread_ref, collapse_ref, wg_ref, bg_ref,
                     wcp_ref, bcp_ref, rf_ref, rgp_ref, wad_ref, bad_ref,
                     wtw_ref, amp_ref, head_ref, *, num_experts, hw, feat_dim):
    f32 = jnp.float32
    cdt = cwb_ref.dtype                 # MXU input dtype for the heavy path
    E = num_experts
    M = x_ref.shape[0]                  # NB * H rows per block

    def dot(a, b):
        return jnp.dot(a, b, preferred_element_type=f32)

    x = x_ref[...].astype(cdt)                                   # [M, C*W]

    # ---------------- forward 2-D DFT (separable) ----------------
    tre = dot(x, cwb_ref[...])                                   # x @ cosW
    tim = -dot(x, swb_ref[...])                                  # -x @ sinW
    csh = csh_ref[...]                                           # [2M, M]: [cosH ; sinH] blk-diag
    r1 = dot(csh, tre.astype(cdt))                               # [cosH@tre ; sinH@tre]
    r2 = dot(csh, tim.astype(cdt))                               # [cosH@tim ; sinH@tim]
    yre = r1[:M] + r2[M:]
    yim = r2[:M] - r1[M:]

    # ------------- amplitude / phase via one rsqrt (EUP) -------------
    s = yre * yre + yim * yim
    nz = s > 0.0
    r = jax.lax.rsqrt(jnp.where(nz, s, 1.0))
    amp = s * r                                                  # |fft2(x)|
    cosp = jnp.where(nz, yre * r, 1.0)                           # cos(angle); angle(0) := 0
    sinp = jnp.where(nz, yim * r, 0.0)

    # ---------- fft_module 1x1 convs for ALL experts in one matmul ----------
    amp_all = dot(amp.astype(cdt), wfb_ref[...])                 # [M, E*C*W]
    amp_ref[...] = amp_all                                       # amplitude_features (all experts)

    cos_t = jnp.concatenate([cosp] * E, axis=1)                  # tile phase per expert group
    sin_t = jnp.concatenate([sinp] * E, axis=1)
    zre = (amp_all * cos_t).astype(cdt)
    zim = (amp_all * sin_t).astype(cdt)

    # ---------- inverse 2-D DFT (real part, 1/(H*W) folded later) ----------
    cwbe = cwbe_ref[...]
    swbe = swbe_ref[...]
    ure = dot(zre, cwbe) - dot(zim, swbe)
    uim = dot(zre, swbe) + dot(zim, cwbe)
    chb = csh[:M]
    shb = csh[M:]
    recon = dot(chb, ure.astype(cdt)) - dot(shb, uim.astype(cdt))  # [M, E*C*W]

    # ---------- experts: 1x1 conv (C->F, no bias) + ReLU + GAP ----------
    fm = jnp.maximum(dot(recon.astype(cdt), web_ref[...]), 0.0)    # [M, E*F*W]
    rsum = dot(sumh_ref[...], fm.astype(cdt))                      # [NB, E*F*W] (sum over h)
    ef = dot(rsum.astype(cdt), sumef_ref[...]) * (1.0 / (hw * hw)) # [NB, E*F]  (sum over w, /HW^2)

    # ---------------- gate: GAP(x) -> Linear -> softmax ----------------
    xs = dot(sumh_ref[...], x)                                     # [NB, C*W]
    pooled = dot(xs.astype(cdt), sumwc_ref[...]) * (1.0 / hw)      # [NB, C]
    glog = dot(pooled, wg_ref[...]) + bg_ref[...]                  # [NB, E]
    glog = glog - jnp.max(glog, axis=-1, keepdims=True)
    p = jnp.exp(glog)
    tw = p / jnp.sum(p, axis=-1, keepdims=True)                    # task weights [NB, E]

    # ---------------- mixture of experts ----------------
    tws = dot(tw, spread_ref[...])                                 # [NB, E*F]
    feats = dot(tws * ef, collapse_ref[...])                       # [NB, F]

    # ------- heads: classifier | pse | adv + RMLM, lane-dense assembly -------
    head = dot(feats, wcp_ref[...]) + bcp_ref[...]                 # lanes [0:2K] = lcp
    g = dot(head, rgp_ref[...])                                    # = out @ Rg (bias incl.)
    fmap = dot(feats, rf_ref[...]) * g * (1.0 / float(np.sqrt(feat_dim)))
    head = head + dot(fmap, wad_ref[...]) + bad_ref[...]           # lanes [2K:3K+2] = adv
    head = head + dot(tw, wtw_ref[...])                            # lanes [3K+2:3K+2+E] = tw
    head_ref[...] = head                                           # single full-width store


# ----------------------------------------------------------------------------
# Wrapper: layout plumbing, DFT factors, kron'ed 1x1-conv weights, padded heads
# ----------------------------------------------------------------------------
def de_fe_mmoe_dadst_mapping_forward(x, params, task_ind, *, block_n=8,
                                     compute_dtype=jnp.bfloat16):
    assert task_ind in (1, 2)
    N, C, H, W = x.shape
    E, F, _ = params["wexp"].shape
    K = params["wc"].shape[1]
    HW = H * W
    CW = C * W
    FW = F * W
    cdt = compute_dtype

    NB = int(block_n)
    n_pad = ((N + NB - 1) // NB) * NB          # pad batch to a multiple of NB
    M = NB * H                                 # matmul M dimension per block
    assert M % 8 == 0
    DH = 3 * K + 2 + E
    DH_PAD = ((DH + 127) // 128) * 128         # lane-dense padded head width

    # ---- separable DFT factors (static constants) ----
    hh = np.arange(H)
    ww = np.arange(W)
    ah = 2.0 * np.pi * np.outer(hh, hh) / H
    aw = 2.0 * np.pi * np.outer(ww, ww) / W
    cos_h, sin_h = np.cos(ah), np.sin(ah)
    cos_w, sin_w = np.cos(aw), np.sin(aw)
    # stacked [cosH ; sinH], block-diagonal over the NB samples of a block
    csh = jnp.asarray(np.concatenate([np.kron(np.eye(NB), cos_h),
                                      np.kron(np.eye(NB), sin_h)], axis=0), cdt)   # [2M, M]
    cwb = jnp.asarray(np.kron(np.eye(C), cos_w), cdt)                              # [CW, CW]
    swb = jnp.asarray(np.kron(np.eye(C), sin_w), cdt)
    cwbe = jnp.asarray(np.kron(np.eye(E * C), cos_w), cdt)                         # [E*CW, E*CW]
    swbe = jnp.asarray(np.kron(np.eye(E * C), sin_w), cdt)

    # ---- 0/1 aggregation constants (exact in bf16) ----
    sumh = jnp.asarray(np.kron(np.eye(NB), np.ones((1, H))), cdt)                  # [NB, M]
    sumwc = jnp.asarray(np.kron(np.eye(C), np.ones((W, 1))), cdt)                  # [CW, C]
    sumef = jnp.asarray(np.kron(np.eye(E * F), np.ones((W, 1))), cdt)              # [E*FW, E*F]
    spread = jnp.asarray(np.kron(np.eye(E), np.ones((1, F))), jnp.float32)         # [E, E*F]
    collapse = jnp.asarray(np.kron(np.ones((E, 1)), np.eye(F)), jnp.float32)       # [E*F, F]

    # ---- 1x1 convs as lane-space matmuls (all experts fused) ----
    i_w = jnp.eye(W, dtype=jnp.float32)
    wfft = params["wfft"].astype(jnp.float32)                                      # [E, C, C]
    wexp = params["wexp"].astype(jnp.float32)                                      # [E, F, C]
    wfb = jnp.einsum('eoc,wv->cweov', wfft, i_w).reshape(CW, E * CW).astype(cdt)
    web = jnp.einsum('eg,efc,wv->ecwgfv', jnp.eye(E, dtype=jnp.float32), wexp,
                     i_w).reshape(E * CW, E * FW).astype(cdt)

    # ---- gate + zero-padded head weights (lane-dense head assembly) ----
    gi = task_ind - 1
    wg = params["wgate"][gi].astype(jnp.float32)                                   # [C, E]
    bg = params["bgate"][gi:gi + 1].astype(jnp.float32)                            # [1, E]
    wcp = jnp.concatenate([params["wc"], params["wp"]], axis=1).astype(jnp.float32)
    bcp = jnp.concatenate([params["bc"], params["bp"]], axis=1).astype(jnp.float32)
    wad = jnp.concatenate([params["wak"], params["wad"]], axis=1).astype(jnp.float32)
    bad = jnp.concatenate([params["bak"], params["bad"]], axis=1).astype(jnp.float32)

    wcp_pad = jnp.zeros((F, DH_PAD), jnp.float32).at[:, 0:2 * K].set(wcp)
    bcp_pad = jnp.zeros((1, DH_PAD), jnp.float32).at[:, 0:2 * K].set(bcp)
    wad_pad = jnp.zeros((F, DH_PAD), jnp.float32).at[:, 2 * K:3 * K + 2].set(wad)
    bad_pad = jnp.zeros((1, DH_PAD), jnp.float32).at[:, 2 * K:3 * K + 2].set(bad)
    wtw_pad = jnp.zeros((E, DH_PAD), jnp.float32).at[:, 3 * K + 2:3 * K + 2 + E].set(
        jnp.eye(E, dtype=jnp.float32))
    rgp = jnp.zeros((DH_PAD, F), jnp.float32).at[0:K, :].set(params["rg"].astype(jnp.float32))
    rf = params["rf"].astype(jnp.float32)

    # ---- input layout: rows = (sample, h), lanes = (c, w); pad batch ----
    xh = x.astype(jnp.float32).transpose(0, 2, 1, 3).reshape(N, H, CW)
    if n_pad != N:
        xh = jnp.concatenate([xh, jnp.zeros((n_pad - N, H, CW), jnp.float32)], axis=0)
    xh = xh.reshape(n_pad * H, CW)

    kernel = functools.partial(_defemmoe_kernel, num_experts=E, hw=float(HW),
                               feat_dim=float(F))
    c2 = lambda i: (0, 0)

    amp_out, head_out = pl.pallas_call(
        kernel,
        grid=(n_pad // NB,),
        in_specs=[
            pl.BlockSpec((M, CW), lambda i: (i, 0)),        # x  (NB samples batched into M)
            pl.BlockSpec((2 * M, M), c2),                   # stacked [cosH; sinH] (blk-diag)
            pl.BlockSpec((CW, CW), c2),                     # kron(I_C, cos DFT_W)
            pl.BlockSpec((CW, CW), c2),                     # kron(I_C, sin DFT_W)
            pl.BlockSpec((E * CW, E * CW), c2),             # kron(I_{E*C}, cos DFT_W)
            pl.BlockSpec((E * CW, E * CW), c2),             # kron(I_{E*C}, sin DFT_W)
            pl.BlockSpec((CW, E * CW), c2),                 # fft_module convs (all experts)
            pl.BlockSpec((E * CW, E * FW), c2),             # expert convs (block-diagonal)
            pl.BlockSpec((NB, M), c2),                      # per-sample row sum (GAP over h)
            pl.BlockSpec((CW, C), c2),                      # gate pool lane sum
            pl.BlockSpec((E * FW, E * F), c2),              # expert GAP lane sum
            pl.BlockSpec((E, E * F), c2),                   # task-weight spread
            pl.BlockSpec((E * F, F), c2),                   # expert-mixture collapse
            pl.BlockSpec((C, E), c2),                       # gate weight
            pl.BlockSpec((1, E), c2),                       # gate bias
            pl.BlockSpec((F, DH_PAD), c2),                  # classifier|pse (lane-padded)
            pl.BlockSpec((1, DH_PAD), c2),
            pl.BlockSpec((F, F), c2),                       # RMLM Rf
            pl.BlockSpec((DH_PAD, F), c2),                  # RMLM Rg (row-padded)
            pl.BlockSpec((F, DH_PAD), c2),                  # adv heads (lane-padded)
            pl.BlockSpec((1, DH_PAD), c2),
            pl.BlockSpec((E, DH_PAD), c2),                  # task-weight placement
        ],
        out_specs=[
            pl.BlockSpec((M, E * CW), lambda i: (i, 0)),    # amplitude features
            pl.BlockSpec((NB, DH_PAD), lambda i: (i, 0)),   # fused heads (lane-dense)
        ],
        out_shape=[
            jax.ShapeDtypeStruct((n_pad * H, E * CW), jnp.float32),
            jax.ShapeDtypeStruct((n_pad, DH_PAD), jnp.float32),
        ],
        compiler_params=pltpu.CompilerParams(dimension_semantics=("parallel",)),
    )(xh, csh, cwb, swb, cwbe, swbe, wfb, web, sumh, sumwc, sumef, spread,
      collapse, wg, bg, wcp_pad, bcp_pad, rf, rgp, wad_pad, bad_pad, wtw_pad)

    # back to PyTorch NCHW, one tensor per expert
    amp = amp_out.reshape(n_pad, H, E, C, W)[:N]
    amplitude_features = [amp[:, :, e].transpose(0, 2, 1, 3) for e in range(E)]
    head = head_out[:N]
    out = head[:, 0:K]
    out_pse = head[:, K:2 * K]
    out_adv_k = head[:, 2 * K:3 * K]
    out_adv_d = head[:, 3 * K:3 * K + 2]
    task_weight = head[:, 3 * K + 2:3 * K + 2 + E][:, None, :]
    return amplitude_features, out, out_pse, out_adv_k, out_adv_d, task_weight


# ----------------------------------------------------------------------------
# Parameters and a pure-JAX (jnp.fft) reference for validation
# ----------------------------------------------------------------------------
def init_params(key, C, E, F, K):
    ks = jax.random.split(key, 14)
    norm = lambda k, shp, sc=0.1: sc * jax.random.normal(k, shp, jnp.float32)
    return dict(
        wfft=norm(ks[0], (E, C, C)),       # fft_modules: Conv2d(C, C, 1, bias=False)
        wexp=norm(ks[1], (E, F, C)),       # experts: Conv2d(C, F, 1, no bias)+ReLU+GAP
        wgate=norm(ks[2], (2, C, E)),      # two gates (one per task)
        bgate=norm(ks[3], (2, E)),
        wc=norm(ks[4], (F, K)), bc=norm(ks[5], (1, K)),        # classifier
        wp=norm(ks[6], (F, K)), bp=norm(ks[7], (1, K)),        # classifier_pse
        wak=norm(ks[8], (F, K)), bak=norm(ks[9], (1, K)),      # classifier_adv (classes)
        wad=norm(ks[10], (F, 2)), bad=norm(ks[11], (1, 2)),    # classifier_adv (domain)
        rf=norm(ks[12], (F, F), 1.0),      # RandomizedMultiLinearMap frozen projections
        rg=norm(ks[13], (K, F), 1.0),
    )


def reference_forward(x, params, task_ind):
    N, C, H, W = x.shape
    E, F, _ = params["wexp"].shape
    freq = jnp.fft.fft2(x)
    amp = jnp.abs(freq)
    ph = jnp.angle(freq)
    cosp, sinp = jnp.cos(ph), jnp.sin(ph)
    amp_feats, ef = [], []
    for e in range(E):
        amp_ext = jnp.einsum('oc,nchw->nohw', params["wfft"][e], amp)
        amp_feats.append(amp_ext)
        recon = jnp.fft.ifft2(amp_ext * (cosp + 1j * sinp)).real
        fm = jnp.maximum(jnp.einsum('fc,nchw->nfhw', params["wexp"][e], recon), 0.0)
        ef.append(fm.mean(axis=(2, 3)))
    ef = jnp.stack(ef, axis=1)
    gi = task_ind - 1
    pooled = x.mean(axis=(2, 3))
    tw = jax.nn.softmax(pooled @ params["wgate"][gi] + params["bgate"][gi], axis=1)
    feats = jnp.einsum('ne,nef->nf', tw, ef)
    out = feats @ params["wc"] + params["bc"]
    out_pse = feats @ params["wp"] + params["bp"]
    fmap = (feats @ params["rf"]) * (out @ params["rg"]) / jnp.sqrt(float(F))
    oak = fmap @ params["wak"] + params["bak"]
    oad = fmap @ params["wad"] + params["bad"]
    return amp_feats, out, out_pse, oak, oad, tw[:, None, :]


def _check_outputs(got, ref):
    amp_g, out_g, pse_g, oak_g, oad_g, tw_g = got
    amp_r, out_r, pse_r, oak_r, oad_r, tw_r = ref
    for g, r in zip(amp_g, amp_r):
        np.testing.assert_allclose(np.asarray(g), np.asarray(r), rtol=5e-2, atol=5e-1)
    for g, r in ((out_g, out_r), (pse_g, pse_r), (oak_g, oak_r),
                 (oad_g, oad_r), (tw_g, tw_r)):
        np.testing.assert_allclose(np.asarray(g), np.asarray(r), rtol=5e-2, atol=5e-2)


if __name__ == "__main__":
    key = jax.random.PRNGKey(0)
    kx, kp = jax.random.split(key)

    N, C, H, W = 2, 4, 16, 16
    E, F, K = 3, 32, 7                 # num experts, expert out_channels, num_classes

    x = jax.random.normal(kx, (N, C, H, W), jnp.float32)
    params = init_params(kp, C, E, F, K)

    fwd = jax.jit(de_fe_mmoe_dadst_mapping_forward,
                  static_argnames=("task_ind", "block_n", "compute_dtype"))

    ref = reference_forward(x, params, 1)

    # f32 MXU-input path: validates kernel semantics against the pure-JAX reference.
    outs_f32 = fwd(x, params, task_ind=1, compute_dtype=jnp.float32)
    jax.block_until_ready(outs_f32)
    _check_outputs(outs_f32, ref)

    # bf16 MXU-input path (default; recommended for v6e/v7x MXU throughput).
    outs = fwd(x, params, task_ind=1, compute_dtype=jnp.bfloat16)
    jax.block_until_ready(outs)
    _check_outputs(outs, ref)

    amp_feats, out, out_pse, out_adv_k, out_adv_d, task_weight = outs
    assert len(amp_feats) == E and amp_feats[0].shape == (N, C, H, W)
    assert out.shape == (N, K) and out_pse.shape == (N, K)
    assert out_adv_k.shape == (N, K) and out_adv_d.shape == (N, 2)
    assert task_weight.shape == (N, 1, E)
    print("KERNEL_OK")
</pallas_src>

<mosaic_0001>
module attributes {stable_mosaic.version = 11 : i64} {
  func.func @_defemmoe_kernel(%arg0: i32, %arg1: memref<128x64xf32, #tpu.memory_space<vmem>>, %arg2: memref<256x128xf32, #tpu.memory_space<vmem>>, %arg3: memref<64x64xf32, #tpu.memory_space<vmem>>, %arg4: memref<64x64xf32, #tpu.memory_space<vmem>>, %arg5: memref<192x192xf32, #tpu.memory_space<vmem>>, %arg6: memref<192x192xf32, #tpu.memory_space<vmem>>, %arg7: memref<64x192xf32, #tpu.memory_space<vmem>>, %arg8: memref<192x1536xf32, #tpu.memory_space<vmem>>, %arg9: memref<8x128xf32, #tpu.memory_space<vmem>>, %arg10: memref<64x4xf32, #tpu.memory_space<vmem>>, %arg11: memref<1536x96xf32, #tpu.memory_space<vmem>>, %arg12: memref<3x96xf32, #tpu.memory_space<vmem>>, %arg13: memref<96x32xf32, #tpu.memory_space<vmem>>, %arg14: memref<4x3xf32, #tpu.memory_space<vmem>>, %arg15: memref<1x3xf32, #tpu.memory_space<vmem>>, %arg16: memref<32x128xf32, #tpu.memory_space<vmem>>, %arg17: memref<1x128xf32, #tpu.memory_space<vmem>>, %arg18: memref<32x32xf32, #tpu.memory_space<vmem>>, %arg19: memref<128x32xf32, #tpu.memory_space<vmem>>, %arg20: memref<32x128xf32, #tpu.memory_space<vmem>>, %arg21: memref<1x128xf32, #tpu.memory_space<vmem>>, %arg22: memref<3x128xf32, #tpu.memory_space<vmem>>, %arg23: memref<128x192xf32, #tpu.memory_space<vmem>>, %arg24: memref<8x128xf32, #tpu.memory_space<vmem>>) attributes {dimension_semantics = [#tpu.dimension_semantics<parallel>], iteration_bounds = array<i64: 1>, scalar_prefetch = 0 : i64, scratch_operands = 0 : i64, tpu.core_type = #tpu.core_type<tc>, window_params = [{transform_indices = @transform_0, window_bounds = array<i64: 128, 64>}, {pipeline_mode = #tpu.pipeline_mode<synchronous>, transform_indices = @transform_1, window_bounds = array<i64: 256, 128>}, {pipeline_mode = #tpu.pipeline_mode<synchronous>, transform_indices = @transform_2, window_bounds = array<i64: 64, 64>}, {pipeline_mode = #tpu.pipeline_mode<synchronous>, transform_indices = @transform_3, window_bounds = array<i64: 64, 64>}, {pipeline_mode = #tpu.pipeline_mode<synchronous>, transform_indices = @transform_4, window_bounds = array<i64: 192, 192>}, {pipeline_mode = #tpu.pipeline_mode<synchronous>, transform_indices = @transform_5, window_bounds = array<i64: 192, 192>}, {pipeline_mode = #tpu.pipeline_mode<synchronous>, transform_indices = @transform_6, window_bounds = array<i64: 64, 192>}, {pipeline_mode = #tpu.pipeline_mode<synchronous>, transform_indices = @transform_7, window_bounds = array<i64: 192, 1536>}, {pipeline_mode = #tpu.pipeline_mode<synchronous>, transform_indices = @transform_8, window_bounds = array<i64: 8, 128>}, {pipeline_mode = #tpu.pipeline_mode<synchronous>, transform_indices = @transform_9, window_bounds = array<i64: 64, 4>}, {pipeline_mode = #tpu.pipeline_mode<synchronous>, transform_indices = @transform_10, window_bounds = array<i64: 1536, 96>}, {pipeline_mode = #tpu.pipeline_mode<synchronous>, transform_indices = @transform_11, window_bounds = array<i64: 3, 96>}, {pipeline_mode = #tpu.pipeline_mode<synchronous>, transform_indices = @transform_12, window_bounds = array<i64: 96, 32>}, {pipeline_mode = #tpu.pipeline_mode<synchronous>, transform_indices = @transform_13, window_bounds = array<i64: 4, 3>}, {pipeline_mode = #tpu.pipeline_mode<synchronous>, transform_indices = @transform_14, window_bounds = array<i64: 1, 3>}, {pipeline_mode = #tpu.pipeline_mode<synchronous>, transform_indices = @transform_15, window_bounds = array<i64: 32, 128>}, {pipeline_mode = #tpu.pipeline_mode<synchronous>, transform_indices = @transform_16, window_bounds = array<i64: 1, 128>}, {pipeline_mode = #tpu.pipeline_mode<synchronous>, transform_indices = @transform_17, window_bounds = array<i64: 32, 32>}, {pipeline_mode = #tpu.pipeline_mode<synchronous>, transform_indices = @transform_18, window_bounds = array<i64: 128, 32>}, {pipeline_mode = #tpu.pipeline_mode<synchronous>, transform_indices = @transform_19, window_bounds = array<i64: 32, 128>}, {pipeline_mode = #tpu.pipeline_mode<synchronous>, transform_indices = @transform_20, window_bounds = array<i64: 1, 128>}, {pipeline_mode = #tpu.pipeline_mode<synchronous>, transform_indices = @transform_21, window_bounds = array<i64: 3, 128>}, {transform_indices = @transform_22, window_bounds = array<i64: 128, 192>}, {transform_indices = @transform_23, window_bounds = array<i64: 8, 128>}]} {
    %c0 = arith.constant 0 : index
    %c0_0 = arith.constant 0 : index
    %0 = vector.load %arg1[%c0, %c0_0] : memref<128x64xf32, #tpu.memory_space<vmem>>, vector<128x64xf32>
    %c0_1 = arith.constant 0 : index
    %c0_2 = arith.constant 0 : index
    %1 = vector.load %arg3[%c0_1, %c0_2] : memref<64x64xf32, #tpu.memory_space<vmem>>, vector<64x64xf32>
    %cst = arith.constant dense<0.000000e+00> : vector<128x64xf32>
    %2 = tpu.matmul %0, %1, %cst {dimension_numbers = #tpu.dot_dimension_numbers<[1], [0], [0], [1], [0, 0, 1, 1], [], []>} : vector<128x64xf32>, vector<64x64xf32>, vector<128x64xf32> -> vector<128x64xf32>
    %c0_3 = arith.constant 0 : index
    %c0_4 = arith.constant 0 : index
    %3 = vector.load %arg4[%c0_3, %c0_4] : memref<64x64xf32, #tpu.memory_space<vmem>>, vector<64x64xf32>
    %cst_5 = arith.constant dense<0.000000e+00> : vector<128x64xf32>
    %4 = tpu.matmul %0, %3, %cst_5 {dimension_numbers = #tpu.dot_dimension_numbers<[1], [0], [0], [1], [0, 0, 1, 1], [], []>} : vector<128x64xf32>, vector<64x64xf32>, vector<128x64xf32> -> vector<128x64xf32>
    %cst_6 = arith.constant 0.000000e+00 : f32
    %5 = vector.broadcast %cst_6 : f32 to vector<128x64xf32>
    %6 = arith.subf %5, %4 : vector<128x64xf32>
    %c0_7 = arith.constant 0 : index
    %c0_8 = arith.constant 0 : index
    %7 = vector.load %arg2[%c0_7, %c0_8] : memref<256x128xf32, #tpu.memory_space<vmem>>, vector<256x128xf32>
    %cst_9 = arith.constant dense<0.000000e+00> : vector<256x64xf32>
    %8 = tpu.matmul %7, %2, %cst_9 {dimension_numbers = #tpu.dot_dimension_numbers<[1], [0], [0], [1], [0, 0, 1, 1], [], []>} : vector<256x128xf32>, vector<128x64xf32>, vector<256x64xf32> -> vector<256x64xf32>
    %cst_10 = arith.constant dense<0.000000e+00> : vector<256x64xf32>
    %9 = tpu.matmul %7, %6, %cst_10 {dimension_numbers = #tpu.dot_dimension_numbers<[1], [0], [0], [1], [0, 0, 1, 1], [], []>} : vector<256x128xf32>, vector<128x64xf32>, vector<256x64xf32> -> vector<256x64xf32>
    %10 = vector.extract_strided_slice %8 {offsets = [0, 0], sizes = [128, 64], strides = [1, 1]} : vector<256x64xf32> to vector<128x64xf32>
    %11 = vector.extract_strided_slice %9 {offsets = [128, 0], sizes = [128, 64], strides = [1, 1]} : vector<256x64xf32> to vector<128x64xf32>
    %12 = arith.addf %10, %11 : vector<128x64xf32>
    %13 = vector.extract_strided_slice %9 {offsets = [0, 0], sizes = [128, 64], strides = [1, 1]} : vector<256x64xf32> to vector<128x64xf32>
    %14 = vector.extract_strided_slice %8 {offsets = [128, 0], sizes = [128, 64], strides = [1, 1]} : vector<256x64xf32> to vector<128x64xf32>
    %15 = arith.subf %13, %14 : vector<128x64xf32>
    %16 = arith.mulf %12, %12 : vector<128x64xf32>
    %17 = arith.mulf %15, %15 : vector<128x64xf32>
    %18 = arith.addf %16, %17 : vector<128x64xf32>
    %cst_11 = arith.constant 0.000000e+00 : f32
    %19 = vector.broadcast %cst_11 : f32 to vector<128x64xf32>
    %20 = arith.cmpf ogt, %18, %19 : vector<128x64xf32>
    %cst_12 = arith.constant 1.000000e+00 : f32
    %21 = vector.broadcast %cst_12 : f32 to vector<128x64xf32>
    %22 = arith.select %20, %18, %21 : vector<128x64xi1>, vector<128x64xf32>
    %23 = math.rsqrt %22 : vector<128x64xf32>
    %24 = arith.mulf %18, %23 : vector<128x64xf32>
    %25 = arith.mulf %12, %23 : vector<128x64xf32>
    %cst_13 = arith.constant 1.000000e+00 : f32
    %26 = vector.broadcast %cst_13 : f32 to vector<128x64xf32>
    %27 = arith.select %20, %25, %26 : vector<128x64xi1>, vector<128x64xf32>
    %28 = arith.mulf %15, %23 : vector<128x64xf32>
    %cst_14 = arith.constant 0.000000e+00 : f32
    %29 = vector.broadcast %cst_14 : f32 to vector<128x64xf32>
    %30 = arith.select %20, %28, %29 : vector<128x64xi1>, vector<128x64xf32>
    %c0_15 = arith.constant 0 : index
    %c0_16 = arith.constant 0 : index
    %31 = vector.load %arg7[%c0_15, %c0_16] : memref<64x192xf32, #tpu.memory_space<vmem>>, vector<64x192xf32>
    %cst_17 = arith.constant dense<0.000000e+00> : vector<128x192xf32>
    %32 = tpu.matmul %24, %31, %cst_17 {dimension_numbers = #tpu.dot_dimension_numbers<[1], [0], [0], [1], [0, 0, 1, 1], [], []>} : vector<128x64xf32>, vector<64x192xf32>, vector<128x192xf32> -> vector<128x192xf32>
    %c0_18 = arith.constant 0 : index
    %c0_19 = arith.constant 0 : index
    %33 = vector.load %arg23[%c0_18, %c0_19] : memref<128x192xf32, #tpu.memory_space<vmem>>, vector<128x192xf32>
    tpu.vector_store %arg23[%c0_18, %c0_19], %32 {strides = array<i32>} : memref<128x192xf32, #tpu.memory_space<vmem>>, vector<128x192xf32>,
    %34 = tpu.concatenate %27, %27, %27 in 1 : vector<128x64xf32>, vector<128x64xf32>, vector<128x64xf32> -> vector<128x192xf32>
    %35 = tpu.concatenate %30, %30, %30 in 1 : vector<128x64xf32>, vector<128x64xf32>, vector<128x64xf32> -> vector<128x192xf32>
    %36 = arith.mulf %32, %34 : vector<128x192xf32>
    %37 = arith.mulf %32, %35 : vector<128x192xf32>
    %c0_20 = arith.constant 0 : index
    %c0_21 = arith.constant 0 : index
    %38 = vector.load %arg5[%c0_20, %c0_21] : memref<192x192xf32, #tpu.memory_space<vmem>>, vector<192x192xf32>
    %c0_22 = arith.constant 0 : index
    %c0_23 = arith.constant 0 : index
    %39 = vector.load %arg6[%c0_22, %c0_23] : memref<192x192xf32, #tpu.memory_space<vmem>>, vector<192x192xf32>
    %cst_24 = arith.constant dense<0.000000e+00> : vector<128x192xf32>
    %40 = tpu.matmul %36, %38, %cst_24 {dimension_numbers = #tpu.dot_dimension_numbers<[1], [0], [0], [1], [0, 0, 1, 1], [], []>} : vector<128x192xf32>, vector<192x192xf32>, vector<128x192xf32> -> vector<128x192xf32>
    %cst_25 = arith.constant dense<0.000000e+00> : vector<128x192xf32>
    %41 = tpu.matmul %37, %39, %cst_25 {dimension_numbers = #tpu.dot_dimension_numbers<[1], [0], [0], [1], [0, 0, 1, 1], [], []>} : vector<128x192xf32>, vector<192x192xf32>, vector<128x192xf32> -> vector<128x192xf32>
    %42 = arith.subf %40, %41 : vector<128x192xf32>
    %cst_26 = arith.constant dense<0.000000e+00> : vector<128x192xf32>
    %43 = tpu.matmul %36, %39, %cst_26 {dimension_numbers = #tpu.dot_dimension_numbers<[1], [0], [0], [1], [0, 0, 1, 1], [], []>} : vector<128x192xf32>, vector<192x192xf32>, vector<128x192xf32> -> vector<128x192xf32>
    %cst_27 = arith.constant dense<0.000000e+00> : vector<128x192xf32>
    %44 = tpu.matmul %37, %38, %cst_27 {dimension_numbers = #tpu.dot_dimension_numbers<[1], [0], [0], [1], [0, 0, 1, 1], [], []>} : vector<128x192xf32>, vector<192x192xf32>, vector<128x192xf32> -> vector<128x192xf32>
    %45 = arith.addf %43, %44 : vector<128x192xf32>
    %46 = vector.extract_strided_slice %7 {offsets = [0, 0], sizes = [128, 128], strides = [1, 1]} : vector<256x128xf32> to vector<128x128xf32>
    %47 = vector.extract_strided_slice %7 {offsets = [128, 0], sizes = [128, 128], strides = [1, 1]} : vector<256x128xf32> to vector<128x128xf32>
    %cst_28 = arith.constant dense<0.000000e+00> : vector<128x192xf32>
    %48 = tpu.matmul %46, %42, %cst_28 {dimension_numbers = #tpu.dot_dimension_numbers<[1], [0], [0], [1], [0, 0, 1, 1], [], []>} : vector<128x128xf32>, vector<128x192xf32>, vector<128x192xf32> -> vector<128x192xf32>
    %cst_29 = arith.constant dense<0.000000e+00> : vector<128x192xf32>
    %49 = tpu.matmul %47, %45, %cst_29 {dimension_numbers = #tpu.dot_dimension_numbers<[1], [0], [0], [1], [0, 0, 1, 1], [], []>} : vector<128x128xf32>, vector<128x192xf32>, vector<128x192xf32> -> vector<128x192xf32>
    %50 = arith.subf %48, %49 : vector<128x192xf32>
    %c0_30 = arith.constant 0 : index
    %c0_31 = arith.constant 0 : index
    %51 = vector.load %arg8[%c0_30, %c0_31] : memref<192x1536xf32, #tpu.memory_space<vmem>>, vector<192x1536xf32>
    %cst_32 = arith.constant dense<0.000000e+00> : vector<128x1536xf32>
    %52 = tpu.matmul %50, %51, %cst_32 {dimension_numbers = #tpu.dot_dimension_numbers<[1], [0], [0], [1], [0, 0, 1, 1], [], []>} : vector<128x192xf32>, vector<192x1536xf32>, vector<128x1536xf32> -> vector<128x1536xf32>
    %cst_33 = arith.constant 0.000000e+00 : f32
    %53 = vector.broadcast %cst_33 : f32 to vector<128x1536xf32>
    %54 = arith.maximumf %52, %53 : vector<128x1536xf32>
    %c0_34 = arith.constant 0 : index
    %c0_35 = arith.constant 0 : index
    %55 = vector.load %arg9[%c0_34, %c0_35] : memref<8x128xf32, #tpu.memory_space<vmem>>, vector<8x128xf32>
    %cst_36 = arith.constant dense<0.000000e+00> : vector<8x1536xf32>
    %56 = tpu.matmul %55, %54, %cst_36 {dimension_numbers = #tpu.dot_dimension_numbers<[1], [0], [0], [1], [0, 0, 1, 1], [], []>} : vector<8x128xf32>, vector<128x1536xf32>, vector<8x1536xf32> -> vector<8x1536xf32>
    %c0_37 = arith.constant 0 : index
    %c0_38 = arith.constant 0 : index
    %57 = vector.load %arg11[%c0_37, %c0_38] : memref<1536x96xf32, #tpu.memory_space<vmem>>, vector<1536x96xf32>
    %cst_39 = arith.constant dense<0.000000e+00> : vector<8x96xf32>
    %58 = tpu.matmul %56, %57, %cst_39 {dimension_numbers = #tpu.dot_dimension_numbers<[1], [0], [0], [1], [0, 0, 1, 1], [], []>} : vector<8x1536xf32>, vector<1536x96xf32>, vector<8x96xf32> -> vector<8x96xf32>
    %cst_40 = arith.constant 1.52587891E-5 : f32
    %59 = vector.broadcast %cst_40 : f32 to vector<8x96xf32>
    %60 = arith.mulf %58, %59 : vector<8x96xf32>
    %c0_41 = arith.constant 0 : index
    %c0_42 = arith.constant 0 : index
    %61 = vector.load %arg9[%c0_41, %c0_42] : memref<8x128xf32, #tpu.memory_space<vmem>>, vector<8x128xf32>
    %cst_43 = arith.constant dense<0.000000e+00> : vector<8x64xf32>
    %62 = tpu.matmul %61, %0, %cst_43 {dimension_numbers = #tpu.dot_dimension_numbers<[1], [0], [0], [1], [0, 0, 1, 1], [], []>} : vector<8x128xf32>, vector<128x64xf32>, vector<8x64xf32> -> vector<8x64xf32>
    %c0_44 = arith.constant 0 : index
    %c0_45 = arith.constant 0 : index
    %63 = vector.load %arg10[%c0_44, %c0_45] : memref<64x4xf32, #tpu.memory_space<vmem>>, vector<64x4xf32>
    %cst_46 = arith.constant dense<0.000000e+00> : vector<8x4xf32>
    %64 = tpu.matmul %62, %63, %cst_46 {dimension_numbers = #tpu.dot_dimension_numbers<[1], [0], [0], [1], [0, 0, 1, 1], [], []>} : vector<8x64xf32>, vector<64x4xf32>, vector<8x4xf32> -> vector<8x4xf32>
    %cst_47 = arith.constant 3.906250e-03 : f32
    %65 = vector.broadcast %cst_47 : f32 to vector<8x4xf32>
    %66 = arith.mulf %64, %65 : vector<8x4xf32>
    %c0_48 = arith.constant 0 : index
    %c0_49 = arith.constant 0 : index
    %67 = vector.load %arg14[%c0_48, %c0_49] : memref<4x3xf32, #tpu.memory_space<vmem>>, vector<4x3xf32>
    %cst_50 = arith.constant dense<0.000000e+00> : vector<8x3xf32>
    %68 = tpu.matmul %66, %67, %cst_50 {dimension_numbers = #tpu.dot_dimension_numbers<[1], [0], [0], [1], [0, 0, 1, 1], [], []>} : vector<8x4xf32>, vector<4x3xf32>, vector<8x3xf32> -> vector<8x3xf32>
    %c0_51 = arith.constant 0 : index
    %c0_52 = arith.constant 0 : index
    %69 = vector.load %arg15[%c0_51, %c0_52] : memref<1x3xf32, #tpu.memory_space<vmem>>, vector<1x3xf32>
    %70 = vector.broadcast %69 : vector<1x3xf32> to vector<8x3xf32>
    %71 = arith.addf %68, %70 : vector<8x3xf32>
    %cst_53 = arith.constant dense<0xFF800000> : vector<8xf32>
    %72 = vector.multi_reduction <maximumf>, %71, %cst_53 [1] : vector<8x3xf32> to vector<8xf32>
    %73 = vector.shape_cast %72 : vector<8xf32> to vector<8x1xf32>
    %74 = vector.broadcast %73 : vector<8x1xf32> to vector<8x3xf32>
    %75 = arith.subf %71, %74 : vector<8x3xf32>
    %76 = math.exp %75 : vector<8x3xf32>
    %cst_54 = arith.constant dense<0.000000e+00> : vector<8xf32>
    %77 = vector.multi_reduction <add>, %76, %cst_54 [1] : vector<8x3xf32> to vector<8xf32>
    %78 = vector.shape_cast %77 : vector<8xf32> to vector<8x1xf32>
    %79 = vector.broadcast %78 : vector<8x1xf32> to vector<8x3xf32>
    %80 = arith.divf %76, %79 : vector<8x3xf32>
    %c0_55 = arith.constant 0 : index
    %c0_56 = arith.constant 0 : index
    %81 = vector.load %arg12[%c0_55, %c0_56] : memref<3x96xf32, #tpu.memory_space<vmem>>, vector<3x96xf32>
    %cst_57 = arith.constant dense<0.000000e+00> : vector<8x96xf32>
    %82 = tpu.matmul %80, %81, %cst_57 {dimension_numbers = #tpu.dot_dimension_numbers<[1], [0], [0], [1], [0, 0, 1, 1], [], []>} : vector<8x3xf32>, vector<3x96xf32>, vector<8x96xf32> -> vector<8x96xf32>
    %83 = arith.mulf %82, %60 : vector<8x96xf32>
    %c0_58 = arith.constant 0 : index
    %c0_59 = arith.constant 0 : index
    %84 = vector.load %arg13[%c0_58, %c0_59] : memref<96x32xf32, #tpu.memory_space<vmem>>, vector<96x32xf32>
    %cst_60 = arith.constant dense<0.000000e+00> : vector<8x32xf32>
    %85 = tpu.matmul %83, %84, %cst_60 {dimension_numbers = #tpu.dot_dimension_numbers<[1], [0], [0], [1], [0, 0, 1, 1], [], []>} : vector<8x96xf32>, vector<96x32xf32>, vector<8x32xf32> -> vector<8x32xf32>
    %c0_61 = arith.constant 0 : index
    %c0_62 = arith.constant 0 : index
    %86 = vector.load %arg16[%c0_61, %c0_62] : memref<32x128xf32, #tpu.memory_space<vmem>>, vector<32x128xf32>
    %cst_63 = arith.constant dense<0.000000e+00> : vector<8x128xf32>
    %87 = tpu.matmul %85, %86, %cst_63 {dimension_numbers = #tpu.dot_dimension_numbers<[1], [0], [0], [1], [0, 0, 1, 1], [], []>} : vector<8x32xf32>, vector<32x128xf32>, vector<8x128xf32> -> vector<8x128xf32>
    %c0_64 = arith.constant 0 : index
    %c0_65 = arith.constant 0 : index
    %88 = vector.load %arg17[%c0_64, %c0_65] : memref<1x128xf32, #tpu.memory_space<vmem>>, vector<1x128xf32>
    %89 = vector.broadcast %88 : vector<1x128xf32> to vector<8x128xf32>
    %90 = arith.addf %87, %89 : vector<8x128xf32>
    %c0_66 = arith.constant 0 : index
    %c0_67 = arith.constant 0 : index
    %91 = vector.load %arg19[%c0_66, %c0_67] : memref<128x32xf32, #tpu.memory_space<vmem>>, vector<128x32xf32>
    %cst_68 = arith.constant dense<0.000000e+00> : vector<8x32xf32>
    %92 = tpu.matmul %90, %91, %cst_68 {dimension_numbers = #tpu.dot_dimension_numbers<[1], [0], [0], [1], [0, 0, 1, 1], [], []>} : vector<8x128xf32>, vector<128x32xf32>, vector<8x32xf32> -> vector<8x32xf32>
    %c0_69 = arith.constant 0 : index
    %c0_70 = arith.constant 0 : index
    %93 = vector.load %arg18[%c0_69, %c0_70] : memref<32x32xf32, #tpu.memory_space<vmem>>, vector<32x32xf32>
    %cst_71 = arith.constant dense<0.000000e+00> : vector<8x32xf32>
    %94 = tpu.matmul %85, %93, %cst_71 {dimension_numbers = #tpu.dot_dimension_numbers<[1], [0], [0], [1], [0, 0, 1, 1], [], []>} : vector<8x32xf32>, vector<32x32xf32>, vector<8x32xf32> -> vector<8x32xf32>
    %95 = arith.mulf %94, %92 : vector<8x32xf32>
    %cst_72 = arith.constant 0.176776692 : f32
    %96 = vector.broadcast %cst_72 : f32 to vector<8x32xf32>
    %97 = arith.mulf %95, %96 : vector<8x32xf32>
    %c0_73 = arith.constant 0 : index
    %c0_74 = arith.constant 0 : index
    %98 = vector.load %arg20[%c0_73, %c0_74] : memref<32x128xf32, #tpu.memory_space<vmem>>, vector<32x128xf32>
    %cst_75 = arith.constant dense<0.000000e+00> : vector<8x128xf32>
    %99 = tpu.matmul %97, %98, %cst_75 {dimension_numbers = #tpu.dot_dimension_numbers<[1], [0], [0], [1], [0, 0, 1, 1], [], []>} : vector<8x32xf32>, vector<32x128xf32>, vector<8x128xf32> -> vector<8x128xf32>
    %100 = arith.addf %90, %99 : vector<8x128xf32>
    %c0_76 = arith.constant 0 : index
    %c0_77 = arith.constant 0 : index
    %101 = vector.load %arg21[%c0_76, %c0_77] : memref<1x128xf32, #tpu.memory_space<vmem>>, vector<1x128xf32>
    %102 = vector.broadcast %101 : vector<1x128xf32> to vector<8x128xf32>
    %103 = arith.addf %100, %102 : vector<8x128xf32>
    %c0_78 = arith.constant 0 : index
    %c0_79 = arith.constant 0 : index
    %104 = vector.load %arg22[%c0_78, %c0_79] : memref<3x128xf32, #tpu.memory_space<vmem>>, vector<3x128xf32>
    %cst_80 = arith.constant dense<0.000000e+00> : vector<8x128xf32>
    %105 = tpu.matmul %80, %104, %cst_80 {dimension_numbers = #tpu.dot_dimension_numbers<[1], [0], [0], [1], [0, 0, 1, 1], [], []>} : vector<8x3xf32>, vector<3x128xf32>, vector<8x128xf32> -> vector<8x128xf32>
    %106 = arith.addf %103, %105 : vector<8x128xf32>
    %c0_81 = arith.constant 0 : index
    %c0_82 = arith.constant 0 : index
    %107 = vector.load %arg24[%c0_81, %c0_82] : memref<8x128xf32, #tpu.memory_space<vmem>>, vector<8x128xf32>
    tpu.vector_store %arg24[%c0_81, %c0_82], %106 {strides = array<i32>} : memref<8x128xf32, #tpu.memory_space<vmem>>, vector<8x128xf32>,
    return
  }
  func.func @transform_0(%arg0: i32) -> (i32, i32) {
    %c0_i32 = arith.constant 0 : i32
    %c0_i32_0 = arith.constant 0 : i32
    return %arg0, %c0_i32 : i32, i32
  }
  func.func @transform_1(%arg0: i32) -> (i32, i32) {
    %c0_i32 = arith.constant 0 : i32
    %c0_i32_0 = arith.constant 0 : i32
    %c0_i32_1 = arith.constant 0 : i32
    return %c0_i32, %c0_i32_0 : i32, i32
  }
  func.func @transform_2(%arg0: i32) -> (i32, i32) {
    %c0_i32 = arith.constant 0 : i32
    %c0_i32_0 = arith.constant 0 : i32
    %c0_i32_1 = arith.constant 0 : i32
    return %c0_i32, %c0_i32_0 : i32, i32
  }
  func.func @transform_3(%arg0: i32) -> (i32, i32) {
    %c0_i32 = arith.constant 0 : i32
    %c0_i32_0 = arith.constant 0 : i32
    %c0_i32_1 = arith.constant 0 : i32
    return %c0_i32, %c0_i32_0 : i32, i32
  }
  func.func @transform_4(%arg0: i32) -> (i32, i32) {
    %c0_i32 = arith.constant 0 : i32
    %c0_i32_0 = arith.constant 0 : i32
    %c0_i32_1 = arith.constant 0 : i32
    return %c0_i32, %c0_i32_0 : i32, i32
  }
  func.func @transform_5(%arg0: i32) -> (i32, i32) {
    %c0_i32 = arith.constant 0 : i32
    %c0_i32_0 = arith.constant 0 : i32
    %c0_i32_1 = arith.constant 0 : i32
    return %c0_i32, %c0_i32_0 : i32, i32
  }
  func.func @transform_6(%arg0: i32) -> (i32, i32) {
    %c0_i32 = arith.constant 0 : i32
    %c0_i32_0 = arith.constant 0 : i32
    %c0_i32_1 = arith.constant 0 : i32
    return %c0_i32, %c0_i32_0 : i32, i32
  }
  func.func @transform_7(%arg0: i32) -> (i32, i32) {
    %c0_i32 = arith.constant 0 : i32
    %c0_i32_0 = arith.constant 0 : i32
    %c0_i32_1 = arith.constant 0 : i32
    return %c0_i32, %c0_i32_0 : i32, i32
  }
  func.func @transform_8(%arg0: i32) -> (i32, i32) {
    %c0_i32 = arith.constant 0 : i32
    %c0_i32_0 = arith.constant 0 : i32
    %c0_i32_1 = arith.constant 0 : i32
    return %c0_i32, %c0_i32_0 : i32, i32
  }
  func.func @transform_9(%arg0: i32) -> (i32, i32) {
    %c0_i32 = arith.constant 0 : i32
    %c0_i32_0 = arith.constant 0 : i32
    %c0_i32_1 = arith.constant 0 : i32
    return %c0_i32, %c0_i32_0 : i32, i32
  }
  func.func @transform_10(%arg0: i32) -> (i32, i32) {
    %c0_i32 = arith.constant 0 : i32
    %c0_i32_0 = arith.constant 0 : i32
    %c0_i32_1 = arith.constant 0 : i32
    return %c0_i32, %c0_i32_0 : i32, i32
  }
  func.func @transform_11(%arg0: i32) -> (i32, i32) {
    %c0_i32 = arith.constant 0 : i32
    %c0_i32_0 = arith.constant 0 : i32
    %c0_i32_1 = arith.constant 0 : i32
    return %c0_i32, %c0_i32_0 : i32, i32
  }
  func.func @transform_12(%arg0: i32) -> (i32, i32) {
    %c0_i32 = arith.constant 0 : i32
    %c0_i32_0 = arith.constant 0 : i32
    %c0_i32_1 = arith.constant 0 : i32
    return %c0_i32, %c0_i32_0 : i32, i32
  }
  func.func @transform_13(%arg0: i32) -> (i32, i32) {
    %c0_i32 = arith.constant 0 : i32
    %c0_i32_0 = arith.constant 0 : i32
    %c0_i32_1 = arith.constant 0 : i32
    return %c0_i32, %c0_i32_0 : i32, i32
  }
  func.func @transform_14(%arg0: i32) -> (i32, i32) {
    %c0_i32 = arith.constant 0 : i32
    %c0_i32_0 = arith.constant 0 : i32
    %c0_i32_1 = arith.constant 0 : i32
    return %c0_i32, %c0_i32_0 : i32, i32
  }
  func.func @transform_15(%arg0: i32) -> (i32, i32) {
    %c0_i32 = arith.constant 0 : i32
    %c0_i32_0 = arith.constant 0 : i32
    %c0_i32_1 = arith.constant 0 : i32
    return %c0_i32, %c0_i32_0 : i32, i32
  }
  func.func @transform_16(%arg0: i32) -> (i32, i32) {
    %c0_i32 = arith.constant 0 : i32
    %c0_i32_0 = arith.constant 0 : i32
    %c0_i32_1 = arith.constant 0 : i32
    return %c0_i32, %c0_i32_0 : i32, i32
  }
  func.func @transform_17(%arg0: i32) -> (i32, i32) {
    %c0_i32 = arith.constant 0 : i32
    %c0_i32_0 = arith.constant 0 : i32
    %c0_i32_1 = arith.constant 0 : i32
    return %c0_i32, %c0_i32_0 : i32, i32
  }
  func.func @transform_18(%arg0: i32) -> (i32, i32) {
    %c0_i32 = arith.constant 0 : i32
    %c0_i32_0 = arith.constant 0 : i32
    %c0_i32_1 = arith.constant 0 : i32
    return %c0_i32, %c0_i32_0 : i32, i32
  }
  func.func @transform_19(%arg0: i32) -> (i32, i32) {
    %c0_i32 = arith.constant 0 : i32
    %c0_i32_0 = arith.constant 0 : i32
    %c0_i32_1 = arith.constant 0 : i32
    return %c0_i32, %c0_i32_0 : i32, i32
  }
  func.func @transform_20(%arg0: i32) -> (i32, i32) {
    %c0_i32 = arith.constant 0 : i32
    %c0_i32_0 = arith.constant 0 : i32
    %c0_i32_1 = arith.constant 0 : i32
    return %c0_i32, %c0_i32_0 : i32, i32
  }
  func.func @transform_21(%arg0: i32) -> (i32, i32) {
    %c0_i32 = arith.constant 0 : i32
    %c0_i32_0 = arith.constant 0 : i32
    %c0_i32_1 = arith.constant 0 : i32
    return %c0_i32, %c0_i32_0 : i32, i32
  }
  func.func @transform_22(%arg0: i32) -> (i32, i32) {
    %c0_i32 = arith.constant 0 : i32
    %c0_i32_0 = arith.constant 0 : i32
    return %arg0, %c0_i32 : i32, i32
  }
  func.func @transform_23(%arg0: i32) -> (i32, i32) {
    %c0_i32 = arith.constant 0 : i32
    %c0_i32_0 = arith.constant 0 : i32
    return %arg0, %c0_i32 : i32, i32
  }
}

</mosaic_0001>

<llo_original>
// kernel: de_fe_mmoe_dadst_mapping_forward.1
$region0: #{de_fe_mmoe_dadst_mapping_forward.1}
  #allocation0 [shape = 'u32[]', space=smem, size = 0x4, offset = 0x4, fixed_abs, tag = 'smem constant byte address 0x4 - core index']
  #allocation1 [shape = 'u32[144,128]{1,0:T(1,128)}', space=vmem, size = 0x12000, scoped, tag = 'internal scratch']
  %s0 = inlined_call_operand.vmem [shape: f32[128,64], index: 0, kind: input, shape index: {}]
  %s1 = inlined_call_operand.vmem [shape: f32[256,128], index: 1, kind: input, shape index: {}]
  %s2 = inlined_call_operand.vmem [shape: f32[64,64], index: 2, kind: input, shape index: {}]
  %s3 = inlined_call_operand.vmem [shape: f32[64,64], index: 3, kind: input, shape index: {}]
  %s4 = inlined_call_operand.vmem [shape: f32[192,192], index: 4, kind: input, shape index: {}]
  %s5 = inlined_call_operand.vmem [shape: f32[192,192], index: 5, kind: input, shape index: {}]
  %s6 = inlined_call_operand.vmem [shape: f32[64,192], index: 6, kind: input, shape index: {}]
  %s7 = inlined_call_operand.vmem [shape: f32[192,1536], index: 7, kind: input, shape index: {}]
  %s8 = inlined_call_operand.vmem [shape: f32[8,128], index: 8, kind: input, shape index: {}]
  %s9 = inlined_call_operand.vmem [shape: f32[64,4], index: 9, kind: input, shape index: {}]
  %s10 = inlined_call_operand.vmem [shape: f32[1536,96], index: 10, kind: input, shape index: {}]
  %s11 = inlined_call_operand.vmem [shape: f32[3,96], index: 11, kind: input, shape index: {}]
  %s12 = inlined_call_operand.vmem [shape: f32[96,32], index: 12, kind: input, shape index: {}]
  %s13 = inlined_call_operand.vmem [shape: f32[4,3], index: 13, kind: input, shape index: {}]
  %s14 = inlined_call_operand.vmem [shape: f32[1,3], index: 14, kind: input, shape index: {}]
  %s15 = inlined_call_operand.vmem [shape: f32[32,128], index: 15, kind: input, shape index: {}]
  %s16 = inlined_call_operand.vmem [shape: f32[1,128], index: 16, kind: input, shape index: {}]
  %s17 = inlined_call_operand.vmem [shape: f32[32,32], index: 17, kind: input, shape index: {}]
  %s18 = inlined_call_operand.vmem [shape: f32[128,32], index: 18, kind: input, shape index: {}]
  %s19 = inlined_call_operand.vmem [shape: f32[32,128], index: 19, kind: input, shape index: {}]
  %s20 = inlined_call_operand.vmem [shape: f32[1,128], index: 20, kind: input, shape index: {}]
  %s21 = inlined_call_operand.vmem [shape: f32[3,128], index: 21, kind: input, shape index: {}]
  %s22 = inlined_call_operand.vmem [shape: f32[128,192], index: 22, kind: output, shape index: {0}]
  %s23 = inlined_call_operand.vmem [shape: f32[8,128], index: 23, kind: output, shape index: {1}]
  %24 = xla_tuple %s22, %s23
  %s25 = sld [smem:[#allocation0]]
  $region106: #{de_fe_mmoe_dadst_mapping_forward.1} parent=0
    _
  %s27 = ssub.s32 1, %s25
  %s28 = scalar_select 0, %s27, %s25
  // Predicated region
  $region2: #{de_fe_mmoe_dadst_mapping_forward.1} parent=0 // pred_check
    _
  $region3: #{de_fe_mmoe_dadst_mapping_forward.1} parent=0 // pred_check_branch
    %30 = sbr.rel (0) target = $region5
  $region4: #{de_fe_mmoe_dadst_mapping_forward.1} parent=0 // pred_region
    _
  $region5: #{de_fe_mmoe_dadst_mapping_forward.1} parent=0 // pred_fallthru
    _
  // Predicated region
  $region6: #{de_fe_mmoe_dadst_mapping_forward.1} parent=0 // pred_check
    _
  $region7: #{de_fe_mmoe_dadst_mapping_forward.1} parent=0 // pred_check_branch
    %32 = sbr.rel (0) target = $region9
  $region8: #{de_fe_mmoe_dadst_mapping_forward.1} parent=0 // pred_region
    _
  $region9: #{de_fe_mmoe_dadst_mapping_forward.1} parent=0 // pred_fallthru
    _
  // Predicated region
  $region10: #{de_fe_mmoe_dadst_mapping_forward.1} parent=0 // pred_check
    _
  $region11: #{de_fe_mmoe_dadst_mapping_forward.1} parent=0 // pred_check_branch
    %34 = sbr.rel (0) target = $region13
  $region12: #{de_fe_mmoe_dadst_mapping_forward.1} parent=0 // pred_region
    _
  $region13: #{de_fe_mmoe_dadst_mapping_forward.1} parent=0 // pred_fallthru
    _
  // Predicated region
  $region14: #{de_fe_mmoe_dadst_mapping_forward.1} parent=0 // pred_check
    _
  $region15: #{de_fe_mmoe_dadst_mapping_forward.1} parent=0 // pred_check_branch
    %36 = sbr.rel (0) target = $region17
  $region16: #{de_fe_mmoe_dadst_mapping_forward.1} parent=0 // pred_region
    _
  $region17: #{de_fe_mmoe_dadst_mapping_forward.1} parent=0 // pred_fallthru
    _
  // Predicated region
  $region18: #{de_fe_mmoe_dadst_mapping_forward.1} parent=0 // pred_check
    _
  $region19: #{de_fe_mmoe_dadst_mapping_forward.1} parent=0 // pred_check_branch
    %38 = sbr.rel (0) target = $region21
  $region20: #{de_fe_mmoe_dadst_mapping_forward.1} parent=0 // pred_region
    _
  $region21: #{de_fe_mmoe_dadst_mapping_forward.1} parent=0 // pred_fallthru
    _
  // Predicated region
  $region22: #{de_fe_mmoe_dadst_mapping_forward.1} parent=0 // pred_check
    _
  $region23: #{de_fe_mmoe_dadst_mapping_forward.1} parent=0 // pred_check_branch
    %40 = sbr.rel (0) target = $region25
  $region24: #{de_fe_mmoe_dadst_mapping_forward.1} parent=0 // pred_region
    _
  $region25: #{de_fe_mmoe_dadst_mapping_forward.1} parent=0 // pred_fallthru
    _
  // Predicated region
  $region26: #{de_fe_mmoe_dadst_mapping_forward.1} parent=0 // pred_check
    _
  $region27: #{de_fe_mmoe_dadst_mapping_forward.1} parent=0 // pred_check_branch
    %42 = sbr.rel (0) target = $region29
  $region28: #{de_fe_mmoe_dadst_mapping_forward.1} parent=0 // pred_region
    _
  $region29: #{de_fe_mmoe_dadst_mapping_forward.1} parent=0 // pred_fallthru
    _
  // Predicated region
  $region30: #{de_fe_mmoe_dadst_mapping_forward.1} parent=0 // pred_check
    _
  $region31: #{de_fe_mmoe_dadst_mapping_forward.1} parent=0 // pred_check_branch
    %44 = sbr.rel (0) target = $region33
  $region32: #{de_fe_mmoe_dadst_mapping_forward.1} parent=0 // pred_region
    _
  $region33: #{de_fe_mmoe_dadst_mapping_forward.1} parent=0 // pred_fallthru
    _
  // Predicated region
  $region34: #{de_fe_mmoe_dadst_mapping_forward.1} parent=0 // pred_check
    _
  $region35: #{de_fe_mmoe_dadst_mapping_forward.1} parent=0 // pred_check_branch
    %46 = sbr.rel (0) target = $region37
  $region36: #{de_fe_mmoe_dadst_mapping_forward.1} parent=0 // pred_region
    _
  $region37: #{de_fe_mmoe_dadst_mapping_forward.1} parent=0 // pred_fallthru
    _
  // Predicated region
  $region38: #{de_fe_mmoe_dadst_mapping_forward.1} parent=0 // pred_check
    _
  $region39: #{de_fe_mmoe_dadst_mapping_forward.1} parent=0 // pred_check_branch
    %48 = sbr.rel (0) target = $region41
  $region40: #{de_fe_mmoe_dadst_mapping_forward.1} parent=0 // pred_region
    _
  $region41: #{de_fe_mmoe_dadst_mapping_forward.1} parent=0 // pred_fallthru
    _
  // Predicated region
  $region42: #{de_fe_mmoe_dadst_mapping_forward.1} parent=0 // pred_check
    _
  $region43: #{de_fe_mmoe_dadst_mapping_forward.1} parent=0 // pred_check_branch
    %50 = sbr.rel (0) target = $region45
  $region44: #{de_fe_mmoe_dadst_mapping_forward.1} parent=0 // pred_region
    _
  $region45: #{de_fe_mmoe_dadst_mapping_forward.1} parent=0 // pred_fallthru
    _
  // Predicated region
  $region46: #{de_fe_mmoe_dadst_mapping_forward.1} parent=0 // pred_check
    _
  $region47: #{de_fe_mmoe_dadst_mapping_forward.1} parent=0 // pred_check_branch
    %52 = sbr.rel (0) target = $region49
  $region48: #{de_fe_mmoe_dadst_mapping_forward.1} parent=0 // pred_region
    _
  $region49: #{de_fe_mmoe_dadst_mapping_forward.1} parent=0 // pred_fallthru
    _
  // Predicated region
  $region50: #{de_fe_mmoe_dadst_mapping_forward.1} parent=0 // pred_check
    _
  $region51: #{de_fe_mmoe_dadst_mapping_forward.1} parent=0 // pred_check_branch
    %54 = sbr.rel (0) target = $region53
  $region52: #{de_fe_mmoe_dadst_mapping_forward.1} parent=0 // pred_region
    _
  $region53: #{de_fe_mmoe_dadst_mapping_forward.1} parent=0 // pred_fallthru
    _
  // Predicated region
  $region54: #{de_fe_mmoe_dadst_mapping_forward.1} parent=0 // pred_check
    _
  $region55: #{de_fe_mmoe_dadst_mapping_forward.1} parent=0 // pred_check_branch
    %56 = sbr.rel (0) target = $region57
  $region56: #{de_fe_mmoe_dadst_mapping_forward.1} parent=0 // pred_region
    _
  $region57: #{de_fe_mmoe_dadst_mapping_forward.1} parent=0 // pred_fallthru
    _
  // Predicated region
  $region58: #{de_fe_mmoe_dadst_mapping_forward.1} parent=0 // pred_check
    _
  $region59: #{de_fe_mmoe_dadst_mapping_forward.1} parent=0 // pred_check_branch
    %58 = sbr.rel (0) target = $region61
  $region60: #{de_fe_mmoe_dadst_mapping_forward.1} parent=0 // pred_region
    _
  $region61: #{de_fe_mmoe_dadst_mapping_forward.1} parent=0 // pred_fallthru
    _
  // Predicated region
  $region62: #{de_fe_mmoe_dadst_mapping_forward.1} parent=0 // pred_check
    _
  $region63: #{de_fe_mmoe_dadst_mapping_forward.1} parent=0 // pred_check_branch
    %60 = sbr.rel (0) target = $region65
  $region64: #{de_fe_mmoe_dadst_mapping_forward.1} parent=0 // pred_region
    _
  $region65: #{de_fe_mmoe_dadst_mapping_forward.1} parent=0 // pred_fallthru
    _
  // Predicated region
  $region66: #{de_fe_mmoe_dadst_mapping_forward.1} parent=0 // pred_check
    _
  $region67: #{de_fe_mmoe_dadst_mapping_forward.1} parent=0 // pred_check_branch
    %62 = sbr.rel (0) target = $region69
  $region68: #{de_fe_mmoe_dadst_mapping_forward.1} parent=0 // pred_region
    _
  $region69: #{de_fe_mmoe_dadst_mapping_forward.1} parent=0 // pred_fallthru
    _
  // Predicated region
  $region70: #{de_fe_mmoe_dadst_mapping_forward.1} parent=0 // pred_check
    _
  $region71: #{de_fe_mmoe_dadst_mapping_forward.1} parent=0 // pred_check_branch
    %64 = sbr.rel (0) target = $region73
  $region72: #{de_fe_mmoe_dadst_mapping_forward.1} parent=0 // pred_region
    _
  $region73: #{de_fe_mmoe_dadst_mapping_forward.1} parent=0 // pred_fallthru
    _
  // Predicated region
  $region74: #{de_fe_mmoe_dadst_mapping_forward.1} parent=0 // pred_check
    _
  $region75: #{de_fe_mmoe_dadst_mapping_forward.1} parent=0 // pred_check_branch
    %66 = sbr.rel (0) target = $region77
  $region76: #{de_fe_mmoe_dadst_mapping_forward.1} parent=0 // pred_region
    _
  $region77: #{de_fe_mmoe_dadst_mapping_forward.1} parent=0 // pred_fallthru
    _
  // Predicated region
  $region78: #{de_fe_mmoe_dadst_mapping_forward.1} parent=0 // pred_check
    _
  $region79: #{de_fe_mmoe_dadst_mapping_forward.1} parent=0 // pred_check_branch
    %68 = sbr.rel (0) target = $region81
  $region80: #{de_fe_mmoe_dadst_mapping_forward.1} parent=0 // pred_region
    _
  $region81: #{de_fe_mmoe_dadst_mapping_forward.1} parent=0 // pred_fallthru
    _
  // Predicated region
  $region82: #{de_fe_mmoe_dadst_mapping_forward.1} parent=0 // pred_check
    _
  $region83: #{de_fe_mmoe_dadst_mapping_forward.1} parent=0 // pred_check_branch
    %70 = sbr.rel (0) target = $region85
  $region84: #{de_fe_mmoe_dadst_mapping_forward.1} parent=0 // pred_region
    _
  $region85: #{de_fe_mmoe_dadst_mapping_forward.1} parent=0 // pred_fallthru
    _
  // Predicated region
  $region86: #{de_fe_mmoe_dadst_mapping_forward.1} parent=0 // pred_check
    _
  $region87: #{de_fe_mmoe_dadst_mapping_forward.1} parent=0 // pred_check_branch
    %72 = sbr.rel (0) target = $region89
  $region88: #{de_fe_mmoe_dadst_mapping_forward.1} parent=0 // pred_region
    _
  $region89: #{de_fe_mmoe_dadst_mapping_forward.1} parent=0 // pred_fallthru
    _
  %v73 = vld [vmem:[%s0] sm:$0xff]
  %v74 = vld [vmem:[%s0 + $0x8] sm:$0xff]
  %v75 = vld [vmem:[%s0 + $0x10] sm:$0xff]
  %v76 = vld [vmem:[%s0 + $0x18] sm:$0xff]
  %v77 = vld [vmem:[%s0 + $0x20] sm:$0xff]
  %v78 = vld [vmem:[%s0 + $0x28] sm:$0xff]
  %v79 = vld [vmem:[%s0 + $0x30] sm:$0xff]
  %v80 = vld [vmem:[%s0 + $0x38] sm:$0xff]
  %v81 = vld [vmem:[%s0 + $0x40] sm:$0xff]
  %v82 = vld [vmem:[%s0 + $0x48] sm:$0xff]
  %v83 = vld [vmem:[%s0 + $0x50] sm:$0xff]
  %v84 = vld [vmem:[%s0 + $0x58] sm:$0xff]
  %v85 = vld [vmem:[%s0 + $0x60] sm:$0xff]
  %v86 = vld [vmem:[%s0 + $0x68] sm:$0xff]
  %v87 = vld [vmem:[%s0 + $0x70] sm:$0xff]
  %v88 = vld [vmem:[%s0 + $0x78] sm:$0xff]
  %v89 = vld [vmem:[%s2] sm:$0xff]
  %v90 = vld [vmem:[%s2 + $0x8] sm:$0xff]
  %v91 = vld [vmem:[%s2 + $0x10] sm:$0xff]
  %v92 = vld [vmem:[%s2 + $0x18] sm:$0xff]
  %v93 = vld [vmem:[%s2 + $0x20] sm:$0xff]
  %v94 = vld [vmem:[%s2 + $0x28] sm:$0xff]
  %v95 = vld [vmem:[%s2 + $0x30] sm:$0xff]
  %v96 = vld [vmem:[%s2 + $0x38] sm:$0xff]
  %vm97 = vcmask 523264
  %v99 = vsel %vm97, %v73, 0
  %v102 = vsel %vm97, %v74, 0
  %v105 = vsel %vm97, %v75, 0
  %v108 = vsel %vm97, %v76, 0
  %v111 = vsel %vm97, %v77, 0
  %v114 = vsel %vm97, %v78, 0
  %v117 = vsel %vm97, %v79, 0
  %v120 = vsel %vm97, %v80, 0
  %v123 = vsel %vm97, %v81, 0
  %v126 = vsel %vm97, %v82, 0
  %v129 = vsel %vm97, %v83, 0
  %v132 = vsel %vm97, %v84, 0
  %v135 = vsel %vm97, %v85, 0
  %v138 = vsel %vm97, %v86, 0
  %v141 = vsel %vm97, %v87, 0
  %v144 = vsel %vm97, %v88, 0
  %146 = vmatprep.subr.mxu0 0.0
  %147 = vmatpush1.msra.mxu0 %v89
  %148 = vmatprep.subr.mxu0 0.0
  %149 = vmatpush1.msra.mxu0 %v90
  %150 = vmatprep.subr.mxu0 0.0
  %151 = vmatpush1.msra.mxu0 %v91
  %152 = vmatprep.subr.mxu0 0.0
  %153 = vmatpush1.msra.mxu0 %v92
  %154 = vmatprep.subr.mxu0 0.0
  %155 = vmatpush1.msra.mxu0 %v93
  %156 = vmatprep.subr.mxu0 0.0
  %157 = vmatpush1.msra.mxu0 %v94
  %158 = vmatprep.subr.mxu0 0.0
  %159 = vmatpush1.msra.mxu0 %v95
  %160 = vmatprep.subr.mxu0 0.0
  %161 = vmatpush1.msra.mxu0 %v96
  %162 = vmatprep.subr.mxu0 0.0
  %163 = vmatpush1.msra.mxu0 0.0
  %164 = vmatprep.subr.mxu0 0.0
  %165 = vmatpush1.msra.mxu0 0.0
  %166 = vmatprep.subr.mxu0 0.0
  %167 = vmatpush1.msra.mxu0 0.0
  %168 = vmatprep.subr.mxu0 0.0
  %169 = vmatpush1.msra.mxu0 0.0
  %170 = vmatprep.subr.mxu0 0.0
  %171 = vmatpush1.msra.mxu0 0.0
  %172 = vmatprep.subr.mxu0 0.0
  %173 = vmatpush1.msra.mxu0 0.0
  %174 = vmatprep.subr.mxu0 0.0
  %175 = vmatpush1.msra.mxu0 0.0
  %176 = vmatprep.subr.mxu0 0.0
  %177 = vmatpush1.msra.mxu0 0.0
  %178 = vmatprep.subr.mxu0 0.0
  %179 = vmatpush1.msra.mxu0 0.0
  %180 = vmatprep.subr.mxu0 0.0
  %181 = vmatpush1.msra.mxu0 0.0
  %182 = vmatprep.subr.mxu0 0.0
  %183 = vmatpush1.msra.mxu0 0.0
  %184 = vmatprep.subr.mxu0 0.0
  %185 = vmatpush1.msra.mxu0 0.0
  %186 = vmatprep.subr.mxu0 0.0
  %187 = vmatpush1.msra.mxu0 0.0
  %188 = vmatprep.subr.mxu0 0.0
  %189 = vmatpush1.msra.mxu0 0.0
  %190 = vmatprep.subr.mxu0 0.0
  %191 = vmatpush1.msra.mxu0 0.0
  %192 = vmatprep.subr.mxu0 0.0
  %193 = vmatpush1.msra.mxu0 0.0
  %194 = vmatprep.subr.mxu0 0.0
  %195 = vmatpush1.msra.mxu0 0.0
  %196 = vmatprep.subr.mxu0 0.0
  %197 = vmatpush1.msra.mxu0 0.0
  %198 = vmatprep.subr.mxu0 0.0
  %199 = vmatpush1.msra.mxu0 0.0
  %200 = vmatprep.subr.mxu0 0.0
  %201 = vmatpush1.msra.mxu0 0.0
  %202 = vmatprep.subr.mxu0 0.0
  %203 = vmatpush1.msra.mxu0 0.0
  %204 = vmatprep.subr.mxu0 0.0
  %205 = vmatpush1.msra.mxu0 0.0
  %206 = vmatprep.subr.mxu0 0.0
  %207 = vmatpush1.msra.mxu0 0.0
  %208 = vmatprep.subr.mxu0 0.0
  %209 = vmatpush1.msra.mxu0 0.0
  %210 = vmatprep.mubr.f32.mxu0 0.0
  %211 = vmatmul.mubr.f32.gmra.mrb[0].mxu0 %v99
  %v212 = vpop.f32.mrb[0].mxu0
  %v213 = vadd.f32 0.0, %v212
  %v214 = vpop.f32.mrb[0].mxu0
  %215 = vmatprep.mubr.f32.mxu0 0.0
  %216 = vmatmul.mubr.f32.gmra.mrb[0].mxu0 %v102
  %v217 = vpop.f32.mrb[0].mxu0
  %v218 = vadd.f32 0.0, %v217
  %v219 = vpop.f32.mrb[0].mxu0
  %220 = vmatprep.mubr.f32.mxu0 0.0
  %221 = vmatmul.mubr.f32.gmra.mrb[0].mxu0 %v105
  %v222 = vpop.f32.mrb[0].mxu0
  %v223 = vadd.f32 0.0, %v222
  %v224 = vpop.f32.mrb[0].mxu0
  %225 = vmatprep.mubr.f32.mxu0 0.0
  %226 = vmatmul.mubr.f32.gmra.mrb[0].mxu0 %v108
  %v227 = vpop.f32.mrb[0].mxu0
  %v228 = vadd.f32 0.0, %v227
  %v229 = vpop.f32.mrb[0].mxu0
  %230 = vmatprep.mubr.f32.mxu0 0.0
  %231 = vmatmul.mubr.f32.gmra.mrb[0].mxu0 %v111
  %v232 = vpop.f32.mrb[0].mxu0
  %v233 = vadd.f32 0.0, %v232
  %v234 = vpop.f32.mrb[0].mxu0
  %235 = vmatprep.mubr.f32.mxu0 0.0
  %236 = vmatmul.mubr.f32.gmra.mrb[0].mxu0 %v114
  %v237 = vpop.f32.mrb[0].mxu0
  %v238 = vadd.f32 0.0, %v237
  %v239 = vpop.f32.mrb[0].mxu0
  %240 = vmatprep.mubr.f32.mxu0 0.0
  %241 = vmatmul.mubr.f32.gmra.mrb[0].mxu0 %v117
  %v242 = vpop.f32.mrb[0].mxu0
  %v243 = vadd.f32 0.0, %v242
  %v244 = vpop.f32.mrb[0].mxu0
  %245 = vmatprep.mubr.f32.mxu0 0.0
  %246 = vmatmul.mubr.f32.gmra.mrb[0].mxu0 %v120
  %v247 = vpop.f32.mrb[0].mxu0
  %v248 = vadd.f32 0.0, %v247
  %v249 = vpop.f32.mrb[0].mxu0
  %250 = vmatprep.mubr.f32.mxu0 0.0
  %251 = vmatmul.mubr.f32.gmra.mrb[0].mxu0 %v123
  %v252 = vpop.f32.mrb[0].mxu0
  %v253 = vadd.f32 0.0, %v252
  %v254 = vpop.f32.mrb[0].mxu0
  %255 = vmatprep.mubr.f32.mxu0 0.0
  %256 = vmatmul.mubr.f32.gmra.mrb[0].mxu0 %v126
  %v257 = vpop.f32.mrb[0].mxu0
  %v258 = vadd.f32 0.0, %v257
  %v259 = vpop.f32.mrb[0].mxu0
  %260 = vmatprep.mubr.f32.mxu0 0.0
  %261 = vmatmul.mubr.f32.gmra.mrb[0].mxu0 %v129
  %v262 = vpop.f32.mrb[0].mxu0
  %v263 = vadd.f32 0.0, %v262
  %v264 = vpop.f32.mrb[0].mxu0
  %265 = vmatprep.mubr.f32.mxu0 0.0
  %266 = vmatmul.mubr.f32.gmra.mrb[0].mxu0 %v132
  %v267 = vpop.f32.mrb[0].mxu0
  %v268 = vadd.f32 0.0, %v267
  %v269 = vpop.f32.mrb[0].mxu0
  %270 = vmatprep.mubr.f32.mxu0 0.0
  %271 = vmatmul.mubr.f32.gmra.mrb[0].mxu0 %v135
  %v272 = vpop.f32.mrb[0].mxu0
  %v273 = vadd.f32 0.0, %v272
  %v274 = vpop.f32.mrb[0].mxu0
  %275 = vmatprep.mubr.f32.mxu0 0.0
  %276 = vmatmul.mubr.f32.gmra.mrb[0].mxu0 %v138
  %v277 = vpop.f32.mrb[0].mxu0
  %v278 = vadd.f32 0.0, %v277
  %v279 = vpop.f32.mrb[0].mxu0
  %280 = vmatprep.mubr.f32.mxu0 0.0
  %281 = vmatmul.mubr.f32.gmra.mrb[0].mxu0 %v141
  %v282 = vpop.f32.mrb[0].mxu0
  %v283 = vadd.f32 0.0, %v282
  %v284 = vpop.f32.mrb[0].mxu0
  %285 = vmatprep.mubr.f32.mxu0 0.0
  %286 = vmatmul.mubr.f32.gmra.mrb[0].mxu0 %v144
  %v287 = vpop.f32.mrb[0].mxu0
  %v288 = vadd.f32 0.0, %v287
  %v289 = vpop.f32.mrb[0].mxu0
  %290 = vdwg.mxu0
  %v291 = vld [vmem:[%s3] sm:$0xff]
  %v292 = vld [vmem:[%s3 + $0x8] sm:$0xff]
  %v293 = vld [vmem:[%s3 + $0x10] sm:$0xff]
  %v294 = vld [vmem:[%s3 + $0x18] sm:$0xff]
  %v295 = vld [vmem:[%s3 + $0x20] sm:$0xff]
  %v296 = vld [vmem:[%s3 + $0x28] sm:$0xff]
  %v297 = vld [vmem:[%s3 + $0x30] sm:$0xff]
  %v298 = vld [vmem:[%s3 + $0x38] sm:$0xff]
  %299 = vmatprep.subr.mxu0 0.0
  %300 = vmatpush1.msra.mxu0 %v291
  %301 = vmatprep.subr.mxu0 0.0
  %302 = vmatpush1.msra.mxu0 %v292
  %303 = vmatprep.subr.mxu0 0.0
  %304 = vmatpush1.msra.mxu0 %v293
  %305 = vmatprep.subr.mxu0 0.0
  %306 = vmatpush1.msra.mxu0 %v294
  %307 = vmatprep.subr.mxu0 0.0
  %308 = vmatpush1.msra.mxu0 %v295
  %309 = vmatprep.subr.mxu0 0.0
  %310 = vmatpush1.msra.mxu0 %v296
  %311 = vmatprep.subr.mxu0 0.0
  %312 = vmatpush1.msra.mxu0 %v297
  %313 = vmatprep.subr.mxu0 0.0
  %314 = vmatpush1.msra.mxu0 %v298
  %315 = vmatprep.subr.mxu0 0.0
  %316 = vmatpush1.msra.mxu0 0.0
  %317 = vmatprep.subr.mxu0 0.0
  %318 = vmatpush1.msra.mxu0 0.0
  %319 = vmatprep.subr.mxu0 0.0
  %320 = vmatpush1.msra.mxu0 0.0
  %321 = vmatprep.subr.mxu0 0.0
  %322 = vmatpush1.msra.mxu0 0.0
  %323 = vmatprep.subr.mxu0 0.0
  %324 = vmatpush1.msra.mxu0 0.0
  %325 = vmatprep.subr.mxu0 0.0
  %326 = vmatpush1.msra.mxu0 0.0
  %327 = vmatprep.subr.mxu0 0.0
  %328 = vmatpush1.msra.mxu0 0.0
  %329 = vmatprep.subr.mxu0 0.0
  %330 = vmatpush1.msra.mxu0 0.0
  %331 = vmatprep.subr.mxu0 0.0
  %332 = vmatpush1.msra.mxu0 0.0
  %333 = vmatprep.subr.mxu0 0.0
  %334 = vmatpush1.msra.mxu0 0.0
  %335 = vmatprep.subr.mxu0 0.0
  %336 = vmatpush1.msra.mxu0 0.0
  %337 = vmatprep.subr.mxu0 0.0
  %338 = vmatpush1.msra.mxu0 0.0
  %339 = vmatprep.subr.mxu0 0.0
  %340 = vmatpush1.msra.mxu0 0.0
  %341 = vmatprep.subr.mxu0 0.0
  %342 = vmatpush1.msra.mxu0 0.0
  %343 = vmatprep.subr.mxu0 0.0
  %344 = vmatpush1.msra.mxu0 0.0
  %345 = vmatprep.subr.mxu0 0.0
  %346 = vmatpush1.msra.mxu0 0.0
  %347 = vmatprep.subr.mxu0 0.0
  %348 = vmatpush1.msra.mxu0 0.0
  %349 = vmatprep.subr.mxu0 0.0
  %350 = vmatpush1.msra.mxu0 0.0
  %351 = vmatprep.subr.mxu0 0.0
  %352 = vmatpush1.msra.mxu0 0.0
  %353 = vmatprep.subr.mxu0 0.0
  %354 = vmatpush1.msra.mxu0 0.0
  %355 = vmatprep.subr.mxu0 0.0
  %356 = vmatpush1.msra.mxu0 0.0
  %357 = vmatprep.subr.mxu0 0.0
  %358 = vmatpush1.msra.mxu0 0.0
  %359 = vmatprep.subr.mxu0 0.0
  %360 = vmatpush1.msra.mxu0 0.0
  %361 = vmatprep.subr.mxu0 0.0
  %362 = vmatpush1.msra.mxu0 0.0
  %363 = vmatprep.mubr.f32.mxu0 0.0
  %364 = vmatmul.mubr.f32.gmra.mrb[0].mxu0 %v99
  %v365 = vpop.f32.mrb[0].mxu0
  %v366 = vadd.f32 0.0, %v365
  %v367 = vpop.f32.mrb[0].mxu0
  %368 = vmatprep.mubr.f32.mxu0 0.0
  %369 = vmatmul.mubr.f32.gmra.mrb[0].mxu0 %v102
  %v370 = vpop.f32.mrb[0].mxu0
  %v371 = vadd.f32 0.0, %v370
  %v372 = vpop.f32.mrb[0].mxu0
  %373 = vmatprep.mubr.f32.mxu0 0.0
  %374 = vmatmul.mubr.f32.gmra.mrb[0].mxu0 %v105
  %v375 = vpop.f32.mrb[0].mxu0
  %v376 = vadd.f32 0.0, %v375
  %v377 = vpop.f32.mrb[0].mxu0
  %378 = vmatprep.mubr.f32.mxu0 0.0
  %379 = vmatmul.mubr.f32.gmra.mrb[0].mxu0 %v108
  %v380 = vpop.f32.mrb[0].mxu0
  %v381 = vadd.f32 0.0, %v380
  %v382 = vpop.f32.mrb[0].mxu0
  %383 = vmatprep.mubr.f32.mxu0 0.0
  %384 = vmatmul.mubr.f32.gmra.mrb[0].mxu0 %v111
  %v385 = vpop.f32.mrb[0].mxu0
  %v386 = vadd.f32 0.0, %v385
  %v387 = vpop.f32.mrb[0].mxu0
  %388 = vmatprep.mubr.f32.mxu0 0.0
  %389 = vmatmul.mubr.f32.gmra.mrb[0].mxu0 %v114
  %v390 = vpop.f32.mrb[0].mxu0
  %v391 = vadd.f32 0.0, %v390
  %v392 = vpop.f32.mrb[0].mxu0
  %393 = vmatprep.mubr.f32.mxu0 0.0
  %394 = vmatmul.mubr.f32.gmra.mrb[0].mxu0 %v117
  %v395 = vpop.f32.mrb[0].mxu0
  %v396 = vadd.f32 0.0, %v395
  %v397 = vpop.f32.mrb[0].mxu0
  %398 = vmatprep.mubr.f32.mxu0 0.0
  %399 = vmatmul.mubr.f32.gmra.mrb[0].mxu0 %v120
  %v400 = vpop.f32.mrb[0].mxu0
  %v401 = vadd.f32 0.0, %v400
  %v402 = vpop.f32.mrb[0].mxu0
  %403 = vmatprep.mubr.f32.mxu0 0.0
  %404 = vmatmul.mubr.f32.gmra.mrb[0].mxu0 %v123
  %v405 = vpop.f32.mrb[0].mxu0
  %v406 = vadd.f32 0.0, %v405
  %v407 = vpop.f32.mrb[0].mxu0
  %408 = vmatprep.mubr.f32.mxu0 0.0
  %409 = vmatmul.mubr.f32.gmra.mrb[0].mxu0 %v126
  %v410 = vpop.f32.mrb[0].mxu0
  %v411 = vadd.f32 0.0, %v410
  %v412 = vpop.f32.mrb[0].mxu0
  %413 = vmatprep.mubr.f32.mxu0 0.0
  %414 = vmatmul.mubr.f32.gmra.mrb[0].mxu0 %v129
  %v415 = vpop.f32.mrb[0].mxu0
  %v416 = vadd.f32 0.0, %v415
  %v417 = vpop.f32.mrb[0].mxu0
  %418 = vmatprep.mubr.f32.mxu0 0.0
  %419 = vmatmul.mubr.f32.gmra.mrb[0].mxu0 %v132
  %v420 = vpop.f32.mrb[0].mxu0
  %v421 = vadd.f32 0.0, %v420
  %v422 = vpop.f32.mrb[0].mxu0
  %423 = vmatprep.mubr.f32.mxu0 0.0
  %424 = vmatmul.mubr.f32.gmra.mrb[0].mxu0 %v135
  %v425 = vpop.f32.mrb[0].mxu0
  %v426 = vadd.f32 0.0, %v425
  %v427 = vpop.f32.mrb[0].mxu0
  %428 = vmatprep.mubr.f32.mxu0 0.0
  %429 = vmatmul.mubr.f32.gmra.mrb[0].mxu0 %v138
  %v430 = vpop.f32.mrb[0].mxu0
  %v431 = vadd.f32 0.0, %v430
  %v432 = vpop.f32.mrb[0].mxu0
  %433 = vmatprep.mubr.f32.mxu0 0.0
  %434 = vmatmul.mubr.f32.gmra.mrb[0].mxu0 %v141
  %v435 = vpop.f32.mrb[0].mxu0
  %v436 = vadd.f32 0.0, %v435
  %v437 = vpop.f32.mrb[0].mxu0
  %438 = vmatprep.mubr.f32.mxu0 0.0
  %439 = vmatmul.mubr.f32.gmra.mrb[0].mxu0 %v144
  %v440 = vpop.f32.mrb[0].mxu0
  %v441 = vadd.f32 0.0, %v440
  %v442 = vpop.f32.mrb[0].mxu0
  %443 = vdwg.mxu0
  %v444 = vsub.f32 0.0, %v366
  %v445 = vsub.f32 0.0, %v371
  %v446 = vsub.f32 0.0, %v376
  %v447 = vsub.f32 0.0, %v381
  %v448 = vsub.f32 0.0, %v386
  %v449 = vsub.f32 0.0, %v391
  %v450 = vsub.f32 0.0, %v396
  %v451 = vsub.f32 0.0, %v401
  %v452 = vsub.f32 0.0, %v406
  %v453 = vsub.f32 0.0, %v411
  %v454 = vsub.f32 0.0, %v416
  %v455 = vsub.f32 0.0, %v421
  %v456 = vsub.f32 0.0, %v426
  %v457 = vsub.f32 0.0, %v431
  %v458 = vsub.f32 0.0, %v436
  %v459 = vsub.f32 0.0, %v441
  %v460 = vld [vmem:[%s1] sm:$0xff]
  %v461 = vld [vmem:[%s1 + $0x8] sm:$0xff]
  %v462 = vld [vmem:[%s1 + $0x10] sm:$0xff]
  %v463 = vld [vmem:[%s1 + $0x18] sm:$0xff]
  %v464 = vld [vmem:[%s1 + $0x20] sm:$0xff]
  %v465 = vld [vmem:[%s1 + $0x28] sm:$0xff]
  %v466 = vld [vmem:[%s1 + $0x30] sm:$0xff]
  %v467 = vld [vmem:[%s1 + $0x38] sm:$0xff]
  %v468 = vld [vmem:[%s1 + $0x40] sm:$0xff]
  %v469 = vld [vmem:[%s1 + $0x48] sm:$0xff]
  %v470 = vld [vmem:[%s1 + $0x50] sm:$0xff]
  %v471 = vld [vmem:[%s1 + $0x58] sm:$0xff]
  %v472 = vld [vmem:[%s1 + $0x60] sm:$0xff]
  %v473 = vld [vmem:[%s1 + $0x68] sm:$0xff]
  %v474 = vld [vmem:[%s1 + $0x70] sm:$0xff]
  %v475 = vld [vmem:[%s1 + $0x78] sm:$0xff]
  %v476 = vld [vmem:[%s1 + $0x80] sm:$0xff]
  %v477 = vld [vmem:[%s1 + $0x88] sm:$0xff]
  %v478 = vld [vmem:[%s1 + $0x90] sm:$0xff]
  %v479 = vld [vmem:[%s1 + $0x98] sm:$0xff]
  %v480 = vld [vmem:[%s1 + $0xa0] sm:$0xff]
  %v481 = vld [vmem:[%s1 + $0xa8] sm:$0xff]
  %v482 = vld [vmem:[%s1 + $0xb0] sm:$0xff]
  %v483 = vld [vmem:[%s1 + $0xb8] sm:$0xff]
  %v484 = vld [vmem:[%s1 + $0xc0] sm:$0xff]
  %v485 = vld [vmem:[%s1 + $0xc8] sm:$0xff]
  %v486 = vld [vmem:[%s1 + $0xd0] sm:$0xff]
  %v487 = vld [vmem:[%s1 + $0xd8] sm:$0xff]
  %v488 = vld [vmem:[%s1 + $0xe0] sm:$0xff]
  %v489 = vld [vmem:[%s1 + $0xe8] sm:$0xff]
  %v490 = vld [vmem:[%s1 + $0xf0] sm:$0xff]
  %v491 = vld [vmem:[%s1 + $0xf8] sm:$0xff]
  %492 = vmatprep.subr.mxu0 0.0
  %493 = vmatpush1.msra.mxu0 %v213
  %494 = vmatprep.subr.mxu0 0.0
  %495 = vmatpush1.msra.mxu0 %v218
  %496 = vmatprep.subr.mxu0 0.0
  %497 = vmatpush1.msra.mxu0 %v223
  %498 = vmatprep.subr.mxu0 0.0
  %499 = vmatpush1.msra.mxu0 %v228
  %500 = vmatprep.subr.mxu0 0.0
  %501 = vmatpush1.msra.mxu0 %v233
  %502 = vmatprep.subr.mxu0 0.0
  %503 = vmatpush1.msra.mxu0 %v238
  %504 = vmatprep.subr.mxu0 0.0
  %505 = vmatpush1.msra.mxu0 %v243
  %506 = vmatprep.subr.mxu0 0.0
  %507 = vmatpush1.msra.mxu0 %v248
  %508 = vmatprep.subr.mxu0 0.0
  %509 = vmatpush1.msra.mxu0 %v253
  %510 = vmatprep.subr.mxu0 0.0
  %511 = vmatpush1.msra.mxu0 %v258
  %512 = vmatprep.subr.mxu0 0.0
  %513 = vmatpush1.msra.mxu0 %v263
  %514 = vmatprep.subr.mxu0 0.0
  %515 = vmatpush1.msra.mxu0 %v268
  %516 = vmatprep.subr.mxu0 0.0
  %517 = vmatpush1.msra.mxu0 %v273
  %518 = vmatprep.subr.mxu0 0.0
  %519 = vmatpush1.msra.mxu0 %v278
  %520 = vmatprep.subr.mxu0 0.0
  %521 = vmatpush1.msra.mxu0 %v283
  %522 = vmatprep.subr.mxu0 0.0
  %523 = vmatpush1.msra.mxu0 %v288
  %524 = vmatprep.subr.mxu0 0.0
  %525 = vmatpush1.msra.mxu0 0.0
  %526 = vmatprep.subr.mxu0 0.0
  %527 = vmatpush1.msra.mxu0 0.0
  %528 = vmatprep.subr.mxu0 0.0
  %529 = vmatpush1.msra.mxu0 0.0
  %530 = vmatprep.subr.mxu0 0.0
  %531 = vmatpush1.msra.mxu0 0.0
  %532 = vmatprep.subr.mxu0 0.0
  %533 = vmatpush1.msra.mxu0 0.0
  %534 = vmatprep.subr.mxu0 0.0
  %535 = vmatpush1.msra.mxu0 0.0
  %536 = vmatprep.subr.mxu0 0.0
  %537 = vmatpush1.msra.mxu0 0.0
  %538 = vmatprep.subr.mxu0 0.0
  %539 = vmatpush1.msra.mxu0 0.0
  %540 = vmatprep.subr.mxu0 0.0
  %541 = vmatpush1.msra.mxu0 0.0
  %542 = vmatprep.subr.mxu0 0.0
  %543 = vmatpush1.msra.mxu0 0.0
  %544 = vmatprep.subr.mxu0 0.0
  %545 = vmatpush1.msra.mxu0 0.0
  %546 = vmatprep.subr.mxu0 0.0
  %547 = vmatpush1.msra.mxu0 0.0
  %548 = vmatprep.subr.mxu0 0.0
  %549 = vmatpush1.msra.mxu0 0.0
  %550 = vmatprep.subr.mxu0 0.0
  %551 = vmatpush1.msra.mxu0 0.0
  %552 = vmatprep.subr.mxu0 0.0
  %553 = vmatpush1.msra.mxu0 0.0
  %554 = vmatprep.subr.mxu0 0.0
  %555 = vmatpush1.msra.mxu0 0.0
  %556 = vmatprep.mubr.f32.mxu0 0.0
  %557 = vmatmul.mubr.f32.gmra.mrb[0].mxu0 %v460
  %v558 = vpop.f32.mrb[0].mxu0
  %v559 = vadd.f32 0.0, %v558
  %v560 = vpop.f32.mrb[0].mxu0
  %561 = vmatprep.mubr.f32.mxu0 0.0
  %562 = vmatmul.mubr.f32.gmra.mrb[0].mxu0 %v461
  %v563 = vpop.f32.mrb[0].mxu0
  %v564 = vadd.f32 0.0, %v563
  %v565 = vpop.f32.mrb[0].mxu0
  %566 = vmatprep.mubr.f32.mxu0 0.0
  %567 = vmatmul.mubr.f32.gmra.mrb[0].mxu0 %v462
  %v568 = vpop.f32.mrb[0].mxu0
  %v569 = vadd.f32 0.0, %v568
  %v570 = vpop.f32.mrb[0].mxu0
  %571 = vmatprep.mubr.f32.mxu0 0.0
  %572 = vmatmul.mubr.f32.gmra.mrb[0].mxu0 %v463
  %v573 = vpop.f32.mrb[0].mxu0
  %v574 = vadd.f32 0.0, %v573
  %v575 = vpop.f32.mrb[0].mxu0
  %576 = vmatprep.mubr.f32.mxu0 0.0
  %577 = vmatmul.mubr.f32.gmra.mrb[0].mxu0 %v464
  %v578 = vpop.f32.mrb[0].mxu0
  %v579 = vadd.f32 0.0, %v578
  %v580 = vpop.f32.mrb[0].mxu0
  %581 = vmatprep.mubr.f32.mxu0 0.0
  %582 = vmatmul.mubr.f32.gmra.mrb[0].mxu0 %v465
  %v583 = vpop.f32.mrb[0].mxu0
  %v584 = vadd.f32 0.0, %v583
  %v585 = vpop.f32.mrb[0].mxu0
  %586 = vmatprep.mubr.f32.mxu0 0.0
  %587 = vmatmul.mubr.f32.gmra.mrb[0].mxu0 %v466
  %v588 = vpop.f32.mrb[0].mxu0
  %v589 = vadd.f32 0.0, %v588
  %v590 = vpop.f32.mrb[0].mxu0
  %591 = vmatprep.mubr.f32.mxu0 0.0
  %592 = vmatmul.mubr.f32.gmra.mrb[0].mxu0 %v467
  %v593 = vpop.f32.mrb[0].mxu0
  %v594 = vadd.f32 0.0, %v593
  %v595 = vpop.f32.mrb[0].mxu0
  %596 = vmatprep.mubr.f32.mxu0 0.0
  %597 = vmatmul.mubr.f32.gmra.mrb[0].mxu0 %v468
  %v598 = vpop.f32.mrb[0].mxu0
  %v599 = vadd.f32 0.0, %v598
  %v600 = vpop.f32.mrb[0].mxu0
  %601 = vmatprep.mubr.f32.mxu0 0.0
  %602 = vmatmul.mubr.f32.gmra.mrb[0].mxu0 %v469
  %v603 = vpop.f32.mrb[0].mxu0
  %v604 = vadd.f32 0.0, %v603
  %v605 = vpop.f32.mrb[0].mxu0
  %606 = vmatprep.mubr.f32.mxu0 0.0
  %607 = vmatmul.mubr.f32.gmra.mrb[0].mxu0 %v470
  %v608 = vpop.f32.mrb[0].mxu0
  %v609 = vadd.f32 0.0, %v608
  %v610 = vpop.f32.mrb[0].mxu0
  %611 = vmatprep.mubr.f32.mxu0 0.0
  %612 = vmatmul.mubr.f32.gmra.mrb[0].mxu0 %v471
  %v613 = vpop.f32.mrb[0].mxu0
  %v614 = vadd.f32 0.0, %v613
  %v615 = vpop.f32.mrb[0].mxu0
  %616 = vmatprep.mubr.f32.mxu0 0.0
  %617 = vmatmul.mubr.f32.gmra.mrb[0].mxu0 %v472
  %v618 = vpop.f32.mrb[0].mxu0
  %v619 = vadd.f32 0.0, %v618
  %v620 = vpop.f32.mrb[0].mxu0
  %621 = vmatprep.mubr.f32.mxu0 0.0
  %622 = vmatmul.mubr.f32.gmra.mrb[0].mxu0 %v473
  %v623 = vpop.f32.mrb[0].mxu0
  %v624 = vadd.f32 0.0, %v623
  %v625 = vpop.f32.mrb[0].mxu0
  %626 = vmatprep.mubr.f32.mxu0 0.0
  %627 = vmatmul.mubr.f32.gmra.mrb[0].mxu0 %v474
  %v628 = vpop.f32.mrb[0].mxu0
  %v629 = vadd.f32 0.0, %v628
  %v630 = vpop.f32.mrb[0].mxu0
  %631 = vmatprep.mubr.f32.mxu0 0.0
  %632 = vmatmul.mubr.f32.gmra.mrb[0].mxu0 %v475
  %v633 = vpop.f32.mrb[0].mxu0
  %v634 = vadd.f32 0.0, %v633
  %v635 = vpop.f32.mrb[0].mxu0
  %636 = vmatprep.mubr.f32.mxu0 0.0
  %637 = vmatmul.mubr.f32.gmra.mrb[0].mxu0 %v476
  %v638 = vpop.f32.mrb[0].mxu0
  %v639 = vadd.f32 0.0, %v638
  %v640 = vpop.f32.mrb[0].mxu0
  %641 = vmatprep.mubr.f32.mxu0 0.0
  %642 = vmatmul.mubr.f32.gmra.mrb[0].mxu0 %v477
  %v643 = vpop.f32.mrb[0].mxu0
  %v644 = vadd.f32 0.0, %v643
  %v645 = vpop.f32.mrb[0].mxu0
  %646 = vmatprep.mubr.f32.mxu0 0.0
  %647 = vmatmul.mubr.f32.gmra.mrb[0].mxu0 %v478
  %v648 = vpop.f32.mrb[0].mxu0
  %v649 = vadd.f32 0.0, %v648
  %v650 = vpop.f32.mrb[0].mxu0
  %651 = vmatprep.mubr.f32.mxu0 0.0
  %652 = vmatmul.mubr.f32.gmra.mrb[0].mxu0 %v479
  %v653 = vpop.f32.mrb[0].mxu0
  %v654 = vadd.f32 0.0, %v653
  %v655 = vpop.f32.mrb[0].mxu0
  %656 = vmatprep.mubr.f32.mxu0 0.0
  %657 = vmatmul.mubr.f32.gmra.mrb[0].mxu0 %v480
  %v658 = vpop.f32.mrb[0].mxu0
  %v659 = vadd.f32 0.0, %v658
  %v660 = vpop.f32.mrb[0].mxu0
  %661 = vmatprep.mubr.f32.mxu0 0.0
  %662 = vmatmul.mubr.f32.gmra.mrb[0].mxu0 %v481
  %v663 = vpop.f32.mrb[0].mxu0
  %v664 = vadd.f32 0.0, %v663
  %v665 = vpop.f32.mrb[0].mxu0
  %666 = vmatprep.mubr.f32.mxu0 0.0
  %667 = vmatmul.mubr.f32.gmra.mrb[0].mxu0 %v482
  %v668 = vpop.f32.mrb[0].mxu0
  %v669 = vadd.f32 0.0, %v668
  %v670 = vpop.f32.mrb[0].mxu0
  %671 = vmatprep.mubr.f32.mxu0 0.0
  %672 = vmatmul.mubr.f32.gmra.mrb[0].mxu0 %v483
  %v673 = vpop.f32.mrb[0].mxu0
  %v674 = vadd.f32 0.0, %v673
  %v675 = vpop.f32.mrb[0].mxu0
  %676 = vmatprep.mubr.f32.mxu0 0.0
  %677 = vmatmul.mubr.f32.gmra.mrb[0].mxu0 %v484
  %v678 = vpop.f32.mrb[0].mxu0
  %v679 = vadd.f32 0.0, %v678
  %v680 = vpop.f32.mrb[0].mxu0
  %681 = vmatprep.mubr.f32.mxu0 0.0
  %682 = vmatmul.mubr.f32.gmra.mrb[0].mxu0 %v485
  %v683 = vpop.f32.mrb[0].mxu0
  %v684 = vadd.f32 0.0, %v683
  %v685 = vpop.f32.mrb[0].mxu0
  %686 = vmatprep.mubr.f32.mxu0 0.0
  %687 = vmatmul.mubr.f32.gmra.mrb[0].mxu0 %v486
  %v688 = vpop.f32.mrb[0].mxu0
  %v689 = vadd.f32 0.0, %v688
  %v690 = vpop.f32.mrb[0].mxu0
  %691 = vmatprep.mubr.f32.mxu0 0.0
  %692 = vmatmul.mubr.f32.gmra.mrb[0].mxu0 %v487
  %v693 = vpop.f32.mrb[0].mxu0
  %v694 = vadd.f32 0.0, %v693
  %v695 = vpop.f32.mrb[0].mxu0
  %696 = vmatprep.mubr.f32.mxu0 0.0
  %697 = vmatmul.mubr.f32.gmra.mrb[0].mxu0 %v488
  %v698 = vpop.f32.mrb[0].mxu0
  %v699 = vadd.f32 0.0, %v698
  %v700 = vpop.f32.mrb[0].mxu0
  %701 = vmatprep.mubr.f32.mxu0 0.0
  %702 = vmatmul.mubr.f32.gmra.mrb[0].mxu0 %v489
  %v703 = vpop.f32.mrb[0].mxu0
  %v704 = vadd.f32 0.0, %v703
  %v705 = vpop.f32.mrb[0].mxu0
  %706 = vmatprep.mubr.f32.mxu0 0.0
  %707 = vmatmul.mubr.f32.gmra.mrb[0].mxu0 %v490
  %v708 = vpop.f32.mrb[0].mxu0
  %v709 = vadd.f32 0.0, %v708
  %v710 = vpop.f32.mrb[0].mxu0
  %711 = vmatprep.mubr.f32.mxu0 0.0
  %712 = vmatmul.mubr.f32.gmra.mrb[0].mxu0 %v491
  %v713 = vpop.f32.mrb[0].mxu0
  %v714 = vadd.f32 0.0, %v713
  %v715 = vpop.f32.mrb[0].mxu0
  %716 = vdwg.mxu0
  %717 = vmatprep.subr.mxu0 0.0
  %718 = vmatpush1.msra.mxu0 %v444
  %719 = vmatprep.subr.mxu0 0.0
  %720 = vmatpush1.msra.mxu0 %v445
  %721 = vmatprep.subr.mxu0 0.0
  %722 = vmatpush1.msra.mxu0 %v446
  %723 = vmatprep.subr.mxu0 0.0
  %724 = vmatpush1.msra.mxu0 %v447
  %725 = vmatprep.subr.mxu0 0.0
  %726 = vmatpush1.msra.mxu0 %v448
  %727 = vmatprep.subr.mxu0 0.0
  %728 = vmatpush1.msra.mxu0 %v449
  %729 = vmatprep.subr.mxu0 0.0
  %730 = vmatpush1.msra.mxu0 %v450
  %731 = vmatprep.subr.mxu0 0.0
  %732 = vmatpush1.msra.mxu0 %v451
  %733 = vmatprep.subr.mxu0 0.0
  %734 = vmatpush1.msra.mxu0 %v452
  %735 = vmatprep.subr.mxu0 0.0
  %736 = vmatpush1.msra.mxu0 %v453
  %737 = vmatprep.subr.mxu0 0.0
  %738 = vmatpush1.msra.mxu0 %v454
  %739 = vmatprep.subr.mxu0 0.0
  %740 = vmatpush1.msra.mxu0 %v455
  %741 = vmatprep.subr.mxu0 0.0
  %742 = vmatpush1.msra.mxu0 %v456
  %743 = vmatprep.subr.mxu0 0.0
  %744 = vmatpush1.msra.mxu0 %v457
  %745 = vmatprep.subr.mxu0 0.0
  %746 = vmatpush1.msra.mxu0 %v458
  %747 = vmatprep.subr.mxu0 0.0
  %748 = vmatpush1.msra.mxu0 %v459
  %749 = vmatprep.subr.mxu0 0.0
  %750 = vmatpush1.msra.mxu0 0.0
  %751 = vmatprep.subr.mxu0 0.0
  %752 = vmatpush1.msra.mxu0 0.0
  %753 = vmatprep.subr.mxu0 0.0
  %754 = vmatpush1.msra.mxu0 0.0
  %755 = vmatprep.subr.mxu0 0.0
  %756 = vmatpush1.msra.mxu0 0.0
  %757 = vmatprep.subr.mxu0 0.0
  %758 = vmatpush1.msra.mxu0 0.0
  %759 = vmatprep.subr.mxu0 0.0
  %760 = vmatpush1.msra.mxu0 0.0
  %761 = vmatprep.subr.mxu0 0.0
  %762 = vmatpush1.msra.mxu0 0.0
  %763 = vmatprep.subr.mxu0 0.0
  %764 = vmatpush1.msra.mxu0 0.0
  %765 = vmatprep.subr.mxu0 0.0
  %766 = vmatpush1.msra.mxu0 0.0
  %767 = vmatprep.subr.mxu0 0.0
  %768 = vmatpush1.msra.mxu0 0.0
  %769 = vmatprep.subr.mxu0 0.0
  %770 = vmatpush1.msra.mxu0 0.0
  %771 = vmatprep.subr.mxu0 0.0
  %772 = vmatpush1.msra.mxu0 0.0
  %773 = vmatprep.subr.mxu0 0.0
  %774 = vmatpush1.msra.mxu0 0.0
  %775 = vmatprep.subr.mxu0 0.0
  %776 = vmatpush1.msra.mxu0 0.0
  %777 = vmatprep.subr.mxu0 0.0
  %778 = vmatpush1.msra.mxu0 0.0
  %779 = vmatprep.subr.mxu0 0.0
  %780 = vmatpush1.msra.mxu0 0.0
  %781 = vmatprep.mubr.f32.mxu0 0.0
  %782 = vmatmul.mubr.f32.gmra.mrb[0].mxu0 %v460
  %v783 = vpop.f32.mrb[0].mxu0
  %v784 = vadd.f32 0.0, %v783
  %v785 = vpop.f32.mrb[0].mxu0
  %786 = vmatprep.mubr.f32.mxu0 0.0
  %787 = vmatmul.mubr.f32.gmra.mrb[0].mxu0 %v461
  %v788 = vpop.f32.mrb[0].mxu0
  %v789 = vadd.f32 0.0, %v788
  %v790 = vpop.f32.mrb[0].mxu0
  %791 = vmatprep.mubr.f32.mxu0 0.0
  %792 = vmatmul.mubr.f32.gmra.mrb[0].mxu0 %v462
  %v793 = vpop.f32.mrb[0].mxu0
  %v794 = vadd.f32 0.0, %v793
  %v795 = vpop.f32.mrb[0].mxu0
  %796 = vmatprep.mubr.f32.mxu0 0.0
  %797 = vmatmul.mubr.f32.gmra.mrb[0].mxu0 %v463
  %v798 = vpop.f32.mrb[0].mxu0
  %v799 = vadd.f32 0.0, %v798
  %v800 = vpop.f32.mrb[0].mxu0
  %801 = vmatprep.mubr.f32.mxu0 0.0
  %802 = vmatmul.mubr.f32.gmra.mrb[0].mxu0 %v464
  %v803 = vpop.f32.mrb[0].mxu0
  %v804 = vadd.f32 0.0, %v803
  %v805 = vpop.f32.mrb[0].mxu0
  %806 = vmatprep.mubr.f32.mxu0 0.0
  %807 = vmatmul.mubr.f32.gmra.mrb[0].mxu0 %v465
  %v808 = vpop.f32.mrb[0].mxu0
  %v809 = vadd.f32 0.0, %v808
  %v810 = vpop.f32.mrb[0].mxu0
  %811 = vmatprep.mubr.f32.mxu0 0.0
  %812 = vmatmul.mubr.f32.gmra.mrb[0].mxu0 %v466
  %v813 = vpop.f32.mrb[0].mxu0
  %v814 = vadd.f32 0.0, %v813
  %v815 = vpop.f32.mrb[0].mxu0
  %816 = vmatprep.mubr.f32.mxu0 0.0
  %817 = vmatmul.mubr.f32.gmra.mrb[0].mxu0 %v467
  %v818 = vpop.f32.mrb[0].mxu0
  %v819 = vadd.f32 0.0, %v818
  %v820 = vpop.f32.mrb[0].mxu0
  %821 = vmatprep.mubr.f32.mxu0 0.0
  %822 = vmatmul.mubr.f32.gmra.mrb[0].mxu0 %v468
  %v823 = vpop.f32.mrb[0].mxu0
  %v824 = vadd.f32 0.0, %v823
  %v825 = vpop.f32.mrb[0].mxu0
  %826 = vmatprep.mubr.f32.mxu0 0.0
  %827 = vmatmul.mubr.f32.gmra.mrb[0].mxu0 %v469
  %v828 = vpop.f32.mrb[0].mxu0
  %v829 = vadd.f32 0.0, %v828
  %v830 = vpop.f32.mrb[0].mxu0
  %831 = vmatprep.mubr.f32.mxu0 0.0
  %832 = vmatmul.mubr.f32.gmra.mrb[0].mxu0 %v470
  %v833 = vpop.f32.mrb[0].mxu0
  %v834 = vadd.f32 0.0, %v833
  %v835 = vpop.f32.mrb[0].mxu0
  %836 = vmatprep.mubr.f32.mxu0 0.0
  %837 = vmatmul.mubr.f32.gmra.mrb[0].mxu0 %v471
  %v838 = vpop.f32.mrb[0].mxu0
  %v839 = vadd.f32 0.0, %v838
  %v840 = vpop.f32.mrb[0].mxu0
  %841 = vmatprep.mubr.f32.mxu0 0.0
  %842 = vmatmul.mubr.f32.gmra.mrb[0].mxu0 %v472
  %v843 = vpop.f32.mrb[0].mxu0
  %v844 = vadd.f32 0.0, %v843
  %v845 = vpop.f32.mrb[0].mxu0
  %846 = vmatprep.mubr.f32.mxu0 0.0
  %847 = vmatmul.mubr.f32.gmra.mrb[0].mxu0 %v473
  %v848 = vpop.f32.mrb[0].mxu0
  %v849 = vadd.f32 0.0, %v848
  %v850 = vpop.f32.mrb[0].mxu0
  %851 = vmatprep.mubr.f32.mxu0 0.0
  %852 = vmatmul.mubr.f32.gmra.mrb[0].mxu0 %v474
  %v853 = vpop.f32.mrb[0].mxu0
  %v854 = vadd.f32 0.0, %v853
  %v855 = vpop.f32.mrb[0].mxu0
  %856 = vmatprep.mubr.f32.mxu0 0.0
  %857 = vmatmul.mubr.f32.gmra.mrb[0].mxu0 %v475
  %v858 = vpop.f32.mrb[0].mxu0
  %v859 = vadd.f32 0.0, %v858
  %v860 = vpop.f32.mrb[0].mxu0
  %861 = vmatprep.mubr.f32.mxu0 0.0
  %862 = vmatmul.mubr.f32.gmra.mrb[0].mxu0 %v476
  %v863 = vpop.f32.mrb[0].mxu0
  %v864 = vadd.f32 0.0, %v863
  %v865 = vpop.f32.mrb[0].mxu0
  %866 = vmatprep.mubr.f32.mxu0 0.0
  %867 = vmatmul.mubr.f32.gmra.mrb[0].mxu0 %v477
  %v868 = vpop.f32.mrb[0].mxu0
  %v869 = vadd.f32 0.0, %v868
  %v870 = vpop.f32.mrb[0].mxu0
  %871 = vmatprep.mubr.f32.mxu0 0.0
  %872 = vmatmul.mubr.f32.gmra.mrb[0].mxu0 %v478
  %v873 = vpop.f32.mrb[0].mxu0
  %v874 = vadd.f32 0.0, %v873
  %v875 = vpop.f32.mrb[0].mxu0
  %876 = vmatprep.mubr.f32.mxu0 0.0
  %877 = vmatmul.mubr.f32.gmra.mrb[0].mxu0 %v479
  %v878 = vpop.f32.mrb[0].mxu0
  %v879 = vadd.f32 0.0, %v878
  %v880 = vpop.f32.mrb[0].mxu0
  %881 = vmatprep.mubr.f32.mxu0 0.0
  %882 = vmatmul.mubr.f32.gmra.mrb[0].mxu0 %v480
  %v883 = vpop.f32.mrb[0].mxu0
  %v884 = vadd.f32 0.0, %v883
  %v885 = vpop.f32.mrb[0].mxu0
  %886 = vmatprep.mubr.f32.mxu0 0.0
  %887 = vmatmul.mubr.f32.gmra.mrb[0].mxu0 %v481
  %v888 = vpop.f32.mrb[0].mxu0
  %v889 = vadd.f32 0.0, %v888
  %v890 = vpop.f32.mrb[0].mxu0
  %891 = vmatprep.mubr.f32.mxu0 0.0
  %892 = vmatmul.mubr.f32.gmra.mrb[0].mxu0 %v482
  %v893 = vpop.f32.mrb[0].mxu0
  %v894 = vadd.f32 0.0, %v893
  %v895 = vpop.f32.mrb[0].mxu0
  %896 = vmatprep.mubr.f32.mxu0 0.0
  %897 = vmatmul.mubr.f32.gmra.mrb[0].mxu0 %v483
  %v898 = vpop.f32.mrb[0].mxu0
  %v899 = vadd.f32 0.0, %v898
  %v900 = vpop.f32.mrb[0].mxu0
  %901 = vmatprep.mubr.f32.mxu0 0.0
  %902 = vmatmul.mubr.f32.gmra.mrb[0].mxu0 %v484
  %v903 = vpop.f32.mrb[0].mxu0
  %v904 = vadd.f32 0.0, %v903
  %v905 = vpop.f32.mrb[0].mxu0
  %906 = vmatprep.mubr.f32.mxu0 0.0
  %907 = vmatmul.mubr.f32.gmra.mrb[0].mxu0 %v485
  %v908 = vpop.f32.mrb[0].mxu0
  %v909 = vadd.f32 0.0, %v908
  %v910 = vpop.f32.mrb[0].mxu0
  %911 = vmatprep.mubr.f32.mxu0 0.0
  %912 = vmatmul.mubr.f32.gmra.mrb[0].mxu0 %v486
  %v913 = vpop.f32.mrb[0].mxu0
  %v914 = vadd.f32 0.0, %v913
  %v915 = vpop.f32.mrb[0].mxu0
  %916 = vmatprep.mubr.f32.mxu0 0.0
  %917 = vmatmul.mubr.f32.gmra.mrb[0].mxu0 %v487
  %v918 = vpop.f32.mrb[0].mxu0
  %v919 = vadd.f32 0.0, %v918
  %v920 = vpop.f32.mrb[0].mxu0
  %921 = vmatprep.mubr.f32.mxu0 0.0
  %922 = vmatmul.mubr.f32.gmra.mrb[0].mxu0 %v488
  %v923 = vpop.f32.mrb[0].mxu0
  %v924 = vadd.f32 0.0, %v923
  %v925 = vpop.f32.mrb[0].mxu0
  %926 = vmatprep.mubr.f32.mxu0 0.0
  %927 = vmatmul.mubr.f32.gmra.mrb[0].mxu0 %v489
  %v928 = vpop.f32.mrb[0].mxu0
  %v929 = vadd.f32 0.0, %v928
  %v930 = vpop.f32.mrb[0].mxu0
  %931 = vmatprep.mubr.f32.mxu0 0.0
  %932 = vmatmul.mubr.f32.gmra.mrb[0].mxu0 %v490
  %v933 = vpop.f32.mrb[0].mxu0
  %v934 = vadd.f32 0.0, %v933
  %v935 = vpop.f32.mrb[0].mxu0
  %936 = vmatprep.mubr.f32.mxu0 0.0
  %937 = vmatmul.mubr.f32.gmra.mrb[0].mxu0 %v491
  %v938 = vpop.f32.mrb[0].mxu0
  %v939 = vadd.f32 0.0, %v938
  %v940 = vpop.f32.mrb[0].mxu0
  %941 = vdwg.mxu0
  %v942 = vadd.f32 %v559, %v864
  %v943 = vadd.f32 %v564, %v869
  %v944 = vadd.f32 %v569, %v874
  %v945 = vadd.f32 %v574, %v879
  %v946 = vadd.f32 %v579, %v884
  %v947 = vadd.f32 %v584, %v889
  %v948 = vadd.f32 %v589, %v894
  %v949 = vadd.f32 %v594, %v899
  %v950 = vadd.f32 %v599, %v904
  %v951 = vadd.f32 %v604, %v909
  %v952 = vadd.f32 %v609, %v914
  %v953 = vadd.f32 %v614, %v919
  %v954 = vadd.f32 %v619, %v924
  %v955 = vadd.f32 %v624, %v929
  %v956 = vadd.f32 %v629, %v934
  %v957 = vadd.f32 %v634, %v939
  %v958 = vsub.f32 %v784, %v639
  %v959 = vsub.f32 %v789, %v644
  %v960 = vsub.f32 %v794, %v649
  %v961 = vsub.f32 %v799, %v654
  %v962 = vsub.f32 %v804, %v659
  %v963 = vsub.f32 %v809, %v664
  %v964 = vsub.f32 %v814, %v669
  %v965 = vsub.f32 %v819, %v674
  %v966 = vsub.f32 %v824, %v679
  %v967 = vsub.f32 %v829, %v684
  %v968 = vsub.f32 %v834, %v689
  %v969 = vsub.f32 %v839, %v694
  %v970 = vsub.f32 %v844, %v699
  %v971 = vsub.f32 %v849, %v704
  %v972 = vsub.f32 %v854, %v709
  %v973 = vsub.f32 %v859, %v714
  %v974 = vmul.f32 %v942, %v942
  %v975 = vmul.f32 %v943, %v943
  %v976 = vmul.f32 %v944, %v944
  %v977 = vmul.f32 %v945, %v945
  %v978 = vmul.f32 %v946, %v946
  %v979 = vmul.f32 %v947, %v947
  %v980 = vmul.f32 %v948, %v948
  %v981 = vmul.f32 %v949, %v949
  %v982 = vmul.f32 %v950, %v950
  %v983 = vmul.f32 %v951, %v951
  %v984 = vmul.f32 %v952, %v952
  %v985 = vmul.f32 %v953, %v953
  %v986 = vmul.f32 %v954, %v954
  %v987 = vmul.f32 %v955, %v955
  %v988 = vmul.f32 %v956, %v956
  %v989 = vmul.f32 %v957, %v957
  %v990 = vmul.f32 %v958, %v958
  %v991 = vmul.f32 %v959, %v959
  %v992 = vmul.f32 %v960, %v960
  %v993 = vmul.f32 %v961, %v961
  %v994 = vmul.f32 %v962, %v962
  %v995 = vmul.f32 %v963, %v963
  %v996 = vmul.f32 %v964, %v964
  %v997 = vmul.f32 %v965, %v965
  %v998 = vmul.f32 %v966, %v966
  %v999 = vmul.f32 %v967, %v967
  %v1000 = vmul.f32 %v968, %v968
  %v1001 = vmul.f32 %v969, %v969
  %v1002 = vmul.f32 %v970, %v970
  %v1003 = vmul.f32 %v971, %v971
  %v1004 = vmul.f32 %v972, %v972
  %v1005 = vmul.f32 %v973, %v973
  %v1006 = vadd.f32 %v974, %v990
  %v1007 = vadd.f32 %v975, %v991
  %v1008 = vadd.f32 %v976, %v992
  %v1009 = vadd.f32 %v977, %v993
  %v1010 = vadd.f32 %v978, %v994
  %v1011 = vadd.f32 %v979, %v995
  %v1012 = vadd.f32 %v980, %v996
  %v1013 = vadd.f32 %v981, %v997
  %v1014 = vadd.f32 %v982, %v998
  %v1015 = vadd.f32 %v983, %v999
  %v1016 = vadd.f32 %v984, %v1000
  %v1017 = vadd.f32 %v985, %v1001
  %v1018 = vadd.f32 %v986, %v1002
  %v1019 = vadd.f32 %v987, %v1003
  %v1020 = vadd.f32 %v988, %v1004
  %v1021 = vadd.f32 %v989, %v1005
  %vm1022 = vcmp.gt.f32.partialorder %v1006, 0.0
  %vm1023 = vcmp.gt.f32.partialorder %v1007, 0.0
  %vm1024 = vcmp.gt.f32.partialorder %v1008, 0.0
  %vm1025 = vcmp.gt.f32.partialorder %v1009, 0.0
  %vm1026 = vcmp.gt.f32.partialorder %v1010, 0.0
  %vm1027 = vcmp.gt.f32.partialorder %v1011, 0.0
  %vm1028 = vcmp.gt.f32.partialorder %v1012, 0.0
  %vm1029 = vcmp.gt.f32.partialorder %v1013, 0.0
  %vm1030 = vcmp.gt.f32.partialorder %v1014, 0.0
  %vm1031 = vcmp.gt.f32.partialorder %v1015, 0.0
  %vm1032 = vcmp.gt.f32.partialorder %v1016, 0.0
  %vm1033 = vcmp.gt.f32.partialorder %v1017, 0.0
  %vm1034 = vcmp.gt.f32.partialorder %v1018, 0.0
  %vm1035 = vcmp.gt.f32.partialorder %v1019, 0.0
  %vm1036 = vcmp.gt.f32.partialorder %v1020, 0.0
  %vm1037 = vcmp.gt.f32.partialorder %v1021, 0.0
  %v1038 = vsel %vm1022, %v1006, 1.0
  %v1039 = vsel %vm1023, %v1007, 1.0
  %v1040 = vsel %vm1024, %v1008, 1.0
  %v1041 = vsel %vm1025, %v1009, 1.0
  %v1042 = vsel %vm1026, %v1010, 1.0
  %v1043 = vsel %vm1027, %v1011, 1.0
  %v1044 = vsel %vm1028, %v1012, 1.0
  %v1045 = vsel %vm1029, %v1013, 1.0
  %v1046 = vsel %vm1030, %v1014, 1.0
  %v1047 = vsel %vm1031, %v1015, 1.0
  %v1048 = vsel %vm1032, %v1016, 1.0
  %v1049 = vsel %vm1033, %v1017, 1.0
  %v1050 = vsel %vm1034, %v1018, 1.0
  %v1051 = vsel %vm1035, %v1019, 1.0
  %v1052 = vsel %vm1036, %v1020, 1.0
  %v1053 = vsel %vm1037, %v1021, 1.0
  %v1054 = vrsqrt.pop %v1038
  %v1055 = vrsqrt.pop %v1039
  %v1056 = vrsqrt.pop %v1040
  %v1057 = vrsqrt.pop %v1041
  %v1058 = vrsqrt.pop %v1042
  %v1059 = vrsqrt.pop %v1043
  %v1060 = vrsqrt.pop %v1044
  %v1061 = vrsqrt.pop %v1045
  %v1062 = vrsqrt.pop %v1046
  %v1063 = vrsqrt.pop %v1047
  %v1064 = vrsqrt.pop %v1048
  %v1065 = vrsqrt.pop %v1049
  %v1066 = vrsqrt.pop %v1050
  %v1067 = vrsqrt.pop %v1051
  %v1068 = vrsqrt.pop %v1052
  %v1069 = vrsqrt.pop %v1053
  %v1070 = vmul.f32 %v1006, %v1054
  %v1071 = vmul.f32 %v1007, %v1055
  %v1072 = vmul.f32 %v1008, %v1056
  %v1073 = vmul.f32 %v1009, %v1057
  %v1074 = vmul.f32 %v1010, %v1058
  %v1075 = vmul.f32 %v1011, %v1059
  %v1076 = vmul.f32 %v1012, %v1060
  %v1077 = vmul.f32 %v1013, %v1061
  %v1078 = vmul.f32 %v1014, %v1062
  %v1079 = vmul.f32 %v1015, %v1063
  %v1080 = vmul.f32 %v1016, %v1064
  %v1081 = vmul.f32 %v1017, %v1065
  %v1082 = vmul.f32 %v1018, %v1066
  %v1083 = vmul.f32 %v1019, %v1067
  %v1084 = vmul.f32 %v1020, %v1068
  %v1085 = vmul.f32 %v1021, %v1069
  %v1086 = vmul.f32 %v942, %v1054
  %v1087 = vmul.f32 %v943, %v1055
  %v1088 = vmul.f32 %v944, %v1056
  %v1089 = vmul.f32 %v945, %v1057
  %v1090 = vmul.f32 %v946, %v1058
  %v1091 = vmul.f32 %v947, %v1059
  %v1092 = vmul.f32 %v948, %v1060
  %v1093 = vmul.f32 %v949, %v1061
  %v1094 = vmul.f32 %v950, %v1062
  %v1095 = vmul.f32 %v951, %v1063
  %v1096 = vmul.f32 %v952, %v1064
  %v1097 = vmul.f32 %v953, %v1065
  %v1098 = vmul.f32 %v954, %v1066
  %v1099 = vmul.f32 %v955, %v1067
  %v1100 = vmul.f32 %v956, %v1068
  %v1101 = vmul.f32 %v957, %v1069
  %v1102 = vsel %vm1022, %v1086, 1.0
  %v1103 = vsel %vm1023, %v1087, 1.0
  %v1104 = vsel %vm1024, %v1088, 1.0
  %v1105 = vsel %vm1025, %v1089, 1.0
  %v1106 = vsel %vm1026, %v1090, 1.0
  %v1107 = vsel %vm1027, %v1091, 1.0
  %v1108 = vsel %vm1028, %v1092, 1.0
  %v1109 = vsel %vm1029, %v1093, 1.0
  %v1110 = vsel %vm1030, %v1094, 1.0
  %v1111 = vsel %vm1031, %v1095, 1.0
  %v1112 = vsel %vm1032, %v1096, 1.0
  %v1113 = vsel %vm1033, %v1097, 1.0
  %v1114 = vsel %vm1034, %v1098, 1.0
  %v1115 = vsel %vm1035, %v1099, 1.0
  %v1116 = vsel %vm1036, %v1100, 1.0
  %v1117 = vsel %vm1037, %v1101, 1.0
  %v1118 = vmul.f32 %v958, %v1054
  %v1119 = vmul.f32 %v959, %v1055
  %v1120 = vmul.f32 %v960, %v1056
  %v1121 = vmul.f32 %v961, %v1057
  %v1122 = vmul.f32 %v962, %v1058
  %v1123 = vmul.f32 %v963, %v1059
  %v1124 = vmul.f32 %v964, %v1060
  %v1125 = vmul.f32 %v965, %v1061
  %v1126 = vmul.f32 %v966, %v1062
  %v1127 = vmul.f32 %v967, %v1063
  %v1128 = vmul.f32 %v968, %v1064
  %v1129 = vmul.f32 %v969, %v1065
  %v1130 = vmul.f32 %v970, %v1066
  %v1131 = vmul.f32 %v971, %v1067
  %v1132 = vmul.f32 %v972, %v1068
  %v1133 = vmul.f32 %v973, %v1069
  %v1134 = vsel %vm1022, %v1118, 0.0
  %v1135 = vsel %vm1023, %v1119, 0.0
  %v1136 = vsel %vm1024, %v1120, 0.0
  %v1137 = vsel %vm1025, %v1121, 0.0
  %v1138 = vsel %vm1026, %v1122, 0.0
  %v1139 = vsel %vm1027, %v1123, 0.0
  %v1140 = vsel %vm1028, %v1124, 0.0
  %v1141 = vsel %vm1029, %v1125, 0.0
  %v1142 = vsel %vm1030, %v1126, 0.0
  %v1143 = vsel %vm1031, %v1127, 0.0
  %v1144 = vsel %vm1032, %v1128, 0.0
  %v1145 = vsel %vm1033, %v1129, 0.0
  %v1146 = vsel %vm1034, %v1130, 0.0
  %v1147 = vsel %vm1035, %v1131, 0.0
  %v1148 = vsel %vm1036, %v1132, 0.0
  %v1149 = vsel %vm1037, %v1133, 0.0
  %v1150 = vld [vmem:[%s6] sm:$0xff]
  %v1151 = vld [vmem:[%s6 + $0x8] sm:$0xff]
  %v1152 = vld [vmem:[%s6 + $0x10] sm:$0xff]
  %v1153 = vld [vmem:[%s6 + $0x18] sm:$0xff]
  %v1154 = vld [vmem:[%s6 + $0x20] sm:$0xff]
  %v1155 = vld [vmem:[%s6 + $0x28] sm:$0xff]
  %v1156 = vld [vmem:[%s6 + $0x30] sm:$0xff]
  %v1157 = vld [vmem:[%s6 + $0x38] sm:$0xff]
  %v1158 = vld [vmem:[%s6 + $0x40] sm:$0xff]
  %v1159 = vld [vmem:[%s6 + $0x48] sm:$0xff]
  %v1160 = vld [vmem:[%s6 + $0x50] sm:$0xff]
  %v1161 = vld [vmem:[%s6 + $0x58] sm:$0xff]
  %v1162 = vld [vmem:[%s6 + $0x60] sm:$0xff]
  %v1163 = vld [vmem:[%s6 + $0x68] sm:$0xff]
  %v1164 = vld [vmem:[%s6 + $0x70] sm:$0xff]
  %v1165 = vld [vmem:[%s6 + $0x78] sm:$0xff]
  %v1167 = vsel %vm97, %v1070, 0
  %v1170 = vsel %vm97, %v1071, 0
  %v1173 = vsel %vm97, %v1072, 0
  %v1176 = vsel %vm97, %v1073, 0
  %v1179 = vsel %vm97, %v1074, 0
  %v1182 = vsel %vm97, %v1075, 0
  %v1185 = vsel %vm97, %v1076, 0
  %v1188 = vsel %vm97, %v1077, 0
  %v1191 = vsel %vm97, %v1078, 0
  %v1194 = vsel %vm97, %v1079, 0
  %v1197 = vsel %vm97, %v1080, 0
  %v1200 = vsel %vm97, %v1081, 0
  %v1203 = vsel %vm97, %v1082, 0
  %v1206 = vsel %vm97, %v1083, 0
  %v1209 = vsel %vm97, %v1084, 0
  %v1212 = vsel %vm97, %v1085, 0
  %1214 = vmatprep.subr.mxu0 %v1151
  %1215 = vmatpush1.msra.mxu0 %v1150
  %1216 = vmatprep.subr.mxu0 %v1153
  %1217 = vmatpush1.msra.mxu0 %v1152
  %1218 = vmatprep.subr.mxu0 %v1155
  %1219 = vmatpush1.msra.mxu0 %v1154
  %1220 = vmatprep.subr.mxu0 %v1157
  %1221 = vmatpush1.msra.mxu0 %v1156
  %1222 = vmatprep.subr.mxu0 %v1159
  %1223 = vmatpush1.msra.mxu0 %v1158
  %1224 = vmatprep.subr.mxu0 %v1161
  %1225 = vmatpush1.msra.mxu0 %v1160
  %1226 = vmatprep.subr.mxu0 %v1163
  %1227 = vmatpush1.msra.mxu0 %v1162
  %1228 = vmatprep.subr.mxu0 %v1165
  %1229 = vmatpush1.msra.mxu0 %v1164
  %1230 = vmatprep.subr.mxu0 0.0
  %1231 = vmatpush1.msra.mxu0 0.0
  %1232 = vmatprep.subr.mxu0 0.0
  %1233 = vmatpush1.msra.mxu0 0.0
  %1234 = vmatprep.subr.mxu0 0.0
  %1235 = vmatpush1.msra.mxu0 0.0
  %1236 = vmatprep.subr.mxu0 0.0
  %1237 = vmatpush1.msra.mxu0 0.0
  %1238 = vmatprep.subr.mxu0 0.0
  %1239 = vmatpush1.msra.mxu0 0.0
  %1240 = vmatprep.subr.mxu0 0.0
  %1241 = vmatpush1.msra.mxu0 0.0
  %1242 = vmatprep.subr.mxu0 0.0
  %1243 = vmatpush1.msra.mxu0 0.0
  %1244 = vmatprep.subr.mxu0 0.0
  %1245 = vmatpush1.msra.mxu0 0.0
  %1246 = vmatprep.subr.mxu0 0.0
  %1247 = vmatpush1.msra.mxu0 0.0
  %1248 = vmatprep.subr.mxu0 0.0
  %1249 = vmatpush1.msra.mxu0 0.0
  %1250 = vmatprep.subr.mxu0 0.0
  %1251 = vmatpush1.msra.mxu0 0.0
  %1252 = vmatprep.subr.mxu0 0.0
  %1253 = vmatpush1.msra.mxu0 0.0
  %1254 = vmatprep.subr.mxu0 0.0
  %1255 = vmatpush1.msra.mxu0 0.0
  %1256 = vmatprep.subr.mxu0 0.0
  %1257 = vmatpush1.msra.mxu0 0.0
  %1258 = vmatprep.subr.mxu0 0.0
  %1259 = vmatpush1.msra.mxu0 0.0
  %1260 = vmatprep.subr.mxu0 0.0
  %1261 = vmatpush1.msra.mxu0 0.0
  %1262 = vmatprep.subr.mxu0 0.0
  %1263 = vmatpush1.msra.mxu0 0.0
  %1264 = vmatprep.subr.mxu0 0.0
  %1265 = vmatpush1.msra.mxu0 0.0
  %1266 = vmatprep.subr.mxu0 0.0
  %1267 = vmatpush1.msra.mxu0 0.0
  %1268 = vmatprep.subr.mxu0 0.0
  %1269 = vmatpush1.msra.mxu0 0.0
  %1270 = vmatprep.subr.mxu0 0.0
  %1271 = vmatpush1.msra.mxu0 0.0
  %1272 = vmatprep.subr.mxu0 0.0
  %1273 = vmatpush1.msra.mxu0 0.0
  %1274 = vmatprep.subr.mxu0 0.0
  %1275 = vmatpush1.msra.mxu0 0.0
  %1276 = vmatprep.subr.mxu0 0.0
  %1277 = vmatpush1.msra.mxu0 0.0
  %1278 = vmatprep.mubr.f32.mxu0 0.0
  %1279 = vmatmul.mubr.f32.gmra.mrb[0].mxu0 %v1167
  %v1280 = vpop.f32.mrb[0].mxu0
  %v1281 = vadd.f32 0.0, %v1280
  %v1282 = vpop.f32.mrb[0].mxu0
  %v1283 = vadd.f32 0.0, %v1282
  %1284 = vmatprep.mubr.f32.mxu0 0.0
  %1285 = vmatmul.mubr.f32.gmra.mrb[0].mxu0 %v1170
  %v1286 = vpop.f32.mrb[0].mxu0
  %v1287 = vadd.f32 0.0, %v1286
  %v1288 = vpop.f32.mrb[0].mxu0
  %v1289 = vadd.f32 0.0, %v1288
  %1290 = vmatprep.mubr.f32.mxu0 0.0
  %1291 = vmatmul.mubr.f32.gmra.mrb[0].mxu0 %v1173
  %v1292 = vpop.f32.mrb[0].mxu0
  %v1293 = vadd.f32 0.0, %v1292
  %v1294 = vpop.f32.mrb[0].mxu0
  %v1295 = vadd.f32 0.0, %v1294
  %1296 = vmatprep.mubr.f32.mxu0 0.0
  %1297 = vmatmul.mubr.f32.gmra.mrb[0].mxu0 %v1176
  %v1298 = vpop.f32.mrb[0].mxu0
  %v1299 = vadd.f32 0.0, %v1298
  %v1300 = vpop.f32.mrb[0].mxu0
  %v1301 = vadd.f32 0.0, %v1300
  %1302 = vmatprep.mubr.f32.mxu0 0.0
  %1303 = vmatmul.mubr.f32.gmra.mrb[0].mxu0 %v1179
  %v1304 = vpop.f32.mrb[0].mxu0
  %v1305 = vadd.f32 0.0, %v1304
  %v1306 = vpop.f32.mrb[0].mxu0
  %v1307 = vadd.f32 0.0, %v1306
  %1308 = vmatprep.mubr.f32.mxu0 0.0
  %1309 = vmatmul.mubr.f32.gmra.mrb[0].mxu0 %v1182
  %v1310 = vpop.f32.mrb[0].mxu0
  %v1311 = vadd.f32 0.0, %v1310
  %v1312 = vpop.f32.mrb[0].mxu0
  %v1313 = vadd.f32 0.0, %v1312
  %1314 = vmatprep.mubr.f32.mxu0 0.0
  %1315 = vmatmul.mubr.f32.gmra.mrb[0].mxu0 %v1185
  %v1316 = vpop.f32.mrb[0].mxu0
  %v1317 = vadd.f32 0.0, %v1316
  %v1318 = vpop.f32.mrb[0].mxu0
  %v1319 = vadd.f32 0.0, %v1318
  %1320 = vmatprep.mubr.f32.mxu0 0.0
  %1321 = vmatmul.mubr.f32.gmra.mrb[0].mxu0 %v1188
  %v1322 = vpop.f32.mrb[0].mxu0
  %v1323 = vadd.f32 0.0, %v1322
  %v1324 = vpop.f32.mrb[0].mxu0
  %v1325 = vadd.f32 0.0, %v1324
  %1326 = vmatprep.mubr.f32.mxu0 0.0
  %1327 = vmatmul.mubr.f32.gmra.mrb[0].mxu0 %v1191
  %v1328 = vpop.f32.mrb[0].mxu0
  %v1329 = vadd.f32 0.0, %v1328
  %v1330 = vpop.f32.mrb[0].mxu0
  %v1331 = vadd.f32 0.0, %v1330
  %1332 = vmatprep.mubr.f32.mxu0 0.0
  %1333 = vmatmul.mubr.f32.gmra.mrb[0].mxu0 %v1194
  %v1334 = vpop.f32.mrb[0].mxu0
  %v1335 = vadd.f32 0.0, %v1334
  %v1336 = vpop.f32.mrb[0].mxu0
  %v1337 = vadd.f32 0.0, %v1336
  %1338 = vmatprep.mubr.f32.mxu0 0.0
  %1339 = vmatmul.mubr.f32.gmra.mrb[0].mxu0 %v1197
  %v1340 = vpop.f32.mrb[0].mxu0
  %v1341 = vadd.f32 0.0, %v1340
  %v1342 = vpop.f32.mrb[0].mxu0
  %v1343 = vadd.f32 0.0, %v1342
  %1344 = vmatprep.mubr.f32.mxu0 0.0
  %1345 = vmatmul.mubr.f32.gmra.mrb[0].mxu0 %v1200
  %v1346 = vpop.f32.mrb[0].mxu0
  %v1347 = vadd.f32 0.0, %v1346
  %v1348 = vpop.f32.mrb[0].mxu0
  %v1349 = vadd.f32 0.0, %v1348
  %1350 = vmatprep.mubr.f32.mxu0 0.0
  %1351 = vmatmul.mubr.f32.gmra.mrb[0].mxu0 %v1203
  %v1352 = vpop.f32.mrb[0].mxu0
  %v1353 = vadd.f32 0.0, %v1352
  %v1354 = vpop.f32.mrb[0].mxu0
  %v1355 = vadd.f32 0.0, %v1354
  %1356 = vmatprep.mubr.f32.mxu0 0.0
  %1357 = vmatmul.mubr.f32.gmra.mrb[0].mxu0 %v1206
  %v1358 = vpop.f32.mrb[0].mxu0
  %v1359 = vadd.f32 0.0, %v1358
  %v1360 = vpop.f32.mrb[0].mxu0
  %v1361 = vadd.f32 0.0, %v1360
  %1362 = vmatprep.mubr.f32.mxu0 0.0
  %1363 = vmatmul.mubr.f32.gmra.mrb[0].mxu0 %v1209
  %v1364 = vpop.f32.mrb[0].mxu0
  %v1365 = vadd.f32 0.0, %v1364
  %v1366 = vpop.f32.mrb[0].mxu0
  %v1367 = vadd.f32 0.0, %v1366
  %1368 = vmatprep.mubr.f32.mxu0 0.0
  %1369 = vmatmul.mubr.f32.gmra.mrb[0].mxu0 %v1212
  %v1370 = vpop.f32.mrb[0].mxu0
  %v1371 = vadd.f32 0.0, %v1370
  %v1372 = vpop.f32.mrb[0].mxu0
  %v1373 = vadd.f32 0.0, %v1372
  %1374 = vdwg.mxu0
  %1375 = vst [vmem:[%s22] sm:$0xff] %v1281
  %1376 = vst.msk [vmem:[%s22 + $0x8] sm:$0xff] %vm97, %v1283
  %1377 = vst [vmem:[%s22 + $0x10] sm:$0xff] %v1287
  %1378 = vst.msk [vmem:[%s22 + $0x18] sm:$0xff] %vm97, %v1289
  %1379 = vst [vmem:[%s22 + $0x20] sm:$0xff] %v1293
  %1380 = vst.msk [vmem:[%s22 + $0x28] sm:$0xff] %vm97, %v1295
  %1381 = vst [vmem:[%s22 + $0x30] sm:$0xff] %v1299
  %1382 = vst.msk [vmem:[%s22 + $0x38] sm:$0xff] %vm97, %v1301
  %1383 = vst [vmem:[%s22 + $0x40] sm:$0xff] %v1305
  %1384 = vst.msk [vmem:[%s22 + $0x48] sm:$0xff] %vm97, %v1307
  %1385 = vst [vmem:[%s22 + $0x50] sm:$0xff] %v1311
  %1386 = vst.msk [vmem:[%s22 + $0x58] sm:$0xff] %vm97, %v1313
  %1387 = vst [vmem:[%s22 + $0x60] sm:$0xff] %v1317
  %1388 = vst.msk [vmem:[%s22 + $0x68] sm:$0xff] %vm97, %v1319
  %1389 = vst [vmem:[%s22 + $0x70] sm:$0xff] %v1323
  %1390 = vst.msk [vmem:[%s22 + $0x78] sm:$0xff] %vm97, %v1325
  %1391 = vst [vmem:[%s22 + $0x80] sm:$0xff] %v1329
  %1392 = vst.msk [vmem:[%s22 + $0x88] sm:$0xff] %vm97, %v1331
  %1393 = vst [vmem:[%s22 + $0x90] sm:$0xff] %v1335
  %1394 = vst.msk [vmem:[%s22 + $0x98] sm:$0xff] %vm97, %v1337
  %1395 = vst [vmem:[%s22 + $0xa0] sm:$0xff] %v1341
  %1396 = vst.msk [vmem:[%s22 + $0xa8] sm:$0xff] %vm97, %v1343
  %1397 = vst [vmem:[%s22 + $0xb0] sm:$0xff] %v1347
  %1398 = vst.msk [vmem:[%s22 + $0xb8] sm:$0xff] %vm97, %v1349
  %1399 = vst [vmem:[%s22 + $0xc0] sm:$0xff] %v1353
  %1400 = vst.msk [vmem:[%s22 + $0xc8] sm:$0xff] %vm97, %v1355
  %1401 = vst [vmem:[%s22 + $0xd0] sm:$0xff] %v1359
  %1402 = vst.msk [vmem:[%s22 + $0xd8] sm:$0xff] %vm97, %v1361
  %1403 = vst [vmem:[%s22 + $0xe0] sm:$0xff] %v1365
  %1404 = vst.msk [vmem:[%s22 + $0xe8] sm:$0xff] %vm97, %v1367
  %1405 = vst [vmem:[%s22 + $0xf0] sm:$0xff] %v1371
  %1406 = vst.msk [vmem:[%s22 + $0xf8] sm:$0xff] %vm97, %v1373
  %1423 = vrot.lane.b32.xlu0 %v1102, 64
  %v1424 = vpop.permute.xlu0 %1423
  %1425 = vrot.lane.b32.xlu0 %v1103, 64
  %v1426 = vpop.permute.xlu0 %1425
  %1427 = vrot.lane.b32.xlu0 %v1104, 64
  %v1428 = vpop.permute.xlu0 %1427
  %1429 = vrot.lane.b32.xlu0 %v1105, 64
  %v1430 = vpop.permute.xlu0 %1429
  %1431 = vrot.lane.b32.xlu0 %v1106, 64
  %v1432 = vpop.permute.xlu0 %1431
  %1433 = vrot.lane.b32.xlu0 %v1107, 64
  %v1434 = vpop.permute.xlu0 %1433
  %1435 = vrot.lane.b32.xlu0 %v1108, 64
  %v1436 = vpop.permute.xlu0 %1435
  %1437 = vrot.lane.b32.xlu0 %v1109, 64
  %v1438 = vpop.permute.xlu0 %1437
  %1439 = vrot.lane.b32.xlu0 %v1110, 64
  %v1440 = vpop.permute.xlu0 %1439
  %1441 = vrot.lane.b32.xlu0 %v1111, 64
  %v1442 = vpop.permute.xlu0 %1441
  %1443 = vrot.lane.b32.xlu0 %v1112, 64
  %v1444 = vpop.permute.xlu0 %1443
  %1445 = vrot.lane.b32.xlu0 %v1113, 64
  %v1446 = vpop.permute.xlu0 %1445
  %1447 = vrot.lane.b32.xlu0 %v1114, 64
  %v1448 = vpop.permute.xlu0 %1447
  %1449 = vrot.lane.b32.xlu0 %v1115, 64
  %v1450 = vpop.permute.xlu0 %1449
  %1451 = vrot.lane.b32.xlu0 %v1116, 64
  %v1452 = vpop.permute.xlu0 %1451
  %1453 = vrot.lane.b32.xlu0 %v1117, 64
  %v1454 = vpop.permute.xlu0 %1453
  %v1471 = vsel %vm97, %v1102, %v1424
  %v1472 = vsel %vm97, %v1103, %v1426
  %v1473 = vsel %vm97, %v1104, %v1428
  %v1474 = vsel %vm97, %v1105, %v1430
  %v1475 = vsel %vm97, %v1106, %v1432
  %v1476 = vsel %vm97, %v1107, %v1434
  %v1477 = vsel %vm97, %v1108, %v1436
  %v1478 = vsel %vm97, %v1109, %v1438
  %v1479 = vsel %vm97, %v1110, %v1440
  %v1480 = vsel %vm97, %v1111, %v1442
  %v1481 = vsel %vm97, %v1112, %v1444
  %v1482 = vsel %vm97, %v1113, %v1446
  %v1483 = vsel %vm97, %v1114, %v1448
  %v1484 = vsel %vm97, %v1115, %v1450
  %v1485 = vsel %vm97, %v1116, %v1452
  %v1486 = vsel %vm97, %v1117, %v1454
  %1503 = vrot.lane.b32.xlu0 %v1134, 64
  %v1504 = vpop.permute.xlu0 %1503
  %1505 = vrot.lane.b32.xlu0 %v1135, 64
  %v1506 = vpop.permute.xlu0 %1505
  %1507 = vrot.lane.b32.xlu0 %v1136, 64
  %v1508 = vpop.permute.xlu0 %1507
  %1509 = vrot.lane.b32.xlu0 %v1137, 64
  %v1510 = vpop.permute.xlu0 %1509
  %1511 = vrot.lane.b32.xlu0 %v1138, 64
  %v1512 = vpop.permute.xlu0 %1511
  %1513 = vrot.lane.b32.xlu0 %v1139, 64
  %v1514 = vpop.permute.xlu0 %1513
  %1515 = vrot.lane.b32.xlu0 %v1140, 64
  %v1516 = vpop.permute.xlu0 %1515
  %1517 = vrot.lane.b32.xlu0 %v1141, 64
  %v1518 = vpop.permute.xlu0 %1517
  %1519 = vrot.lane.b32.xlu0 %v1142, 64
  %v1520 = vpop.permute.xlu0 %1519
  %1521 = vrot.lane.b32.xlu0 %v1143, 64
  %v1522 = vpop.permute.xlu0 %1521
  %1523 = vrot.lane.b32.xlu0 %v1144, 64
  %v1524 = vpop.permute.xlu0 %1523
  %1525 = vrot.lane.b32.xlu0 %v1145, 64
  %v1526 = vpop.permute.xlu0 %1525
  %1527 = vrot.lane.b32.xlu0 %v1146, 64
  %v1528 = vpop.permute.xlu0 %1527
  %1529 = vrot.lane.b32.xlu0 %v1147, 64
  %v1530 = vpop.permute.xlu0 %1529
  %1531 = vrot.lane.b32.xlu0 %v1148, 64
  %v1532 = vpop.permute.xlu0 %1531
  %1533 = vrot.lane.b32.xlu0 %v1149, 64
  %v1534 = vpop.permute.xlu0 %1533
  %v1551 = vsel %vm97, %v1134, %v1504
  %v1552 = vsel %vm97, %v1135, %v1506
  %v1553 = vsel %vm97, %v1136, %v1508
  %v1554 = vsel %vm97, %v1137, %v1510
  %v1555 = vsel %vm97, %v1138, %v1512
  %v1556 = vsel %vm97, %v1139, %v1514
  %v1557 = vsel %vm97, %v1140, %v1516
  %v1558 = vsel %vm97, %v1141, %v1518
  %v1559 = vsel %vm97, %v1142, %v1520
  %v1560 = vsel %vm97, %v1143, %v1522
  %v1561 = vsel %vm97, %v1144, %v1524
  %v1562 = vsel %vm97, %v1145, %v1526
  %v1563 = vsel %vm97, %v1146, %v1528
  %v1564 = vsel %vm97, %v1147, %v1530
  %v1565 = vsel %vm97, %v1148, %v1532
  %v1566 = vsel %vm97, %v1149, %v1534
  %v1567 = vmul.f32 %v1281, %v1471
  %v1568 = vmul.f32 %v1283, %v1102
  %v1569 = vmul.f32 %v1287, %v1472
  %v1570 = vmul.f32 %v1289, %v1103
  %v1571 = vmul.f32 %v1293, %v1473
  %v1572 = vmul.f32 %v1295, %v1104
  %v1573 = vmul.f32 %v1299, %v1474
  %v1574 = vmul.f32 %v1301, %v1105
  %v1575 = vmul.f32 %v1305, %v1475
  %v1576 = vmul.f32 %v1307, %v1106
  %v1577 = vmul.f32 %v1311, %v1476
  %v1578 = vmul.f32 %v1313, %v1107
  %v1579 = vmul.f32 %v1317, %v1477
  %v1580 = vmul.f32 %v1319, %v1108
  %v1581 = vmul.f32 %v1323, %v1478
  %v1582 = vmul.f32 %v1325, %v1109
  %v1583 = vmul.f32 %v1329, %v1479
  %v1584 = vmul.f32 %v1331, %v1110
  %v1585 = vmul.f32 %v1335, %v1480
  %v1586 = vmul.f32 %v1337, %v1111
  %v1587 = vmul.f32 %v1341, %v1481
  %v1588 = vmul.f32 %v1343, %v1112
  %v1589 = vmul.f32 %v1347, %v1482
  %v1590 = vmul.f32 %v1349, %v1113
  %v1591 = vmul.f32 %v1353, %v1483
  %v1592 = vmul.f32 %v1355, %v1114
  %v1593 = vmul.f32 %v1359, %v1484
  %v1594 = vmul.f32 %v1361, %v1115
  %v1595 = vmul.f32 %v1365, %v1485
  %v1596 = vmul.f32 %v1367, %v1116
  %v1597 = vmul.f32 %v1371, %v1486
  %v1598 = vmul.f32 %v1373, %v1117
  %v1599 = vmul.f32 %v1281, %v1551
  %v1600 = vmul.f32 %v1283, %v1134
  %v1601 = vmul.f32 %v1287, %v1552
  %v1602 = vmul.f32 %v1289, %v1135
  %v1603 = vmul.f32 %v1293, %v1553
  %v1604 = vmul.f32 %v1295, %v1136
  %v1605 = vmul.f32 %v1299, %v1554
  %v1606 = vmul.f32 %v1301, %v1137
  %v1607 = vmul.f32 %v1305, %v1555
  %v1608 = vmul.f32 %v1307, %v1138
  %v1609 = vmul.f32 %v1311, %v1556
  %v1610 = vmul.f32 %v1313, %v1139
  %v1611 = vmul.f32 %v1317, %v1557
  %v1612 = vmul.f32 %v1319, %v1140
  %v1613 = vmul.f32 %v1323, %v1558
  %v1614 = vmul.f32 %v1325, %v1141
  %v1615 = vmul.f32 %v1329, %v1559
  %v1616 = vmul.f32 %v1331, %v1142
  %v1617 = vmul.f32 %v1335, %v1560
  %v1618 = vmul.f32 %v1337, %v1143
  %v1619 = vmul.f32 %v1341, %v1561
  %v1620 = vmul.f32 %v1343, %v1144
  %v1621 = vmul.f32 %v1347, %v1562
  %v1622 = vmul.f32 %v1349, %v1145
  %v1623 = vmul.f32 %v1353, %v1563
  %v1624 = vmul.f32 %v1355, %v1146
  %v1625 = vmul.f32 %v1359, %v1564
  %v1626 = vmul.f32 %v1361, %v1147
  %v1627 = vmul.f32 %v1365, %v1565
  %v1628 = vmul.f32 %v1367, %v1148
  %v1629 = vmul.f32 %v1371, %v1566
  %v1630 = vmul.f32 %v1373, %v1149
  %v1631 = vld [vmem:[%s4] sm:$0xff]
  %v1632 = vld [vmem:[%s4 + $0x8] sm:$0xff]
  %v1633 = vld [vmem:[%s4 + $0x10] sm:$0xff]
  %v1634 = vld [vmem:[%s4 + $0x18] sm:$0xff]
  %v1635 = vld [vmem:[%s4 + $0x20] sm:$0xff]
  %v1636 = vld [vmem:[%s4 + $0x28] sm:$0xff]
  %v1637 = vld [vmem:[%s4 + $0x30] sm:$0xff]
  %v1638 = vld [vmem:[%s4 + $0x38] sm:$0xff]
  %v1639 = vld [vmem:[%s4 + $0x40] sm:$0xff]
  %v1640 = vld [vmem:[%s4 + $0x48] sm:$0xff]
  %v1641 = vld [vmem:[%s4 + $0x50] sm:$0xff]
  %v1642 = vld [vmem:[%s4 + $0x58] sm:$0xff]
  %v1643 = vld [vmem:[%s4 + $0x60] sm:$0xff]
  %v1644 = vld [vmem:[%s4 + $0x68] sm:$0xff]
  %v1645 = vld [vmem:[%s4 + $0x70] sm:$0xff]
  %v1646 = vld [vmem:[%s4 + $0x78] sm:$0xff]
  %v1647 = vld [vmem:[%s4 + $0x80] sm:$0xff]
  %v1648 = vld [vmem:[%s4 + $0x88] sm:$0xff]
  %v1649 = vld [vmem:[%s4 + $0x90] sm:$0xff]
  %v1650 = vld [vmem:[%s4 + $0x98] sm:$0xff]
  %v1651 = vld [vmem:[%s4 + $0xa0] sm:$0xff]
  %v1652 = vld [vmem:[%s4 + $0xa8] sm:$0xff]
  %v1653 = vld [vmem:[%s4 + $0xb0] sm:$0xff]
  %v1654 = vld [vmem:[%s4 + $0xb8] sm:$0xff]
  %v1655 = vld [vmem:[%s4 + $0xc0] sm:$0xff]
  %v1656 = vld [vmem:[%s4 + $0xc8] sm:$0xff]
  %v1657 = vld [vmem:[%s4 + $0xd0] sm:$0xff]
  %v1658 = vld [vmem:[%s4 + $0xd8] sm:$0xff]
  %v1659 = vld [vmem:[%s4 + $0xe0] sm:$0xff]
  %v1660 = vld [vmem:[%s4 + $0xe8] sm:$0xff]
  %v1661 = vld [vmem:[%s4 + $0xf0] sm:$0xff]
  %v1662 = vld [vmem:[%s4 + $0xf8] sm:$0xff]
  %v1663 = vld [vmem:[%s4 + $0x100] sm:$0xff]
  %v1664 = vld [vmem:[%s4 + $0x108] sm:$0xff]
  %v1665 = vld [vmem:[%s4 + $0x110] sm:$0xff]
  %v1666 = vld [vmem:[%s4 + $0x118] sm:$0xff]
  %v1667 = vld [vmem:[%s4 + $0x120] sm:$0xff]
  %v1668 = vld [vmem:[%s4 + $0x128] sm:$0xff]
  %v1669 = vld [vmem:[%s4 + $0x130] sm:$0xff]
  %v1670 = vld [vmem:[%s4 + $0x138] sm:$0xff]
  %v1671 = vld [vmem:[%s4 + $0x140] sm:$0xff]
  %v1672 = vld [vmem:[%s4 + $0x148] sm:$0xff]
  %v1673 = vld [vmem:[%s4 + $0x150] sm:$0xff]
  %v1674 = vld [vmem:[%s4 + $0x158] sm:$0xff]
  %v1675 = vld [vmem:[%s4 + $0x160] sm:$0xff]
  %v1676 = vld [vmem:[%s4 + $0x168] sm:$0xff]
  %v1677 = vld [vmem:[%s4 + $0x170] sm:$0xff]
  %v1678 = vld [vmem:[%s4 + $0x178] sm:$0xff]
  %v1679 = vld [vmem:[%s5] sm:$0xff]
  %v1680 = vld [vmem:[%s5 + $0x8] sm:$0xff]
  %v1681 = vld [vmem:[%s5 + $0x10] sm:$0xff]
  %v1682 = vld [vmem:[%s5 + $0x18] sm:$0xff]
  %v1683 = vld [vmem:[%s5 + $0x20] sm:$0xff]
  %v1684 = vld [vmem:[%s5 + $0x28] sm:$0xff]
  %v1685 = vld [vmem:[%s5 + $0x30] sm:$0xff]
  %v1686 = vld [vmem:[%s5 + $0x38] sm:$0xff]
  %v1687 = vld [vmem:[%s5 + $0x40] sm:$0xff]
  %v1688 = vld [vmem:[%s5 + $0x48] sm:$0xff]
  %v1689 = vld [vmem:[%s5 + $0x50] sm:$0xff]
  %v1690 = vld [vmem:[%s5 + $0x58] sm:$0xff]
  %v1691 = vld [vmem:[%s5 + $0x60] sm:$0xff]
  %v1692 = vld [vmem:[%s5 + $0x68] sm:$0xff]
  %v1693 = vld [vmem:[%s5 + $0x70] sm:$0xff]
  %v1694 = vld [vmem:[%s5 + $0x78] sm:$0xff]
  %v1695 = vld [vmem:[%s5 + $0x80] sm:$0xff]
  %v1696 = vld [vmem:[%s5 + $0x88] sm:$0xff]
  %v1697 = vld [vmem:[%s5 + $0x90] sm:$0xff]
  %v1698 = vld [vmem:[%s5 + $0x98] sm:$0xff]
  %v1699 = vld [vmem:[%s5 + $0xa0] sm:$0xff]
  %v1700 = vld [vmem:[%s5 + $0xa8] sm:$0xff]
  %v1701 = vld [vmem:[%s5 + $0xb0] sm:$0xff]
  %v1702 = vld [vmem:[%s5 + $0xb8] sm:$0xff]
  %v1703 = vld [vmem:[%s5 + $0xc0] sm:$0xff]
  %v1704 = vld [vmem:[%s5 + $0xc8] sm:$0xff]
  %v1705 = vld [vmem:[%s5 + $0xd0] sm:$0xff]
  %v1706 = vld [vmem:[%s5 + $0xd8] sm:$0xff]
  %v1707 = vld [vmem:[%s5 + $0xe0] sm:$0xff]
  %v1708 = vld [vmem:[%s5 + $0xe8] sm:$0xff]
  %v1709 = vld [vmem:[%s5 + $0xf0] sm:$0xff]
  %v1710 = vld [vmem:[%s5 + $0xf8] sm:$0xff]
  %v1711 = vld [vmem:[%s5 + $0x100] sm:$0xff]
  %v1712 = vld [vmem:[%s5 + $0x108] sm:$0xff]
  %v1713 = vld [vmem:[%s5 + $0x110] sm:$0xff]
  %v1714 = vld [vmem:[%s5 + $0x118] sm:$0xff]
  %v1715 = vld [vmem:[%s5 + $0x120] sm:$0xff]
  %v1716 = vld [vmem:[%s5 + $0x128] sm:$0xff]
  %v1717 = vld [vmem:[%s5 + $0x130] sm:$0xff]
  %v1718 = vld [vmem:[%s5 + $0x138] sm:$0xff]
  %v1719 = vld [vmem:[%s5 + $0x140] sm:$0xff]
  %v1720 = vld [vmem:[%s5 + $0x148] sm:$0xff]
  %v1721 = vld [vmem:[%s5 + $0x150] sm:$0xff]
  %v1722 = vld [vmem:[%s5 + $0x158] sm:$0xff]
  %v1723 = vld [vmem:[%s5 + $0x160] sm:$0xff]
  %v1724 = vld [vmem:[%s5 + $0x168] sm:$0xff]
  %v1725 = vld [vmem:[%s5 + $0x170] sm:$0xff]
  %v1726 = vld [vmem:[%s5 + $0x178] sm:$0xff]
  %v1728 = vsel %vm97, %v1568, 0
  %v1731 = vsel %vm97, %v1570, 0
  %v1734 = vsel %vm97, %v1572, 0
  %v1737 = vsel %vm97, %v1574, 0
  %v1740 = vsel %vm97, %v1576, 0
  %v1743 = vsel %vm97, %v1578, 0
  %v1746 = vsel %vm97, %v1580, 0
  %v1749 = vsel %vm97, %v1582, 0
  %v1752 = vsel %vm97, %v1584, 0
  %v1755 = vsel %vm97, %v1586, 0
  %v1758 = vsel %vm97, %v1588, 0
  %v1761 = vsel %vm97, %v1590, 0
  %v1764 = vsel %vm97, %v1592, 0
  %v1767 = vsel %vm97, %v1594, 0
  %v1770 = vsel %vm97, %v1596, 0
  %v1773 = vsel %vm97, %v1598, 0
  %1775 = vmatprep.subr.mxu0 %v1632
  %1776 = vmatpush1.msra.mxu0 %v1631
  %1777 = vmatprep.subr.mxu0 %v1634
  %1778 = vmatpush1.msra.mxu0 %v1633
  %1779 = vmatprep.subr.mxu0 %v1636
  %1780 = vmatpush1.msra.mxu0 %v1635
  %1781 = vmatprep.subr.mxu0 %v1638
  %1782 = vmatpush1.msra.mxu0 %v1637
  %1783 = vmatprep.subr.mxu0 %v1640
  %1784 = vmatpush1.msra.mxu0 %v1639
  %1785 = vmatprep.subr.mxu0 %v1642
  %1786 = vmatpush1.msra.mxu0 %v1641
  %1787 = vmatprep.subr.mxu0 %v1644
  %1788 = vmatpush1.msra.mxu0 %v1643
  %1789 = vmatprep.subr.mxu0 %v1646
  %1790 = vmatpush1.msra.mxu0 %v1645
  %1791 = vmatprep.subr.mxu0 %v1648
  %1792 = vmatpush1.msra.mxu0 %v1647
  %1793 = vmatprep.subr.mxu0 %v1650
  %1794 = vmatpush1.msra.mxu0 %v1649
  %1795 = vmatprep.subr.mxu0 %v1652
  %1796 = vmatpush1.msra.mxu0 %v1651
  %1797 = vmatprep.subr.mxu0 %v1654
  %1798 = vmatpush1.msra.mxu0 %v1653
  %1799 = vmatprep.subr.mxu0 %v1656
  %1800 = vmatpush1.msra.mxu0 %v1655
  %1801 = vmatprep.subr.mxu0 %v1658
  %1802 = vmatpush1.msra.mxu0 %v1657
  %1803 = vmatprep.subr.mxu0 %v1660
  %1804 = vmatpush1.msra.mxu0 %v1659
  %1805 = vmatprep.subr.mxu0 %v1662
  %1806 = vmatpush1.msra.mxu0 %v1661
  %1807 = vmatprep.subr.mxu0 %v1664
  %1808 = vmatpush1.msra.mxu0 %v1663
  %1809 = vmatprep.subr.mxu0 %v1666
  %1810 = vmatpush1.msra.mxu0 %v1665
  %1811 = vmatprep.subr.mxu0 %v1668
  %1812 = vmatpush1.msra.mxu0 %v1667
  %1813 = vmatprep.subr.mxu0 %v1670
  %1814 = vmatpush1.msra.mxu0 %v1669
  %1815 = vmatprep.subr.mxu0 %v1672
  %1816 = vmatpush1.msra.mxu0 %v1671
  %1817 = vmatprep.subr.mxu0 %v1674
  %1818 = vmatpush1.msra.mxu0 %v1673
  %1819 = vmatprep.subr.mxu0 %v1676
  %1820 = vmatpush1.msra.mxu0 %v1675
  %1821 = vmatprep.subr.mxu0 %v1678
  %1822 = vmatpush1.msra.mxu0 %v1677
  %1823 = vmatprep.subr.mxu0 0.0
  %1824 = vmatpush1.msra.mxu0 0.0
  %1825 = vmatprep.subr.mxu0 0.0
  %1826 = vmatpush1.msra.mxu0 0.0
  %1827 = vmatprep.subr.mxu0 0.0
  %1828 = vmatpush1.msra.mxu0 0.0
  %1829 = vmatprep.subr.mxu0 0.0
  %1830 = vmatpush1.msra.mxu0 0.0
  %1831 = vmatprep.subr.mxu0 0.0
  %1832 = vmatpush1.msra.mxu0 0.0
  %1833 = vmatprep.subr.mxu0 0.0
  %1834 = vmatpush1.msra.mxu0 0.0
  %1835 = vmatprep.subr.mxu0 0.0
  %1836 = vmatpush1.msra.mxu0 0.0
  %1837 = vmatprep.subr.mxu0 0.0
  %1838 = vmatpush1.msra.mxu0 0.0
  %1839 = vmatprep.mubr.f32.mxu0 %v1728
  %1840 = vmatmul.mubr.f32.gmra.mrb[0].mxu0 %v1567
  %v1841 = vpop.f32.mrb[0].mxu0
  %v1842 = vadd.f32 0.0, %v1841
  %v1843 = vpop.f32.mrb[0].mxu0
  %v1844 = vadd.f32 0.0, %v1843
  %1845 = vmatprep.mubr.f32.mxu0 %v1731
  %1846 = vmatmul.mubr.f32.gmra.mrb[0].mxu0 %v1569
  %v1847 = vpop.f32.mrb[0].mxu0
  %v1848 = vadd.f32 0.0, %v1847
  %v1849 = vpop.f32.mrb[0].mxu0
  %v1850 = vadd.f32 0.0, %v1849
  %1851 = vmatprep.mubr.f32.mxu0 %v1734
  %1852 = vmatmul.mubr.f32.gmra.mrb[0].mxu0 %v1571
  %v1853 = vpop.f32.mrb[0].mxu0
  %v1854 = vadd.f32 0.0, %v1853
  %v1855 = vpop.f32.mrb[0].mxu0
  %v1856 = vadd.f32 0.0, %v1855
  %1857 = vmatprep.mubr.f32.mxu0 %v1737
  %1858 = vmatmul.mubr.f32.gmra.mrb[0].mxu0 %v1573
  %v1859 = vpop.f32.mrb[0].mxu0
  %v1860 = vadd.f32 0.0, %v1859
  %v1861 = vpop.f32.mrb[0].mxu0
  %v1862 = vadd.f32 0.0, %v1861
  %1863 = vmatprep.mubr.f32.mxu0 %v1740
  %1864 = vmatmul.mubr.f32.gmra.mrb[0].mxu0 %v1575
  %v1865 = vpop.f32.mrb[0].mxu0
  %v1866 = vadd.f32 0.0, %v1865
  %v1867 = vpop.f32.mrb[0].mxu0
  %v1868 = vadd.f32 0.0, %v1867
  %1869 = vmatprep.mubr.f32.mxu0 %v1743
  %1870 = vmatmul.mubr.f32.gmra.mrb[0].mxu0 %v1577
  %v1871 = vpop.f32.mrb[0].mxu0
  %v1872 = vadd.f32 0.0, %v1871
  %v1873 = vpop.f32.mrb[0].mxu0
  %v1874 = vadd.f32 0.0, %v1873
  %1875 = vmatprep.mubr.f32.mxu0 %v1746
  %1876 = vmatmul.mubr.f32.gmra.mrb[0].mxu0 %v1579
  %v1877 = vpop.f32.mrb[0].mxu0
  %v1878 = vadd.f32 0.0, %v1877
  %v1879 = vpop.f32.mrb[0].mxu0
  %v1880 = vadd.f32 0.0, %v1879
  %1881 = vmatprep.mubr.f32.mxu0 %v1749
  %1882 = vmatmul.mubr.f32.gmra.mrb[0].mxu0 %v1581
  %v1883 = vpop.f32.mrb[0].mxu0
  %v1884 = vadd.f32 0.0, %v1883
  %v1885 = vpop.f32.mrb[0].mxu0
  %v1886 = vadd.f32 0.0, %v1885
  %1887 = vmatprep.mubr.f32.mxu0 %v1752
  %1888 = vmatmul.mubr.f32.gmra.mrb[0].mxu0 %v1583
  %v1889 = vpop.f32.mrb[0].mxu0
  %v1890 = vadd.f32 0.0, %v1889
  %v1891 = vpop.f32.mrb[0].mxu0
  %v1892 = vadd.f32 0.0, %v1891
  %1893 = vmatprep.mubr.f32.mxu0 %v1755
  %1894 = vmatmul.mubr.f32.gmra.mrb[0].mxu0 %v1585
  %v1895 = vpop.f32.mrb[0].mxu0
  %v1896 = vadd.f32 0.0, %v1895
  %v1897 = vpop.f32.mrb[0].mxu0
  %v1898 = vadd.f32 0.0, %v1897
  %1899 = vmatprep.mubr.f32.mxu0 %v1758
  %1900 = vmatmul.mubr.f32.gmra.mrb[0].mxu0 %v1587
  %v1901 = vpop.f32.mrb[0].mxu0
  %v1902 = vadd.f32 0.0, %v1901
  %v1903 = vpop.f32.mrb[0].mxu0
  %v1904 = vadd.f32 0.0, %v1903
  %1905 = vmatprep.mubr.f32.mxu0 %v1761
  %1906 = vmatmul.mubr.f32.gmra.mrb[0].mxu0 %v1589
  %v1907 = vpop.f32.mrb[0].mxu0
  %v1908 = vadd.f32 0.0, %v1907
  %v1909 = vpop.f32.mrb[0].mxu0
  %v1910 = vadd.f32 0.0, %v1909
  %1911 = vmatprep.mubr.f32.mxu0 %v1764
  %1912 = vmatmul.mubr.f32.gmra.mrb[0].mxu0 %v1591
  %v1913 = vpop.f32.mrb[0].mxu0
  %v1914 = vadd.f32 0.0, %v1913
  %v1915 = vpop.f32.mrb[0].mxu0
  %v1916 = vadd.f32 0.0, %v1915
  %1917 = vmatprep.mubr.f32.mxu0 %v1767
  %1918 = vmatmul.mubr.f32.gmra.mrb[0].mxu0 %v1593
  %v1919 = vpop.f32.mrb[0].mxu0
  %v1920 = vadd.f32 0.0, %v1919
  %v1921 = vpop.f32.mrb[0].mxu0
  %v1922 = vadd.f32 0.0, %v1921
  %1923 = vmatprep.mubr.f32.mxu0 %v1770
  %1924 = vmatmul.mubr.f32.gmra.mrb[0].mxu0 %v1595
  %v1925 = vpop.f32.mrb[0].mxu0
  %v1926 = vadd.f32 0.0, %v1925
  %v1927 = vpop.f32.mrb[0].mxu0
  %v1928 = vadd.f32 0.0, %v1927
  %1929 = vmatprep.mubr.f32.mxu0 %v1773
  %1930 = vmatmul.mubr.f32.gmra.mrb[0].mxu0 %v1597
  %v1931 = vpop.f32.mrb[0].mxu0
  %v1932 = vadd.f32 0.0, %v1931
  %v1933 = vpop.f32.mrb[0].mxu0
  %v1934 = vadd.f32 0.0, %v1933
  %1935 = vdwg.mxu0
  %v1937 = vsel %vm97, %v1600, 0
  %v1940 = vsel %vm97, %v1602, 0
  %v1943 = vsel %vm97, %v1604, 0
  %v1946 = vsel %vm97, %v1606, 0
  %v1949 = vsel %vm97, %v1608, 0
  %v1952 = vsel %vm97, %v1610, 0
  %v1955 = vsel %vm97, %v1612, 0
  %v1958 = vsel %vm97, %v1614, 0
  %v1961 = vsel %vm97, %v1616, 0
  %v1964 = vsel %vm97, %v1618, 0
  %v1967 = vsel %vm97, %v1620, 0
  %v1970 = vsel %vm97, %v1622, 0
  %v1973 = vsel %vm97, %v1624, 0
  %v1976 = vsel %vm97, %v1626, 0
  %v1979 = vsel %vm97, %v1628, 0
  %v1982 = vsel %vm97, %v1630, 0
  %1984 = vmatprep.subr.mxu0 %v1680
  %1985 = vmatpush1.msra.mxu0 %v1679
  %1986 = vmatprep.subr.mxu0 %v1682
  %1987 = vmatpush1.msra.mxu0 %v1681
  %1988 = vmatprep.subr.mxu0 %v1684
  %1989 = vmatpush1.msra.mxu0 %v1683
  %1990 = vmatprep.subr.mxu0 %v1686
  %1991 = vmatpush1.msra.mxu0 %v1685
  %1992 = vmatprep.subr.mxu0 %v1688
  %1993 = vmatpush1.msra.mxu0 %v1687
  %1994 = vmatprep.subr.mxu0 %v1690
  %1995 = vmatpush1.msra.mxu0 %v1689
  %1996 = vmatprep.subr.mxu0 %v1692
  %1997 = vmatpush1.msra.mxu0 %v1691
  %1998 = vmatprep.subr.mxu0 %v1694
  %1999 = vmatpush1.msra.mxu0 %v1693
  %2000 = vmatprep.subr.mxu0 %v1696
  %2001 = vmatpush1.msra.mxu0 %v1695
  %2002 = vmatprep.subr.mxu0 %v1698
  %2003 = vmatpush1.msra.mxu0 %v1697
  %2004 = vmatprep.subr.mxu0 %v1700
  %2005 = vmatpush1.msra.mxu0 %v1699
  %2006 = vmatprep.subr.mxu0 %v1702
  %2007 = vmatpush1.msra.mxu0 %v1701
  %2008 = vmatprep.subr.mxu0 %v1704
  %2009 = vmatpush1.msra.mxu0 %v1703
  %2010 = vmatprep.subr.mxu0 %v1706
  %2011 = vmatpush1.msra.mxu0 %v1705
  %2012 = vmatprep.subr.mxu0 %v1708
  %2013 = vmatpush1.msra.mxu0 %v1707
  %2014 = vmatprep.subr.mxu0 %v1710
  %2015 = vmatpush1.msra.mxu0 %v1709
  %2016 = vmatprep.subr.mxu0 %v1712
  %2017 = vmatpush1.msra.mxu0 %v1711
  %2018 = vmatprep.subr.mxu0 %v1714
  %2019 = vmatpush1.msra.mxu0 %v1713
  %2020 = vmatprep.subr.mxu0 %v1716
  %2021 = vmatpush1.msra.mxu0 %v1715
  %2022 = vmatprep.subr.mxu0 %v1718
  %2023 = vmatpush1.msra.mxu0 %v1717
  %2024 = vmatprep.subr.mxu0 %v1720
  %2025 = vmatpush1.msra.mxu0 %v1719
  %2026 = vmatprep.subr.mxu0 %v1722
  %2027 = vmatpush1.msra.mxu0 %v1721
  %2028 = vmatprep.subr.mxu0 %v1724
  %2029 = vmatpush1.msra.mxu0 %v1723
  %2030 = vmatprep.subr.mxu0 %v1726
  %2031 = vmatpush1.msra.mxu0 %v1725
  %2032 = vmatprep.subr.mxu0 0.0
  %2033 = vmatpush1.msra.mxu0 0.0
  %2034 = vmatprep.subr.mxu0 0.0
  %2035 = vmatpush1.msra.mxu0 0.0
  %2036 = vmatprep.subr.mxu0 0.0
  %2037 = vmatpush1.msra.mxu0 0.0
  %2038 = vmatprep.subr.mxu0 0.0
  %2039 = vmatpush1.msra.mxu0 0.0
  %2040 = vmatprep.subr.mxu0 0.0
  %2041 = vmatpush1.msra.mxu0 0.0
  %2042 = vmatprep.subr.mxu0 0.0
  %2043 = vmatpush1.msra.mxu0 0.0
  %2044 = vmatprep.subr.mxu0 0.0
  %2045 = vmatpush1.msra.mxu0 0.0
  %2046 = vmatprep.subr.mxu0 0.0
  %2047 = vmatpush1.msra.mxu0 0.0
  %2048 = vmatprep.mubr.f32.mxu0 %v1937
  %2049 = vmatmul.mubr.f32.gmra.mrb[0].mxu0 %v1599
  %v2050 = vpop.f32.mrb[0].mxu0
  %v2051 = vadd.f32 0.0, %v2050
  %v2052 = vpop.f32.mrb[0].mxu0
  %v2053 = vadd.f32 0.0, %v2052
  %2054 = vmatprep.mubr.f32.mxu0 %v1940
  %2055 = vmatmul.mubr.f32.gmra.mrb[0].mxu0 %v1601
  %v2056 = vpop.f32.mrb[0].mxu0
  %v2057 = vadd.f32 0.0, %v2056
  %v2058 = vpop.f32.mrb[0].mxu0
  %v2059 = vadd.f32 0.0, %v2058
  %2060 = vmatprep.mubr.f32.mxu0 %v1943
  %2061 = vmatmul.mubr.f32.gmra.mrb[0].mxu0 %v1603
  %v2062 = vpop.f32.mrb[0].mxu0
  %v2063 = vadd.f32 0.0, %v2062
  %v2064 = vpop.f32.mrb[0].mxu0
  %v2065 = vadd.f32 0.0, %v2064
  %2066 = vmatprep.mubr.f32.mxu0 %v1946
  %2067 = vmatmul.mubr.f32.gmra.mrb[0].mxu0 %v1605
  %v2068 = vpop.f32.mrb[0].mxu0
  %v2069 = vadd.f32 0.0, %v2068
  %v2070 = vpop.f32.mrb[0].mxu0
  %v2071 = vadd.f32 0.0, %v2070
  %2072 = vmatprep.mubr.f32.mxu0 %v1949
  %2073 = vmatmul.mubr.f32.gmra.mrb[0].mxu0 %v1607
  %v2074 = vpop.f32.mrb[0].mxu0
  %v2075 = vadd.f32 0.0, %v2074
  %v2076 = vpop.f32.mrb[0].mxu0
  %v2077 = vadd.f32 0.0, %v2076
  %2078 = vmatprep.mubr.f32.mxu0 %v1952
  %2079 = vmatmul.mubr.f32.gmra.mrb[0].mxu0 %v1609
  %v2080 = vpop.f32.mrb[0].mxu0
  %v2081 = vadd.f32 0.0, %v2080
  %v2082 = vpop.f32.mrb[0].mxu0
  %v2083 = vadd.f32 0.0, %v2082
  %2084 = vmatprep.mubr.f32.mxu0 %v1955
  %2085 = vmatmul.mubr.f32.gmra.mrb[0].mxu0 %v1611
  %v2086 = vpop.f32.mrb[0].mxu0
  %v2087 = vadd.f32 0.0, %v2086
  %v2088 = vpop.f32.mrb[0].mxu0
  %v2089 = vadd.f32 0.0, %v2088
  %2090 = vmatprep.mubr.f32.mxu0 %v1958
  %2091 = vmatmul.mubr.f32.gmra.mrb[0].mxu0 %v1613
  %v2092 = vpop.f32.mrb[0].mxu0
  %v2093 = vadd.f32 0.0, %v2092
  %v2094 = vpop.f32.mrb[0].mxu0
  %v2095 = vadd.f32 0.0, %v2094
  %2096 = vmatprep.mubr.f32.mxu0 %v1961
  %2097 = vmatmul.mubr.f32.gmra.mrb[0].mxu0 %v1615
  %v2098 = vpop.f32.mrb[0].mxu0
  %v2099 = vadd.f32 0.0, %v2098
  %v2100 = vpop.f32.mrb[0].mxu0
  %v2101 = vadd.f32 0.0, %v2100
  %2102 = vmatprep.mubr.f32.mxu0 %v1964
  %2103 = vmatmul.mubr.f32.gmra.mrb[0].mxu0 %v1617
  %v2104 = vpop.f32.mrb[0].mxu0
  %v2105 = vadd.f32 0.0, %v2104
  %v2106 = vpop.f32.mrb[0].mxu0
  %v2107 = vadd.f32 0.0, %v2106
  %2108 = vmatprep.mubr.f32.mxu0 %v1967
  %2109 = vmatmul.mubr.f32.gmra.mrb[0].mxu0 %v1619
  %v2110 = vpop.f32.mrb[0].mxu0
  %v2111 = vadd.f32 0.0, %v2110
  %v2112 = vpop.f32.mrb[0].mxu0
  %v2113 = vadd.f32 0.0, %v2112
  %2114 = vmatprep.mubr.f32.mxu0 %v1970
  %2115 = vmatmul.mubr.f32.gmra.mrb[0].mxu0 %v1621
  %v2116 = vpop.f32.mrb[0].mxu0
  %v2117 = vadd.f32 0.0, %v2116
  %v2118 = vpop.f32.mrb[0].mxu0
  %v2119 = vadd.f32 0.0, %v2118
  %2120 = vmatprep.mubr.f32.mxu0 %v1973
  %2121 = vmatmul.mubr.f32.gmra.mrb[0].mxu0 %v1623
  %v2122 = vpop.f32.mrb[0].mxu0
  %v2123 = vadd.f32 0.0, %v2122
  %v2124 = vpop.f32.mrb[0].mxu0
  %v2125 = vadd.f32 0.0, %v2124
  %2126 = vmatprep.mubr.f32.mxu0 %v1976
  %2127 = vmatmul.mubr.f32.gmra.mrb[0].mxu0 %v1625
  %v2128 = vpop.f32.mrb[0].mxu0
  %v2129 = vadd.f32 0.0, %v2128
  %v2130 = vpop.f32.mrb[0].mxu0
  %v2131 = vadd.f32 0.0, %v2130
  %2132 = vmatprep.mubr.f32.mxu0 %v1979
  %2133 = vmatmul.mubr.f32.gmra.mrb[0].mxu0 %v1627
  %v2134 = vpop.f32.mrb[0].mxu0
  %v2135 = vadd.f32 0.0, %v2134
  %v2136 = vpop.f32.mrb[0].mxu0
  %v2137 = vadd.f32 0.0, %v2136
  %2138 = vmatprep.mubr.f32.mxu0 %v1982
  %2139 = vmatmul.mubr.f32.gmra.mrb[0].mxu0 %v1629
  %v2140 = vpop.f32.mrb[0].mxu0
  %v2141 = vadd.f32 0.0, %v2140
  %v2142 = vpop.f32.mrb[0].mxu0
  %v2143 = vadd.f32 0.0, %v2142
  %2144 = vdwg.mxu0
  %v2145 = vsub.f32 %v1842, %v2051
  %v2146 = vsub.f32 %v1844, %v2053
  %v2147 = vsub.f32 %v1848, %v2057
  %v2148 = vsub.f32 %v1850, %v2059
  %v2149 = vsub.f32 %v1854, %v2063
  %v2150 = vsub.f32 %v1856, %v2065
  %v2151 = vsub.f32 %v1860, %v2069
  %v2152 = vsub.f32 %v1862, %v2071
  %v2153 = vsub.f32 %v1866, %v2075
  %v2154 = vsub.f32 %v1868, %v2077
  %v2155 = vsub.f32 %v1872, %v2081
  %v2156 = vsub.f32 %v1874, %v2083
  %v2157 = vsub.f32 %v1878, %v2087
  %v2158 = vsub.f32 %v1880, %v2089
  %v2159 = vsub.f32 %v1884, %v2093
  %v2160 = vsub.f32 %v1886, %v2095
  %v2161 = vsub.f32 %v1890, %v2099
  %v2162 = vsub.f32 %v1892, %v2101
  %v2163 = vsub.f32 %v1896, %v2105
  %v2164 = vsub.f32 %v1898, %v2107
  %v2165 = vsub.f32 %v1902, %v2111
  %v2166 = vsub.f32 %v1904, %v2113
  %v2167 = vsub.f32 %v1908, %v2117
  %v2168 = vsub.f32 %v1910, %v2119
  %v2169 = vsub.f32 %v1914, %v2123
  %v2170 = vsub.f32 %v1916, %v2125
  %v2171 = vsub.f32 %v1920, %v2129
  %v2172 = vsub.f32 %v1922, %v2131
  %v2173 = vsub.f32 %v1926, %v2135
  %v2174 = vsub.f32 %v1928, %v2137
  %v2175 = vsub.f32 %v1932, %v2141
  %v2176 = vsub.f32 %v1934, %v2143
  %2177 = vmatprep.subr.mxu0 %v1632
  %2178 = vmatpush1.msra.mxu0 %v1631
  %2179 = vmatprep.subr.mxu0 %v1634
  %2180 = vmatpush1.msra.mxu0 %v1633
  %2181 = vmatprep.subr.mxu0 %v1636
  %2182 = vmatpush1.msra.mxu0 %v1635
  %2183 = vmatprep.subr.mxu0 %v1638
  %2184 = vmatpush1.msra.mxu0 %v1637
  %2185 = vmatprep.subr.mxu0 %v1640
  %2186 = vmatpush1.msra.mxu0 %v1639
  %2187 = vmatprep.subr.mxu0 %v1642
  %2188 = vmatpush1.msra.mxu0 %v1641
  %2189 = vmatprep.subr.mxu0 %v1644
  %2190 = vmatpush1.msra.mxu0 %v1643
  %2191 = vmatprep.subr.mxu0 %v1646
  %2192 = vmatpush1.msra.mxu0 %v1645
  %2193 = vmatprep.subr.mxu0 %v1648
  %2194 = vmatpush1.msra.mxu0 %v1647
  %2195 = vmatprep.subr.mxu0 %v1650
  %2196 = vmatpush1.msra.mxu0 %v1649
  %2197 = vmatprep.subr.mxu0 %v1652
  %2198 = vmatpush1.msra.mxu0 %v1651
  %2199 = vmatprep.subr.mxu0 %v1654
  %2200 = vmatpush1.msra.mxu0 %v1653
  %2201 = vmatprep.subr.mxu0 %v1656
  %2202 = vmatpush1.msra.mxu0 %v1655
  %2203 = vmatprep.subr.mxu0 %v1658
  %2204 = vmatpush1.msra.mxu0 %v1657
  %2205 = vmatprep.subr.mxu0 %v1660
  %2206 = vmatpush1.msra.mxu0 %v1659
  %2207 = vmatprep.subr.mxu0 %v1662
  %2208 = vmatpush1.msra.mxu0 %v1661
  %2209 = vmatprep.subr.mxu0 %v1664
  %2210 = vmatpush1.msra.mxu0 %v1663
  %2211 = vmatprep.subr.mxu0 %v1666
  %2212 = vmatpush1.msra.mxu0 %v1665
  %2213 = vmatprep.subr.mxu0 %v1668
  %2214 = vmatpush1.msra.mxu0 %v1667
  %2215 = vmatprep.subr.mxu0 %v1670
  %2216 = vmatpush1.msra.mxu0 %v1669
  %2217 = vmatprep.subr.mxu0 %v1672
  %2218 = vmatpush1.msra.mxu0 %v1671
  %2219 = vmatprep.subr.mxu0 %v1674
  %2220 = vmatpush1.msra.mxu0 %v1673
  %2221 = vmatprep.subr.mxu0 %v1676
  %2222 = vmatpush1.msra.mxu0 %v1675
  %2223 = vmatprep.subr.mxu0 %v1678
  %2224 = vmatpush1.msra.mxu0 %v1677
  %2225 = vmatprep.subr.mxu0 0.0
  %2226 = vmatpush1.msra.mxu0 0.0
  %2227 = vmatprep.subr.mxu0 0.0
  %2228 = vmatpush1.msra.mxu0 0.0
  %2229 = vmatprep.subr.mxu0 0.0
  %2230 = vmatpush1.msra.mxu0 0.0
  %2231 = vmatprep.subr.mxu0 0.0
  %2232 = vmatpush1.msra.mxu0 0.0
  %2233 = vmatprep.subr.mxu0 0.0
  %2234 = vmatpush1.msra.mxu0 0.0
  %2235 = vmatprep.subr.mxu0 0.0
  %2236 = vmatpush1.msra.mxu0 0.0
  %2237 = vmatprep.subr.mxu0 0.0
  %2238 = vmatpush1.msra.mxu0 0.0
  %2239 = vmatprep.subr.mxu0 0.0
  %2240 = vmatpush1.msra.mxu0 0.0
  %2241 = vmatprep.mubr.f32.mxu0 %v1937
  %2242 = vmatmul.mubr.f32.gmra.mrb[0].mxu0 %v1599
  %v2243 = vpop.f32.mrb[0].mxu0
  %v2244 = vadd.f32 0.0, %v2243
  %v2245 = vpop.f32.mrb[0].mxu0
  %v2246 = vadd.f32 0.0, %v2245
  %2247 = vmatprep.mubr.f32.mxu0 %v1940
  %2248 = vmatmul.mubr.f32.gmra.mrb[0].mxu0 %v1601
  %v2249 = vpop.f32.mrb[0].mxu0
  %v2250 = vadd.f32 0.0, %v2249
  %v2251 = vpop.f32.mrb[0].mxu0
  %v2252 = vadd.f32 0.0, %v2251
  %2253 = vmatprep.mubr.f32.mxu0 %v1943
  %2254 = vmatmul.mubr.f32.gmra.mrb[0].mxu0 %v1603
  %v2255 = vpop.f32.mrb[0].mxu0
  %v2256 = vadd.f32 0.0, %v2255
  %v2257 = vpop.f32.mrb[0].mxu0
  %v2258 = vadd.f32 0.0, %v2257
  %2259 = vmatprep.mubr.f32.mxu0 %v1946
  %2260 = vmatmul.mubr.f32.gmra.mrb[0].mxu0 %v1605
  %v2261 = vpop.f32.mrb[0].mxu0
  %v2262 = vadd.f32 0.0, %v2261
  %v2263 = vpop.f32.mrb[0].mxu0
  %v2264 = vadd.f32 0.0, %v2263
  %2265 = vmatprep.mubr.f32.mxu0 %v1949
  %2266 = vmatmul.mubr.f32.gmra.mrb[0].mxu0 %v1607
  %v2267 = vpop.f32.mrb[0].mxu0
  %v2268 = vadd.f32 0.0, %v2267
  %v2269 = vpop.f32.mrb[0].mxu0
  %v2270 = vadd.f32 0.0, %v2269
  %2271 = vmatprep.mubr.f32.mxu0 %v1952
  %2272 = vmatmul.mubr.f32.gmra.mrb[0].mxu0 %v1609
  %v2273 = vpop.f32.mrb[0].mxu0
  %v2274 = vadd.f32 0.0, %v2273
  %v2275 = vpop.f32.mrb[0].mxu0
  %v2276 = vadd.f32 0.0, %v2275
  %2277 = vmatprep.mubr.f32.mxu0 %v1955
  %2278 = vmatmul.mubr.f32.gmra.mrb[0].mxu0 %v1611
  %v2279 = vpop.f32.mrb[0].mxu0
  %v2280 = vadd.f32 0.0, %v2279
  %v2281 = vpop.f32.mrb[0].mxu0
  %v2282 = vadd.f32 0.0, %v2281
  %2283 = vmatprep.mubr.f32.mxu0 %v1958
  %2284 = vmatmul.mubr.f32.gmra.mrb[0].mxu0 %v1613
  %v2285 = vpop.f32.mrb[0].mxu0
  %v2286 = vadd.f32 0.0, %v2285
  %v2287 = vpop.f32.mrb[0].mxu0
  %v2288 = vadd.f32 0.0, %v2287
  %2289 = vmatprep.mubr.f32.mxu0 %v1961
  %2290 = vmatmul.mubr.f32.gmra.mrb[0].mxu0 %v1615
  %v2291 = vpop.f32.mrb[0].mxu0
  %v2292 = vadd.f32 0.0, %v2291
  %v2293 = vpop.f32.mrb[0].mxu0
  %v2294 = vadd.f32 0.0, %v2293
  %2295 = vmatprep.mubr.f32.mxu0 %v1964
  %2296 = vmatmul.mubr.f32.gmra.mrb[0].mxu0 %v1617
  %v2297 = vpop.f32.mrb[0].mxu0
  %v2298 = vadd.f32 0.0, %v2297
  %v2299 = vpop.f32.mrb[0].mxu0
  %v2300 = vadd.f32 0.0, %v2299
  %2301 = vmatprep.mubr.f32.mxu0 %v1967
  %2302 = vmatmul.mubr.f32.gmra.mrb[0].mxu0 %v1619
  %v2303 = vpop.f32.mrb[0].mxu0
  %v2304 = vadd.f32 0.0, %v2303
  %v2305 = vpop.f32.mrb[0].mxu0
  %v2306 = vadd.f32 0.0, %v2305
  %2307 = vmatprep.mubr.f32.mxu0 %v1970
  %2308 = vmatmul.mubr.f32.gmra.mrb[0].mxu0 %v1621
  %v2309 = vpop.f32.mrb[0].mxu0
  %v2310 = vadd.f32 0.0, %v2309
  %v2311 = vpop.f32.mrb[0].mxu0
  %v2312 = vadd.f32 0.0, %v2311
  %2313 = vmatprep.mubr.f32.mxu0 %v1973
  %2314 = vmatmul.mubr.f32.gmra.mrb[0].mxu0 %v1623
  %v2315 = vpop.f32.mrb[0].mxu0
  %v2316 = vadd.f32 0.0, %v2315
  %v2317 = vpop.f32.mrb[0].mxu0
  %v2318 = vadd.f32 0.0, %v2317
  %2319 = vmatprep.mubr.f32.mxu0 %v1976
  %2320 = vmatmul.mubr.f32.gmra.mrb[0].mxu0 %v1625
  %v2321 = vpop.f32.mrb[0].mxu0
  %v2322 = vadd.f32 0.0, %v2321
  %v2323 = vpop.f32.mrb[0].mxu0
  %v2324 = vadd.f32 0.0, %v2323
  %2325 = vmatprep.mubr.f32.mxu0 %v1979
  %2326 = vmatmul.mubr.f32.gmra.mrb[0].mxu0 %v1627
  %v2327 = vpop.f32.mrb[0].mxu0
  %v2328 = vadd.f32 0.0, %v2327
  %v2329 = vpop.f32.mrb[0].mxu0
  %v2330 = vadd.f32 0.0, %v2329
  %2331 = vmatprep.mubr.f32.mxu0 %v1982
  %2332 = vmatmul.mubr.f32.gmra.mrb[0].mxu0 %v1629
  %v2333 = vpop.f32.mrb[0].mxu0
  %v2334 = vadd.f32 0.0, %v2333
  %v2335 = vpop.f32.mrb[0].mxu0
  %v2336 = vadd.f32 0.0, %v2335
  %2337 = vdwg.mxu0
  %2338 = vmatprep.subr.mxu0 %v1680
  %2339 = vmatpush1.msra.mxu0 %v1679
  %2340 = vmatprep.subr.mxu0 %v1682
  %2341 = vmatpush1.msra.mxu0 %v1681
  %2342 = vmatprep.subr.mxu0 %v1684
  %2343 = vmatpush1.msra.mxu0 %v1683
  %2344 = vmatprep.subr.mxu0 %v1686
  %2345 = vmatpush1.msra.mxu0 %v1685
  %2346 = vmatprep.subr.mxu0 %v1688
  %2347 = vmatpush1.msra.mxu0 %v1687
  %2348 = vmatprep.subr.mxu0 %v1690
  %2349 = vmatpush1.msra.mxu0 %v1689
  %2350 = vmatprep.subr.mxu0 %v1692
  %2351 = vmatpush1.msra.mxu0 %v1691
  %2352 = vmatprep.subr.mxu0 %v1694
  %2353 = vmatpush1.msra.mxu0 %v1693
  %2354 = vmatprep.subr.mxu0 %v1696
  %2355 = vmatpush1.msra.mxu0 %v1695
  %2356 = vmatprep.subr.mxu0 %v1698
  %2357 = vmatpush1.msra.mxu0 %v1697
  %2358 = vmatprep.subr.mxu0 %v1700
  %2359 = vmatpush1.msra.mxu0 %v1699
  %2360 = vmatprep.subr.mxu0 %v1702
  %2361 = vmatpush1.msra.mxu0 %v1701
  %2362 = vmatprep.subr.mxu0 %v1704
  %2363 = vmatpush1.msra.mxu0 %v1703
  %2364 = vmatprep.subr.mxu0 %v1706
  %2365 = vmatpush1.msra.mxu0 %v1705
  %2366 = vmatprep.subr.mxu0 %v1708
  %2367 = vmatpush1.msra.mxu0 %v1707
  %2368 = vmatprep.subr.mxu0 %v1710
  %2369 = vmatpush1.msra.mxu0 %v1709
  %2370 = vmatprep.subr.mxu0 %v1712
  %2371 = vmatpush1.msra.mxu0 %v1711
  %2372 = vmatprep.subr.mxu0 %v1714
  %2373 = vmatpush1.msra.mxu0 %v1713
  %2374 = vmatprep.subr.mxu0 %v1716
  %2375 = vmatpush1.msra.mxu0 %v1715
  %2376 = vmatprep.subr.mxu0 %v1718
  %2377 = vmatpush1.msra.mxu0 %v1717
  %2378 = vmatprep.subr.mxu0 %v1720
  %2379 = vmatpush1.msra.mxu0 %v1719
  %2380 = vmatprep.subr.mxu0 %v1722
  %2381 = vmatpush1.msra.mxu0 %v1721
  %2382 = vmatprep.subr.mxu0 %v1724
  %2383 = vmatpush1.msra.mxu0 %v1723
  %2384 = vmatprep.subr.mxu0 %v1726
  %2385 = vmatpush1.msra.mxu0 %v1725
  %2386 = vmatprep.subr.mxu0 0.0
  %2387 = vmatpush1.msra.mxu0 0.0
  %2388 = vmatprep.subr.mxu0 0.0
  %2389 = vmatpush1.msra.mxu0 0.0
  %2390 = vmatprep.subr.mxu0 0.0
  %2391 = vmatpush1.msra.mxu0 0.0
  %2392 = vmatprep.subr.mxu0 0.0
  %2393 = vmatpush1.msra.mxu0 0.0
  %2394 = vmatprep.subr.mxu0 0.0
  %2395 = vmatpush1.msra.mxu0 0.0
  %2396 = vmatprep.subr.mxu0 0.0
  %2397 = vmatpush1.msra.mxu0 0.0
  %2398 = vmatprep.subr.mxu0 0.0
  %2399 = vmatpush1.msra.mxu0 0.0
  %2400 = vmatprep.subr.mxu0 0.0
  %2401 = vmatpush1.msra.mxu0 0.0
  %2402 = vmatprep.mubr.f32.mxu0 %v1728
  %2403 = vmatmul.mubr.f32.gmra.mrb[0].mxu0 %v1567
  %v2404 = vpop.f32.mrb[0].mxu0
  %v2405 = vadd.f32 %v2244, %v2404
  %v2406 = vpop.f32.mrb[0].mxu0
  %v2407 = vadd.f32 %v2246, %v2406
  %2408 = vmatprep.mubr.f32.mxu0 %v1731
  %2409 = vmatmul.mubr.f32.gmra.mrb[0].mxu0 %v1569
  %v2410 = vpop.f32.mrb[0].mxu0
  %v2411 = vadd.f32 %v2250, %v2410
  %v2412 = vpop.f32.mrb[0].mxu0
  %v2413 = vadd.f32 %v2252, %v2412
  %2414 = vmatprep.mubr.f32.mxu0 %v1734
  %2415 = vmatmul.mubr.f32.gmra.mrb[0].mxu0 %v1571
  %v2416 = vpop.f32.mrb[0].mxu0
  %v2417 = vadd.f32 %v2256, %v2416
  %v2418 = vpop.f32.mrb[0].mxu0
  %v2419 = vadd.f32 %v2258, %v2418
  %2420 = vmatprep.mubr.f32.mxu0 %v1737
  %2421 = vmatmul.mubr.f32.gmra.mrb[0].mxu0 %v1573
  %v2422 = vpop.f32.mrb[0].mxu0
  %v2423 = vadd.f32 %v2262, %v2422
  %v2424 = vpop.f32.mrb[0].mxu0
  %v2425 = vadd.f32 %v2264, %v2424
  %2426 = vmatprep.mubr.f32.mxu0 %v1740
  %2427 = vmatmul.mubr.f32.gmra.mrb[0].mxu0 %v1575
  %v2428 = vpop.f32.mrb[0].mxu0
  %v2429 = vadd.f32 %v2268, %v2428
  %v2430 = vpop.f32.mrb[0].mxu0
  %v2431 = vadd.f32 %v2270, %v2430
  %2432 = vmatprep.mubr.f32.mxu0 %v1743
  %2433 = vmatmul.mubr.f32.gmra.mrb[0].mxu0 %v1577
  %v2434 = vpop.f32.mrb[0].mxu0
  %v2435 = vadd.f32 %v2274, %v2434
  %v2436 = vpop.f32.mrb[0].mxu0
  %v2437 = vadd.f32 %v2276, %v2436
  %2438 = vmatprep.mubr.f32.mxu0 %v1746
  %2439 = vmatmul.mubr.f32.gmra.mrb[0].mxu0 %v1579
  %v2440 = vpop.f32.mrb[0].mxu0
  %v2441 = vadd.f32 %v2280, %v2440
  %v2442 = vpop.f32.mrb[0].mxu0
  %v2443 = vadd.f32 %v2282, %v2442
  %2444 = vmatprep.mubr.f32.mxu0 %v1749
  %2445 = vmatmul.mubr.f32.gmra.mrb[0].mxu0 %v1581
  %v2446 = vpop.f32.mrb[0].mxu0
  %v2447 = vadd.f32 %v2286, %v2446
  %v2448 = vpop.f32.mrb[0].mxu0
  %v2449 = vadd.f32 %v2288, %v2448
  %2450 = vmatprep.mubr.f32.mxu0 %v1752
  %2451 = vmatmul.mubr.f32.gmra.mrb[0].mxu0 %v1583
  %v2452 = vpop.f32.mrb[0].mxu0
  %v2453 = vadd.f32 %v2292, %v2452
  %v2454 = vpop.f32.mrb[0].mxu0
  %v2455 = vadd.f32 %v2294, %v2454
  %2456 = vmatprep.mubr.f32.mxu0 %v1755
  %2457 = vmatmul.mubr.f32.gmra.mrb[0].mxu0 %v1585
  %v2458 = vpop.f32.mrb[0].mxu0
  %v2459 = vadd.f32 %v2298, %v2458
  %v2460 = vpop.f32.mrb[0].mxu0
  %v2461 = vadd.f32 %v2300, %v2460
  %2462 = vmatprep.mubr.f32.mxu0 %v1758
  %2463 = vmatmul.mubr.f32.gmra.mrb[0].mxu0 %v1587
  %v2464 = vpop.f32.mrb[0].mxu0
  %v2465 = vadd.f32 %v2304, %v2464
  %v2466 = vpop.f32.mrb[0].mxu0
  %v2467 = vadd.f32 %v2306, %v2466
  %2468 = vmatprep.mubr.f32.mxu0 %v1761
  %2469 = vmatmul.mubr.f32.gmra.mrb[0].mxu0 %v1589
  %v2470 = vpop.f32.mrb[0].mxu0
  %v2471 = vadd.f32 %v2310, %v2470
  %v2472 = vpop.f32.mrb[0].mxu0
  %v2473 = vadd.f32 %v2312, %v2472
  %2474 = vmatprep.mubr.f32.mxu0 %v1764
  %2475 = vmatmul.mubr.f32.gmra.mrb[0].mxu0 %v1591
  %v2476 = vpop.f32.mrb[0].mxu0
  %v2477 = vadd.f32 %v2316, %v2476
  %v2478 = vpop.f32.mrb[0].mxu0
  %v2479 = vadd.f32 %v2318, %v2478
  %2480 = vmatprep.mubr.f32.mxu0 %v1767
  %2481 = vmatmul.mubr.f32.gmra.mrb[0].mxu0 %v1593
  %v2482 = vpop.f32.mrb[0].mxu0
  %v2483 = vadd.f32 %v2322, %v2482
  %v2484 = vpop.f32.mrb[0].mxu0
  %v2485 = vadd.f32 %v2324, %v2484
  %2486 = vmatprep.mubr.f32.mxu0 %v1770
  %2487 = vmatmul.mubr.f32.gmra.mrb[0].mxu0 %v1595
  %v2488 = vpop.f32.mrb[0].mxu0
  %v2489 = vadd.f32 %v2328, %v2488
  %v2490 = vpop.f32.mrb[0].mxu0
  %v2491 = vadd.f32 %v2330, %v2490
  %2492 = vmatprep.mubr.f32.mxu0 %v1773
  %2493 = vmatmul.mubr.f32.gmra.mrb[0].mxu0 %v1597
  %v2494 = vpop.f32.mrb[0].mxu0
  %v2495 = vadd.f32 %v2334, %v2494
  %v2496 = vpop.f32.mrb[0].mxu0
  %v2497 = vadd.f32 %v2336, %v2496
  %2498 = vdwg.mxu0
  %2499 = vmatprep.subr.mxu0 %v2146
  %2500 = vmatpush1.msra.mxu0 %v2145
  %2501 = vmatprep.subr.mxu0 %v2148
  %2502 = vmatpush1.msra.mxu0 %v2147
  %2503 = vmatprep.subr.mxu0 %v2150
  %2504 = vmatpush1.msra.mxu0 %v2149
  %2505 = vmatprep.subr.mxu0 %v2152
  %2506 = vmatpush1.msra.mxu0 %v2151
  %2507 = vmatprep.subr.mxu0 %v2154
  %2508 = vmatpush1.msra.mxu0 %v2153
  %2509 = vmatprep.subr.mxu0 %v2156
  %2510 = vmatpush1.msra.mxu0 %v2155
  %2511 = vmatprep.subr.mxu0 %v2158
  %2512 = vmatpush1.msra.mxu0 %v2157
  %2513 = vmatprep.subr.mxu0 %v2160
  %2514 = vmatpush1.msra.mxu0 %v2159
  %2515 = vmatprep.subr.mxu0 %v2162
  %2516 = vmatpush1.msra.mxu0 %v2161
  %2517 = vmatprep.subr.mxu0 %v2164
  %2518 = vmatpush1.msra.mxu0 %v2163
  %2519 = vmatprep.subr.mxu0 %v2166
  %2520 = vmatpush1.msra.mxu0 %v2165
  %2521 = vmatprep.subr.mxu0 %v2168
  %2522 = vmatpush1.msra.mxu0 %v2167
  %2523 = vmatprep.subr.mxu0 %v2170
  %2524 = vmatpush1.msra.mxu0 %v2169
  %2525 = vmatprep.subr.mxu0 %v2172
  %2526 = vmatpush1.msra.mxu0 %v2171
  %2527 = vmatprep.subr.mxu0 %v2174
  %2528 = vmatpush1.msra.mxu0 %v2173
  %2529 = vmatprep.subr.mxu0 %v2176
  %2530 = vmatpush1.msra.mxu0 %v2175
  %2531 = vmatprep.subr.mxu0 0.0
  %2532 = vmatpush1.msra.mxu0 0.0
  %2533 = vmatprep.subr.mxu0 0.0
  %2534 = vmatpush1.msra.mxu0 0.0
  %2535 = vmatprep.subr.mxu0 0.0
  %2536 = vmatpush1.msra.mxu0 0.0
  %2537 = vmatprep.subr.mxu0 0.0
  %2538 = vmatpush1.msra.mxu0 0.0
  %2539 = vmatprep.subr.mxu0 0.0
  %2540 = vmatpush1.msra.mxu0 0.0
  %2541 = vmatprep.subr.mxu0 0.0
  %2542 = vmatpush1.msra.mxu0 0.0
  %2543 = vmatprep.subr.mxu0 0.0
  %2544 = vmatpush1.msra.mxu0 0.0
  %2545 = vmatprep.subr.mxu0 0.0
  %2546 = vmatpush1.msra.mxu0 0.0
  %2547 = vmatprep.subr.mxu0 0.0
  %2548 = vmatpush1.msra.mxu0 0.0
  %2549 = vmatprep.subr.mxu0 0.0
  %2550 = vmatpush1.msra.mxu0 0.0
  %2551 = vmatprep.subr.mxu0 0.0
  %2552 = vmatpush1.msra.mxu0 0.0
  %2553 = vmatprep.subr.mxu0 0.0
  %2554 = vmatpush1.msra.mxu0 0.0
  %2555 = vmatprep.subr.mxu0 0.0
  %2556 = vmatpush1.msra.mxu0 0.0
  %2557 = vmatprep.subr.mxu0 0.0
  %2558 = vmatpush1.msra.mxu0 0.0
  %2559 = vmatprep.subr.mxu0 0.0
  %2560 = vmatpush1.msra.mxu0 0.0
  %2561 = vmatprep.subr.mxu0 0.0
  %2562 = vmatpush1.msra.mxu0 0.0
  %2563 = vmatprep.mubr.f32.mxu0 0.0
  %2564 = vmatmul.mubr.f32.gmra.mrb[0].mxu0 %v460
  %v2565 = vpop.f32.mrb[0].mxu0
  %v2566 = vadd.f32 0.0, %v2565
  %v2567 = vpop.f32.mrb[0].mxu0
  %v2568 = vadd.f32 0.0, %v2567
  %2569 = vmatprep.mubr.f32.mxu0 0.0
  %2570 = vmatmul.mubr.f32.gmra.mrb[0].mxu0 %v461
  %v2571 = vpop.f32.mrb[0].mxu0
  %v2572 = vadd.f32 0.0, %v2571
  %v2573 = vpop.f32.mrb[0].mxu0
  %v2574 = vadd.f32 0.0, %v2573
  %2575 = vmatprep.mubr.f32.mxu0 0.0
  %2576 = vmatmul.mubr.f32.gmra.mrb[0].mxu0 %v462
  %v2577 = vpop.f32.mrb[0].mxu0
  %v2578 = vadd.f32 0.0, %v2577
  %v2579 = vpop.f32.mrb[0].mxu0
  %v2580 = vadd.f32 0.0, %v2579
  %2581 = vmatprep.mubr.f32.mxu0 0.0
  %2582 = vmatmul.mubr.f32.gmra.mrb[0].mxu0 %v463
  %v2583 = vpop.f32.mrb[0].mxu0
  %v2584 = vadd.f32 0.0, %v2583
  %v2585 = vpop.f32.mrb[0].mxu0
  %v2586 = vadd.f32 0.0, %v2585
  %2587 = vmatprep.mubr.f32.mxu0 0.0
  %2588 = vmatmul.mubr.f32.gmra.mrb[0].mxu0 %v464
  %v2589 = vpop.f32.mrb[0].mxu0
  %v2590 = vadd.f32 0.0, %v2589
  %v2591 = vpop.f32.mrb[0].mxu0
  %v2592 = vadd.f32 0.0, %v2591
  %2593 = vmatprep.mubr.f32.mxu0 0.0
  %2594 = vmatmul.mubr.f32.gmra.mrb[0].mxu0 %v465
  %v2595 = vpop.f32.mrb[0].mxu0
  %v2596 = vadd.f32 0.0, %v2595
  %v2597 = vpop.f32.mrb[0].mxu0
  %v2598 = vadd.f32 0.0, %v2597
  %2599 = vmatprep.mubr.f32.mxu0 0.0
  %2600 = vmatmul.mubr.f32.gmra.mrb[0].mxu0 %v466
  %v2601 = vpop.f32.mrb[0].mxu0
  %v2602 = vadd.f32 0.0, %v2601
  %v2603 = vpop.f32.mrb[0].mxu0
  %v2604 = vadd.f32 0.0, %v2603
  %2605 = vmatprep.mubr.f32.mxu0 0.0
  %2606 = vmatmul.mubr.f32.gmra.mrb[0].mxu0 %v467
  %v2607 = vpop.f32.mrb[0].mxu0
  %v2608 = vadd.f32 0.0, %v2607
  %v2609 = vpop.f32.mrb[0].mxu0
  %v2610 = vadd.f32 0.0, %v2609
  %2611 = vmatprep.mubr.f32.mxu0 0.0
  %2612 = vmatmul.mubr.f32.gmra.mrb[0].mxu0 %v468
  %v2613 = vpop.f32.mrb[0].mxu0
  %v2614 = vadd.f32 0.0, %v2613
  %v2615 = vpop.f32.mrb[0].mxu0
  %v2616 = vadd.f32 0.0, %v2615
  %2617 = vmatprep.mubr.f32.mxu0 0.0
  %2618 = vmatmul.mubr.f32.gmra.mrb[0].mxu0 %v469
  %v2619 = vpop.f32.mrb[0].mxu0
  %v2620 = vadd.f32 0.0, %v2619
  %v2621 = vpop.f32.mrb[0].mxu0
  %v2622 = vadd.f32 0.0, %v2621
  %2623 = vmatprep.mubr.f32.mxu0 0.0
  %2624 = vmatmul.mubr.f32.gmra.mrb[0].mxu0 %v470
  %v2625 = vpop.f32.mrb[0].mxu0
  %v2626 = vadd.f32 0.0, %v2625
  %v2627 = vpop.f32.mrb[0].mxu0
  %v2628 = vadd.f32 0.0, %v2627
  %2629 = vmatprep.mubr.f32.mxu0 0.0
  %2630 = vmatmul.mubr.f32.gmra.mrb[0].mxu0 %v471
  %v2631 = vpop.f32.mrb[0].mxu0
  %v2632 = vadd.f32 0.0, %v2631
  %v2633 = vpop.f32.mrb[0].mxu0
  %v2634 = vadd.f32 0.0, %v2633
  %2635 = vmatprep.mubr.f32.mxu0 0.0
  %2636 = vmatmul.mubr.f32.gmra.mrb[0].mxu0 %v472
  %v2637 = vpop.f32.mrb[0].mxu0
  %v2638 = vadd.f32 0.0, %v2637
  %v2639 = vpop.f32.mrb[0].mxu0
  %v2640 = vadd.f32 0.0, %v2639
  %2641 = vmatprep.mubr.f32.mxu0 0.0
  %2642 = vmatmul.mubr.f32.gmra.mrb[0].mxu0 %v473
  %v2643 = vpop.f32.mrb[0].mxu0
  %v2644 = vadd.f32 0.0, %v2643
  %v2645 = vpop.f32.mrb[0].mxu0
  %v2646 = vadd.f32 0.0, %v2645
  %2647 = vmatprep.mubr.f32.mxu0 0.0
  %2648 = vmatmul.mubr.f32.gmra.mrb[0].mxu0 %v474
  %v2649 = vpop.f32.mrb[0].mxu0
  %v2650 = vadd.f32 0.0, %v2649
  %v2651 = vpop.f32.mrb[0].mxu0
  %v2652 = vadd.f32 0.0, %v2651
  %2653 = vmatprep.mubr.f32.mxu0 0.0
  %2654 = vmatmul.mubr.f32.gmra.mrb[0].mxu0 %v475
  %v2655 = vpop.f32.mrb[0].mxu0
  %v2656 = vadd.f32 0.0, %v2655
  %v2657 = vpop.f32.mrb[0].mxu0
  %v2658 = vadd.f32 0.0, %v2657
  %2659 = vdwg.mxu0
  %2660 = vmatprep.subr.mxu0 %v2407
  %2661 = vmatpush1.msra.mxu0 %v2405
  %2662 = vmatprep.subr.mxu0 %v2413
  %2663 = vmatpush1.msra.mxu0 %v2411
  %2664 = vmatprep.subr.mxu0 %v2419
  %2665 = vmatpush1.msra.mxu0 %v2417
  %2666 = vmatprep.subr.mxu0 %v2425
  %2667 = vmatpush1.msra.mxu0 %v2423
  %2668 = vmatprep.subr.mxu0 %v2431
  %2669 = vmatpush1.msra.mxu0 %v2429
  %2670 = vmatprep.subr.mxu0 %v2437
  %2671 = vmatpush1.msra.mxu0 %v2435
  %2672 = vmatprep.subr.mxu0 %v2443
  %2673 = vmatpush1.msra.mxu0 %v2441
  %2674 = vmatprep.subr.mxu0 %v2449
  %2675 = vmatpush1.msra.mxu0 %v2447
  %2676 = vmatprep.subr.mxu0 %v2455
  %2677 = vmatpush1.msra.mxu0 %v2453
  %2678 = vmatprep.subr.mxu0 %v2461
  %2679 = vmatpush1.msra.mxu0 %v2459
  %2680 = vmatprep.subr.mxu0 %v2467
  %2681 = vmatpush1.msra.mxu0 %v2465
  %2682 = vmatprep.subr.mxu0 %v2473
  %2683 = vmatpush1.msra.mxu0 %v2471
  %2684 = vmatprep.subr.mxu0 %v2479
  %2685 = vmatpush1.msra.mxu0 %v2477
  %2686 = vmatprep.subr.mxu0 %v2485
  %2687 = vmatpush1.msra.mxu0 %v2483
  %2688 = vmatprep.subr.mxu0 %v2491
  %2689 = vmatpush1.msra.mxu0 %v2489
  %2690 = vmatprep.subr.mxu0 %v2497
  %2691 = vmatpush1.msra.mxu0 %v2495
  %2692 = vmatprep.subr.mxu0 0.0
  %2693 = vmatpush1.msra.mxu0 0.0
  %2694 = vmatprep.subr.mxu0 0.0
  %2695 = vmatpush1.msra.mxu0 0.0
  %2696 = vmatprep.subr.mxu0 0.0
  %2697 = vmatpush1.msra.mxu0 0.0
  %2698 = vmatprep.subr.mxu0 0.0
  %2699 = vmatpush1.msra.mxu0 0.0
  %2700 = vmatprep.subr.mxu0 0.0
  %2701 = vmatpush1.msra.mxu0 0.0
  %2702 = vmatprep.subr.mxu0 0.0
  %2703 = vmatpush1.msra.mxu0 0.0
  %2704 = vmatprep.subr.mxu0 0.0
  %2705 = vmatpush1.msra.mxu0 0.0
  %2706 = vmatprep.subr.mxu0 0.0
  %2707 = vmatpush1.msra.mxu0 0.0
  %2708 = vmatprep.subr.mxu0 0.0
  %2709 = vmatpush1.msra.mxu0 0.0
  %2710 = vmatprep.subr.mxu0 0.0
  %2711 = vmatpush1.msra.mxu0 0.0
  %2712 = vmatprep.subr.mxu0 0.0
  %2713 = vmatpush1.msra.mxu0 0.0
  %2714 = vmatprep.subr.mxu0 0.0
  %2715 = vmatpush1.msra.mxu0 0.0
  %2716 = vmatprep.subr.mxu0 0.0
  %2717 = vmatpush1.msra.mxu0 0.0
  %2718 = vmatprep.subr.mxu0 0.0
  %2719 = vmatpush1.msra.mxu0 0.0
  %2720 = vmatprep.subr.mxu0 0.0
  %2721 = vmatpush1.msra.mxu0 0.0
  %2722 = vmatprep.subr.mxu0 0.0
  %2723 = vmatpush1.msra.mxu0 0.0
  %2724 = vmatprep.mubr.f32.mxu0 0.0
  %2725 = vmatmul.mubr.f32.gmra.mrb[0].mxu0 %v476
  %v2726 = vpop.f32.mrb[0].mxu0
  %v2727 = vadd.f32 0.0, %v2726
  %v2728 = vpop.f32.mrb[0].mxu0
  %v2729 = vadd.f32 0.0, %v2728
  %2730 = vmatprep.mubr.f32.mxu0 0.0
  %2731 = vmatmul.mubr.f32.gmra.mrb[0].mxu0 %v477
  %v2732 = vpop.f32.mrb[0].mxu0
  %v2733 = vadd.f32 0.0, %v2732
  %v2734 = vpop.f32.mrb[0].mxu0
  %v2735 = vadd.f32 0.0, %v2734
  %2736 = vmatprep.mubr.f32.mxu0 0.0
  %2737 = vmatmul.mubr.f32.gmra.mrb[0].mxu0 %v478
  %v2738 = vpop.f32.mrb[0].mxu0
  %v2739 = vadd.f32 0.0, %v2738
  %v2740 = vpop.f32.mrb[0].mxu0
  %v2741 = vadd.f32 0.0, %v2740
  %2742 = vmatprep.mubr.f32.mxu0 0.0
  %2743 = vmatmul.mubr.f32.gmra.mrb[0].mxu0 %v479
  %v2744 = vpop.f32.mrb[0].mxu0
  %v2745 = vadd.f32 0.0, %v2744
  %v2746 = vpop.f32.mrb[0].mxu0
  %v2747 = vadd.f32 0.0, %v2746
  %2748 = vmatprep.mubr.f32.mxu0 0.0
  %2749 = vmatmul.mubr.f32.gmra.mrb[0].mxu0 %v480
  %v2750 = vpop.f32.mrb[0].mxu0
  %v2751 = vadd.f32 0.0, %v2750
  %v2752 = vpop.f32.mrb[0].mxu0
  %v2753 = vadd.f32 0.0, %v2752
  %2754 = vmatprep.mubr.f32.mxu0 0.0
  %2755 = vmatmul.mubr.f32.gmra.mrb[0].mxu0 %v481
  %v2756 = vpop.f32.mrb[0].mxu0
  %v2757 = vadd.f32 0.0, %v2756
  %v2758 = vpop.f32.mrb[0].mxu0
  %v2759 = vadd.f32 0.0, %v2758
  %2760 = vmatprep.mubr.f32.mxu0 0.0
  %2761 = vmatmul.mubr.f32.gmra.mrb[0].mxu0 %v482
  %v2762 = vpop.f32.mrb[0].mxu0
  %v2763 = vadd.f32 0.0, %v2762
  %v2764 = vpop.f32.mrb[0].mxu0
  %v2765 = vadd.f32 0.0, %v2764
  %2766 = vmatprep.mubr.f32.mxu0 0.0
  %2767 = vmatmul.mubr.f32.gmra.mrb[0].mxu0 %v483
  %v2768 = vpop.f32.mrb[0].mxu0
  %v2769 = vadd.f32 0.0, %v2768
  %v2770 = vpop.f32.mrb[0].mxu0
  %v2771 = vadd.f32 0.0, %v2770
  %2772 = vmatprep.mubr.f32.mxu0 0.0
  %2773 = vmatmul.mubr.f32.gmra.mrb[0].mxu0 %v484
  %v2774 = vpop.f32.mrb[0].mxu0
  %v2775 = vadd.f32 0.0, %v2774
  %v2776 = vpop.f32.mrb[0].mxu0
  %v2777 = vadd.f32 0.0, %v2776
  %2778 = vmatprep.mubr.f32.mxu0 0.0
  %2779 = vmatmul.mubr.f32.gmra.mrb[0].mxu0 %v485
  %v2780 = vpop.f32.mrb[0].mxu0
  %v2781 = vadd.f32 0.0, %v2780
  %v2782 = vpop.f32.mrb[0].mxu0
  %v2783 = vadd.f32 0.0, %v2782
  %2784 = vmatprep.mubr.f32.mxu0 0.0
  %2785 = vmatmul.mubr.f32.gmra.mrb[0].mxu0 %v486
  %v2786 = vpop.f32.mrb[0].mxu0
  %v2787 = vadd.f32 0.0, %v2786
  %v2788 = vpop.f32.mrb[0].mxu0
  %v2789 = vadd.f32 0.0, %v2788
  %2790 = vmatprep.mubr.f32.mxu0 0.0
  %2791 = vmatmul.mubr.f32.gmra.mrb[0].mxu0 %v487
  %v2792 = vpop.f32.mrb[0].mxu0
  %v2793 = vadd.f32 0.0, %v2792
  %v2794 = vpop.f32.mrb[0].mxu0
  %v2795 = vadd.f32 0.0, %v2794
  %2796 = vmatprep.mubr.f32.mxu0 0.0
  %2797 = vmatmul.mubr.f32.gmra.mrb[0].mxu0 %v488
  %v2798 = vpop.f32.mrb[0].mxu0
  %v2799 = vadd.f32 0.0, %v2798
  %v2800 = vpop.f32.mrb[0].mxu0
  %v2801 = vadd.f32 0.0, %v2800
  %2802 = vmatprep.mubr.f32.mxu0 0.0
  %2803 = vmatmul.mubr.f32.gmra.mrb[0].mxu0 %v489
  %v2804 = vpop.f32.mrb[0].mxu0
  %v2805 = vadd.f32 0.0, %v2804
  %v2806 = vpop.f32.mrb[0].mxu0
  %v2807 = vadd.f32 0.0, %v2806
  %2808 = vmatprep.mubr.f32.mxu0 0.0
  %2809 = vmatmul.mubr.f32.gmra.mrb[0].mxu0 %v490
  %v2810 = vpop.f32.mrb[0].mxu0
  %v2811 = vadd.f32 0.0, %v2810
  %v2812 = vpop.f32.mrb[0].mxu0
  %v2813 = vadd.f32 0.0, %v2812
  %2814 = vmatprep.mubr.f32.mxu0 0.0
  %2815 = vmatmul.mubr.f32.gmra.mrb[0].mxu0 %v491
  %v2816 = vpop.f32.mrb[0].mxu0
  %v2817 = vadd.f32 0.0, %v2816
  %v2818 = vpop.f32.mrb[0].mxu0
  %v2819 = vadd.f32 0.0, %v2818
  %2820 = vdwg.mxu0
  %v2821 = vsub.f32 %v2566, %v2727
  %v2822 = vsub.f32 %v2568, %v2729
  %v2823 = vsub.f32 %v2572, %v2733
  %v2824 = vsub.f32 %v2574, %v2735
  %v2825 = vsub.f32 %v2578, %v2739
  %v2826 = vsub.f32 %v2580, %v2741
  %v2827 = vsub.f32 %v2584, %v2745
  %v2828 = vsub.f32 %v2586, %v2747
  %v2829 = vsub.f32 %v2590, %v2751
  %v2830 = vsub.f32 %v2592, %v2753
  %v2831 = vsub.f32 %v2596, %v2757
  %v2832 = vsub.f32 %v2598, %v2759
  %v2833 = vsub.f32 %v2602, %v2763
  %v2834 = vsub.f32 %v2604, %v2765
  %v2835 = vsub.f32 %v2608, %v2769
  %v2836 = vsub.f32 %v2610, %v2771
  %v2837 = vsub.f32 %v2614, %v2775
  %v2838 = vsub.f32 %v2616, %v2777
  %v2839 = vsub.f32 %v2620, %v2781
  %v2840 = vsub.f32 %v2622, %v2783
  %v2841 = vsub.f32 %v2626, %v2787
  %v2842 = vsub.f32 %v2628, %v2789
  %v2843 = vsub.f32 %v2632, %v2793
  %v2844 = vsub.f32 %v2634, %v2795
  %v2845 = vsub.f32 %v2638, %v2799
  %v2846 = vsub.f32 %v2640, %v2801
  %v2847 = vsub.f32 %v2644, %v2805
  %v2848 = vsub.f32 %v2646, %v2807
  %v2849 = vsub.f32 %v2650, %v2811
  %v2850 = vsub.f32 %v2652, %v2813
  %v2851 = vsub.f32 %v2656, %v2817
  %v2852 = vsub.f32 %v2658, %v2819
  %v2853 = vld [vmem:[%s7] sm:$0xff]
  %v2854 = vld [vmem:[%s7 + $0x8] sm:$0xff]
  %v2855 = vld [vmem:[%s7 + $0x10] sm:$0xff]
  %v2856 = vld [vmem:[%s7 + $0x18] sm:$0xff]
  %v2857 = vld [vmem:[%s7 + $0x20] sm:$0xff]
  %v2858 = vld [vmem:[%s7 + $0x28] sm:$0xff]
  %v2859 = vld [vmem:[%s7 + $0x30] sm:$0xff]
  %v2860 = vld [vmem:[%s7 + $0x38] sm:$0xff]
  %v2861 = vld [vmem:[%s7 + $0x40] sm:$0xff]
  %v2862 = vld [vmem:[%s7 + $0x48] sm:$0xff]
  %v2863 = vld [vmem:[%s7 + $0x50] sm:$0xff]
  %v2864 = vld [vmem:[%s7 + $0x58] sm:$0xff]
  %v2865 = vld [vmem:[%s7 + $0x60] sm:$0xff]
  %v2866 = vld [vmem:[%s7 + $0x68] sm:$0xff]
  %v2867 = vld [vmem:[%s7 + $0x70] sm:$0xff]
  %v2868 = vld [vmem:[%s7 + $0x78] sm:$0xff]
  %v2869 = vld [vmem:[%s7 + $0x80] sm:$0xff]
  %v2870 = vld [vmem:[%s7 + $0x88] sm:$0xff]
  %v2871 = vld [vmem:[%s7 + $0x90] sm:$0xff]
  %v2872 = vld [vmem:[%s7 + $0x98] sm:$0xff]
  %v2873 = vld [vmem:[%s7 + $0xa0] sm:$0xff]
  %v2874 = vld [vmem:[%s7 + $0xa8] sm:$0xff]
  %v2875 = vld [vmem:[%s7 + $0xb0] sm:$0xff]
  %v2876 = vld [vmem:[%s7 + $0xb8] sm:$0xff]
  %v2877 = vld [vmem:[%s7 + $0xc0] sm:$0xff]
  %v2878 = vld [vmem:[%s7 + $0xc8] sm:$0xff]
  %v2879 = vld [vmem:[%s7 + $0xd0] sm:$0xff]
  %v2880 = vld [vmem:[%s7 + $0xd8] sm:$0xff]
  %v2881 = vld [vmem:[%s7 + $0xe0] sm:$0xff]
  %v2882 = vld [vmem:[%s7 + $0xe8] sm:$0xff]
  %v2883 = vld [vmem:[%s7 + $0xf0] sm:$0xff]
  %v2884 = vld [vmem:[%s7 + $0xf8] sm:$0xff]
  %v2885 = vld [vmem:[%s7 + $0x100] sm:$0xff]
  %v2886 = vld [vmem:[%s7 + $0x108] sm:$0xff]
  %v2887 = vld [vmem:[%s7 + $0x110] sm:$0xff]
  %v2888 = vld [vmem:[%s7 + $0x118] sm:$0xff]
  %v2889 = vld [vmem:[%s7 + $0x120] sm:$0xff]
  %v2890 = vld [vmem:[%s7 + $0x128] sm:$0xff]
  %v2891 = vld [vmem:[%s7 + $0x130] sm:$0xff]
  %v2892 = vld [vmem:[%s7 + $0x138] sm:$0xff]
  %v2893 = vld [vmem:[%s7 + $0x140] sm:$0xff]
  %v2894 = vld [vmem:[%s7 + $0x148] sm:$0xff]
  %v2895 = vld [vmem:[%s7 + $0x150] sm:$0xff]
  %v2896 = vld [vmem:[%s7 + $0x158] sm:$0xff]
  %v2897 = vld [vmem:[%s7 + $0x160] sm:$0xff]
  %v2898 = vld [vmem:[%s7 + $0x168] sm:$0xff]
  %v2899 = vld [vmem:[%s7 + $0x170] sm:$0xff]
  %v2900 = vld [vmem:[%s7 + $0x178] sm:$0xff]
  %v2901 = vld [vmem:[%s7 + $0x180] sm:$0xff]
  %v2902 = vld [vmem:[%s7 + $0x188] sm:$0xff]
  %v2903 = vld [vmem:[%s7 + $0x190] sm:$0xff]
  %v2904 = vld [vmem:[%s7 + $0x198] sm:$0xff]
  %v2905 = vld [vmem:[%s7 + $0x1a0] sm:$0xff]
  %v2906 = vld [vmem:[%s7 + $0x1a8] sm:$0xff]
  %v2907 = vld [vmem:[%s7 + $0x1b0] sm:$0xff]
  %v2908 = vld [vmem:[%s7 + $0x1b8] sm:$0xff]
  %v2909 = vld [vmem:[%s7 + $0x1c0] sm:$0xff]
  %v2910 = vld [vmem:[%s7 + $0x1c8] sm:$0xff]
  %v2911 = vld [vmem:[%s7 + $0x1d0] sm:$0xff]
  %v2912 = vld [vmem:[%s7 + $0x1d8] sm:$0xff]
  %v2913 = vld [vmem:[%s7 + $0x1e0] sm:$0xff]
  %v2914 = vld [vmem:[%s7 + $0x1e8] sm:$0xff]
  %v2915 = vld [vmem:[%s7 + $0x1f0] sm:$0xff]
  %v2916 = vld [vmem:[%s7 + $0x1f8] sm:$0xff]
  %v2917 = vld [vmem:[%s7 + $0x200] sm:$0xff]
  %v2918 = vld [vmem:[%s7 + $0x208] sm:$0xff]
  %v2919 = vld [vmem:[%s7 + $0x210] sm:$0xff]
  %v2920 = vld [vmem:[%s7 + $0x218] sm:$0xff]
  %v2921 = vld [vmem:[%s7 + $0x220] sm:$0xff]
  %v2922 = vld [vmem:[%s7 + $0x228] sm:$0xff]
  %v2923 = vld [vmem:[%s7 + $0x230] sm:$0xff]
  %v2924 = vld [vmem:[%s7 + $0x238] sm:$0xff]
  %v2925 = vld [vmem:[%s7 + $0x240] sm:$0xff]
  %v2926 = vld [vmem:[%s7 + $0x248] sm:$0xff]
  %v2927 = vld [vmem:[%s7 + $0x250] sm:$0xff]
  %v2928 = vld [vmem:[%s7 + $0x258] sm:$0xff]
  %v2929 = vld [vmem:[%s7 + $0x260] sm:$0xff]
  %v2930 = vld [vmem:[%s7 + $0x268] sm:$0xff]
  %v2931 = vld [vmem:[%s7 + $0x270] sm:$0xff]
  %v2932 = vld [vmem:[%s7 + $0x278] sm:$0xff]
  %v2933 = vld [vmem:[%s7 + $0x280] sm:$0xff]
  %v2934 = vld [vmem:[%s7 + $0x288] sm:$0xff]
  %v2935 = vld [vmem:[%s7 + $0x290] sm:$0xff]
  %v2936 = vld [vmem:[%s7 + $0x298] sm:$0xff]
  %v2937 = vld [vmem:[%s7 + $0x2a0] sm:$0xff]
  %v2938 = vld [vmem:[%s7 + $0x2a8] sm:$0xff]
  %v2939 = vld [vmem:[%s7 + $0x2b0] sm:$0xff]
  %v2940 = vld [vmem:[%s7 + $0x2b8] sm:$0xff]
  %v2941 = vld [vmem:[%s7 + $0x2c0] sm:$0xff]
  %v2942 = vld [vmem:[%s7 + $0x2c8] sm:$0xff]
  %v2943 = vld [vmem:[%s7 + $0x2d0] sm:$0xff]
  %v2944 = vld [vmem:[%s7 + $0x2d8] sm:$0xff]
  %v2945 = vld [vmem:[%s7 + $0x2e0] sm:$0xff]
  %v2946 = vld [vmem:[%s7 + $0x2e8] sm:$0xff]
  %v2947 = vld [vmem:[%s7 + $0x2f0] sm:$0xff]
  %v2948 = vld [vmem:[%s7 + $0x2f8] sm:$0xff]
  %v2949 = vld [vmem:[%s7 + $0x300] sm:$0xff]
  %v2950 = vld [vmem:[%s7 + $0x308] sm:$0xff]
  %v2951 = vld [vmem:[%s7 + $0x310] sm:$0xff]
  %v2952 = vld [vmem:[%s7 + $0x318] sm:$0xff]
  %v2953 = vld [vmem:[%s7 + $0x320] sm:$0xff]
  %v2954 = vld [vmem:[%s7 + $0x328] sm:$0xff]
  %v2955 = vld [vmem:[%s7 + $0x330] sm:$0xff]
  %v2956 = vld [vmem:[%s7 + $0x338] sm:$0xff]
  %v2957 = vld [vmem:[%s7 + $0x340] sm:$0xff]
  %v2958 = vld [vmem:[%s7 + $0x348] sm:$0xff]
  %v2959 = vld [vmem:[%s7 + $0x350] sm:$0xff]
  %v2960 = vld [vmem:[%s7 + $0x358] sm:$0xff]
  %v2961 = vld [vmem:[%s7 + $0x360] sm:$0xff]
  %v2962 = vld [vmem:[%s7 + $0x368] sm:$0xff]
  %v2963 = vld [vmem:[%s7 + $0x370] sm:$0xff]
  %v2964 = vld [vmem:[%s7 + $0x378] sm:$0xff]
  %v2965 = vld [vmem:[%s7 + $0x380] sm:$0xff]
  %v2966 = vld [vmem:[%s7 + $0x388] sm:$0xff]
  %v2967 = vld [vmem:[%s7 + $0x390] sm:$0xff]
  %v2968 = vld [vmem:[%s7 + $0x398] sm:$0xff]
  %v2969 = vld [vmem:[%s7 + $0x3a0] sm:$0xff]
  %v2970 = vld [vmem:[%s7 + $0x3a8] sm:$0xff]
  %v2971 = vld [vmem:[%s7 + $0x3b0] sm:$0xff]
  %v2972 = vld [vmem:[%s7 + $0x3b8] sm:$0xff]
  %v2973 = vld [vmem:[%s7 + $0x3c0] sm:$0xff]
  %v2974 = vld [vmem:[%s7 + $0x3c8] sm:$0xff]
  %v2975 = vld [vmem:[%s7 + $0x3d0] sm:$0xff]
  %v2976 = vld [vmem:[%s7 + $0x3d8] sm:$0xff]
  %v2977 = vld [vmem:[%s7 + $0x3e0] sm:$0xff]
  %v2978 = vld [vmem:[%s7 + $0x3e8] sm:$0xff]
  %v2979 = vld [vmem:[%s7 + $0x3f0] sm:$0xff]
  %v2980 = vld [vmem:[%s7 + $0x3f8] sm:$0xff]
  %v2981 = vld [vmem:[%s7 + $0x400] sm:$0xff]
  %v2982 = vld [vmem:[%s7 + $0x408] sm:$0xff]
  %v2983 = vld [vmem:[%s7 + $0x410] sm:$0xff]
  %v2984 = vld [vmem:[%s7 + $0x418] sm:$0xff]
  %v2985 = vld [vmem:[%s7 + $0x420] sm:$0xff]
  %v2986 = vld [vmem:[%s7 + $0x428] sm:$0xff]
  %v2987 = vld [vmem:[%s7 + $0x430] sm:$0xff]
  %v2988 = vld [vmem:[%s7 + $0x438] sm:$0xff]
  %v2989 = vld [vmem:[%s7 + $0x440] sm:$0xff]
  %v2990 = vld [vmem:[%s7 + $0x448] sm:$0xff]
  %v2991 = vld [vmem:[%s7 + $0x450] sm:$0xff]
  %v2992 = vld [vmem:[%s7 + $0x458] sm:$0xff]
  %v2993 = vld [vmem:[%s7 + $0x460] sm:$0xff]
  %v2994 = vld [vmem:[%s7 + $0x468] sm:$0xff]
  %v2995 = vld [vmem:[%s7 + $0x470] sm:$0xff]
  %v2996 = vld [vmem:[%s7 + $0x478] sm:$0xff]
  %v2997 = vld [vmem:[%s7 + $0x480] sm:$0xff]
  %v2998 = vld [vmem:[%s7 + $0x488] sm:$0xff]
  %v2999 = vld [vmem:[%s7 + $0x490] sm:$0xff]
  %v3000 = vld [vmem:[%s7 + $0x498] sm:$0xff]
  %v3001 = vld [vmem:[%s7 + $0x4a0] sm:$0xff]
  %v3002 = vld [vmem:[%s7 + $0x4a8] sm:$0xff]
  %v3003 = vld [vmem:[%s7 + $0x4b0] sm:$0xff]
  %v3004 = vld [vmem:[%s7 + $0x4b8] sm:$0xff]
  %v3005 = vld [vmem:[%s7 + $0x4c0] sm:$0xff]
  %v3006 = vld [vmem:[%s7 + $0x4c8] sm:$0xff]
  %v3007 = vld [vmem:[%s7 + $0x4d0] sm:$0xff]
  %v3008 = vld [vmem:[%s7 + $0x4d8] sm:$0xff]
  %v3009 = vld [vmem:[%s7 + $0x4e0] sm:$0xff]
  %v3010 = vld [vmem:[%s7 + $0x4e8] sm:$0xff]
  %v3011 = vld [vmem:[%s7 + $0x4f0] sm:$0xff]
  %v3012 = vld [vmem:[%s7 + $0x4f8] sm:$0xff]
  %v3013 = vld [vmem:[%s7 + $0x500] sm:$0xff]
  %v3014 = vld [vmem:[%s7 + $0x508] sm:$0xff]
  %v3015 = vld [vmem:[%s7 + $0x510] sm:$0xff]
  %v3016 = vld [vmem:[%s7 + $0x518] sm:$0xff]
  %v3017 = vld [vmem:[%s7 + $0x520] sm:$0xff]
  %v3018 = vld [vmem:[%s7 + $0x528] sm:$0xff]
  %v3019 = vld [vmem:[%s7 + $0x530] sm:$0xff]
  %v3020 = vld [vmem:[%s7 + $0x538] sm:$0xff]
  %v3021 = vld [vmem:[%s7 + $0x540] sm:$0xff]
  %v3022 = vld [vmem:[%s7 + $0x548] sm:$0xff]
  %v3023 = vld [vmem:[%s7 + $0x550] sm:$0xff]
  %v3024 = vld [vmem:[%s7 + $0x558] sm:$0xff]
  %v3025 = vld [vmem:[%s7 + $0x560] sm:$0xff]
  %v3026 = vld [vmem:[%s7 + $0x568] sm:$0xff]
  %v3027 = vld [vmem:[%s7 + $0x570] sm:$0xff]
  %v3028 = vld [vmem:[%s7 + $0x578] sm:$0xff]
  %v3029 = vld [vmem:[%s7 + $0x580] sm:$0xff]
  %v3030 = vld [vmem:[%s7 + $0x588] sm:$0xff]
  %v3031 = vld [vmem:[%s7 + $0x590] sm:$0xff]
  %v3032 = vld [vmem:[%s7 + $0x598] sm:$0xff]
  %v3033 = vld [vmem:[%s7 + $0x5a0] sm:$0xff]
  %v3034 = vld [vmem:[%s7 + $0x5a8] sm:$0xff]
  %v3035 = vld [vmem:[%s7 + $0x5b0] sm:$0xff]
  %v3036 = vld [vmem:[%s7 + $0x5b8] sm:$0xff]
  %v3037 = vld [vmem:[%s7 + $0x5c0] sm:$0xff]
  %v3038 = vld [vmem:[%s7 + $0x5c8] sm:$0xff]
  %v3039 = vld [vmem:[%s7 + $0x5d0] sm:$0xff]
  %v3040 = vld [vmem:[%s7 + $0x5d8] sm:$0xff]
  %v3041 = vld [vmem:[%s7 + $0x5e0] sm:$0xff]
  %v3042 = vld [vmem:[%s7 + $0x5e8] sm:$0xff]
  %v3043 = vld [vmem:[%s7 + $0x5f0] sm:$0xff]
  %v3044 = vld [vmem:[%s7 + $0x5f8] sm:$0xff]
  %v3045 = vld [vmem:[%s7 + $0x600] sm:$0xff]
  %v3046 = vld [vmem:[%s7 + $0x608] sm:$0xff]
  %v3047 = vld [vmem:[%s7 + $0x610] sm:$0xff]
  %v3048 = vld [vmem:[%s7 + $0x618] sm:$0xff]
  %v3049 = vld [vmem:[%s7 + $0x620] sm:$0xff]
  %v3050 = vld [vmem:[%s7 + $0x628] sm:$0xff]
  %v3051 = vld [vmem:[%s7 + $0x630] sm:$0xff]
  %v3052 = vld [vmem:[%s7 + $0x638] sm:$0xff]
  %v3053 = vld [vmem:[%s7 + $0x640] sm:$0xff]
  %v3054 = vld [vmem:[%s7 + $0x648] sm:$0xff]
  %v3055 = vld [vmem:[%s7 + $0x650] sm:$0xff]
  %v3056 = vld [vmem:[%s7 + $0x658] sm:$0xff]
  %v3057 = vld [vmem:[%s7 + $0x660] sm:$0xff]
  %v3058 = vld [vmem:[%s7 + $0x668] sm:$0xff]
  %v3059 = vld [vmem:[%s7 + $0x670] sm:$0xff]
  %v3060 = vld [vmem:[%s7 + $0x678] sm:$0xff]
  %v3061 = vld [vmem:[%s7 + $0x680] sm:$0xff]
  %v3062 = vld [vmem:[%s7 + $0x688] sm:$0xff]
  %v3063 = vld [vmem:[%s7 + $0x690] sm:$0xff]
  %v3064 = vld [vmem:[%s7 + $0x698] sm:$0xff]
  %v3065 = vld [vmem:[%s7 + $0x6a0] sm:$0xff]
  %v3066 = vld [vmem:[%s7 + $0x6a8] sm:$0xff]
  %v3067 = vld [vmem:[%s7 + $0x6b0] sm:$0xff]
  %v3068 = vld [vmem:[%s7 + $0x6b8] sm:$0xff]
  %v3069 = vld [vmem:[%s7 + $0x6c0] sm:$0xff]
  %v3070 = vld [vmem:[%s7 + $0x6c8] sm:$0xff]
  %v3071 = vld [vmem:[%s7 + $0x6d0] sm:$0xff]
  %v3072 = vld [vmem:[%s7 + $0x6d8] sm:$0xff]
  %v3073 = vld [vmem:[%s7 + $0x6e0] sm:$0xff]
  %v3074 = vld [vmem:[%s7 + $0x6e8] sm:$0xff]
  %v3075 = vld [vmem:[%s7 + $0x6f0] sm:$0xff]
  %v3076 = vld [vmem:[%s7 + $0x6f8] sm:$0xff]
  %v3077 = vld [vmem:[%s7 + $0x700] sm:$0xff]
  %v3078 = vld [vmem:[%s7 + $0x708] sm:$0xff]
  %v3079 = vld [vmem:[%s7 + $0x710] sm:$0xff]
  %v3080 = vld [vmem:[%s7 + $0x718] sm:$0xff]
  %v3081 = vld [vmem:[%s7 + $0x720] sm:$0xff]
  %v3082 = vld [vmem:[%s7 + $0x728] sm:$0xff]
  %v3083 = vld [vmem:[%s7 + $0x730] sm:$0xff]
  %v3084 = vld [vmem:[%s7 + $0x738] sm:$0xff]
  %v3085 = vld [vmem:[%s7 + $0x740] sm:$0xff]
  %v3086 = vld [vmem:[%s7 + $0x748] sm:$0xff]
  %v3087 = vld [vmem:[%s7 + $0x750] sm:$0xff]
  %v3088 = vld [vmem:[%s7 + $0x758] sm:$0xff]
  %v3089 = vld [vmem:[%s7 + $0x760] sm:$0xff]
  %v3090 = vld [vmem:[%s7 + $0x768] sm:$0xff]
  %v3091 = vld [vmem:[%s7 + $0x770] sm:$0xff]
  %v3092 = vld [vmem:[%s7 + $0x778] sm:$0xff]
  %v3093 = vld [vmem:[%s7 + $0x780] sm:$0xff]
  %v3094 = vld [vmem:[%s7 + $0x788] sm:$0xff]
  %v3095 = vld [vmem:[%s7 + $0x790] sm:$0xff]
  %v3096 = vld [vmem:[%s7 + $0x798] sm:$0xff]
  %v3097 = vld [vmem:[%s7 + $0x7a0] sm:$0xff]
  %v3098 = vld [vmem:[%s7 + $0x7a8] sm:$0xff]
  %v3099 = vld [vmem:[%s7 + $0x7b0] sm:$0xff]
  %v3100 = vld [vmem:[%s7 + $0x7b8] sm:$0xff]
  %v3101 = vld [vmem:[%s7 + $0x7c0] sm:$0xff]
  %v3102 = vld [vmem:[%s7 + $0x7c8] sm:$0xff]
  %v3103 = vld [vmem:[%s7 + $0x7d0] sm:$0xff]
  %v3104 = vld [vmem:[%s7 + $0x7d8] sm:$0xff]
  %v3105 = vld [vmem:[%s7 + $0x7e0] sm:$0xff]
  %v3106 = vld [vmem:[%s7 + $0x7e8] sm:$0xff]
  %v3107 = vld [vmem:[%s7 + $0x7f0] sm:$0xff]
  %v3108 = vld [vmem:[%s7 + $0x7f8] sm:$0xff]
  %v3109 = vld [vmem:[%s7 + $0x800] sm:$0xff]
  %v3110 = vld [vmem:[%s7 + $0x808] sm:$0xff]
  %v3111 = vld [vmem:[%s7 + $0x810] sm:$0xff]
  %v3112 = vld [vmem:[%s7 + $0x818] sm:$0xff]
  %v3113 = vld [vmem:[%s7 + $0x820] sm:$0xff]
  %v3114 = vld [vmem:[%s7 + $0x828] sm:$0xff]
  %v3115 = vld [vmem:[%s7 + $0x830] sm:$0xff]
  %v3116 = vld [vmem:[%s7 + $0x838] sm:$0xff]
  %v3117 = vld [vmem:[%s7 + $0x840] sm:$0xff]
  %v3118 = vld [vmem:[%s7 + $0x848] sm:$0xff]
  %v3119 = vld [vmem:[%s7 + $0x850] sm:$0xff]
  %v3120 = vld [vmem:[%s7 + $0x858] sm:$0xff]
  %v3121 = vld [vmem:[%s7 + $0x860] sm:$0xff]
  %v3122 = vld [vmem:[%s7 + $0x868] sm:$0xff]
  %v3123 = vld [vmem:[%s7 + $0x870] sm:$0xff]
  %v3124 = vld [vmem:[%s7 + $0x878] sm:$0xff]
  %v3125 = vld [vmem:[%s7 + $0x880] sm:$0xff]
  %v3126 = vld [vmem:[%s7 + $0x888] sm:$0xff]
  %v3127 = vld [vmem:[%s7 + $0x890] sm:$0xff]
  %v3128 = vld [vmem:[%s7 + $0x898] sm:$0xff]
  %v3129 = vld [vmem:[%s7 + $0x8a0] sm:$0xff]
  %v3130 = vld [vmem:[%s7 + $0x8a8] sm:$0xff]
  %v3131 = vld [vmem:[%s7 + $0x8b0] sm:$0xff]
  %v3132 = vld [vmem:[%s7 + $0x8b8] sm:$0xff]
  %v3133 = vld [vmem:[%s7 + $0x8c0] sm:$0xff]
  %v3134 = vld [vmem:[%s7 + $0x8c8] sm:$0xff]
  %v3135 = vld [vmem:[%s7 + $0x8d0] sm:$0xff]
  %v3136 = vld [vmem:[%s7 + $0x8d8] sm:$0xff]
  %v3137 = vld [vmem:[%s7 + $0x8e0] sm:$0xff]
  %v3138 = vld [vmem:[%s7 + $0x8e8] sm:$0xff]
  %v3139 = vld [vmem:[%s7 + $0x8f0] sm:$0xff]
  %v3140 = vld [vmem:[%s7 + $0x8f8] sm:$0xff]
  %v3142 = vsel %vm97, %v2822, 0
  %v3145 = vsel %vm97, %v2824, 0
  %v3148 = vsel %vm97, %v2826, 0
  %v3151 = vsel %vm97, %v2828, 0
  %v3154 = vsel %vm97, %v2830, 0
  %v3157 = vsel %vm97, %v2832, 0
  %v3160 = vsel %vm97, %v2834, 0
  %v3163 = vsel %vm97, %v2836, 0
  %v3166 = vsel %vm97, %v2838, 0
  %v3169 = vsel %vm97, %v2840, 0
  %v3172 = vsel %vm97, %v2842, 0
  %v3175 = vsel %vm97, %v2844, 0
  %v3178 = vsel %vm97, %v2846, 0
  %v3181 = vsel %vm97, %v2848, 0
  %v3184 = vsel %vm97, %v2850, 0
  %v3187 = vsel %vm97, %v2852, 0
  %3189 = vmatprep.subr.mxu0 %v2854
  %3190 = vmatpush1.msra.mxu0 %v2853
  %3191 = vmatprep.subr.mxu0 %v2866
  %3192 = vmatpush1.msra.mxu0 %v2865
  %3193 = vmatprep.subr.mxu0 %v2878
  %3194 = vmatpush1.msra.mxu0 %v2877
  %3195 = vmatprep.subr.mxu0 %v2890
  %3196 = vmatpush1.msra.mxu0 %v2889
  %3197 = vmatprep.subr.mxu0 %v2902
  %3198 = vmatpush1.msra.mxu0 %v2901
  %3199 = vmatprep.subr.mxu0 %v2914
  %3200 = vmatpush1.msra.mxu0 %v2913
  %3201 = vmatprep.subr.mxu0 %v2926
  %3202 = vmatpush1.msra.mxu0 %v2925
  %3203 = vmatprep.subr.mxu0 %v2938
  %3204 = vmatpush1.msra.mxu0 %v2937
  %3205 = vmatprep.subr.mxu0 %v2950
  %3206 = vmatpush1.msra.mxu0 %v2949
  %3207 = vmatprep.subr.mxu0 %v2962
  %3208 = vmatpush1.msra.mxu0 %v2961
  %3209 = vmatprep.subr.mxu0 %v2974
  %3210 = vmatpush1.msra.mxu0 %v2973
  %3211 = vmatprep.subr.mxu0 %v2986
  %3212 = vmatpush1.msra.mxu0 %v2985
  %3213 = vmatprep.subr.mxu0 %v2998
  %3214 = vmatpush1.msra.mxu0 %v2997
  %3215 = vmatprep.subr.mxu0 %v3010
  %3216 = vmatpush1.msra.mxu0 %v3009
  %3217 = vmatprep.subr.mxu0 %v3022
  %3218 = vmatpush1.msra.mxu0 %v3021
  %3219 = vmatprep.subr.mxu0 %v3034
  %3220 = vmatpush1.msra.mxu0 %v3033
  %3221 = vmatprep.subr.mxu0 %v3046
  %3222 = vmatpush1.msra.mxu0 %v3045
  %3223 = vmatprep.subr.mxu0 %v3058
  %3224 = vmatpush1.msra.mxu0 %v3057
  %3225 = vmatprep.subr.mxu0 %v3070
  %3226 = vmatpush1.msra.mxu0 %v3069
  %3227 = vmatprep.subr.mxu0 %v3082
  %3228 = vmatpush1.msra.mxu0 %v3081
  %3229 = vmatprep.subr.mxu0 %v3094
  %3230 = vmatpush1.msra.mxu0 %v3093
  %3231 = vmatprep.subr.mxu0 %v3106
  %3232 = vmatpush1.msra.mxu0 %v3105
  %3233 = vmatprep.subr.mxu0 %v3118
  %3234 = vmatpush1.msra.mxu0 %v3117
  %3235 = vmatprep.subr.mxu0 %v3130
  %3236 = vmatpush1.msra.mxu0 %v3129
  %3237 = vmatprep.subr.mxu0 0.0
  %3238 = vmatpush1.msra.mxu0 0.0
  %3239 = vmatprep.subr.mxu0 0.0
  %3240 = vmatpush1.msra.mxu0 0.0
  %3241 = vmatprep.subr.mxu0 0.0
  %3242 = vmatpush1.msra.mxu0 0.0
  %3243 = vmatprep.subr.mxu0 0.0
  %3244 = vmatpush1.msra.mxu0 0.0
  %3245 = vmatprep.subr.mxu0 0.0
  %3246 = vmatpush1.msra.mxu0 0.0
  %3247 = vmatprep.subr.mxu0 0.0
  %3248 = vmatpush1.msra.mxu0 0.0
  %3249 = vmatprep.subr.mxu0 0.0
  %3250 = vmatpush1.msra.mxu0 0.0
  %3251 = vmatprep.subr.mxu0 0.0
  %3252 = vmatpush1.msra.mxu0 0.0
  %3253 = vmatprep.mubr.f32.mxu0 %v3142
  %3254 = vmatmul.mubr.f32.gmra.mrb[0].mxu0 %v2821
  %v3255 = vpop.f32.mrb[0].mxu0
  %v3256 = vadd.f32 0.0, %v3255
  %v3257 = vpop.f32.mrb[0].mxu0
  %v3258 = vadd.f32 0.0, %v3257
  %3259 = vmatprep.mubr.f32.mxu0 %v3145
  %3260 = vmatmul.mubr.f32.gmra.mrb[0].mxu0 %v2823
  %v3261 = vpop.f32.mrb[0].mxu0
  %v3262 = vadd.f32 0.0, %v3261
  %v3263 = vpop.f32.mrb[0].mxu0
  %v3264 = vadd.f32 0.0, %v3263
  %3265 = vmatprep.mubr.f32.mxu0 %v3148
  %3266 = vmatmul.mubr.f32.gmra.mrb[0].mxu0 %v2825
  %v3267 = vpop.f32.mrb[0].mxu0
  %v3268 = vadd.f32 0.0, %v3267
  %v3269 = vpop.f32.mrb[0].mxu0
  %v3270 = vadd.f32 0.0, %v3269
  %3271 = vmatprep.mubr.f32.mxu0 %v3151
  %3272 = vmatmul.mubr.f32.gmra.mrb[0].mxu0 %v2827
  %v3273 = vpop.f32.mrb[0].mxu0
  %v3274 = vadd.f32 0.0, %v3273
  %v3275 = vpop.f32.mrb[0].mxu0
  %v3276 = vadd.f32 0.0, %v3275
  %3277 = vmatprep.mubr.f32.mxu0 %v3154
  %3278 = vmatmul.mubr.f32.gmra.mrb[0].mxu0 %v2829
  %v3279 = vpop.f32.mrb[0].mxu0
  %v3280 = vadd.f32 0.0, %v3279
  %v3281 = vpop.f32.mrb[0].mxu0
  %v3282 = vadd.f32 0.0, %v3281
  %3283 = vmatprep.mubr.f32.mxu0 %v3157
  %3284 = vmatmul.mubr.f32.gmra.mrb[0].mxu0 %v2831
  %v3285 = vpop.f32.mrb[0].mxu0
  %v3286 = vadd.f32 0.0, %v3285
  %v3287 = vpop.f32.mrb[0].mxu0
  %v3288 = vadd.f32 0.0, %v3287
  %3289 = vmatprep.mubr.f32.mxu0 %v3160
  %3290 = vmatmul.mubr.f32.gmra.mrb[0].mxu0 %v2833
  %v3291 = vpop.f32.mrb[0].mxu0
  %v3292 = vadd.f32 0.0, %v3291
  %v3293 = vpop.f32.mrb[0].mxu0
  %v3294 = vadd.f32 0.0, %v3293
  %3295 = vmatprep.mubr.f32.mxu0 %v3163
  %3296 = vmatmul.mubr.f32.gmra.mrb[0].mxu0 %v2835
  %v3297 = vpop.f32.mrb[0].mxu0
  %v3298 = vadd.f32 0.0, %v3297
  %v3299 = vpop.f32.mrb[0].mxu0
  %v3300 = vadd.f32 0.0, %v3299
  %3301 = vmatprep.mubr.f32.mxu0 %v3166
  %3302 = vmatmul.mubr.f32.gmra.mrb[0].mxu0 %v2837
  %v3303 = vpop.f32.mrb[0].mxu0
  %v3304 = vadd.f32 0.0, %v3303
  %v3305 = vpop.f32.mrb[0].mxu0
  %v3306 = vadd.f32 0.0, %v3305
  %3307 = vmatprep.mubr.f32.mxu0 %v3169
  %3308 = vmatmul.mubr.f32.gmra.mrb[0].mxu0 %v2839
  %v3309 = vpop.f32.mrb[0].mxu0
  %v3310 = vadd.f32 0.0, %v3309
  %v3311 = vpop.f32.mrb[0].mxu0
  %v3312 = vadd.f32 0.0, %v3311
  %3313 = vmatprep.mubr.f32.mxu0 %v3172
  %3314 = vmatmul.mubr.f32.gmra.mrb[0].mxu0 %v2841
  %v3315 = vpop.f32.mrb[0].mxu0
  %v3316 = vadd.f32 0.0, %v3315
  %v3317 = vpop.f32.mrb[0].mxu0
  %v3318 = vadd.f32 0.0, %v3317
  %3319 = vmatprep.mubr.f32.mxu0 %v3175
  %3320 = vmatmul.mubr.f32.gmra.mrb[0].mxu0 %v2843
  %v3321 = vpop.f32.mrb[0].mxu0
  %v3322 = vadd.f32 0.0, %v3321
  %v3323 = vpop.f32.mrb[0].mxu0
  %v3324 = vadd.f32 0.0, %v3323
  %3325 = vmatprep.mubr.f32.mxu0 %v3178
  %3326 = vmatmul.mubr.f32.gmra.mrb[0].mxu0 %v2845
  %v3327 = vpop.f32.mrb[0].mxu0
  %v3328 = vadd.f32 0.0, %v3327
  %v3329 = vpop.f32.mrb[0].mxu0
  %v3330 = vadd.f32 0.0, %v3329
  %3331 = vmatprep.mubr.f32.mxu0 %v3181
  %3332 = vmatmul.mubr.f32.gmra.mrb[0].mxu0 %v2847
  %v3333 = vpop.f32.mrb[0].mxu0
  %v3334 = vadd.f32 0.0, %v3333
  %v3335 = vpop.f32.mrb[0].mxu0
  %v3336 = vadd.f32 0.0, %v3335
  %3337 = vmatprep.mubr.f32.mxu0 %v3184
  %3338 = vmatmul.mubr.f32.gmra.mrb[0].mxu0 %v2849
  %v3339 = vpop.f32.mrb[0].mxu0
  %v3340 = vadd.f32 0.0, %v3339
  %v3341 = vpop.f32.mrb[0].mxu0
  %v3342 = vadd.f32 0.0, %v3341
  %3343 = vmatprep.mubr.f32.mxu0 %v3187
  %3344 = vmatmul.mubr.f32.gmra.mrb[0].mxu0 %v2851
  %v3345 = vpop.f32.mrb[0].mxu0
  %v3346 = vadd.f32 0.0, %v3345
  %v3347 = vpop.f32.mrb[0].mxu0
  %v3348 = vadd.f32 0.0, %v3347
  %3349 = vdwg.mxu0
  %3350 = vmatprep.subr.mxu0 %v2856
  %3351 = vmatpush1.msra.mxu0 %v2855
  %3352 = vmatprep.subr.mxu0 %v2868
  %3353 = vmatpush1.msra.mxu0 %v2867
  %3354 = vmatprep.subr.mxu0 %v2880
  %3355 = vmatpush1.msra.mxu0 %v2879
  %3356 = vmatprep.subr.mxu0 %v2892
  %3357 = vmatpush1.msra.mxu0 %v2891
  %3358 = vmatprep.subr.mxu0 %v2904
  %3359 = vmatpush1.msra.mxu0 %v2903
  %3360 = vmatprep.subr.mxu0 %v2916
  %3361 = vmatpush1.msra.mxu0 %v2915
  %3362 = vmatprep.subr.mxu0 %v2928
  %3363 = vmatpush1.msra.mxu0 %v2927
  %3364 = vmatprep.subr.mxu0 %v2940
  %3365 = vmatpush1.msra.mxu0 %v2939
  %3366 = vmatprep.subr.mxu0 %v2952
  %3367 = vmatpush1.msra.mxu0 %v2951
  %3368 = vmatprep.subr.mxu0 %v2964
  %3369 = vmatpush1.msra.mxu0 %v2963
  %3370 = vmatprep.subr.mxu0 %v2976
  %3371 = vmatpush1.msra.mxu0 %v2975
  %3372 = vmatprep.subr.mxu0 %v2988
  %3373 = vmatpush1.msra.mxu0 %v2987
  %3374 = vmatprep.subr.mxu0 %v3000
  %3375 = vmatpush1.msra.mxu0 %v2999
  %3376 = vmatprep.subr.mxu0 %v3012
  %3377 = vmatpush1.msra.mxu0 %v3011
  %3378 = vmatprep.subr.mxu0 %v3024
  %3379 = vmatpush1.msra.mxu0 %v3023
  %3380 = vmatprep.subr.mxu0 %v3036
  %3381 = vmatpush1.msra.mxu0 %v3035
  %3382 = vmatprep.subr.mxu0 %v3048
  %3383 = vmatpush1.msra.mxu0 %v3047
  %3384 = vmatprep.subr.mxu0 %v3060
  %3385 = vmatpush1.msra.mxu0 %v3059
  %3386 = vmatprep.subr.mxu0 %v3072
  %3387 = vmatpush1.msra.mxu0 %v3071
  %3388 = vmatprep.subr.mxu0 %v3084
  %3389 = vmatpush1.msra.mxu0 %v3083
  %3390 = vmatprep.subr.mxu0 %v3096
  %3391 = vmatpush1.msra.mxu0 %v3095
  %3392 = vmatprep.subr.mxu0 %v3108
  %3393 = vmatpush1.msra.mxu0 %v3107
  %3394 = vmatprep.subr.mxu0 %v3120
  %3395 = vmatpush1.msra.mxu0 %v3119
  %3396 = vmatprep.subr.mxu0 %v3132
  %3397 = vmatpush1.msra.mxu0 %v3131
  %3398 = vmatprep.subr.mxu0 0.0
  %3399 = vmatpush1.msra.mxu0 0.0
  %3400 = vmatprep.subr.mxu0 0.0
  %3401 = vmatpush1.msra.mxu0 0.0
  %3402 = vmatprep.subr.mxu0 0.0
  %3403 = vmatpush1.msra.mxu0 0.0
  %3404 = vmatprep.subr.mxu0 0.0
  %3405 = vmatpush1.msra.mxu0 0.0
  %3406 = vmatprep.subr.mxu0 0.0
  %3407 = vmatpush1.msra.mxu0 0.0
  %3408 = vmatprep.subr.mxu0 0.0
  %3409 = vmatpush1.msra.mxu0 0.0
  %3410 = vmatprep.subr.mxu0 0.0
  %3411 = vmatpush1.msra.mxu0 0.0
  %3412 = vmatprep.subr.mxu0 0.0
  %3413 = vmatpush1.msra.mxu0 0.0
  %3414 = vmatprep.mubr.f32.mxu0 %v3142
  %3415 = vmatmul.mubr.f32.gmra.mrb[0].mxu0 %v2821
  %v3416 = vpop.f32.mrb[0].mxu0
  %v3417 = vadd.f32 0.0, %v3416
  %v3418 = vpop.f32.mrb[0].mxu0
  %v3419 = vadd.f32 0.0, %v3418
  %3420 = vmatprep.mubr.f32.mxu0 %v3145
  %3421 = vmatmul.mubr.f32.gmra.mrb[0].mxu0 %v2823
  %v3422 = vpop.f32.mrb[0].mxu0
  %v3423 = vadd.f32 0.0, %v3422
  %v3424 = vpop.f32.mrb[0].mxu0
  %v3425 = vadd.f32 0.0, %v3424
  %3426 = vmatprep.mubr.f32.mxu0 %v3148
  %3427 = vmatmul.mubr.f32.gmra.mrb[0].mxu0 %v2825
  %v3428 = vpop.f32.mrb[0].mxu0
  %v3429 = vadd.f32 0.0, %v3428
  %v3430 = vpop.f32.mrb[0].mxu0
  %v3431 = vadd.f32 0.0, %v3430
  %3432 = vmatprep.mubr.f32.mxu0 %v3151
  %3433 = vmatmul.mubr.f32.gmra.mrb[0].mxu0 %v2827
  %v3434 = vpop.f32.mrb[0].mxu0
  %v3435 = vadd.f32 0.0, %v3434
  %v3436 = vpop.f32.mrb[0].mxu0
  %v3437 = vadd.f32 0.0, %v3436
  %3438 = vmatprep.mubr.f32.mxu0 %v3154
  %3439 = vmatmul.mubr.f32.gmra.mrb[0].mxu0 %v2829
  %v3440 = vpop.f32.mrb[0].mxu0
  %v3441 = vadd.f32 0.0, %v3440
  %v3442 = vpop.f32.mrb[0].mxu0
  %v3443 = vadd.f32 0.0, %v3442
  %3444 = vmatprep.mubr.f32.mxu0 %v3157
  %3445 = vmatmul.mubr.f32.gmra.mrb[0].mxu0 %v2831
  %v3446 = vpop.f32.mrb[0].mxu0
  %v3447 = vadd.f32 0.0, %v3446
  %v3448 = vpop.f32.mrb[0].mxu0
  %v3449 = vadd.f32 0.0, %v3448
  %3450 = vmatprep.mubr.f32.mxu0 %v3160
  %3451 = vmatmul.mubr.f32.gmra.mrb[0].mxu0 %v2833
  %v3452 = vpop.f32.mrb[0].mxu0
  %v3453 = vadd.f32 0.0, %v3452
  %v3454 = vpop.f32.mrb[0].mxu0
  %v3455 = vadd.f32 0.0, %v3454
  %3456 = vmatprep.mubr.f32.mxu0 %v3163
  %3457 = vmatmul.mubr.f32.gmra.mrb[0].mxu0 %v2835
  %v3458 = vpop.f32.mrb[0].mxu0
  %v3459 = vadd.f32 0.0, %v3458
  %v3460 = vpop.f32.mrb[0].mxu0
  %v3461 = vadd.f32 0.0, %v3460
  %3462 = vmatprep.mubr.f32.mxu0 %v3166
  %3463 = vmatmul.mubr.f32.gmra.mrb[0].mxu0 %v2837
  %v3464 = vpop.f32.mrb[0].mxu0
  %v3465 = vadd.f32 0.0, %v3464
  %v3466 = vpop.f32.mrb[0].mxu0
  %v3467 = vadd.f32 0.0, %v3466
  %3468 = vmatprep.mubr.f32.mxu0 %v3169
  %3469 = vmatmul.mubr.f32.gmra.mrb[0].mxu0 %v2839
  %v3470 = vpop.f32.mrb[0].mxu0
  %v3471 = vadd.f32 0.0, %v3470
  %v3472 = vpop.f32.mrb[0].mxu0
  %v3473 = vadd.f32 0.0, %v3472
  %3474 = vmatprep.mubr.f32.mxu0 %v3172
  %3475 = vmatmul.mubr.f32.gmra.mrb[0].mxu0 %v2841
  %v3476 = vpop.f32.mrb[0].mxu0
  %v3477 = vadd.f32 0.0, %v3476
  %v3478 = vpop.f32.mrb[0].mxu0
  %v3479 = vadd.f32 0.0, %v3478
  %3480 = vmatprep.mubr.f32.mxu0 %v3175
  %3481 = vmatmul.mubr.f32.gmra.mrb[0].mxu0 %v2843
  %v3482 = vpop.f32.mrb[0].mxu0
  %v3483 = vadd.f32 0.0, %v3482
  %v3484 = vpop.f32.mrb[0].mxu0
  %v3485 = vadd.f32 0.0, %v3484
  %3486 = vmatprep.mubr.f32.mxu0 %v3178
  %3487 = vmatmul.mubr.f32.gmra.mrb[0].mxu0 %v2845
  %v3488 = vpop.f32.mrb[0].mxu0
  %v3489 = vadd.f32 0.0, %v3488
  %v3490 = vpop.f32.mrb[0].mxu0
  %v3491 = vadd.f32 0.0, %v3490
  %3492 = vmatprep.mubr.f32.mxu0 %v3181
  %3493 = vmatmul.mubr.f32.gmra.mrb[0].mxu0 %v2847
  %v3494 = vpop.f32.mrb[0].mxu0
  %v3495 = vadd.f32 0.0, %v3494
  %v3496 = vpop.f32.mrb[0].mxu0
  %v3497 = vadd.f32 0.0, %v3496
  %3498 = vmatprep.mubr.f32.mxu0 %v3184
  %3499 = vmatmul.mubr.f32.gmra.mrb[0].mxu0 %v2849
  %v3500 = vpop.f32.mrb[0].mxu0
  %v3501 = vadd.f32 0.0, %v3500
  %v3502 = vpop.f32.mrb[0].mxu0
  %v3503 = vadd.f32 0.0, %v3502
  %3504 = vmatprep.mubr.f32.mxu0 %v3187
  %3505 = vmatmul.mubr.f32.gmra.mrb[0].mxu0 %v2851
  %v3506 = vpop.f32.mrb[0].mxu0
  %v3507 = vadd.f32 0.0, %v3506
  %v3508 = vpop.f32.mrb[0].mxu0
  %v3509 = vadd.f32 0.0, %v3508
  %3510 = vdwg.mxu0
  %3511 = vmatprep.subr.mxu0 %v2858
  %3512 = vmatpush1.msra.mxu0 %v2857
  %3513 = vmatprep.subr.mxu0 %v2870
  %3514 = vmatpush1.msra.mxu0 %v2869
  %3515 = vmatprep.subr.mxu0 %v2882
  %3516 = vmatpush1.msra.mxu0 %v2881
  %3517 = vmatprep.subr.mxu0 %v2894
  %3518 = vmatpush1.msra.mxu0 %v2893
  %3519 = vmatprep.subr.mxu0 %v2906
  %3520 = vmatpush1.msra.mxu0 %v2905
  %3521 = vmatprep.subr.mxu0 %v2918
  %3522 = vmatpush1.msra.mxu0 %v2917
  %3523 = vmatprep.subr.mxu0 %v2930
  %3524 = vmatpush1.msra.mxu0 %v2929
  %3525 = vmatprep.subr.mxu0 %v2942
  %3526 = vmatpush1.msra.mxu0 %v2941
  %3527 = vmatprep.subr.mxu0 %v2954
  %3528 = vmatpush1.msra.mxu0 %v2953
  %3529 = vmatprep.subr.mxu0 %v2966
  %3530 = vmatpush1.msra.mxu0 %v2965
  %3531 = vmatprep.subr.mxu0 %v2978
  %3532 = vmatpush1.msra.mxu0 %v2977
  %3533 = vmatprep.subr.mxu0 %v2990
  %3534 = vmatpush1.msra.mxu0 %v2989
  %3535 = vmatprep.subr.mxu0 %v3002
  %3536 = vmatpush1.msra.mxu0 %v3001
  %3537 = vmatprep.subr.mxu0 %v3014
  %3538 = vmatpush1.msra.mxu0 %v3013
  %3539 = vmatprep.subr.mxu0 %v3026
  %3540 = vmatpush1.msra.mxu0 %v3025
  %3541 = vmatprep.subr.mxu0 %v3038
  %3542 = vmatpush1.msra.mxu0 %v3037
  %3543 = vmatprep.subr.mxu0 %v3050
  %3544 = vmatpush1.msra.mxu0 %v3049
  %3545 = vmatprep.subr.mxu0 %v3062
  %3546 = vmatpush1.msra.mxu0 %v3061
  %3547 = vmatprep.subr.mxu0 %v3074
  %3548 = vmatpush1.msra.mxu0 %v3073
  %3549 = vmatprep.subr.mxu0 %v3086
  %3550 = vmatpush1.msra.mxu0 %v3085
  %3551 = vmatprep.subr.mxu0 %v3098
  %3552 = vmatpush1.msra.mxu0 %v3097
  %3553 = vmatprep.subr.mxu0 %v3110
  %3554 = vmatpush1.msra.mxu0 %v3109
  %3555 = vmatprep.subr.mxu0 %v3122
  %3556 = vmatpush1.msra.mxu0 %v3121
  %3557 = vmatprep.subr.mxu0 %v3134
  %3558 = vmatpush1.msra.mxu0 %v3133
  %3559 = vmatprep.subr.mxu0 0.0
  %3560 = vmatpush1.msra.mxu0 0.0
  %3561 = vmatprep.subr.mxu0 0.0
  %3562 = vmatpush1.msra.mxu0 0.0
  %3563 = vmatprep.subr.mxu0 0.0
  %3564 = vmatpush1.msra.mxu0 0.0
  %3565 = vmatprep.subr.mxu0 0.0
  %3566 = vmatpush1.msra.mxu0 0.0
  %3567 = vmatprep.subr.mxu0 0.0
  %3568 = vmatpush1.msra.mxu0 0.0
  %3569 = vmatprep.subr.mxu0 0.0
  %3570 = vmatpush1.msra.mxu0 0.0
  %3571 = vmatprep.subr.mxu0 0.0
  %3572 = vmatpush1.msra.mxu0 0.0
  %3573 = vmatprep.subr.mxu0 0.0
  %3574 = vmatpush1.msra.mxu0 0.0
  %3575 = vmatprep.mubr.f32.mxu0 %v3142
  %3576 = vmatmul.mubr.f32.gmra.mrb[0].mxu0 %v2821
  %v3577 = vpop.f32.mrb[0].mxu0
  %v3578 = vadd.f32 0.0, %v3577
  %v3579 = vpop.f32.mrb[0].mxu0
  %v3580 = vadd.f32 0.0, %v3579
  %3581 = vmatprep.mubr.f32.mxu0 %v3145
  %3582 = vmatmul.mubr.f32.gmra.mrb[0].mxu0 %v2823
  %v3583 = vpop.f32.mrb[0].mxu0
  %v3584 = vadd.f32 0.0, %v3583
  %v3585 = vpop.f32.mrb[0].mxu0
  %v3586 = vadd.f32 0.0, %v3585
  %3587 = vmatprep.mubr.f32.mxu0 %v3148
  %3588 = vmatmul.mubr.f32.gmra.mrb[0].mxu0 %v2825
  %v3589 = vpop.f32.mrb[0].mxu0
  %v3590 = vadd.f32 0.0, %v3589
  %v3591 = vpop.f32.mrb[0].mxu0
  %v3592 = vadd.f32 0.0, %v3591
  %3593 = vmatprep.mubr.f32.mxu0 %v3151
  %3594 = vmatmul.mubr.f32.gmra.mrb[0].mxu0 %v2827
  %v3595 = vpop.f32.mrb[0].mxu0
  %v3596 = vadd.f32 0.0, %v3595
  %v3597 = vpop.f32.mrb[0].mxu0
  %v3598 = vadd.f32 0.0, %v3597
  %3599 = vmatprep.mubr.f32.mxu0 %v3154
  %3600 = vmatmul.mubr.f32.gmra.mrb[0].mxu0 %v2829
  %v3601 = vpop.f32.mrb[0].mxu0
  %v3602 = vadd.f32 0.0, %v3601
  %v3603 = vpop.f32.mrb[0].mxu0
  %v3604 = vadd.f32 0.0, %v3603
  %3605 = vmatprep.mubr.f32.mxu0 %v3157
  %3606 = vmatmul.mubr.f32.gmra.mrb[0].mxu0 %v2831
  %v3607 = vpop.f32.mrb[0].mxu0
  %v3608 = vadd.f32 0.0, %v3607
  %v3609 = vpop.f32.mrb[0].mxu0
  %v3610 = vadd.f32 0.0, %v3609
  %3611 = vmatprep.mubr.f32.mxu0 %v3160
  %3612 = vmatmul.mubr.f32.gmra.mrb[0].mxu0 %v2833
  %v3613 = vpop.f32.mrb[0].mxu0
  %v3614 = vadd.f32 0.0, %v3613
  %v3615 = vpop.f32.mrb[0].mxu0
  %v3616 = vadd.f32 0.0, %v3615
  %3617 = vmatprep.mubr.f32.mxu0 %v3163
  %3618 = vmatmul.mubr.f32.gmra.mrb[0].mxu0 %v2835
  %v3619 = vpop.f32.mrb[0].mxu0
  %v3620 = vadd.f32 0.0, %v3619
  %v3621 = vpop.f32.mrb[0].mxu0
  %v3622 = vadd.f32 0.0, %v3621
  %3623 = vmatprep.mubr.f32.mxu0 %v3166
  %3624 = vmatmul.mubr.f32.gmra.mrb[0].mxu0 %v2837
  %v3625 = vpop.f32.mrb[0].mxu0
  %v3626 = vadd.f32 0.0, %v3625
  %v3627 = vpop.f32.mrb[0].mxu0
  %v3628 = vadd.f32 0.0, %v3627
  %3629 = vmatprep.mubr.f32.mxu0 %v3169
  %3630 = vmatmul.mubr.f32.gmra.mrb[0].mxu0 %v2839
  %v3631 = vpop.f32.mrb[0].mxu0
  %v3632 = vadd.f32 0.0, %v3631
  %v3633 = vpop.f32.mrb[0].mxu0
  %v3634 = vadd.f32 0.0, %v3633
  %3635 = vmatprep.mubr.f32.mxu0 %v3172
  %3636 = vmatmul.mubr.f32.gmra.mrb[0].mxu0 %v2841
  %v3637 = vpop.f32.mrb[0].mxu0
  %v3638 = vadd.f32 0.0, %v3637
  %v3639 = vpop.f32.mrb[0].mxu0
  %v3640 = vadd.f32 0.0, %v3639
  %3641 = vmatprep.mubr.f32.mxu0 %v3175
  %3642 = vmatmul.mubr.f32.gmra.mrb[0].mxu0 %v2843
  %v3643 = vpop.f32.mrb[0].mxu0
  %v3644 = vadd.f32 0.0, %v3643
  %v3645 = vpop.f32.mrb[0].mxu0
  %v3646 = vadd.f32 0.0, %v3645
  %3647 = vmatprep.mubr.f32.mxu0 %v3178
  %3648 = vmatmul.mubr.f32.gmra.mrb[0].mxu0 %v2845
  %v3649 = vpop.f32.mrb[0].mxu0
  %v3650 = vadd.f32 0.0, %v3649
  %v3651 = vpop.f32.mrb[0].mxu0
  %v3652 = vadd.f32 0.0, %v3651
  %3653 = vmatprep.mubr.f32.mxu0 %v3181
  %3654 = vmatmul.mubr.f32.gmra.mrb[0].mxu0 %v2847
  %v3655 = vpop.f32.mrb[0].mxu0
  %v3656 = vadd.f32 0.0, %v3655
  %v3657 = vpop.f32.mrb[0].mxu0
  %v3658 = vadd.f32 0.0, %v3657
  %3659 = vmatprep.mubr.f32.mxu0 %v3184
  %3660 = vmatmul.mubr.f32.gmra.mrb[0].mxu0 %v2849
  %v3661 = vpop.f32.mrb[0].mxu0
  %v3662 = vadd.f32 0.0, %v3661
  %v3663 = vpop.f32.mrb[0].mxu0
  %v3664 = vadd.f32 0.0, %v3663
  %3665 = vmatprep.mubr.f32.mxu0 %v3187
  %3666 = vmatmul.mubr.f32.gmra.mrb[0].mxu0 %v2851
  %v3667 = vpop.f32.mrb[0].mxu0
  %v3668 = vadd.f32 0.0, %v3667
  %v3669 = vpop.f32.mrb[0].mxu0
  %v3670 = vadd.f32 0.0, %v3669
  %3671 = vdwg.mxu0
  %3672 = vmatprep.subr.mxu0 %v2860
  %3673 = vmatpush1.msra.mxu0 %v2859
  %3674 = vmatprep.subr.mxu0 %v2872
  %3675 = vmatpush1.msra.mxu0 %v2871
  %3676 = vmatprep.subr.mxu0 %v2884
  %3677 = vmatpush1.msra.mxu0 %v2883
  %3678 = vmatprep.subr.mxu0 %v2896
  %3679 = vmatpush1.msra.mxu0 %v2895
  %3680 = vmatprep.subr.mxu0 %v2908
  %3681 = vmatpush1.msra.mxu0 %v2907
  %3682 = vmatprep.subr.mxu0 %v2920
  %3683 = vmatpush1.msra.mxu0 %v2919
  %3684 = vmatprep.subr.mxu0 %v2932
  %3685 = vmatpush1.msra.mxu0 %v2931
  %3686 = vmatprep.subr.mxu0 %v2944
  %3687 = vmatpush1.msra.mxu0 %v2943
  %3688 = vmatprep.subr.mxu0 %v2956
  %3689 = vmatpush1.msra.mxu0 %v2955
  %3690 = vmatprep.subr.mxu0 %v2968
  %3691 = vmatpush1.msra.mxu0 %v2967
  %3692 = vmatprep.subr.mxu0 %v2980
  %3693 = vmatpush1.msra.mxu0 %v2979
  %3694 = vmatprep.subr.mxu0 %v2992
  %3695 = vmatpush1.msra.mxu0 %v2991
  %3696 = vmatprep.subr.mxu0 %v3004
  %3697 = vmatpush1.msra.mxu0 %v3003
  %3698 = vmatprep.subr.mxu0 %v3016
  %3699 = vmatpush1.msra.mxu0 %v3015
  %3700 = vmatprep.subr.mxu0 %v3028
  %3701 = vmatpush1.msra.mxu0 %v3027
  %3702 = vmatprep.subr.mxu0 %v3040
  %3703 = vmatpush1.msra.mxu0 %v3039
  %3704 = vmatprep.subr.mxu0 %v3052
  %3705 = vmatpush1.msra.mxu0 %v3051
  %3706 = vmatprep.subr.mxu0 %v3064
  %3707 = vmatpush1.msra.mxu0 %v3063
  %3708 = vmatprep.subr.mxu0 %v3076
  %3709 = vmatpush1.msra.mxu0 %v3075
  %3710 = vmatprep.subr.mxu0 %v3088
  %3711 = vmatpush1.msra.mxu0 %v3087
  %3712 = vmatprep.subr.mxu0 %v3100
  %3713 = vmatpush1.msra.mxu0 %v3099
  %3714 = vmatprep.subr.mxu0 %v3112
  %3715 = vmatpush1.msra.mxu0 %v3111
  %3716 = vmatprep.subr.mxu0 %v3124
  %3717 = vmatpush1.msra.mxu0 %v3123
  %3718 = vmatprep.subr.mxu0 %v3136
  %3719 = vmatpush1.msra.mxu0 %v3135
  %3720 = vmatprep.subr.mxu0 0.0
  %3721 = vmatpush1.msra.mxu0 0.0
  %3722 = vmatprep.subr.mxu0 0.0
  %3723 = vmatpush1.msra.mxu0 0.0
  %3724 = vmatprep.subr.mxu0 0.0
  %3725 = vmatpush1.msra.mxu0 0.0
  %3726 = vmatprep.subr.mxu0 0.0
  %3727 = vmatpush1.msra.mxu0 0.0
  %3728 = vmatprep.subr.mxu0 0.0
  %3729 = vmatpush1.msra.mxu0 0.0
  %3730 = vmatprep.subr.mxu0 0.0
  %3731 = vmatpush1.msra.mxu0 0.0
  %3732 = vmatprep.subr.mxu0 0.0
  %3733 = vmatpush1.msra.mxu0 0.0
  %3734 = vmatprep.subr.mxu0 0.0
  %3735 = vmatpush1.msra.mxu0 0.0
  %3736 = vmatprep.mubr.f32.mxu0 %v3142
  %3737 = vmatmul.mubr.f32.gmra.mrb[0].mxu0 %v2821
  %v3738 = vpop.f32.mrb[0].mxu0
  %v3739 = vadd.f32 0.0, %v3738
  %v3740 = vpop.f32.mrb[0].mxu0
  %v3741 = vadd.f32 0.0, %v3740
  %3742 = vmatprep.mubr.f32.mxu0 %v3145
  %3743 = vmatmul.mubr.f32.gmra.mrb[0].mxu0 %v2823
  %v3744 = vpop.f32.mrb[0].mxu0
  %v3745 = vadd.f32 0.0, %v3744
  %v3746 = vpop.f32.mrb[0].mxu0
  %v3747 = vadd.f32 0.0, %v3746
  %3748 = vmatprep.mubr.f32.mxu0 %v3148
  %3749 = vmatmul.mubr.f32.gmra.mrb[0].mxu0 %v2825
  %v3750 = vpop.f32.mrb[0].mxu0
  %v3751 = vadd.f32 0.0, %v3750
  %v3752 = vpop.f32.mrb[0].mxu0
  %v3753 = vadd.f32 0.0, %v3752
  %3754 = vmatprep.mubr.f32.mxu0 %v3151
  %3755 = vmatmul.mubr.f32.gmra.mrb[0].mxu0 %v2827
  %v3756 = vpop.f32.mrb[0].mxu0
  %v3757 = vadd.f32 0.0, %v3756
  %v3758 = vpop.f32.mrb[0].mxu0
  %v3759 = vadd.f32 0.0, %v3758
  %3760 = vmatprep.mubr.f32.mxu0 %v3154
  %3761 = vmatmul.mubr.f32.gmra.mrb[0].mxu0 %v2829
  %v3762 = vpop.f32.mrb[0].mxu0
  %v3763 = vadd.f32 0.0, %v3762
  %v3764 = vpop.f32.mrb[0].mxu0
  %v3765 = vadd.f32 0.0, %v3764
  %3766 = vmatprep.mubr.f32.mxu0 %v3157
  %3767 = vmatmul.mubr.f32.gmra.mrb[0].mxu0 %v2831
  %v3768 = vpop.f32.mrb[0].mxu0
  %v3769 = vadd.f32 0.0, %v3768
  %v3770 = vpop.f32.mrb[0].mxu0
  %v3771 = vadd.f32 0.0, %v3770
  %3772 = vmatprep.mubr.f32.mxu0 %v3160
  %3773 = vmatmul.mubr.f32.gmra.mrb[0].mxu0 %v2833
  %v3774 = vpop.f32.mrb[0].mxu0
  %v3775 = vadd.f32 0.0, %v3774
  %v3776 = vpop.f32.mrb[0].mxu0
  %v3777 = vadd.f32 0.0, %v3776
  %3778 = vmatprep.mubr.f32.mxu0 %v3163
  %3779 = vmatmul.mubr.f32.gmra.mrb[0].mxu0 %v2835
  %v3780 = vpop.f32.mrb[0].mxu0
  %v3781 = vadd.f32 0.0, %v3780
  %v3782 = vpop.f32.mrb[0].mxu0
  %v3783 = vadd.f32 0.0, %v3782
  %3784 = vmatprep.mubr.f32.mxu0 %v3166
  %3785 = vmatmul.mubr.f32.gmra.mrb[0].mxu0 %v2837
  %v3786 = vpop.f32.mrb[0].mxu0
  %v3787 = vadd.f32 0.0, %v3786
  %v3788 = vpop.f32.mrb[0].mxu0
  %v3789 = vadd.f32 0.0, %v3788
  %3790 = vmatprep.mubr.f32.mxu0 %v3169
  %3791 = vmatmul.mubr.f32.gmra.mrb[0].mxu0 %v2839
  %v3792 = vpop.f32.mrb[0].mxu0
  %v3793 = vadd.f32 0.0, %v3792
  %v3794 = vpop.f32.mrb[0].mxu0
  %v3795 = vadd.f32 0.0, %v3794
  %3796 = vmatprep.mubr.f32.mxu0 %v3172
  %3797 = vmatmul.mubr.f32.gmra.mrb[0].mxu0 %v2841
  %v3798 = vpop.f32.mrb[0].mxu0
  %v3799 = vadd.f32 0.0, %v3798
  %v3800 = vpop.f32.mrb[0].mxu0
  %v3801 = vadd.f32 0.0, %v3800
  %3802 = vmatprep.mubr.f32.mxu0 %v3175
  %3803 = vmatmul.mubr.f32.gmra.mrb[0].mxu0 %v2843
  %v3804 = vpop.f32.mrb[0].mxu0
  %v3805 = vadd.f32 0.0, %v3804
  %v3806 = vpop.f32.mrb[0].mxu0
  %v3807 = vadd.f32 0.0, %v3806
  %3808 = vmatprep.mubr.f32.mxu0 %v3178
  %3809 = vmatmul.mubr.f32.gmra.mrb[0].mxu0 %v2845
  %v3810 = vpop.f32.mrb[0].mxu0
  %v3811 = vadd.f32 0.0, %v3810
  %v3812 = vpop.f32.mrb[0].mxu0
  %v3813 = vadd.f32 0.0, %v3812
  %3814 = vmatprep.mubr.f32.mxu0 %v3181
  %3815 = vmatmul.mubr.f32.gmra.mrb[0].mxu0 %v2847
  %v3816 = vpop.f32.mrb[0].mxu0
  %v3817 = vadd.f32 0.0, %v3816
  %v3818 = vpop.f32.mrb[0].mxu0
  %v3819 = vadd.f32 0.0, %v3818
  %3820 = vmatprep.mubr.f32.mxu0 %v3184
  %3821 = vmatmul.mubr.f32.gmra.mrb[0].mxu0 %v2849
  %v3822 = vpop.f32.mrb[0].mxu0
  %v3823 = vadd.f32 0.0, %v3822
  %v3824 = vpop.f32.mrb[0].mxu0
  %v3825 = vadd.f32 0.0, %v3824
  %3826 = vmatprep.mubr.f32.mxu0 %v3187
  %3827 = vmatmul.mubr.f32.gmra.mrb[0].mxu0 %v2851
  %v3828 = vpop.f32.mrb[0].mxu0
  %v3829 = vadd.f32 0.0, %v3828
  %v3830 = vpop.f32.mrb[0].mxu0
  %v3831 = vadd.f32 0.0, %v3830
  %3832 = vdwg.mxu0
  %3833 = vmatprep.subr.mxu0 %v2862
  %3834 = vmatpush1.msra.mxu0 %v2861
  %3835 = vmatprep.subr.mxu0 %v2874
  %3836 = vmatpush1.msra.mxu0 %v2873
  %3837 = vmatprep.subr.mxu0 %v2886
  %3838 = vmatpush1.msra.mxu0 %v2885
  %3839 = vmatprep.subr.mxu0 %v2898
  %3840 = vmatpush1.msra.mxu0 %v2897
  %3841 = vmatprep.subr.mxu0 %v2910
  %3842 = vmatpush1.msra.mxu0 %v2909
  %3843 = vmatprep.subr.mxu0 %v2922
  %3844 = vmatpush1.msra.mxu0 %v2921
  %3845 = vmatprep.subr.mxu0 %v2934
  %3846 = vmatpush1.msra.mxu0 %v2933
  %3847 = vmatprep.subr.mxu0 %v2946
  %3848 = vmatpush1.msra.mxu0 %v2945
  %3849 = vmatprep.subr.mxu0 %v2958
  %3850 = vmatpush1.msra.mxu0 %v2957
  %3851 = vmatprep.subr.mxu0 %v2970
  %3852 = vmatpush1.msra.mxu0 %v2969
  %3853 = vmatprep.subr.mxu0 %v2982
  %3854 = vmatpush1.msra.mxu0 %v2981
  %3855 = vmatprep.subr.mxu0 %v2994
  %3856 = vmatpush1.msra.mxu0 %v2993
  %3857 = vmatprep.subr.mxu0 %v3006
  %3858 = vmatpush1.msra.mxu0 %v3005
  %3859 = vmatprep.subr.mxu0 %v3018
  %3860 = vmatpush1.msra.mxu0 %v3017
  %3861 = vmatprep.subr.mxu0 %v3030
  %3862 = vmatpush1.msra.mxu0 %v3029
  %3863 = vmatprep.subr.mxu0 %v3042
  %3864 = vmatpush1.msra.mxu0 %v3041
  %3865 = vmatprep.subr.mxu0 %v3054
  %3866 = vmatpush1.msra.mxu0 %v3053
  %3867 = vmatprep.subr.mxu0 %v3066
  %3868 = vmatpush1.msra.mxu0 %v3065
  %3869 = vmatprep.subr.mxu0 %v3078
  %3870 = vmatpush1.msra.mxu0 %v3077
  %3871 = vmatprep.subr.mxu0 %v3090
  %3872 = vmatpush1.msra.mxu0 %v3089
  %3873 = vmatprep.subr.mxu0 %v3102
  %3874 = vmatpush1.msra.mxu0 %v3101
  %3875 = vmatprep.subr.mxu0 %v3114
  %3876 = vmatpush1.msra.mxu0 %v3113
  %3877 = vmatprep.subr.mxu0 %v3126
  %3878 = vmatpush1.msra.mxu0 %v3125
  %3879 = vmatprep.subr.mxu0 %v3138
  %3880 = vmatpush1.msra.mxu0 %v3137
  %3881 = vmatprep.subr.mxu0 0.0
  %3882 = vmatpush1.msra.mxu0 0.0
  %3883 = vmatprep.subr.mxu0 0.0
  %3884 = vmatpush1.msra.mxu0 0.0
  %3885 = vmatprep.subr.mxu0 0.0
  %3886 = vmatpush1.msra.mxu0 0.0
  %3887 = vmatprep.subr.mxu0 0.0
  %3888 = vmatpush1.msra.mxu0 0.0
  %3889 = vmatprep.subr.mxu0 0.0
  %3890 = vmatpush1.msra.mxu0 0.0
  %3891 = vmatprep.subr.mxu0 0.0
  %3892 = vmatpush1.msra.mxu0 0.0
  %3893 = vmatprep.subr.mxu0 0.0
  %3894 = vmatpush1.msra.mxu0 0.0
  %3895 = vmatprep.subr.mxu0 0.0
  %3896 = vmatpush1.msra.mxu0 0.0
  %3897 = vmatprep.mubr.f32.mxu0 %v3142
  %3898 = vmatmul.mubr.f32.gmra.mrb[0].mxu0 %v2821
  %v3899 = vpop.f32.mrb[0].mxu0
  %v3900 = vadd.f32 0.0, %v3899
  %v3901 = vpop.f32.mrb[0].mxu0
  %v3902 = vadd.f32 0.0, %v3901
  %3903 = vmatprep.mubr.f32.mxu0 %v3145
  %3904 = vmatmul.mubr.f32.gmra.mrb[0].mxu0 %v2823
  %v3905 = vpop.f32.mrb[0].mxu0
  %v3906 = vadd.f32 0.0, %v3905
  %v3907 = vpop.f32.mrb[0].mxu0
  %v3908 = vadd.f32 0.0, %v3907
  %3909 = vmatprep.mubr.f32.mxu0 %v3148
  %3910 = vmatmul.mubr.f32.gmra.mrb[0].mxu0 %v2825
  %v3911 = vpop.f32.mrb[0].mxu0
  %v3912 = vadd.f32 0.0, %v3911
  %v3913 = vpop.f32.mrb[0].mxu0
  %v3914 = vadd.f32 0.0, %v3913
  %3915 = vmatprep.mubr.f32.mxu0 %v3151
  %3916 = vmatmul.mubr.f32.gmra.mrb[0].mxu0 %v2827
  %v3917 = vpop.f32.mrb[0].mxu0
  %v3918 = vadd.f32 0.0, %v3917
  %v3919 = vpop.f32.mrb[0].mxu0
  %v3920 = vadd.f32 0.0, %v3919
  %3921 = vmatprep.mubr.f32.mxu0 %v3154
  %3922 = vmatmul.mubr.f32.gmra.mrb[0].mxu0 %v2829
  %v3923 = vpop.f32.mrb[0].mxu0
  %v3924 = vadd.f32 0.0, %v3923
  %v3925 = vpop.f32.mrb[0].mxu0
  %v3926 = vadd.f32 0.0, %v3925
  %3927 = vmatprep.mubr.f32.mxu0 %v3157
  %3928 = vmatmul.mubr.f32.gmra.mrb[0].mxu0 %v2831
  %v3929 = vpop.f32.mrb[0].mxu0
  %v3930 = vadd.f32 0.0, %v3929
  %v3931 = vpop.f32.mrb[0].mxu0
  %v3932 = vadd.f32 0.0, %v3931
  %3933 = vmatprep.mubr.f32.mxu0 %v3160
  %3934 = vmatmul.mubr.f32.gmra.mrb[0].mxu0 %v2833
  %v3935 = vpop.f32.mrb[0].mxu0
  %v3936 = vadd.f32 0.0, %v3935
  %v3937 = vpop.f32.mrb[0].mxu0
  %v3938 = vadd.f32 0.0, %v3937
  %3939 = vmatprep.mubr.f32.mxu0 %v3163
  %3940 = vmatmul.mubr.f32.gmra.mrb[0].mxu0 %v2835
  %v3941 = vpop.f32.mrb[0].mxu0
  %v3942 = vadd.f32 0.0, %v3941
  %v3943 = vpop.f32.mrb[0].mxu0
  %v3944 = vadd.f32 0.0, %v3943
  %3945 = vmatprep.mubr.f32.mxu0 %v3166
  %3946 = vmatmul.mubr.f32.gmra.mrb[0].mxu0 %v2837
  %v3947 = vpop.f32.mrb[0].mxu0
  %v3948 = vadd.f32 0.0, %v3947
  %v3949 = vpop.f32.mrb[0].mxu0
  %v3950 = vadd.f32 0.0, %v3949
  %3951 = vmatprep.mubr.f32.mxu0 %v3169
  %3952 = vmatmul.mubr.f32.gmra.mrb[0].mxu0 %v2839
  %v3953 = vpop.f32.mrb[0].mxu0
  %v3954 = vadd.f32 0.0, %v3953
  %v3955 = vpop.f32.mrb[0].mxu0
  %v3956 = vadd.f32 0.0, %v3955
  %3957 = vmatprep.mubr.f32.mxu0 %v3172
  %3958 = vmatmul.mubr.f32.gmra.mrb[0].mxu0 %v2841
  %v3959 = vpop.f32.mrb[0].mxu0
  %v3960 = vadd.f32 0.0, %v3959
  %v3961 = vpop.f32.mrb[0].mxu0
  %v3962 = vadd.f32 0.0, %v3961
  %3963 = vmatprep.mubr.f32.mxu0 %v3175
  %3964 = vmatmul.mubr.f32.gmra.mrb[0].mxu0 %v2843
  %v3965 = vpop.f32.mrb[0].mxu0
  %v3966 = vadd.f32 0.0, %v3965
  %v3967 = vpop.f32.mrb[0].mxu0
  %v3968 = vadd.f32 0.0, %v3967
  %3969 = vmatprep.mubr.f32.mxu0 %v3178
  %3970 = vmatmul.mubr.f32.gmra.mrb[0].mxu0 %v2845
  %v3971 = vpop.f32.mrb[0].mxu0
  %v3972 = vadd.f32 0.0, %v3971
  %v3973 = vpop.f32.mrb[0].mxu0
  %v3974 = vadd.f32 0.0, %v3973
  %3975 = vmatprep.mubr.f32.mxu0 %v3181
  %3976 = vmatmul.mubr.f32.gmra.mrb[0].mxu0 %v2847
  %v3977 = vpop.f32.mrb[0].mxu0
  %v3978 = vadd.f32 0.0, %v3977
  %v3979 = vpop.f32.mrb[0].mxu0
  %v3980 = vadd.f32 0.0, %v3979
  %3981 = vmatprep.mubr.f32.mxu0 %v3184
  %3982 = vmatmul.mubr.f32.gmra.mrb[0].mxu0 %v2849
  %v3983 = vpop.f32.mrb[0].mxu0
  %v3984 = vadd.f32 0.0, %v3983
  %v3985 = vpop.f32.mrb[0].mxu0
  %v3986 = vadd.f32 0.0, %v3985
  %3987 = vmatprep.mubr.f32.mxu0 %v3187
  %3988 = vmatmul.mubr.f32.gmra.mrb[0].mxu0 %v2851
  %v3989 = vpop.f32.mrb[0].mxu0
  %v3990 = vadd.f32 0.0, %v3989
  %v3991 = vpop.f32.mrb[0].mxu0
  %v3992 = vadd.f32 0.0, %v3991
  %3993 = vdwg.mxu0
  %3994 = vmatprep.subr.mxu0 %v2864
  %3995 = vmatpush1.msra.mxu0 %v2863
  %3996 = vmatprep.subr.mxu0 %v2876
  %3997 = vmatpush1.msra.mxu0 %v2875
  %3998 = vmatprep.subr.mxu0 %v2888
  %3999 = vmatpush1.msra.mxu0 %v2887
  %4000 = vmatprep.subr.mxu0 %v2900
  %4001 = vmatpush1.msra.mxu0 %v2899
  %4002 = vmatprep.subr.mxu0 %v2912
  %4003 = vmatpush1.msra.mxu0 %v2911
  %4004 = vmatprep.subr.mxu0 %v2924
  %4005 = vmatpush1.msra.mxu0 %v2923
  %4006 = vmatprep.subr.mxu0 %v2936
  %4007 = vmatpush1.msra.mxu0 %v2935
  %4008 = vmatprep.subr.mxu0 %v2948
  %4009 = vmatpush1.msra.mxu0 %v2947
  %4010 = vmatprep.subr.mxu0 %v2960
  %4011 = vmatpush1.msra.mxu0 %v2959
  %4012 = vmatprep.subr.mxu0 %v2972
  %4013 = vmatpush1.msra.mxu0 %v2971
  %4014 = vmatprep.subr.mxu0 %v2984
  %4015 = vmatpush1.msra.mxu0 %v2983
  %4016 = vmatprep.subr.mxu0 %v2996
  %4017 = vmatpush1.msra.mxu0 %v2995
  %4018 = vmatprep.subr.mxu0 %v3008
  %4019 = vmatpush1.msra.mxu0 %v3007
  %4020 = vmatprep.subr.mxu0 %v3020
  %4021 = vmatpush1.msra.mxu0 %v3019
  %4022 = vmatprep.subr.mxu0 %v3032
  %4023 = vmatpush1.msra.mxu0 %v3031
  %4024 = vmatprep.subr.mxu0 %v3044
  %4025 = vmatpush1.msra.mxu0 %v3043
  %4026 = vmatprep.subr.mxu0 %v3056
  %4027 = vmatpush1.msra.mxu0 %v3055
  %4028 = vmatprep.subr.mxu0 %v3068
  %4029 = vmatpush1.msra.mxu0 %v3067
  %4030 = vmatprep.subr.mxu0 %v3080
  %4031 = vmatpush1.msra.mxu0 %v3079
  %4032 = vmatprep.subr.mxu0 %v3092
  %4033 = vmatpush1.msra.mxu0 %v3091
  %4034 = vmatprep.subr.mxu0 %v3104
  %4035 = vmatpush1.msra.mxu0 %v3103
  %4036 = vmatprep.subr.mxu0 %v3116
  %4037 = vmatpush1.msra.mxu0 %v3115
  %4038 = vmatprep.subr.mxu0 %v3128
  %4039 = vmatpush1.msra.mxu0 %v3127
  %4040 = vmatprep.subr.mxu0 %v3140
  %4041 = vmatpush1.msra.mxu0 %v3139
  %4042 = vmatprep.subr.mxu0 0.0
  %4043 = vmatpush1.msra.mxu0 0.0
  %4044 = vmatprep.subr.mxu0 0.0
  %4045 = vmatpush1.msra.mxu0 0.0
  %4046 = vmatprep.subr.mxu0 0.0
  %4047 = vmatpush1.msra.mxu0 0.0
  %4048 = vmatprep.subr.mxu0 0.0
  %4049 = vmatpush1.msra.mxu0 0.0
  %4050 = vmatprep.subr.mxu0 0.0
  %4051 = vmatpush1.msra.mxu0 0.0
  %4052 = vmatprep.subr.mxu0 0.0
  %4053 = vmatpush1.msra.mxu0 0.0
  %4054 = vmatprep.subr.mxu0 0.0
  %4055 = vmatpush1.msra.mxu0 0.0
  %4056 = vmatprep.subr.mxu0 0.0
  %4057 = vmatpush1.msra.mxu0 0.0
  %4058 = vmatprep.mubr.f32.mxu0 %v3142
  %4059 = vmatmul.mubr.f32.gmra.mrb[0].mxu0 %v2821
  %v4060 = vpop.f32.mrb[0].mxu0
  %v4061 = vadd.f32 0.0, %v4060
  %v4062 = vpop.f32.mrb[0].mxu0
  %v4063 = vadd.f32 0.0, %v4062
  %4064 = vmatprep.mubr.f32.mxu0 %v3145
  %4065 = vmatmul.mubr.f32.gmra.mrb[0].mxu0 %v2823
  %v4066 = vpop.f32.mrb[0].mxu0
  %v4067 = vadd.f32 0.0, %v4066
  %v4068 = vpop.f32.mrb[0].mxu0
  %v4069 = vadd.f32 0.0, %v4068
  %4070 = vmatprep.mubr.f32.mxu0 %v3148
  %4071 = vmatmul.mubr.f32.gmra.mrb[0].mxu0 %v2825
  %v4072 = vpop.f32.mrb[0].mxu0
  %v4073 = vadd.f32 0.0, %v4072
  %v4074 = vpop.f32.mrb[0].mxu0
  %v4075 = vadd.f32 0.0, %v4074
  %4076 = vmatprep.mubr.f32.mxu0 %v3151
  %4077 = vmatmul.mubr.f32.gmra.mrb[0].mxu0 %v2827
  %v4078 = vpop.f32.mrb[0].mxu0
  %v4079 = vadd.f32 0.0, %v4078
  %v4080 = vpop.f32.mrb[0].mxu0
  %v4081 = vadd.f32 0.0, %v4080
  %4082 = vmatprep.mubr.f32.mxu0 %v3154
  %4083 = vmatmul.mubr.f32.gmra.mrb[0].mxu0 %v2829
  %v4084 = vpop.f32.mrb[0].mxu0
  %v4085 = vadd.f32 0.0, %v4084
  %v4086 = vpop.f32.mrb[0].mxu0
  %v4087 = vadd.f32 0.0, %v4086
  %4088 = vmatprep.mubr.f32.mxu0 %v3157
  %4089 = vmatmul.mubr.f32.gmra.mrb[0].mxu0 %v2831
  %v4090 = vpop.f32.mrb[0].mxu0
  %v4091 = vadd.f32 0.0, %v4090
  %v4092 = vpop.f32.mrb[0].mxu0
  %v4093 = vadd.f32 0.0, %v4092
  %4094 = vmatprep.mubr.f32.mxu0 %v3160
  %4095 = vmatmul.mubr.f32.gmra.mrb[0].mxu0 %v2833
  %v4096 = vpop.f32.mrb[0].mxu0
  %v4097 = vadd.f32 0.0, %v4096
  %v4098 = vpop.f32.mrb[0].mxu0
  %v4099 = vadd.f32 0.0, %v4098
  %4100 = vmatprep.mubr.f32.mxu0 %v3163
  %4101 = vmatmul.mubr.f32.gmra.mrb[0].mxu0 %v2835
  %v4102 = vpop.f32.mrb[0].mxu0
  %v4103 = vadd.f32 0.0, %v4102
  %v4104 = vpop.f32.mrb[0].mxu0
  %v4105 = vadd.f32 0.0, %v4104
  %4106 = vmatprep.mubr.f32.mxu0 %v3166
  %4107 = vmatmul.mubr.f32.gmra.mrb[0].mxu0 %v2837
  %v4108 = vpop.f32.mrb[0].mxu0
  %v4109 = vadd.f32 0.0, %v4108
  %v4110 = vpop.f32.mrb[0].mxu0
  %v4111 = vadd.f32 0.0, %v4110
  %4112 = vmatprep.mubr.f32.mxu0 %v3169
  %4113 = vmatmul.mubr.f32.gmra.mrb[0].mxu0 %v2839
  %v4114 = vpop.f32.mrb[0].mxu0
  %v4115 = vadd.f32 0.0, %v4114
  %v4116 = vpop.f32.mrb[0].mxu0
  %v4117 = vadd.f32 0.0, %v4116
  %4118 = vmatprep.mubr.f32.mxu0 %v3172
  %4119 = vmatmul.mubr.f32.gmra.mrb[0].mxu0 %v2841
  %v4120 = vpop.f32.mrb[0].mxu0
  %v4121 = vadd.f32 0.0, %v4120
  %v4122 = vpop.f32.mrb[0].mxu0
  %v4123 = vadd.f32 0.0, %v4122
  %4124 = vmatprep.mubr.f32.mxu0 %v3175
  %4125 = vmatmul.mubr.f32.gmra.mrb[0].mxu0 %v2843
  %v4126 = vpop.f32.mrb[0].mxu0
  %v4127 = vadd.f32 0.0, %v4126
  %v4128 = vpop.f32.mrb[0].mxu0
  %v4129 = vadd.f32 0.0, %v4128
  %4130 = vmatprep.mubr.f32.mxu0 %v3178
  %4131 = vmatmul.mubr.f32.gmra.mrb[0].mxu0 %v2845
  %v4132 = vpop.f32.mrb[0].mxu0
  %v4133 = vadd.f32 0.0, %v4132
  %v4134 = vpop.f32.mrb[0].mxu0
  %v4135 = vadd.f32 0.0, %v4134
  %4136 = vmatprep.mubr.f32.mxu0 %v3181
  %4137 = vmatmul.mubr.f32.gmra.mrb[0].mxu0 %v2847
  %v4138 = vpop.f32.mrb[0].mxu0
  %v4139 = vadd.f32 0.0, %v4138
  %v4140 = vpop.f32.mrb[0].mxu0
  %v4141 = vadd.f32 0.0, %v4140
  %4142 = vmatprep.mubr.f32.mxu0 %v3184
  %4143 = vmatmul.mubr.f32.gmra.mrb[0].mxu0 %v2849
  %v4144 = vpop.f32.mrb[0].mxu0
  %v4145 = vadd.f32 0.0, %v4144
  %v4146 = vpop.f32.mrb[0].mxu0
  %v4147 = vadd.f32 0.0, %v4146
  %4148 = vmatprep.mubr.f32.mxu0 %v3187
  %4149 = vmatmul.mubr.f32.gmra.mrb[0].mxu0 %v2851
  %v4150 = vpop.f32.mrb[0].mxu0
  %v4151 = vadd.f32 0.0, %v4150
  %v4152 = vpop.f32.mrb[0].mxu0
  %v4153 = vadd.f32 0.0, %v4152
  %4154 = vdwg.mxu0
  %v4155 = vmax.f32 %v3256, 0.0
  %v4156 = vmax.f32 %v3258, 0.0
  %v4157 = vmax.f32 %v3417, 0.0
  %v4158 = vmax.f32 %v3419, 0.0
  %v4159 = vmax.f32 %v3578, 0.0
  %v4160 = vmax.f32 %v3580, 0.0
  %v4161 = vmax.f32 %v3739, 0.0
  %v4162 = vmax.f32 %v3741, 0.0
  %v4163 = vmax.f32 %v3900, 0.0
  %v4164 = vmax.f32 %v3902, 0.0
  %v4165 = vmax.f32 %v4061, 0.0
  %v4166 = vmax.f32 %v4063, 0.0
  %v4167 = vmax.f32 %v3262, 0.0
  %v4168 = vmax.f32 %v3264, 0.0
  %v4169 = vmax.f32 %v3423, 0.0
  %v4170 = vmax.f32 %v3425, 0.0
  %v4171 = vmax.f32 %v3584, 0.0
  %v4172 = vmax.f32 %v3586, 0.0
  %v4173 = vmax.f32 %v3745, 0.0
  %v4174 = vmax.f32 %v3747, 0.0
  %v4175 = vmax.f32 %v3906, 0.0
  %v4176 = vmax.f32 %v3908, 0.0
  %v4177 = vmax.f32 %v4067, 0.0
  %v4178 = vmax.f32 %v4069, 0.0
  %v4179 = vmax.f32 %v3268, 0.0
  %v4180 = vmax.f32 %v3270, 0.0
  %v4181 = vmax.f32 %v3429, 0.0
  %v4182 = vmax.f32 %v3431, 0.0
  %v4183 = vmax.f32 %v3590, 0.0
  %v4184 = vmax.f32 %v3592, 0.0
  %v4185 = vmax.f32 %v3751, 0.0
  %v4186 = vmax.f32 %v3753, 0.0
  %v4187 = vmax.f32 %v3912, 0.0
  %v4188 = vmax.f32 %v3914, 0.0
  %v4189 = vmax.f32 %v4073, 0.0
  %v4190 = vmax.f32 %v4075, 0.0
  %v4191 = vmax.f32 %v3274, 0.0
  %v4192 = vmax.f32 %v3276, 0.0
  %v4193 = vmax.f32 %v3435, 0.0
  %v4194 = vmax.f32 %v3437, 0.0
  %v4195 = vmax.f32 %v3596, 0.0
  %v4196 = vmax.f32 %v3598, 0.0
  %v4197 = vmax.f32 %v3757, 0.0
  %v4198 = vmax.f32 %v3759, 0.0
  %v4199 = vmax.f32 %v3918, 0.0
  %v4200 = vmax.f32 %v3920, 0.0
  %v4201 = vmax.f32 %v4079, 0.0
  %v4202 = vmax.f32 %v4081, 0.0
  %v4203 = vmax.f32 %v3280, 0.0
  %v4204 = vmax.f32 %v3282, 0.0
  %v4205 = vmax.f32 %v3441, 0.0
  %v4206 = vmax.f32 %v3443, 0.0
  %v4207 = vmax.f32 %v3602, 0.0
  %v4208 = vmax.f32 %v3604, 0.0
  %v4209 = vmax.f32 %v3763, 0.0
  %v4210 = vmax.f32 %v3765, 0.0
  %v4211 = vmax.f32 %v3924, 0.0
  %v4212 = vmax.f32 %v3926, 0.0
  %v4213 = vmax.f32 %v4085, 0.0
  %v4214 = vmax.f32 %v4087, 0.0
  %v4215 = vmax.f32 %v3286, 0.0
  %v4216 = vmax.f32 %v3288, 0.0
  %v4217 = vmax.f32 %v3447, 0.0
  %v4218 = vmax.f32 %v3449, 0.0
  %v4219 = vmax.f32 %v3608, 0.0
  %v4220 = vmax.f32 %v3610, 0.0
  %v4221 = vmax.f32 %v3769, 0.0
  %v4222 = vmax.f32 %v3771, 0.0
  %v4223 = vmax.f32 %v3930, 0.0
  %v4224 = vmax.f32 %v3932, 0.0
  %v4225 = vmax.f32 %v4091, 0.0
  %v4226 = vmax.f32 %v4093, 0.0
  %v4227 = vmax.f32 %v3292, 0.0
  %v4228 = vmax.f32 %v3294, 0.0
  %v4229 = vmax.f32 %v3453, 0.0
  %v4230 = vmax.f32 %v3455, 0.0
  %v4231 = vmax.f32 %v3614, 0.0
  %v4232 = vmax.f32 %v3616, 0.0
  %v4233 = vmax.f32 %v3775, 0.0
  %v4234 = vmax.f32 %v3777, 0.0
  %v4235 = vmax.f32 %v3936, 0.0
  %v4236 = vmax.f32 %v3938, 0.0
  %v4237 = vmax.f32 %v4097, 0.0
  %v4238 = vmax.f32 %v4099, 0.0
  %v4239 = vmax.f32 %v3298, 0.0
  %v4240 = vmax.f32 %v3300, 0.0
  %v4241 = vmax.f32 %v3459, 0.0
  %v4242 = vmax.f32 %v3461, 0.0
  %v4243 = vmax.f32 %v3620, 0.0
  %v4244 = vmax.f32 %v3622, 0.0
  %v4245 = vmax.f32 %v3781, 0.0
  %v4246 = vmax.f32 %v3783, 0.0
  %v4247 = vmax.f32 %v3942, 0.0
  %v4248 = vmax.f32 %v3944, 0.0
  %v4249 = vmax.f32 %v4103, 0.0
  %v4250 = vmax.f32 %v4105, 0.0
  %v4251 = vmax.f32 %v3304, 0.0
  %v4252 = vmax.f32 %v3306, 0.0
  %v4253 = vmax.f32 %v3465, 0.0
  %v4254 = vmax.f32 %v3467, 0.0
  %v4255 = vmax.f32 %v3626, 0.0
  %v4256 = vmax.f32 %v3628, 0.0
  %v4257 = vmax.f32 %v3787, 0.0
  %v4258 = vmax.f32 %v3789, 0.0
  %v4259 = vmax.f32 %v3948, 0.0
  %v4260 = vmax.f32 %v3950, 0.0
  %v4261 = vmax.f32 %v4109, 0.0
  %v4262 = vmax.f32 %v4111, 0.0
  %v4263 = vmax.f32 %v3310, 0.0
  %v4264 = vmax.f32 %v3312, 0.0
  %v4265 = vmax.f32 %v3471, 0.0
  %v4266 = vmax.f32 %v3473, 0.0
  %v4267 = vmax.f32 %v3632, 0.0
  %v4268 = vmax.f32 %v3634, 0.0
  %v4269 = vmax.f32 %v3793, 0.0
  %v4270 = vmax.f32 %v3795, 0.0
  %v4271 = vmax.f32 %v3954, 0.0
  %v4272 = vmax.f32 %v3956, 0.0
  %v4273 = vmax.f32 %v4115, 0.0
  %v4274 = vmax.f32 %v4117, 0.0
  %v4275 = vmax.f32 %v3316, 0.0
  %v4276 = vmax.f32 %v3318, 0.0
  %v4277 = vmax.f32 %v3477, 0.0
  %v4278 = vmax.f32 %v3479, 0.0
  %v4279 = vmax.f32 %v3638, 0.0
  %v4280 = vmax.f32 %v3640, 0.0
  %v4281 = vmax.f32 %v3799, 0.0
  %v4282 = vmax.f32 %v3801, 0.0
  %v4283 = vmax.f32 %v3960, 0.0
  %v4284 = vmax.f32 %v3962, 0.0
  %v4285 = vmax.f32 %v4121, 0.0
  %v4286 = vmax.f32 %v4123, 0.0
  %v4287 = vmax.f32 %v3322, 0.0
  %v4288 = vmax.f32 %v3324, 0.0
  %v4289 = vmax.f32 %v3483, 0.0
  %v4290 = vmax.f32 %v3485, 0.0
  %v4291 = vmax.f32 %v3644, 0.0
  %v4292 = vmax.f32 %v3646, 0.0
  %v4293 = vmax.f32 %v3805, 0.0
  %v4294 = vmax.f32 %v3807, 0.0
  %v4295 = vmax.f32 %v3966, 0.0
  %v4296 = vmax.f32 %v3968, 0.0
  %v4297 = vmax.f32 %v4127, 0.0
  %v4298 = vmax.f32 %v4129, 0.0
  %v4299 = vmax.f32 %v3328, 0.0
  %v4300 = vmax.f32 %v3330, 0.0
  %v4301 = vmax.f32 %v3489, 0.0
  %v4302 = vmax.f32 %v3491, 0.0
  %v4303 = vmax.f32 %v3650, 0.0
  %v4304 = vmax.f32 %v3652, 0.0
  %v4305 = vmax.f32 %v3811, 0.0
  %v4306 = vmax.f32 %v3813, 0.0
  %v4307 = vmax.f32 %v3972, 0.0
  %v4308 = vmax.f32 %v3974, 0.0
  %v4309 = vmax.f32 %v4133, 0.0
  %v4310 = vmax.f32 %v4135, 0.0
  %v4311 = vmax.f32 %v3334, 0.0
  %v4312 = vmax.f32 %v3336, 0.0
  %v4313 = vmax.f32 %v3495, 0.0
  %v4314 = vmax.f32 %v3497, 0.0
  %v4315 = vmax.f32 %v3656, 0.0
  %v4316 = vmax.f32 %v3658, 0.0
  %v4317 = vmax.f32 %v3817, 0.0
  %v4318 = vmax.f32 %v3819, 0.0
  %v4319 = vmax.f32 %v3978, 0.0
  %v4320 = vmax.f32 %v3980, 0.0
  %v4321 = vmax.f32 %v4139, 0.0
  %v4322 = vmax.f32 %v4141, 0.0
  %v4323 = vmax.f32 %v3340, 0.0
  %v4324 = vmax.f32 %v3342, 0.0
  %v4325 = vmax.f32 %v3501, 0.0
  %v4326 = vmax.f32 %v3503, 0.0
  %v4327 = vmax.f32 %v3662, 0.0
  %v4328 = vmax.f32 %v3664, 0.0
  %v4329 = vmax.f32 %v3823, 0.0
  %v4330 = vmax.f32 %v3825, 0.0
  %v4331 = vmax.f32 %v3984, 0.0
  %v4332 = vmax.f32 %v3986, 0.0
  %v4333 = vmax.f32 %v4145, 0.0
  %v4334 = vmax.f32 %v4147, 0.0
  %v4335 = vmax.f32 %v3346, 0.0
  %v4336 = vmax.f32 %v3348, 0.0
  %v4337 = vmax.f32 %v3507, 0.0
  %v4338 = vmax.f32 %v3509, 0.0
  %v4339 = vmax.f32 %v3668, 0.0
  %v4340 = vmax.f32 %v3670, 0.0
  %v4341 = vmax.f32 %v3829, 0.0
  %v4342 = vmax.f32 %v3831, 0.0
  %v4343 = vmax.f32 %v3990, 0.0
  %v4344 = vmax.f32 %v3992, 0.0
  %v4345 = vmax.f32 %v4151, 0.0
  %v4346 = vmax.f32 %v4153, 0.0
  %v4347 = vld [vmem:[%s8] sm:$0xff]
  %4348 = vmatprep.subr.mxu0 %v4156
  %4349 = vmatpush1.msra.mxu0 %v4155
  %4350 = vmatprep.subr.mxu0 %v4168
  %4351 = vmatpush1.msra.mxu0 %v4167
  %4352 = vmatprep.subr.mxu0 %v4180
  %4353 = vmatpush1.msra.mxu0 %v4179
  %4354 = vmatprep.subr.mxu0 %v4192
  %4355 = vmatpush1.msra.mxu0 %v4191
  %4356 = vmatprep.subr.mxu0 %v4204
  %4357 = vmatpush1.msra.mxu0 %v4203
  %4358 = vmatprep.subr.mxu0 %v4216
  %4359 = vmatpush1.msra.mxu0 %v4215
  %4360 = vmatprep.subr.mxu0 %v4228
  %4361 = vmatpush1.msra.mxu0 %v4227
  %4362 = vmatprep.subr.mxu0 %v4240
  %4363 = vmatpush1.msra.mxu0 %v4239
  %4364 = vmatprep.subr.mxu0 %v4252
  %4365 = vmatpush1.msra.mxu0 %v4251
  %4366 = vmatprep.subr.mxu0 %v4264
  %4367 = vmatpush1.msra.mxu0 %v4263
  %4368 = vmatprep.subr.mxu0 %v4276
  %4369 = vmatpush1.msra.mxu0 %v4275
  %4370 = vmatprep.subr.mxu0 %v4288
  %4371 = vmatpush1.msra.mxu0 %v4287
  %4372 = vmatprep.subr.mxu0 %v4300
  %4373 = vmatpush1.msra.mxu0 %v4299
  %4374 = vmatprep.subr.mxu0 %v4312
  %4375 = vmatpush1.msra.mxu0 %v4311
  %4376 = vmatprep.subr.mxu0 %v4324
  %4377 = vmatpush1.msra.mxu0 %v4323
  %4378 = vmatprep.subr.mxu0 %v4336
  %4379 = vmatpush1.msra.mxu0 %v4335
  %4380 = vmatprep.subr.mxu0 0.0
  %4381 = vmatpush1.msra.mxu0 0.0
  %4382 = vmatprep.subr.mxu0 0.0
  %4383 = vmatpush1.msra.mxu0 0.0
  %4384 = vmatprep.subr.mxu0 0.0
  %4385 = vmatpush1.msra.mxu0 0.0
  %4386 = vmatprep.subr.mxu0 0.0
  %4387 = vmatpush1.msra.mxu0 0.0
  %4388 = vmatprep.subr.mxu0 0.0
  %4389 = vmatpush1.msra.mxu0 0.0
  %4390 = vmatprep.subr.mxu0 0.0
  %4391 = vmatpush1.msra.mxu0 0.0
  %4392 = vmatprep.subr.mxu0 0.0
  %4393 = vmatpush1.msra.mxu0 0.0
  %4394 = vmatprep.subr.mxu0 0.0
  %4395 = vmatpush1.msra.mxu0 0.0
  %4396 = vmatprep.subr.mxu0 0.0
  %4397 = vmatpush1.msra.mxu0 0.0
  %4398 = vmatprep.subr.mxu0 0.0
  %4399 = vmatpush1.msra.mxu0 0.0
  %4400 = vmatprep.subr.mxu0 0.0
  %4401 = vmatpush1.msra.mxu0 0.0
  %4402 = vmatprep.subr.mxu0 0.0
  %4403 = vmatpush1.msra.mxu0 0.0
  %4404 = vmatprep.subr.mxu0 0.0
  %4405 = vmatpush1.msra.mxu0 0.0
  %4406 = vmatprep.subr.mxu0 0.0
  %4407 = vmatpush1.msra.mxu0 0.0
  %4408 = vmatprep.subr.mxu0 0.0
  %4409 = vmatpush1.msra.mxu0 0.0
  %4410 = vmatprep.subr.mxu0 0.0
  %4411 = vmatpush1.msra.mxu0 0.0
  %4412 = vmatprep.mubr.f32.mxu0 0.0
  %4413 = vmatmul.mubr.f32.gmra.mrb[0].mxu0 %v4347
  %v4414 = vpop.f32.mrb[0].mxu0
  %v4415 = vadd.f32 0.0, %v4414
  %v4416 = vpop.f32.mrb[0].mxu0
  %v4417 = vadd.f32 0.0, %v4416
  %4418 = vdwg.mxu0
  %4419 = vmatprep.subr.mxu0 %v4158
  %4420 = vmatpush1.msra.mxu0 %v4157
  %4421 = vmatprep.subr.mxu0 %v4170
  %4422 = vmatpush1.msra.mxu0 %v4169
  %4423 = vmatprep.subr.mxu0 %v4182
  %4424 = vmatpush1.msra.mxu0 %v4181
  %4425 = vmatprep.subr.mxu0 %v4194
  %4426 = vmatpush1.msra.mxu0 %v4193
  %4427 = vmatprep.subr.mxu0 %v4206
  %4428 = vmatpush1.msra.mxu0 %v4205
  %4429 = vmatprep.subr.mxu0 %v4218
  %4430 = vmatpush1.msra.mxu0 %v4217
  %4431 = vmatprep.subr.mxu0 %v4230
  %4432 = vmatpush1.msra.mxu0 %v4229
  %4433 = vmatprep.subr.mxu0 %v4242
  %4434 = vmatpush1.msra.mxu0 %v4241
  %4435 = vmatprep.subr.mxu0 %v4254
  %4436 = vmatpush1.msra.mxu0 %v4253
  %4437 = vmatprep.subr.mxu0 %v4266
  %4438 = vmatpush1.msra.mxu0 %v4265
  %4439 = vmatprep.subr.mxu0 %v4278
  %4440 = vmatpush1.msra.mxu0 %v4277
  %4441 = vmatprep.subr.mxu0 %v4290
  %4442 = vmatpush1.msra.mxu0 %v4289
  %4443 = vmatprep.subr.mxu0 %v4302
  %4444 = vmatpush1.msra.mxu0 %v4301
  %4445 = vmatprep.subr.mxu0 %v4314
  %4446 = vmatpush1.msra.mxu0 %v4313
  %4447 = vmatprep.subr.mxu0 %v4326
  %4448 = vmatpush1.msra.mxu0 %v4325
  %4449 = vmatprep.subr.mxu0 %v4338
  %4450 = vmatpush1.msra.mxu0 %v4337
  %4451 = vmatprep.subr.mxu0 0.0
  %4452 = vmatpush1.msra.mxu0 0.0
  %4453 = vmatprep.subr.mxu0 0.0
  %4454 = vmatpush1.msra.mxu0 0.0
  %4455 = vmatprep.subr.mxu0 0.0
  %4456 = vmatpush1.msra.mxu0 0.0
  %4457 = vmatprep.subr.mxu0 0.0
  %4458 = vmatpush1.msra.mxu0 0.0
  %4459 = vmatprep.subr.mxu0 0.0
  %4460 = vmatpush1.msra.mxu0 0.0
  %4461 = vmatprep.subr.mxu0 0.0
  %4462 = vmatpush1.msra.mxu0 0.0
  %4463 = vmatprep.subr.mxu0 0.0
  %4464 = vmatpush1.msra.mxu0 0.0
  %4465 = vmatprep.subr.mxu0 0.0
  %4466 = vmatpush1.msra.mxu0 0.0
  %4467 = vmatprep.subr.mxu0 0.0
  %4468 = vmatpush1.msra.mxu0 0.0
  %4469 = vmatprep.subr.mxu0 0.0
  %4470 = vmatpush1.msra.mxu0 0.0
  %4471 = vmatprep.subr.mxu0 0.0
  %4472 = vmatpush1.msra.mxu0 0.0
  %4473 = vmatprep.subr.mxu0 0.0
  %4474 = vmatpush1.msra.mxu0 0.0
  %4475 = vmatprep.subr.mxu0 0.0
  %4476 = vmatpush1.msra.mxu0 0.0
  %4477 = vmatprep.subr.mxu0 0.0
  %4478 = vmatpush1.msra.mxu0 0.0
  %4479 = vmatprep.subr.mxu0 0.0
  %4480 = vmatpush1.msra.mxu0 0.0
  %4481 = vmatprep.subr.mxu0 0.0
  %4482 = vmatpush1.msra.mxu0 0.0
  %4483 = vmatprep.mubr.f32.mxu0 0.0
  %4484 = vmatmul.mubr.f32.gmra.mrb[0].mxu0 %v4347
  %v4485 = vpop.f32.mrb[0].mxu0
  %v4486 = vadd.f32 0.0, %v4485
  %v4487 = vpop.f32.mrb[0].mxu0
  %v4488 = vadd.f32 0.0, %v4487
  %4489 = vdwg.mxu0
  %4490 = vmatprep.subr.mxu0 %v4160
  %4491 = vmatpush1.msra.mxu0 %v4159
  %4492 = vmatprep.subr.mxu0 %v4172
  %4493 = vmatpush1.msra.mxu0 %v4171
  %4494 = vmatprep.subr.mxu0 %v4184
  %4495 = vmatpush1.msra.mxu0 %v4183
  %4496 = vmatprep.subr.mxu0 %v4196
  %4497 = vmatpush1.msra.mxu0 %v4195
  %4498 = vmatprep.subr.mxu0 %v4208
  %4499 = vmatpush1.msra.mxu0 %v4207
  %4500 = vmatprep.subr.mxu0 %v4220
  %4501 = vmatpush1.msra.mxu0 %v4219
  %4502 = vmatprep.subr.mxu0 %v4232
  %4503 = vmatpush1.msra.mxu0 %v4231
  %4504 = vmatprep.subr.mxu0 %v4244
  %4505 = vmatpush1.msra.mxu0 %v4243
  %4506 = vmatprep.subr.mxu0 %v4256
  %4507 = vmatpush1.msra.mxu0 %v4255
  %4508 = vmatprep.subr.mxu0 %v4268
  %4509 = vmatpush1.msra.mxu0 %v4267
  %4510 = vmatprep.subr.mxu0 %v4280
  %4511 = vmatpush1.msra.mxu0 %v4279
  %4512 = vmatprep.subr.mxu0 %v4292
  %4513 = vmatpush1.msra.mxu0 %v4291
  %4514 = vmatprep.subr.mxu0 %v4304
  %4515 = vmatpush1.msra.mxu0 %v4303
  %4516 = vmatprep.subr.mxu0 %v4316
  %4517 = vmatpush1.msra.mxu0 %v4315
  %4518 = vmatprep.subr.mxu0 %v4328
  %4519 = vmatpush1.msra.mxu0 %v4327
  %4520 = vmatprep.subr.mxu0 %v4340
  %4521 = vmatpush1.msra.mxu0 %v4339
  %4522 = vmatprep.subr.mxu0 0.0
  %4523 = vmatpush1.msra.mxu0 0.0
  %4524 = vmatprep.subr.mxu0 0.0
  %4525 = vmatpush1.msra.mxu0 0.0
  %4526 = vmatprep.subr.mxu0 0.0
  %4527 = vmatpush1.msra.mxu0 0.0
  %4528 = vmatprep.subr.mxu0 0.0
  %4529 = vmatpush1.msra.mxu0 0.0
  %4530 = vmatprep.subr.mxu0 0.0
  %4531 = vmatpush1.msra.mxu0 0.0
  %4532 = vmatprep.subr.mxu0 0.0
  %4533 = vmatpush1.msra.mxu0 0.0
  %4534 = vmatprep.subr.mxu0 0.0
  %4535 = vmatpush1.msra.mxu0 0.0
  %4536 = vmatprep.subr.mxu0 0.0
  %4537 = vmatpush1.msra.mxu0 0.0
  %4538 = vmatprep.subr.mxu0 0.0
  %4539 = vmatpush1.msra.mxu0 0.0
  %4540 = vmatprep.subr.mxu0 0.0
  %4541 = vmatpush1.msra.mxu0 0.0
  %4542 = vmatprep.subr.mxu0 0.0
  %4543 = vmatpush1.msra.mxu0 0.0
  %4544 = vmatprep.subr.mxu0 0.0
  %4545 = vmatpush1.msra.mxu0 0.0
  %4546 = vmatprep.subr.mxu0 0.0
  %4547 = vmatpush1.msra.mxu0 0.0
  %4548 = vmatprep.subr.mxu0 0.0
  %4549 = vmatpush1.msra.mxu0 0.0
  %4550 = vmatprep.subr.mxu0 0.0
  %4551 = vmatpush1.msra.mxu0 0.0
  %4552 = vmatprep.subr.mxu0 0.0
  %4553 = vmatpush1.msra.mxu0 0.0
  %4554 = vmatprep.mubr.f32.mxu0 0.0
  %4555 = vmatmul.mubr.f32.gmra.mrb[0].mxu0 %v4347
  %v4556 = vpop.f32.mrb[0].mxu0
  %v4557 = vadd.f32 0.0, %v4556
  %v4558 = vpop.f32.mrb[0].mxu0
  %v4559 = vadd.f32 0.0, %v4558
  %4560 = vdwg.mxu0
  %4561 = vmatprep.subr.mxu0 %v4162
  %4562 = vmatpush1.msra.mxu0 %v4161
  %4563 = vmatprep.subr.mxu0 %v4174
  %4564 = vmatpush1.msra.mxu0 %v4173
  %4565 = vmatprep.subr.mxu0 %v4186
  %4566 = vmatpush1.msra.mxu0 %v4185
  %4567 = vmatprep.subr.mxu0 %v4198
  %4568 = vmatpush1.msra.mxu0 %v4197
  %4569 = vmatprep.subr.mxu0 %v4210
  %4570 = vmatpush1.msra.mxu0 %v4209
  %4571 = vmatprep.subr.mxu0 %v4222
  %4572 = vmatpush1.msra.mxu0 %v4221
  %4573 = vmatprep.subr.mxu0 %v4234
  %4574 = vmatpush1.msra.mxu0 %v4233
  %4575 = vmatprep.subr.mxu0 %v4246
  %4576 = vmatpush1.msra.mxu0 %v4245
  %4577 = vmatprep.subr.mxu0 %v4258
  %4578 = vmatpush1.msra.mxu0 %v4257
  %4579 = vmatprep.subr.mxu0 %v4270
  %4580 = vmatpush1.msra.mxu0 %v4269
  %4581 = vmatprep.subr.mxu0 %v4282
  %4582 = vmatpush1.msra.mxu0 %v4281
  %4583 = vmatprep.subr.mxu0 %v4294
  %4584 = vmatpush1.msra.mxu0 %v4293
  %4585 = vmatprep.subr.mxu0 %v4306
  %4586 = vmatpush1.msra.mxu0 %v4305
  %4587 = vmatprep.subr.mxu0 %v4318
  %4588 = vmatpush1.msra.mxu0 %v4317
  %4589 = vmatprep.subr.mxu0 %v4330
  %4590 = vmatpush1.msra.mxu0 %v4329
  %4591 = vmatprep.subr.mxu0 %v4342
  %4592 = vmatpush1.msra.mxu0 %v4341
  %4593 = vmatprep.subr.mxu0 0.0
  %4594 = vmatpush1.msra.mxu0 0.0
  %4595 = vmatprep.subr.mxu0 0.0
  %4596 = vmatpush1.msra.mxu0 0.0
  %4597 = vmatprep.subr.mxu0 0.0
  %4598 = vmatpush1.msra.mxu0 0.0
  %4599 = vmatprep.subr.mxu0 0.0
  %4600 = vmatpush1.msra.mxu0 0.0
  %4601 = vmatprep.subr.mxu0 0.0
  %4602 = vmatpush1.msra.mxu0 0.0
  %4603 = vmatprep.subr.mxu0 0.0
  %4604 = vmatpush1.msra.mxu0 0.0
  %4605 = vmatprep.subr.mxu0 0.0
  %4606 = vmatpush1.msra.mxu0 0.0
  %4607 = vmatprep.subr.mxu0 0.0
  %4608 = vmatpush1.msra.mxu0 0.0
  %4609 = vmatprep.subr.mxu0 0.0
  %4610 = vmatpush1.msra.mxu0 0.0
  %4611 = vmatprep.subr.mxu0 0.0
  %4612 = vmatpush1.msra.mxu0 0.0
  %4613 = vmatprep.subr.mxu0 0.0
  %4614 = vmatpush1.msra.mxu0 0.0
  %4615 = vmatprep.subr.mxu0 0.0
  %4616 = vmatpush1.msra.mxu0 0.0
  %4617 = vmatprep.subr.mxu0 0.0
  %4618 = vmatpush1.msra.mxu0 0.0
  %4619 = vmatprep.subr.mxu0 0.0
  %4620 = vmatpush1.msra.mxu0 0.0
  %4621 = vmatprep.subr.mxu0 0.0
  %4622 = vmatpush1.msra.mxu0 0.0
  %4623 = vmatprep.subr.mxu0 0.0
  %4624 = vmatpush1.msra.mxu0 0.0
  %4625 = vmatprep.mubr.f32.mxu0 0.0
  %4626 = vmatmul.mubr.f32.gmra.mrb[0].mxu0 %v4347
  %v4627 = vpop.f32.mrb[0].mxu0
  %v4628 = vadd.f32 0.0, %v4627
  %v4629 = vpop.f32.mrb[0].mxu0
  %v4630 = vadd.f32 0.0, %v4629
  %4631 = vdwg.mxu0
  %4632 = vmatprep.subr.mxu0 %v4164
  %4633 = vmatpush1.msra.mxu0 %v4163
  %4634 = vmatprep.subr.mxu0 %v4176
  %4635 = vmatpush1.msra.mxu0 %v4175
  %4636 = vmatprep.subr.mxu0 %v4188
  %4637 = vmatpush1.msra.mxu0 %v4187
  %4638 = vmatprep.subr.mxu0 %v4200
  %4639 = vmatpush1.msra.mxu0 %v4199
  %4640 = vmatprep.subr.mxu0 %v4212
  %4641 = vmatpush1.msra.mxu0 %v4211
  %4642 = vmatprep.subr.mxu0 %v4224
  %4643 = vmatpush1.msra.mxu0 %v4223
  %4644 = vmatprep.subr.mxu0 %v4236
  %4645 = vmatpush1.msra.mxu0 %v4235
  %4646 = vmatprep.subr.mxu0 %v4248
  %4647 = vmatpush1.msra.mxu0 %v4247
  %4648 = vmatprep.subr.mxu0 %v4260
  %4649 = vmatpush1.msra.mxu0 %v4259
  %4650 = vmatprep.subr.mxu0 %v4272
  %4651 = vmatpush1.msra.mxu0 %v4271
  %4652 = vmatprep.subr.mxu0 %v4284
  %4653 = vmatpush1.msra.mxu0 %v4283
  %4654 = vmatprep.subr.mxu0 %v4296
  %4655 = vmatpush1.msra.mxu0 %v4295
  %4656 = vmatprep.subr.mxu0 %v4308
  %4657 = vmatpush1.msra.mxu0 %v4307
  %4658 = vmatprep.subr.mxu0 %v4320
  %4659 = vmatpush1.msra.mxu0 %v4319
  %4660 = vmatprep.subr.mxu0 %v4332
  %4661 = vmatpush1.msra.mxu0 %v4331
  %4662 = vmatprep.subr.mxu0 %v4344
  %4663 = vmatpush1.msra.mxu0 %v4343
  %4664 = vmatprep.subr.mxu0 0.0
  %4665 = vmatpush1.msra.mxu0 0.0
  %4666 = vmatprep.subr.mxu0 0.0
  %4667 = vmatpush1.msra.mxu0 0.0
  %4668 = vmatprep.subr.mxu0 0.0
  %4669 = vmatpush1.msra.mxu0 0.0
  %4670 = vmatprep.subr.mxu0 0.0
  %4671 = vmatpush1.msra.mxu0 0.0
  %4672 = vmatprep.subr.mxu0 0.0
  %4673 = vmatpush1.msra.mxu0 0.0
  %4674 = vmatprep.subr.mxu0 0.0
  %4675 = vmatpush1.msra.mxu0 0.0
  %4676 = vmatprep.subr.mxu0 0.0
  %4677 = vmatpush1.msra.mxu0 0.0
  %4678 = vmatprep.subr.mxu0 0.0
  %4679 = vmatpush1.msra.mxu0 0.0
  %4680 = vmatprep.subr.mxu0 0.0
  %4681 = vmatpush1.msra.mxu0 0.0
  %4682 = vmatprep.subr.mxu0 0.0
  %4683 = vmatpush1.msra.mxu0 0.0
  %4684 = vmatprep.subr.mxu0 0.0
  %4685 = vmatpush1.msra.mxu0 0.0
  %4686 = vmatprep.subr.mxu0 0.0
  %4687 = vmatpush1.msra.mxu0 0.0
  %4688 = vmatprep.subr.mxu0 0.0
  %4689 = vmatpush1.msra.mxu0 0.0
  %4690 = vmatprep.subr.mxu0 0.0
  %4691 = vmatpush1.msra.mxu0 0.0
  %4692 = vmatprep.subr.mxu0 0.0
  %4693 = vmatpush1.msra.mxu0 0.0
  %4694 = vmatprep.subr.mxu0 0.0
  %4695 = vmatpush1.msra.mxu0 0.0
  %4696 = vmatprep.mubr.f32.mxu0 0.0
  %4697 = vmatmul.mubr.f32.gmra.mrb[0].mxu0 %v4347
  %v4698 = vpop.f32.mrb[0].mxu0
  %v4699 = vadd.f32 0.0, %v4698
  %v4700 = vpop.f32.mrb[0].mxu0
  %v4701 = vadd.f32 0.0, %v4700
  %4702 = vdwg.mxu0
  %4703 = vmatprep.subr.mxu0 %v4166
  %4704 = vmatpush1.msra.mxu0 %v4165
  %4705 = vmatprep.subr.mxu0 %v4178
  %4706 = vmatpush1.msra.mxu0 %v4177
  %4707 = vmatprep.subr.mxu0 %v4190
  %4708 = vmatpush1.msra.mxu0 %v4189
  %4709 = vmatprep.subr.mxu0 %v4202
  %4710 = vmatpush1.msra.mxu0 %v4201
  %4711 = vmatprep.subr.mxu0 %v4214
  %4712 = vmatpush1.msra.mxu0 %v4213
  %4713 = vmatprep.subr.mxu0 %v4226
  %4714 = vmatpush1.msra.mxu0 %v4225
  %4715 = vmatprep.subr.mxu0 %v4238
  %4716 = vmatpush1.msra.mxu0 %v4237
  %4717 = vmatprep.subr.mxu0 %v4250
  %4718 = vmatpush1.msra.mxu0 %v4249
  %4719 = vmatprep.subr.mxu0 %v4262
  %4720 = vmatpush1.msra.mxu0 %v4261
  %4721 = vmatprep.subr.mxu0 %v4274
  %4722 = vmatpush1.msra.mxu0 %v4273
  %4723 = vmatprep.subr.mxu0 %v4286
  %4724 = vmatpush1.msra.mxu0 %v4285
  %4725 = vmatprep.subr.mxu0 %v4298
  %4726 = vmatpush1.msra.mxu0 %v4297
  %4727 = vmatprep.subr.mxu0 %v4310
  %4728 = vmatpush1.msra.mxu0 %v4309
  %4729 = vmatprep.subr.mxu0 %v4322
  %4730 = vmatpush1.msra.mxu0 %v4321
  %4731 = vmatprep.subr.mxu0 %v4334
  %4732 = vmatpush1.msra.mxu0 %v4333
  %4733 = vmatprep.subr.mxu0 %v4346
  %4734 = vmatpush1.msra.mxu0 %v4345
  %4735 = vmatprep.subr.mxu0 0.0
  %4736 = vmatpush1.msra.mxu0 0.0
  %4737 = vmatprep.subr.mxu0 0.0
  %4738 = vmatpush1.msra.mxu0 0.0
  %4739 = vmatprep.subr.mxu0 0.0
  %4740 = vmatpush1.msra.mxu0 0.0
  %4741 = vmatprep.subr.mxu0 0.0
  %4742 = vmatpush1.msra.mxu0 0.0
  %4743 = vmatprep.subr.mxu0 0.0
  %4744 = vmatpush1.msra.mxu0 0.0
  %4745 = vmatprep.subr.mxu0 0.0
  %4746 = vmatpush1.msra.mxu0 0.0
  %4747 = vmatprep.subr.mxu0 0.0
  %4748 = vmatpush1.msra.mxu0 0.0
  %4749 = vmatprep.subr.mxu0 0.0
  %4750 = vmatpush1.msra.mxu0 0.0
  %4751 = vmatprep.subr.mxu0 0.0
  %4752 = vmatpush1.msra.mxu0 0.0
  %4753 = vmatprep.subr.mxu0 0.0
  %4754 = vmatpush1.msra.mxu0 0.0
  %4755 = vmatprep.subr.mxu0 0.0
  %4756 = vmatpush1.msra.mxu0 0.0
  %4757 = vmatprep.subr.mxu0 0.0
  %4758 = vmatpush1.msra.mxu0 0.0
  %4759 = vmatprep.subr.mxu0 0.0
  %4760 = vmatpush1.msra.mxu0 0.0
  %4761 = vmatprep.subr.mxu0 0.0
  %4762 = vmatpush1.msra.mxu0 0.0
  %4763 = vmatprep.subr.mxu0 0.0
  %4764 = vmatpush1.msra.mxu0 0.0
  %4765 = vmatprep.subr.mxu0 0.0
  %4766 = vmatpush1.msra.mxu0 0.0
  %4767 = vmatprep.mubr.f32.mxu0 0.0
  %4768 = vmatmul.mubr.f32.gmra.mrb[0].mxu0 %v4347
  %v4769 = vpop.f32.mrb[0].mxu0
  %v4770 = vadd.f32 0.0, %v4769
  %v4771 = vpop.f32.mrb[0].mxu0
  %v4772 = vadd.f32 0.0, %v4771
  %4773 = vdwg.mxu0
  %v4774 = vld [vmem:[%s10] sm:$0xff]
  %v4775 = vld [vmem:[%s10 + $0x8] sm:$0xff]
  %v4776 = vld [vmem:[%s10 + $0x10] sm:$0xff]
  %v4777 = vld [vmem:[%s10 + $0x18] sm:$0xff]
  %v4778 = vld [vmem:[%s10 + $0x20] sm:$0xff]
  %v4779 = vld [vmem:[%s10 + $0x28] sm:$0xff]
  %v4780 = vld [vmem:[%s10 + $0x30] sm:$0xff]
  %v4781 = vld [vmem:[%s10 + $0x38] sm:$0xff]
  %v4782 = vld [vmem:[%s10 + $0x40] sm:$0xff]
  %v4783 = vld [vmem:[%s10 + $0x48] sm:$0xff]
  %v4784 = vld [vmem:[%s10 + $0x50] sm:$0xff]
  %v4785 = vld [vmem:[%s10 + $0x58] sm:$0xff]
  %v4786 = vld [vmem:[%s10 + $0x60] sm:$0xff]
  %v4787 = vld [vmem:[%s10 + $0x68] sm:$0xff]
  %v4788 = vld [vmem:[%s10 + $0x70] sm:$0xff]
  %v4789 = vld [vmem:[%s10 + $0x78] sm:$0xff]
  %v4790 = vld [vmem:[%s10 + $0x80] sm:$0xff]
  %v4791 = vld [vmem:[%s10 + $0x88] sm:$0xff]
  %v4792 = vld [vmem:[%s10 + $0x90] sm:$0xff]
  %v4793 = vld [vmem:[%s10 + $0x98] sm:$0xff]
  %v4794 = vld [vmem:[%s10 + $0xa0] sm:$0xff]
  %v4795 = vld [vmem:[%s10 + $0xa8] sm:$0xff]
  %v4796 = vld [vmem:[%s10 + $0xb0] sm:$0xff]
  %v4797 = vld [vmem:[%s10 + $0xb8] sm:$0xff]
  %v4798 = vld [vmem:[%s10 + $0xc0] sm:$0xff]
  %v4799 = vld [vmem:[%s10 + $0xc8] sm:$0xff]
  %v4800 = vld [vmem:[%s10 + $0xd0] sm:$0xff]
  %v4801 = vld [vmem:[%s10 + $0xd8] sm:$0xff]
  %v4802 = vld [vmem:[%s10 + $0xe0] sm:$0xff]
  %v4803 = vld [vmem:[%s10 + $0xe8] sm:$0xff]
  %v4804 = vld [vmem:[%s10 + $0xf0] sm:$0xff]
  %v4805 = vld [vmem:[%s10 + $0xf8] sm:$0xff]
  %v4806 = vld [vmem:[%s10 + $0x100] sm:$0xff]
  %v4807 = vld [vmem:[%s10 + $0x108] sm:$0xff]
  %v4808 = vld [vmem:[%s10 + $0x110] sm:$0xff]
  %v4809 = vld [vmem:[%s10 + $0x118] sm:$0xff]
  %v4810 = vld [vmem:[%s10 + $0x120] sm:$0xff]
  %v4811 = vld [vmem:[%s10 + $0x128] sm:$0xff]
  %v4812 = vld [vmem:[%s10 + $0x130] sm:$0xff]
  %v4813 = vld [vmem:[%s10 + $0x138] sm:$0xff]
  %v4814 = vld [vmem:[%s10 + $0x140] sm:$0xff]
  %v4815 = vld [vmem:[%s10 + $0x148] sm:$0xff]
  %v4816 = vld [vmem:[%s10 + $0x150] sm:$0xff]
  %v4817 = vld [vmem:[%s10 + $0x158] sm:$0xff]
  %v4818 = vld [vmem:[%s10 + $0x160] sm:$0xff]
  %v4819 = vld [vmem:[%s10 + $0x168] sm:$0xff]
  %v4820 = vld [vmem:[%s10 + $0x170] sm:$0xff]
  %v4821 = vld [vmem:[%s10 + $0x178] sm:$0xff]
  %v4822 = vld [vmem:[%s10 + $0x180] sm:$0xff]
  %v4823 = vld [vmem:[%s10 + $0x188] sm:$0xff]
  %v4824 = vld [vmem:[%s10 + $0x190] sm:$0xff]
  %v4825 = vld [vmem:[%s10 + $0x198] sm:$0xff]
  %v4826 = vld [vmem:[%s10 + $0x1a0] sm:$0xff]
  %v4827 = vld [vmem:[%s10 + $0x1a8] sm:$0xff]
  %v4828 = vld [vmem:[%s10 + $0x1b0] sm:$0xff]
  %v4829 = vld [vmem:[%s10 + $0x1b8] sm:$0xff]
  %v4830 = vld [vmem:[%s10 + $0x1c0] sm:$0xff]
  %v4831 = vld [vmem:[%s10 + $0x1c8] sm:$0xff]
  %v4832 = vld [vmem:[%s10 + $0x1d0] sm:$0xff]
  %v4833 = vld [vmem:[%s10 + $0x1d8] sm:$0xff]
  %v4834 = vld [vmem:[%s10 + $0x1e0] sm:$0xff]
  %v4835 = vld [vmem:[%s10 + $0x1e8] sm:$0xff]
  %v4836 = vld [vmem:[%s10 + $0x1f0] sm:$0xff]
  %v4837 = vld [vmem:[%s10 + $0x1f8] sm:$0xff]
  %v4838 = vld [vmem:[%s10 + $0x200] sm:$0xff]
  %v4839 = vld [vmem:[%s10 + $0x208] sm:$0xff]
  %v4840 = vld [vmem:[%s10 + $0x210] sm:$0xff]
  %v4841 = vld [vmem:[%s10 + $0x218] sm:$0xff]
  %v4842 = vld [vmem:[%s10 + $0x220] sm:$0xff]
  %v4843 = vld [vmem:[%s10 + $0x228] sm:$0xff]
  %v4844 = vld [vmem:[%s10 + $0x230] sm:$0xff]
  %v4845 = vld [vmem:[%s10 + $0x238] sm:$0xff]
  %v4846 = vld [vmem:[%s10 + $0x240] sm:$0xff]
  %v4847 = vld [vmem:[%s10 + $0x248] sm:$0xff]
  %v4848 = vld [vmem:[%s10 + $0x250] sm:$0xff]
  %v4849 = vld [vmem:[%s10 + $0x258] sm:$0xff]
  %v4850 = vld [vmem:[%s10 + $0x260] sm:$0xff]
  %v4851 = vld [vmem:[%s10 + $0x268] sm:$0xff]
  %v4852 = vld [vmem:[%s10 + $0x270] sm:$0xff]
  %v4853 = vld [vmem:[%s10 + $0x278] sm:$0xff]
  %v4854 = vld [vmem:[%s10 + $0x280] sm:$0xff]
  %v4855 = vld [vmem:[%s10 + $0x288] sm:$0xff]
  %v4856 = vld [vmem:[%s10 + $0x290] sm:$0xff]
  %v4857 = vld [vmem:[%s10 + $0x298] sm:$0xff]
  %v4858 = vld [vmem:[%s10 + $0x2a0] sm:$0xff]
  %v4859 = vld [vmem:[%s10 + $0x2a8] sm:$0xff]
  %v4860 = vld [vmem:[%s10 + $0x2b0] sm:$0xff]
  %v4861 = vld [vmem:[%s10 + $0x2b8] sm:$0xff]
  %v4862 = vld [vmem:[%s10 + $0x2c0] sm:$0xff]
  %v4863 = vld [vmem:[%s10 + $0x2c8] sm:$0xff]
  %v4864 = vld [vmem:[%s10 + $0x2d0] sm:$0xff]
  %v4865 = vld [vmem:[%s10 + $0x2d8] sm:$0xff]
  %v4866 = vld [vmem:[%s10 + $0x2e0] sm:$0xff]
  %v4867 = vld [vmem:[%s10 + $0x2e8] sm:$0xff]
  %v4868 = vld [vmem:[%s10 + $0x2f0] sm:$0xff]
  %v4869 = vld [vmem:[%s10 + $0x2f8] sm:$0xff]
  %v4870 = vld [vmem:[%s10 + $0x300] sm:$0xff]
  %v4871 = vld [vmem:[%s10 + $0x308] sm:$0xff]
  %v4872 = vld [vmem:[%s10 + $0x310] sm:$0xff]
  %v4873 = vld [vmem:[%s10 + $0x318] sm:$0xff]
  %v4874 = vld [vmem:[%s10 + $0x320] sm:$0xff]
  %v4875 = vld [vmem:[%s10 + $0x328] sm:$0xff]
  %v4876 = vld [vmem:[%s10 + $0x330] sm:$0xff]
  %v4877 = vld [vmem:[%s10 + $0x338] sm:$0xff]
  %v4878 = vld [vmem:[%s10 + $0x340] sm:$0xff]
  %v4879 = vld [vmem:[%s10 + $0x348] sm:$0xff]
  %v4880 = vld [vmem:[%s10 + $0x350] sm:$0xff]
  %v4881 = vld [vmem:[%s10 + $0x358] sm:$0xff]
  %v4882 = vld [vmem:[%s10 + $0x360] sm:$0xff]
  %v4883 = vld [vmem:[%s10 + $0x368] sm:$0xff]
  %v4884 = vld [vmem:[%s10 + $0x370] sm:$0xff]
  %v4885 = vld [vmem:[%s10 + $0x378] sm:$0xff]
  %v4886 = vld [vmem:[%s10 + $0x380] sm:$0xff]
  %v4887 = vld [vmem:[%s10 + $0x388] sm:$0xff]
  %v4888 = vld [vmem:[%s10 + $0x390] sm:$0xff]
  %v4889 = vld [vmem:[%s10 + $0x398] sm:$0xff]
  %v4890 = vld [vmem:[%s10 + $0x3a0] sm:$0xff]
  %v4891 = vld [vmem:[%s10 + $0x3a8] sm:$0xff]
  %v4892 = vld [vmem:[%s10 + $0x3b0] sm:$0xff]
  %v4893 = vld [vmem:[%s10 + $0x3b8] sm:$0xff]
  %v4894 = vld [vmem:[%s10 + $0x3c0] sm:$0xff]
  %v4895 = vld [vmem:[%s10 + $0x3c8] sm:$0xff]
  %v4896 = vld [vmem:[%s10 + $0x3d0] sm:$0xff]
  %v4897 = vld [vmem:[%s10 + $0x3d8] sm:$0xff]
  %v4898 = vld [vmem:[%s10 + $0x3e0] sm:$0xff]
  %v4899 = vld [vmem:[%s10 + $0x3e8] sm:$0xff]
  %v4900 = vld [vmem:[%s10 + $0x3f0] sm:$0xff]
  %v4901 = vld [vmem:[%s10 + $0x3f8] sm:$0xff]
  %v4902 = vld [vmem:[%s10 + $0x400] sm:$0xff]
  %v4903 = vld [vmem:[%s10 + $0x408] sm:$0xff]
  %v4904 = vld [vmem:[%s10 + $0x410] sm:$0xff]
  %v4905 = vld [vmem:[%s10 + $0x418] sm:$0xff]
  %v4906 = vld [vmem:[%s10 + $0x420] sm:$0xff]
  %v4907 = vld [vmem:[%s10 + $0x428] sm:$0xff]
  %v4908 = vld [vmem:[%s10 + $0x430] sm:$0xff]
  %v4909 = vld [vmem:[%s10 + $0x438] sm:$0xff]
  %v4910 = vld [vmem:[%s10 + $0x440] sm:$0xff]
  %v4911 = vld [vmem:[%s10 + $0x448] sm:$0xff]
  %v4912 = vld [vmem:[%s10 + $0x450] sm:$0xff]
  %v4913 = vld [vmem:[%s10 + $0x458] sm:$0xff]
  %v4914 = vld [vmem:[%s10 + $0x460] sm:$0xff]
  %v4915 = vld [vmem:[%s10 + $0x468] sm:$0xff]
  %v4916 = vld [vmem:[%s10 + $0x470] sm:$0xff]
  %v4917 = vld [vmem:[%s10 + $0x478] sm:$0xff]
  %v4918 = vld [vmem:[%s10 + $0x480] sm:$0xff]
  %v4919 = vld [vmem:[%s10 + $0x488] sm:$0xff]
  %v4920 = vld [vmem:[%s10 + $0x490] sm:$0xff]
  %v4921 = vld [vmem:[%s10 + $0x498] sm:$0xff]
  %v4922 = vld [vmem:[%s10 + $0x4a0] sm:$0xff]
  %v4923 = vld [vmem:[%s10 + $0x4a8] sm:$0xff]
  %v4924 = vld [vmem:[%s10 + $0x4b0] sm:$0xff]
  %v4925 = vld [vmem:[%s10 + $0x4b8] sm:$0xff]
  %v4926 = vld [vmem:[%s10 + $0x4c0] sm:$0xff]
  %v4927 = vld [vmem:[%s10 + $0x4c8] sm:$0xff]
  %v4928 = vld [vmem:[%s10 + $0x4d0] sm:$0xff]
  %v4929 = vld [vmem:[%s10 + $0x4d8] sm:$0xff]
  %v4930 = vld [vmem:[%s10 + $0x4e0] sm:$0xff]
  %v4931 = vld [vmem:[%s10 + $0x4e8] sm:$0xff]
  %v4932 = vld [vmem:[%s10 + $0x4f0] sm:$0xff]
  %v4933 = vld [vmem:[%s10 + $0x4f8] sm:$0xff]
  %v4934 = vld [vmem:[%s10 + $0x500] sm:$0xff]
  %v4935 = vld [vmem:[%s10 + $0x508] sm:$0xff]
  %v4936 = vld [vmem:[%s10 + $0x510] sm:$0xff]
  %v4937 = vld [vmem:[%s10 + $0x518] sm:$0xff]
  %v4938 = vld [vmem:[%s10 + $0x520] sm:$0xff]
  %v4939 = vld [vmem:[%s10 + $0x528] sm:$0xff]
  %v4940 = vld [vmem:[%s10 + $0x530] sm:$0xff]
  %v4941 = vld [vmem:[%s10 + $0x538] sm:$0xff]
  %v4942 = vld [vmem:[%s10 + $0x540] sm:$0xff]
  %v4943 = vld [vmem:[%s10 + $0x548] sm:$0xff]
  %v4944 = vld [vmem:[%s10 + $0x550] sm:$0xff]
  %v4945 = vld [vmem:[%s10 + $0x558] sm:$0xff]
  %v4946 = vld [vmem:[%s10 + $0x560] sm:$0xff]
  %v4947 = vld [vmem:[%s10 + $0x568] sm:$0xff]
  %v4948 = vld [vmem:[%s10 + $0x570] sm:$0xff]
  %v4949 = vld [vmem:[%s10 + $0x578] sm:$0xff]
  %v4950 = vld [vmem:[%s10 + $0x580] sm:$0xff]
  %v4951 = vld [vmem:[%s10 + $0x588] sm:$0xff]
  %v4952 = vld [vmem:[%s10 + $0x590] sm:$0xff]
  %v4953 = vld [vmem:[%s10 + $0x598] sm:$0xff]
  %v4954 = vld [vmem:[%s10 + $0x5a0] sm:$0xff]
  %v4955 = vld [vmem:[%s10 + $0x5a8] sm:$0xff]
  %v4956 = vld [vmem:[%s10 + $0x5b0] sm:$0xff]
  %v4957 = vld [vmem:[%s10 + $0x5b8] sm:$0xff]
  %v4958 = vld [vmem:[%s10 + $0x5c0] sm:$0xff]
  %v4959 = vld [vmem:[%s10 + $0x5c8] sm:$0xff]
  %v4960 = vld [vmem:[%s10 + $0x5d0] sm:$0xff]
  %v4961 = vld [vmem:[%s10 + $0x5d8] sm:$0xff]
  %v4962 = vld [vmem:[%s10 + $0x5e0] sm:$0xff]
  %v4963 = vld [vmem:[%s10 + $0x5e8] sm:$0xff]
  %v4964 = vld [vmem:[%s10 + $0x5f0] sm:$0xff]
  %v4965 = vld [vmem:[%s10 + $0x5f8] sm:$0xff]
  %4966 = vmatprep.subr.mxu0 0.0
  %4967 = vmatpush1.msra.mxu0 %v4774
  %4968 = vmatprep.subr.mxu0 0.0
  %4969 = vmatpush1.msra.mxu0 %v4775
  %4970 = vmatprep.subr.mxu0 0.0
  %4971 = vmatpush1.msra.mxu0 %v4776
  %4972 = vmatprep.subr.mxu0 0.0
  %4973 = vmatpush1.msra.mxu0 %v4777
  %4974 = vmatprep.subr.mxu0 0.0
  %4975 = vmatpush1.msra.mxu0 %v4778
  %4976 = vmatprep.subr.mxu0 0.0
  %4977 = vmatpush1.msra.mxu0 %v4779
  %4978 = vmatprep.subr.mxu0 0.0
  %4979 = vmatpush1.msra.mxu0 %v4780
  %4980 = vmatprep.subr.mxu0 0.0
  %4981 = vmatpush1.msra.mxu0 %v4781
  %4982 = vmatprep.subr.mxu0 0.0
  %4983 = vmatpush1.msra.mxu0 %v4782
  %4984 = vmatprep.subr.mxu0 0.0
  %4985 = vmatpush1.msra.mxu0 %v4783
  %4986 = vmatprep.subr.mxu0 0.0
  %4987 = vmatpush1.msra.mxu0 %v4784
  %4988 = vmatprep.subr.mxu0 0.0
  %4989 = vmatpush1.msra.mxu0 %v4785
  %4990 = vmatprep.subr.mxu0 0.0
  %4991 = vmatpush1.msra.mxu0 %v4786
  %4992 = vmatprep.subr.mxu0 0.0
  %4993 = vmatpush1.msra.mxu0 %v4787
  %4994 = vmatprep.subr.mxu0 0.0
  %4995 = vmatpush1.msra.mxu0 %v4788
  %4996 = vmatprep.subr.mxu0 0.0
  %4997 = vmatpush1.msra.mxu0 %v4789
  %4998 = vmatprep.subr.mxu0 0.0
  %4999 = vmatpush1.msra.mxu0 %v4790
  %5000 = vmatprep.subr.mxu0 0.0
  %5001 = vmatpush1.msra.mxu0 %v4791
  %5002 = vmatprep.subr.mxu0 0.0
  %5003 = vmatpush1.msra.mxu0 %v4792
  %5004 = vmatprep.subr.mxu0 0.0
  %5005 = vmatpush1.msra.mxu0 %v4793
  %5006 = vmatprep.subr.mxu0 0.0
  %5007 = vmatpush1.msra.mxu0 %v4794
  %5008 = vmatprep.subr.mxu0 0.0
  %5009 = vmatpush1.msra.mxu0 %v4795
  %5010 = vmatprep.subr.mxu0 0.0
  %5011 = vmatpush1.msra.mxu0 %v4796
  %5012 = vmatprep.subr.mxu0 0.0
  %5013 = vmatpush1.msra.mxu0 %v4797
  %5014 = vmatprep.subr.mxu0 0.0
  %5015 = vmatpush1.msra.mxu0 %v4798
  %5016 = vmatprep.subr.mxu0 0.0
  %5017 = vmatpush1.msra.mxu0 %v4799
  %5018 = vmatprep.subr.mxu0 0.0
  %5019 = vmatpush1.msra.mxu0 %v4800
  %5020 = vmatprep.subr.mxu0 0.0
  %5021 = vmatpush1.msra.mxu0 %v4801
  %5022 = vmatprep.subr.mxu0 0.0
  %5023 = vmatpush1.msra.mxu0 %v4802
  %5024 = vmatprep.subr.mxu0 0.0
  %5025 = vmatpush1.msra.mxu0 %v4803
  %5026 = vmatprep.subr.mxu0 0.0
  %5027 = vmatpush1.msra.mxu0 %v4804
  %5028 = vmatprep.subr.mxu0 0.0
  %5029 = vmatpush1.msra.mxu0 %v4805
  %5030 = vmatprep.mubr.f32.mxu0 %v4417
  %5031 = vmatmul.mubr.f32.gmra.mrb[0].mxu0 %v4415
  %v5032 = vpop.f32.mrb[0].mxu0
  %v5033 = vadd.f32 0.0, %v5032
  %v5034 = vpop.f32.mrb[0].mxu0
  %5035 = vdwg.mxu0
  %5036 = vmatprep.subr.mxu0 0.0
  %5037 = vmatpush1.msra.mxu0 %v4806
  %5038 = vmatprep.subr.mxu0 0.0
  %5039 = vmatpush1.msra.mxu0 %v4807
  %5040 = vmatprep.subr.mxu0 0.0
  %5041 = vmatpush1.msra.mxu0 %v4808
  %5042 = vmatprep.subr.mxu0 0.0
  %5043 = vmatpush1.msra.mxu0 %v4809
  %5044 = vmatprep.subr.mxu0 0.0
  %5045 = vmatpush1.msra.mxu0 %v4810
  %5046 = vmatprep.subr.mxu0 0.0
  %5047 = vmatpush1.msra.mxu0 %v4811
  %5048 = vmatprep.subr.mxu0 0.0
  %5049 = vmatpush1.msra.mxu0 %v4812
  %5050 = vmatprep.subr.mxu0 0.0
  %5051 = vmatpush1.msra.mxu0 %v4813
  %5052 = vmatprep.subr.mxu0 0.0
  %5053 = vmatpush1.msra.mxu0 %v4814
  %5054 = vmatprep.subr.mxu0 0.0
  %5055 = vmatpush1.msra.mxu0 %v4815
  %5056 = vmatprep.subr.mxu0 0.0
  %5057 = vmatpush1.msra.mxu0 %v4816
  %5058 = vmatprep.subr.mxu0 0.0
  %5059 = vmatpush1.msra.mxu0 %v4817
  %5060 = vmatprep.subr.mxu0 0.0
  %5061 = vmatpush1.msra.mxu0 %v4818
  %5062 = vmatprep.subr.mxu0 0.0
  %5063 = vmatpush1.msra.mxu0 %v4819
  %5064 = vmatprep.subr.mxu0 0.0
  %5065 = vmatpush1.msra.mxu0 %v4820
  %5066 = vmatprep.subr.mxu0 0.0
  %5067 = vmatpush1.msra.mxu0 %v4821
  %5068 = vmatprep.subr.mxu0 0.0
  %5069 = vmatpush1.msra.mxu0 %v4822
  %5070 = vmatprep.subr.mxu0 0.0
  %5071 = vmatpush1.msra.mxu0 %v4823
  %5072 = vmatprep.subr.mxu0 0.0
  %5073 = vmatpush1.msra.mxu0 %v4824
  %5074 = vmatprep.subr.mxu0 0.0
  %5075 = vmatpush1.msra.mxu0 %v4825
  %5076 = vmatprep.subr.mxu0 0.0
  %5077 = vmatpush1.msra.mxu0 %v4826
  %5078 = vmatprep.subr.mxu0 0.0
  %5079 = vmatpush1.msra.mxu0 %v4827
  %5080 = vmatprep.subr.mxu0 0.0
  %5081 = vmatpush1.msra.mxu0 %v4828
  %5082 = vmatprep.subr.mxu0 0.0
  %5083 = vmatpush1.msra.mxu0 %v4829
  %5084 = vmatprep.subr.mxu0 0.0
  %5085 = vmatpush1.msra.mxu0 %v4830
  %5086 = vmatprep.subr.mxu0 0.0
  %5087 = vmatpush1.msra.mxu0 %v4831
  %5088 = vmatprep.subr.mxu0 0.0
  %5089 = vmatpush1.msra.mxu0 %v4832
  %5090 = vmatprep.subr.mxu0 0.0
  %5091 = vmatpush1.msra.mxu0 %v4833
  %5092 = vmatprep.subr.mxu0 0.0
  %5093 = vmatpush1.msra.mxu0 %v4834
  %5094 = vmatprep.subr.mxu0 0.0
  %5095 = vmatpush1.msra.mxu0 %v4835
  %5096 = vmatprep.subr.mxu0 0.0
  %5097 = vmatpush1.msra.mxu0 %v4836
  %5098 = vmatprep.subr.mxu0 0.0
  %5099 = vmatpush1.msra.mxu0 %v4837
  %5100 = vmatprep.mubr.f32.mxu0 %v4488
  %5101 = vmatmul.mubr.f32.gmra.mrb[0].mxu0 %v4486
  %v5102 = vpop.f32.mrb[0].mxu0
  %v5103 = vadd.f32 %v5033, %v5102
  %v5104 = vpop.f32.mrb[0].mxu0
  %5105 = vdwg.mxu0
  %5106 = vmatprep.subr.mxu0 0.0
  %5107 = vmatpush1.msra.mxu0 %v4838
  %5108 = vmatprep.subr.mxu0 0.0
  %5109 = vmatpush1.msra.mxu0 %v4839
  %5110 = vmatprep.subr.mxu0 0.0
  %5111 = vmatpush1.msra.mxu0 %v4840
  %5112 = vmatprep.subr.mxu0 0.0
  %5113 = vmatpush1.msra.mxu0 %v4841
  %5114 = vmatprep.subr.mxu0 0.0
  %5115 = vmatpush1.msra.mxu0 %v4842
  %5116 = vmatprep.subr.mxu0 0.0
  %5117 = vmatpush1.msra.mxu0 %v4843
  %5118 = vmatprep.subr.mxu0 0.0
  %5119 = vmatpush1.msra.mxu0 %v4844
  %5120 = vmatprep.subr.mxu0 0.0
  %5121 = vmatpush1.msra.mxu0 %v4845
  %5122 = vmatprep.subr.mxu0 0.0
  %5123 = vmatpush1.msra.mxu0 %v4846
  %5124 = vmatprep.subr.mxu0 0.0
  %5125 = vmatpush1.msra.mxu0 %v4847
  %5126 = vmatprep.subr.mxu0 0.0
  %5127 = vmatpush1.msra.mxu0 %v4848
  %5128 = vmatprep.subr.mxu0 0.0
  %5129 = vmatpush1.msra.mxu0 %v4849
  %5130 = vmatprep.subr.mxu0 0.0
  %5131 = vmatpush1.msra.mxu0 %v4850
  %5132 = vmatprep.subr.mxu0 0.0
  %5133 = vmatpush1.msra.mxu0 %v4851
  %5134 = vmatprep.subr.mxu0 0.0
  %5135 = vmatpush1.msra.mxu0 %v4852
  %5136 = vmatprep.subr.mxu0 0.0
  %5137 = vmatpush1.msra.mxu0 %v4853
  %5138 = vmatprep.subr.mxu0 0.0
  %5139 = vmatpush1.msra.mxu0 %v4854
  %5140 = vmatprep.subr.mxu0 0.0
  %5141 = vmatpush1.msra.mxu0 %v4855
  %5142 = vmatprep.subr.mxu0 0.0
  %5143 = vmatpush1.msra.mxu0 %v4856
  %5144 = vmatprep.subr.mxu0 0.0
  %5145 = vmatpush1.msra.mxu0 %v4857
  %5146 = vmatprep.subr.mxu0 0.0
  %5147 = vmatpush1.msra.mxu0 %v4858
  %5148 = vmatprep.subr.mxu0 0.0
  %5149 = vmatpush1.msra.mxu0 %v4859
  %5150 = vmatprep.subr.mxu0 0.0
  %5151 = vmatpush1.msra.mxu0 %v4860
  %5152 = vmatprep.subr.mxu0 0.0
  %5153 = vmatpush1.msra.mxu0 %v4861
  %5154 = vmatprep.subr.mxu0 0.0
  %5155 = vmatpush1.msra.mxu0 %v4862
  %5156 = vmatprep.subr.mxu0 0.0
  %5157 = vmatpush1.msra.mxu0 %v4863
  %5158 = vmatprep.subr.mxu0 0.0
  %5159 = vmatpush1.msra.mxu0 %v4864
  %5160 = vmatprep.subr.mxu0 0.0
  %5161 = vmatpush1.msra.mxu0 %v4865
  %5162 = vmatprep.subr.mxu0 0.0
  %5163 = vmatpush1.msra.mxu0 %v4866
  %5164 = vmatprep.subr.mxu0 0.0
  %5165 = vmatpush1.msra.mxu0 %v4867
  %5166 = vmatprep.subr.mxu0 0.0
  %5167 = vmatpush1.msra.mxu0 %v4868
  %5168 = vmatprep.subr.mxu0 0.0
  %5169 = vmatpush1.msra.mxu0 %v4869
  %5170 = vmatprep.mubr.f32.mxu0 %v4559
  %5171 = vmatmul.mubr.f32.gmra.mrb[0].mxu0 %v4557
  %v5172 = vpop.f32.mrb[0].mxu0
  %v5173 = vadd.f32 %v5103, %v5172
  %v5174 = vpop.f32.mrb[0].mxu0
  %5175 = vdwg.mxu0
  %5176 = vmatprep.subr.mxu0 0.0
  %5177 = vmatpush1.msra.mxu0 %v4870
  %5178 = vmatprep.subr.mxu0 0.0
  %5179 = vmatpush1.msra.mxu0 %v4871
  %5180 = vmatprep.subr.mxu0 0.0
  %5181 = vmatpush1.msra.mxu0 %v4872
  %5182 = vmatprep.subr.mxu0 0.0
  %5183 = vmatpush1.msra.mxu0 %v4873
  %5184 = vmatprep.subr.mxu0 0.0
  %5185 = vmatpush1.msra.mxu0 %v4874
  %5186 = vmatprep.subr.mxu0 0.0
  %5187 = vmatpush1.msra.mxu0 %v4875
  %5188 = vmatprep.subr.mxu0 0.0
  %5189 = vmatpush1.msra.mxu0 %v4876
  %5190 = vmatprep.subr.mxu0 0.0
  %5191 = vmatpush1.msra.mxu0 %v4877
  %5192 = vmatprep.subr.mxu0 0.0
  %5193 = vmatpush1.msra.mxu0 %v4878
  %5194 = vmatprep.subr.mxu0 0.0
  %5195 = vmatpush1.msra.mxu0 %v4879
  %5196 = vmatprep.subr.mxu0 0.0
  %5197 = vmatpush1.msra.mxu0 %v4880
  %5198 = vmatprep.subr.mxu0 0.0
  %5199 = vmatpush1.msra.mxu0 %v4881
  %5200 = vmatprep.subr.mxu0 0.0
  %5201 = vmatpush1.msra.mxu0 %v4882
  %5202 = vmatprep.subr.mxu0 0.0
  %5203 = vmatpush1.msra.mxu0 %v4883
  %5204 = vmatprep.subr.mxu0 0.0
  %5205 = vmatpush1.msra.mxu0 %v4884
  %5206 = vmatprep.subr.mxu0 0.0
  %5207 = vmatpush1.msra.mxu0 %v4885
  %5208 = vmatprep.subr.mxu0 0.0
  %5209 = vmatpush1.msra.mxu0 %v4886
  %5210 = vmatprep.subr.mxu0 0.0
  %5211 = vmatpush1.msra.mxu0 %v4887
  %5212 = vmatprep.subr.mxu0 0.0
  %5213 = vmatpush1.msra.mxu0 %v4888
  %5214 = vmatprep.subr.mxu0 0.0
  %5215 = vmatpush1.msra.mxu0 %v4889
  %5216 = vmatprep.subr.mxu0 0.0
  %5217 = vmatpush1.msra.mxu0 %v4890
  %5218 = vmatprep.subr.mxu0 0.0
  %5219 = vmatpush1.msra.mxu0 %v4891
  %5220 = vmatprep.subr.mxu0 0.0
  %5221 = vmatpush1.msra.mxu0 %v4892
  %5222 = vmatprep.subr.mxu0 0.0
  %5223 = vmatpush1.msra.mxu0 %v4893
  %5224 = vmatprep.subr.mxu0 0.0
  %5225 = vmatpush1.msra.mxu0 %v4894
  %5226 = vmatprep.subr.mxu0 0.0
  %5227 = vmatpush1.msra.mxu0 %v4895
  %5228 = vmatprep.subr.mxu0 0.0
  %5229 = vmatpush1.msra.mxu0 %v4896
  %5230 = vmatprep.subr.mxu0 0.0
  %5231 = vmatpush1.msra.mxu0 %v4897
  %5232 = vmatprep.subr.mxu0 0.0
  %5233 = vmatpush1.msra.mxu0 %v4898
  %5234 = vmatprep.subr.mxu0 0.0
  %5235 = vmatpush1.msra.mxu0 %v4899
  %5236 = vmatprep.subr.mxu0 0.0
  %5237 = vmatpush1.msra.mxu0 %v4900
  %5238 = vmatprep.subr.mxu0 0.0
  %5239 = vmatpush1.msra.mxu0 %v4901
  %5240 = vmatprep.mubr.f32.mxu0 %v4630
  %5241 = vmatmul.mubr.f32.gmra.mrb[0].mxu0 %v4628
  %v5242 = vpop.f32.mrb[0].mxu0
  %v5243 = vadd.f32 %v5173, %v5242
  %v5244 = vpop.f32.mrb[0].mxu0
  %5245 = vdwg.mxu0
  %5246 = vmatprep.subr.mxu0 0.0
  %5247 = vmatpush1.msra.mxu0 %v4902
  %5248 = vmatprep.subr.mxu0 0.0
  %5249 = vmatpush1.msra.mxu0 %v4903
  %5250 = vmatprep.subr.mxu0 0.0
  %5251 = vmatpush1.msra.mxu0 %v4904
  %5252 = vmatprep.subr.mxu0 0.0
  %5253 = vmatpush1.msra.mxu0 %v4905
  %5254 = vmatprep.subr.mxu0 0.0
  %5255 = vmatpush1.msra.mxu0 %v4906
  %5256 = vmatprep.subr.mxu0 0.0
  %5257 = vmatpush1.msra.mxu0 %v4907
  %5258 = vmatprep.subr.mxu0 0.0
  %5259 = vmatpush1.msra.mxu0 %v4908
  %5260 = vmatprep.subr.mxu0 0.0
  %5261 = vmatpush1.msra.mxu0 %v4909
  %5262 = vmatprep.subr.mxu0 0.0
  %5263 = vmatpush1.msra.mxu0 %v4910
  %5264 = vmatprep.subr.mxu0 0.0
  %5265 = vmatpush1.msra.mxu0 %v4911
  %5266 = vmatprep.subr.mxu0 0.0
  %5267 = vmatpush1.msra.mxu0 %v4912
  %5268 = vmatprep.subr.mxu0 0.0
  %5269 = vmatpush1.msra.mxu0 %v4913
  %5270 = vmatprep.subr.mxu0 0.0
  %5271 = vmatpush1.msra.mxu0 %v4914
  %5272 = vmatprep.subr.mxu0 0.0
  %5273 = vmatpush1.msra.mxu0 %v4915
  %5274 = vmatprep.subr.mxu0 0.0
  %5275 = vmatpush1.msra.mxu0 %v4916
  %5276 = vmatprep.subr.mxu0 0.0
  %5277 = vmatpush1.msra.mxu0 %v4917
  %5278 = vmatprep.subr.mxu0 0.0
  %5279 = vmatpush1.msra.mxu0 %v4918
  %5280 = vmatprep.subr.mxu0 0.0
  %5281 = vmatpush1.msra.mxu0 %v4919
  %5282 = vmatprep.subr.mxu0 0.0
  %5283 = vmatpush1.msra.mxu0 %v4920
  %5284 = vmatprep.subr.mxu0 0.0
  %5285 = vmatpush1.msra.mxu0 %v4921
  %5286 = vmatprep.subr.mxu0 0.0
  %5287 = vmatpush1.msra.mxu0 %v4922
  %5288 = vmatprep.subr.mxu0 0.0
  %5289 = vmatpush1.msra.mxu0 %v4923
  %5290 = vmatprep.subr.mxu0 0.0
  %5291 = vmatpush1.msra.mxu0 %v4924
  %5292 = vmatprep.subr.mxu0 0.0
  %5293 = vmatpush1.msra.mxu0 %v4925
  %5294 = vmatprep.subr.mxu0 0.0
  %5295 = vmatpush1.msra.mxu0 %v4926
  %5296 = vmatprep.subr.mxu0 0.0
  %5297 = vmatpush1.msra.mxu0 %v4927
  %5298 = vmatprep.subr.mxu0 0.0
  %5299 = vmatpush1.msra.mxu0 %v4928
  %5300 = vmatprep.subr.mxu0 0.0
  %5301 = vmatpush1.msra.mxu0 %v4929
  %5302 = vmatprep.subr.mxu0 0.0
  %5303 = vmatpush1.msra.mxu0 %v4930
  %5304 = vmatprep.subr.mxu0 0.0
  %5305 = vmatpush1.msra.mxu0 %v4931
  %5306 = vmatprep.subr.mxu0 0.0
  %5307 = vmatpush1.msra.mxu0 %v4932
  %5308 = vmatprep.subr.mxu0 0.0
  %5309 = vmatpush1.msra.mxu0 %v4933
  %5310 = vmatprep.mubr.f32.mxu0 %v4701
  %5311 = vmatmul.mubr.f32.gmra.mrb[0].mxu0 %v4699
  %v5312 = vpop.f32.mrb[0].mxu0
  %v5313 = vadd.f32 %v5243, %v5312
  %v5314 = vpop.f32.mrb[0].mxu0
  %5315 = vdwg.mxu0
  %5316 = vmatprep.subr.mxu0 0.0
  %5317 = vmatpush1.msra.mxu0 %v4934
  %5318 = vmatprep.subr.mxu0 0.0
  %5319 = vmatpush1.msra.mxu0 %v4935
  %5320 = vmatprep.subr.mxu0 0.0
  %5321 = vmatpush1.msra.mxu0 %v4936
  %5322 = vmatprep.subr.mxu0 0.0
  %5323 = vmatpush1.msra.mxu0 %v4937
  %5324 = vmatprep.subr.mxu0 0.0
  %5325 = vmatpush1.msra.mxu0 %v4938
  %5326 = vmatprep.subr.mxu0 0.0
  %5327 = vmatpush1.msra.mxu0 %v4939
  %5328 = vmatprep.subr.mxu0 0.0
  %5329 = vmatpush1.msra.mxu0 %v4940
  %5330 = vmatprep.subr.mxu0 0.0
  %5331 = vmatpush1.msra.mxu0 %v4941
  %5332 = vmatprep.subr.mxu0 0.0
  %5333 = vmatpush1.msra.mxu0 %v4942
  %5334 = vmatprep.subr.mxu0 0.0
  %5335 = vmatpush1.msra.mxu0 %v4943
  %5336 = vmatprep.subr.mxu0 0.0
  %5337 = vmatpush1.msra.mxu0 %v4944
  %5338 = vmatprep.subr.mxu0 0.0
  %5339 = vmatpush1.msra.mxu0 %v4945
  %5340 = vmatprep.subr.mxu0 0.0
  %5341 = vmatpush1.msra.mxu0 %v4946
  %5342 = vmatprep.subr.mxu0 0.0
  %5343 = vmatpush1.msra.mxu0 %v4947
  %5344 = vmatprep.subr.mxu0 0.0
  %5345 = vmatpush1.msra.mxu0 %v4948
  %5346 = vmatprep.subr.mxu0 0.0
  %5347 = vmatpush1.msra.mxu0 %v4949
  %5348 = vmatprep.subr.mxu0 0.0
  %5349 = vmatpush1.msra.mxu0 %v4950
  %5350 = vmatprep.subr.mxu0 0.0
  %5351 = vmatpush1.msra.mxu0 %v4951
  %5352 = vmatprep.subr.mxu0 0.0
  %5353 = vmatpush1.msra.mxu0 %v4952
  %5354 = vmatprep.subr.mxu0 0.0
  %5355 = vmatpush1.msra.mxu0 %v4953
  %5356 = vmatprep.subr.mxu0 0.0
  %5357 = vmatpush1.msra.mxu0 %v4954
  %5358 = vmatprep.subr.mxu0 0.0
  %5359 = vmatpush1.msra.mxu0 %v4955
  %5360 = vmatprep.subr.mxu0 0.0
  %5361 = vmatpush1.msra.mxu0 %v4956
  %5362 = vmatprep.subr.mxu0 0.0
  %5363 = vmatpush1.msra.mxu0 %v4957
  %5364 = vmatprep.subr.mxu0 0.0
  %5365 = vmatpush1.msra.mxu0 %v4958
  %5366 = vmatprep.subr.mxu0 0.0
  %5367 = vmatpush1.msra.mxu0 %v4959
  %5368 = vmatprep.subr.mxu0 0.0
  %5369 = vmatpush1.msra.mxu0 %v4960
  %5370 = vmatprep.subr.mxu0 0.0
  %5371 = vmatpush1.msra.mxu0 %v4961
  %5372 = vmatprep.subr.mxu0 0.0
  %5373 = vmatpush1.msra.mxu0 %v4962
  %5374 = vmatprep.subr.mxu0 0.0
  %5375 = vmatpush1.msra.mxu0 %v4963
  %5376 = vmatprep.subr.mxu0 0.0
  %5377 = vmatpush1.msra.mxu0 %v4964
  %5378 = vmatprep.subr.mxu0 0.0
  %5379 = vmatpush1.msra.mxu0 %v4965
  %5380 = vmatprep.mubr.f32.mxu0 %v4772
  %5381 = vmatmul.mubr.f32.gmra.mrb[0].mxu0 %v4770
  %v5382 = vpop.f32.mrb[0].mxu0
  %v5383 = vadd.f32 %v5313, %v5382
  %v5384 = vpop.f32.mrb[0].mxu0
  %5385 = vdwg.mxu0
  %v5386 = vmul.f32 %v5383, 1.5258789e-05
  %5387 = vmatprep.subr.mxu0 0.0
  %5388 = vmatpush1.msra.mxu0 %v73
  %5389 = vmatprep.subr.mxu0 0.0
  %5390 = vmatpush1.msra.mxu0 %v74
  %5391 = vmatprep.subr.mxu0 0.0
  %5392 = vmatpush1.msra.mxu0 %v75
  %5393 = vmatprep.subr.mxu0 0.0
  %5394 = vmatpush1.msra.mxu0 %v76
  %5395 = vmatprep.subr.mxu0 0.0
  %5396 = vmatpush1.msra.mxu0 %v77
  %5397 = vmatprep.subr.mxu0 0.0
  %5398 = vmatpush1.msra.mxu0 %v78
  %5399 = vmatprep.subr.mxu0 0.0
  %5400 = vmatpush1.msra.mxu0 %v79
  %5401 = vmatprep.subr.mxu0 0.0
  %5402 = vmatpush1.msra.mxu0 %v80
  %5403 = vmatprep.subr.mxu0 0.0
  %5404 = vmatpush1.msra.mxu0 %v81
  %5405 = vmatprep.subr.mxu0 0.0
  %5406 = vmatpush1.msra.mxu0 %v82
  %5407 = vmatprep.subr.mxu0 0.0
  %5408 = vmatpush1.msra.mxu0 %v83
  %5409 = vmatprep.subr.mxu0 0.0
  %5410 = vmatpush1.msra.mxu0 %v84
  %5411 = vmatprep.subr.mxu0 0.0
  %5412 = vmatpush1.msra.mxu0 %v85
  %5413 = vmatprep.subr.mxu0 0.0
  %5414 = vmatpush1.msra.mxu0 %v86
  %5415 = vmatprep.subr.mxu0 0.0
  %5416 = vmatpush1.msra.mxu0 %v87
  %5417 = vmatprep.subr.mxu0 0.0
  %5418 = vmatpush1.msra.mxu0 %v88
  %5419 = vmatprep.subr.mxu0 0.0
  %5420 = vmatpush1.msra.mxu0 0.0
  %5421 = vmatprep.subr.mxu0 0.0
  %5422 = vmatpush1.msra.mxu0 0.0
  %5423 = vmatprep.subr.mxu0 0.0
  %5424 = vmatpush1.msra.mxu0 0.0
  %5425 = vmatprep.subr.mxu0 0.0
  %5426 = vmatpush1.msra.mxu0 0.0
  %5427 = vmatprep.subr.mxu0 0.0
  %5428 = vmatpush1.msra.mxu0 0.0
  %5429 = vmatprep.subr.mxu0 0.0
  %5430 = vmatpush1.msra.mxu0 0.0
  %5431 = vmatprep.subr.mxu0 0.0
  %5432 = vmatpush1.msra.mxu0 0.0
  %5433 = vmatprep.subr.mxu0 0.0
  %5434 = vmatpush1.msra.mxu0 0.0
  %5435 = vmatprep.subr.mxu0 0.0
  %5436 = vmatpush1.msra.mxu0 0.0
  %5437 = vmatprep.subr.mxu0 0.0
  %5438 = vmatpush1.msra.mxu0 0.0
  %5439 = vmatprep.subr.mxu0 0.0
  %5440 = vmatpush1.msra.mxu0 0.0
  %5441 = vmatprep.subr.mxu0 0.0
  %5442 = vmatpush1.msra.mxu0 0.0
  %5443 = vmatprep.subr.mxu0 0.0
  %5444 = vmatpush1.msra.mxu0 0.0
  %5445 = vmatprep.subr.mxu0 0.0
  %5446 = vmatpush1.msra.mxu0 0.0
  %5447 = vmatprep.subr.mxu0 0.0
  %5448 = vmatpush1.msra.mxu0 0.0
  %5449 = vmatprep.subr.mxu0 0.0
  %5450 = vmatpush1.msra.mxu0 0.0
  %5451 = vmatprep.mubr.f32.mxu0 0.0
  %5452 = vmatmul.mubr.f32.gmra.mrb[0].mxu0 %v4347
  %v5453 = vpop.f32.mrb[0].mxu0
  %v5454 = vadd.f32 0.0, %v5453
  %v5455 = vpop.f32.mrb[0].mxu0
  %5456 = vdwg.mxu0
  %v5457 = vld [vmem:[%s9] sm:$0xff]
  %v5458 = vld [vmem:[%s9 + $0x8] sm:$0xff]
  %v5459 = vld [vmem:[%s9 + $0x10] sm:$0xff]
  %v5460 = vld [vmem:[%s9 + $0x18] sm:$0xff]
  %v5461 = vld [vmem:[%s9 + $0x20] sm:$0xff]
  %v5462 = vld [vmem:[%s9 + $0x28] sm:$0xff]
  %v5463 = vld [vmem:[%s9 + $0x30] sm:$0xff]
  %v5464 = vld [vmem:[%s9 + $0x38] sm:$0xff]
  %v5466 = vsel %vm97, %v5454, 0
  %5468 = vmatprep.subr.mxu0 0.0
  %5469 = vmatpush1.msra.mxu0 %v5457
  %5470 = vmatprep.subr.mxu0 0.0
  %5471 = vmatpush1.msra.mxu0 %v5458
  %5472 = vmatprep.subr.mxu0 0.0
  %5473 = vmatpush1.msra.mxu0 %v5459
  %5474 = vmatprep.subr.mxu0 0.0
  %5475 = vmatpush1.msra.mxu0 %v5460
  %5476 = vmatprep.subr.mxu0 0.0
  %5477 = vmatpush1.msra.mxu0 %v5461
  %5478 = vmatprep.subr.mxu0 0.0
  %5479 = vmatpush1.msra.mxu0 %v5462
  %5480 = vmatprep.subr.mxu0 0.0
  %5481 = vmatpush1.msra.mxu0 %v5463
  %5482 = vmatprep.subr.mxu0 0.0
  %5483 = vmatpush1.msra.mxu0 %v5464
  %5484 = vmatprep.subr.mxu0 0.0
  %5485 = vmatpush1.msra.mxu0 0.0
  %5486 = vmatprep.subr.mxu0 0.0
  %5487 = vmatpush1.msra.mxu0 0.0
  %5488 = vmatprep.subr.mxu0 0.0
  %5489 = vmatpush1.msra.mxu0 0.0
  %5490 = vmatprep.subr.mxu0 0.0
  %5491 = vmatpush1.msra.mxu0 0.0
  %5492 = vmatprep.subr.mxu0 0.0
  %5493 = vmatpush1.msra.mxu0 0.0
  %5494 = vmatprep.subr.mxu0 0.0
  %5495 = vmatpush1.msra.mxu0 0.0
  %5496 = vmatprep.subr.mxu0 0.0
  %5497 = vmatpush1.msra.mxu0 0.0
  %5498 = vmatprep.subr.mxu0 0.0
  %5499 = vmatpush1.msra.mxu0 0.0
  %5500 = vmatprep.subr.mxu0 0.0
  %5501 = vmatpush1.msra.mxu0 0.0
  %5502 = vmatprep.subr.mxu0 0.0
  %5503 = vmatpush1.msra.mxu0 0.0
  %5504 = vmatprep.subr.mxu0 0.0
  %5505 = vmatpush1.msra.mxu0 0.0
  %5506 = vmatprep.subr.mxu0 0.0
  %5507 = vmatpush1.msra.mxu0 0.0
  %5508 = vmatprep.subr.mxu0 0.0
  %5509 = vmatpush1.msra.mxu0 0.0
  %5510 = vmatprep.subr.mxu0 0.0
  %5511 = vmatpush1.msra.mxu0 0.0
  %5512 = vmatprep.subr.mxu0 0.0
  %5513 = vmatpush1.msra.mxu0 0.0
  %5514 = vmatprep.subr.mxu0 0.0
  %5515 = vmatpush1.msra.mxu0 0.0
  %5516 = vmatprep.subr.mxu0 0.0
  %5517 = vmatpush1.msra.mxu0 0.0
  %5518 = vmatprep.subr.mxu0 0.0
  %5519 = vmatpush1.msra.mxu0 0.0
  %5520 = vmatprep.subr.mxu0 0.0
  %5521 = vmatpush1.msra.mxu0 0.0
  %5522 = vmatprep.subr.mxu0 0.0
  %5523 = vmatpush1.msra.mxu0 0.0
  %5524 = vmatprep.subr.mxu0 0.0
  %5525 = vmatpush1.msra.mxu0 0.0
  %5526 = vmatprep.subr.mxu0 0.0
  %5527 = vmatpush1.msra.mxu0 0.0
  %5528 = vmatprep.subr.mxu0 0.0
  %5529 = vmatpush1.msra.mxu0 0.0
  %5530 = vmatprep.subr.mxu0 0.0
  %5531 = vmatpush1.msra.mxu0 0.0
  %5532 = vmatprep.mubr.f32.mxu0 0.0
  %5533 = vmatmul.mubr.f32.gmra.mrb[0].mxu0 %v5466
  %v5534 = vpop.f32.mrb[0].mxu0
  %v5535 = vadd.f32 0.0, %v5534
  %v5536 = vpop.f32.mrb[0].mxu0
  %5537 = vdwg.mxu0
  %v5538 = vmul.f32 %v5535, 0.00390625
  %v5539 = vld [vmem:[%s13] sm:$0xf]
  %v5540 = vld [vmem:[%s14] sm:$0x1]
  %v5542 = vlaneseq
  %v5543 = vshrl.u32 %v5542, 7
  %v5544 = vsub.s32 0, %v5543
  %v5545 = vrot.slane %v5540, %v5544
  %vm5547 = vcmask 31744
  %v5549 = vsel %vm5547, %v5538, 0
  %vm5551 = vcmask 1043456
  %v5553 = vsel %vm5551, %v5539, 0
  %5555 = vmatprep.subr.mxu0 0.0
  %5556 = vmatpush1.msra.mxu0 %v5553
  %5557 = vmatprep.subr.mxu0 0.0
  %5558 = vmatpush1.msra.mxu0 0.0
  %5559 = vmatprep.subr.mxu0 0.0
  %5560 = vmatpush1.msra.mxu0 0.0
  %5561 = vmatprep.subr.mxu0 0.0
  %5562 = vmatpush1.msra.mxu0 0.0
  %5563 = vmatprep.subr.mxu0 0.0
  %5564 = vmatpush1.msra.mxu0 0.0
  %5565 = vmatprep.subr.mxu0 0.0
  %5566 = vmatpush1.msra.mxu0 0.0
  %5567 = vmatprep.subr.mxu0 0.0
  %5568 = vmatpush1.msra.mxu0 0.0
  %5569 = vmatprep.subr.mxu0 0.0
  %5570 = vmatpush1.msra.mxu0 0.0
  %5571 = vmatprep.subr.mxu0 0.0
  %5572 = vmatpush1.msra.mxu0 0.0
  %5573 = vmatprep.subr.mxu0 0.0
  %5574 = vmatpush1.msra.mxu0 0.0
  %5575 = vmatprep.subr.mxu0 0.0
  %5576 = vmatpush1.msra.mxu0 0.0
  %5577 = vmatprep.subr.mxu0 0.0
  %5578 = vmatpush1.msra.mxu0 0.0
  %5579 = vmatprep.subr.mxu0 0.0
  %5580 = vmatpush1.msra.mxu0 0.0
  %5581 = vmatprep.subr.mxu0 0.0
  %5582 = vmatpush1.msra.mxu0 0.0
  %5583 = vmatprep.subr.mxu0 0.0
  %5584 = vmatpush1.msra.mxu0 0.0
  %5585 = vmatprep.subr.mxu0 0.0
  %5586 = vmatpush1.msra.mxu0 0.0
  %5587 = vmatprep.subr.mxu0 0.0
  %5588 = vmatpush1.msra.mxu0 0.0
  %5589 = vmatprep.subr.mxu0 0.0
  %5590 = vmatpush1.msra.mxu0 0.0
  %5591 = vmatprep.subr.mxu0 0.0
  %5592 = vmatpush1.msra.mxu0 0.0
  %5593 = vmatprep.subr.mxu0 0.0
  %5594 = vmatpush1.msra.mxu0 0.0
  %5595 = vmatprep.subr.mxu0 0.0
  %5596 = vmatpush1.msra.mxu0 0.0
  %5597 = vmatprep.subr.mxu0 0.0
  %5598 = vmatpush1.msra.mxu0 0.0
  %5599 = vmatprep.subr.mxu0 0.0
  %5600 = vmatpush1.msra.mxu0 0.0
  %5601 = vmatprep.subr.mxu0 0.0
  %5602 = vmatpush1.msra.mxu0 0.0
  %5603 = vmatprep.subr.mxu0 0.0
  %5604 = vmatpush1.msra.mxu0 0.0
  %5605 = vmatprep.subr.mxu0 0.0
  %5606 = vmatpush1.msra.mxu0 0.0
  %5607 = vmatprep.subr.mxu0 0.0
  %5608 = vmatpush1.msra.mxu0 0.0
  %5609 = vmatprep.subr.mxu0 0.0
  %5610 = vmatpush1.msra.mxu0 0.0
  %5611 = vmatprep.subr.mxu0 0.0
  %5612 = vmatpush1.msra.mxu0 0.0
  %5613 = vmatprep.subr.mxu0 0.0
  %5614 = vmatpush1.msra.mxu0 0.0
  %5615 = vmatprep.subr.mxu0 0.0
  %5616 = vmatpush1.msra.mxu0 0.0
  %5617 = vmatprep.subr.mxu0 0.0
  %5618 = vmatpush1.msra.mxu0 0.0
  %5619 = vmatprep.mubr.f32.mxu0 0.0
  %5620 = vmatmul.mubr.f32.gmra.mrb[0].mxu0 %v5549
  %v5621 = vpop.f32.mrb[0].mxu0
  %v5622 = vadd.f32 %v5545, %v5621
  %v5623 = vpop.f32.mrb[0].mxu0
  %5624 = vdwg.mxu0
  %vm5625 = vcmask 23552
  %v5626 = vsel %vm5625, %v5622, -inf
  %5627 = vmax.xlane.f32.xlu0 %v5626
  %v5628 = vpop.xlane.xlu0 %5627
  %v5629 = vsub.f32 %v5622, %v5628
  %v5630 = vmul.f32 %v5629, 1.442695
  %v5631 = vpow.pop %v5630
  %v5632 = vsel %vm5625, %v5631, 0.0
  %5633 = vadd.xlane.f32.xlu0 %v5632
  %v5634 = vpop.xlane.xlu0 %5633
  %v5635 = vrcp.pop %v5634
  %v5636 = vmul.f32 %v5631, %v5635
  %v5637 = vld [vmem:[%s11] sm:$0x7]
  %v5639 = vsel %vm5625, %v5636, 0
  %vm5641 = vcmask 1042432
  %v5643 = vsel %vm5641, %v5637, 0
  %5645 = vmatprep.subr.mxu0 0.0
  %5646 = vmatpush1.msra.mxu0 %v5643
  %5647 = vmatprep.subr.mxu0 0.0
  %5648 = vmatpush1.msra.mxu0 0.0
  %5649 = vmatprep.subr.mxu0 0.0
  %5650 = vmatpush1.msra.mxu0 0.0
  %5651 = vmatprep.subr.mxu0 0.0
  %5652 = vmatpush1.msra.mxu0 0.0
  %5653 = vmatprep.subr.mxu0 0.0
  %5654 = vmatpush1.msra.mxu0 0.0
  %5655 = vmatprep.subr.mxu0 0.0
  %5656 = vmatpush1.msra.mxu0 0.0
  %5657 = vmatprep.subr.mxu0 0.0
  %5658 = vmatpush1.msra.mxu0 0.0
  %5659 = vmatprep.subr.mxu0 0.0
  %5660 = vmatpush1.msra.mxu0 0.0
  %5661 = vmatprep.subr.mxu0 0.0
  %5662 = vmatpush1.msra.mxu0 0.0
  %5663 = vmatprep.subr.mxu0 0.0
  %5664 = vmatpush1.msra.mxu0 0.0
  %5665 = vmatprep.subr.mxu0 0.0
  %5666 = vmatpush1.msra.mxu0 0.0
  %5667 = vmatprep.subr.mxu0 0.0
  %5668 = vmatpush1.msra.mxu0 0.0
  %5669 = vmatprep.subr.mxu0 0.0
  %5670 = vmatpush1.msra.mxu0 0.0
  %5671 = vmatprep.subr.mxu0 0.0
  %5672 = vmatpush1.msra.mxu0 0.0
  %5673 = vmatprep.subr.mxu0 0.0
  %5674 = vmatpush1.msra.mxu0 0.0
  %5675 = vmatprep.subr.mxu0 0.0
  %5676 = vmatpush1.msra.mxu0 0.0
  %5677 = vmatprep.subr.mxu0 0.0
  %5678 = vmatpush1.msra.mxu0 0.0
  %5679 = vmatprep.subr.mxu0 0.0
  %5680 = vmatpush1.msra.mxu0 0.0
  %5681 = vmatprep.subr.mxu0 0.0
  %5682 = vmatpush1.msra.mxu0 0.0
  %5683 = vmatprep.subr.mxu0 0.0
  %5684 = vmatpush1.msra.mxu0 0.0
  %5685 = vmatprep.subr.mxu0 0.0
  %5686 = vmatpush1.msra.mxu0 0.0
  %5687 = vmatprep.subr.mxu0 0.0
  %5688 = vmatpush1.msra.mxu0 0.0
  %5689 = vmatprep.subr.mxu0 0.0
  %5690 = vmatpush1.msra.mxu0 0.0
  %5691 = vmatprep.subr.mxu0 0.0
  %5692 = vmatpush1.msra.mxu0 0.0
  %5693 = vmatprep.subr.mxu0 0.0
  %5694 = vmatpush1.msra.mxu0 0.0
  %5695 = vmatprep.subr.mxu0 0.0
  %5696 = vmatpush1.msra.mxu0 0.0
  %5697 = vmatprep.subr.mxu0 0.0
  %5698 = vmatpush1.msra.mxu0 0.0
  %5699 = vmatprep.subr.mxu0 0.0
  %5700 = vmatpush1.msra.mxu0 0.0
  %5701 = vmatprep.subr.mxu0 0.0
  %5702 = vmatpush1.msra.mxu0 0.0
  %5703 = vmatprep.subr.mxu0 0.0
  %5704 = vmatpush1.msra.mxu0 0.0
  %5705 = vmatprep.subr.mxu0 0.0
  %5706 = vmatpush1.msra.mxu0 0.0
  %5707 = vmatprep.subr.mxu0 0.0
  %5708 = vmatpush1.msra.mxu0 0.0
  %5709 = vmatprep.mubr.f32.mxu0 0.0
  %5710 = vmatmul.mubr.f32.gmra.mrb[0].mxu0 %v5639
  %v5711 = vpop.f32.mrb[0].mxu0
  %v5712 = vadd.f32 0.0, %v5711
  %v5713 = vpop.f32.mrb[0].mxu0
  %5714 = vdwg.mxu0
  %v5715 = vmul.f32 %v5712, %v5386
  %v5716 = vld [vmem:[%s12] sm:$0xff]
  %v5717 = vld [vmem:[%s12 + $0x8] sm:$0xff]
  %v5718 = vld [vmem:[%s12 + $0x10] sm:$0xff]
  %v5719 = vld [vmem:[%s12 + $0x18] sm:$0xff]
  %v5720 = vld [vmem:[%s12 + $0x20] sm:$0xff]
  %v5721 = vld [vmem:[%s12 + $0x28] sm:$0xff]
  %v5722 = vld [vmem:[%s12 + $0x30] sm:$0xff]
  %v5723 = vld [vmem:[%s12 + $0x38] sm:$0xff]
  %v5724 = vld [vmem:[%s12 + $0x40] sm:$0xff]
  %v5725 = vld [vmem:[%s12 + $0x48] sm:$0xff]
  %v5726 = vld [vmem:[%s12 + $0x50] sm:$0xff]
  %v5727 = vld [vmem:[%s12 + $0x58] sm:$0xff]
  %vm5728 = vcmask 785408
  %v5730 = vsel %vm5728, %v5715, 0
  %5732 = vmatprep.subr.mxu0 0.0
  %5733 = vmatpush1.msra.mxu0 %v5716
  %5734 = vmatprep.subr.mxu0 0.0
  %5735 = vmatpush1.msra.mxu0 %v5717
  %5736 = vmatprep.subr.mxu0 0.0
  %5737 = vmatpush1.msra.mxu0 %v5718
  %5738 = vmatprep.subr.mxu0 0.0
  %5739 = vmatpush1.msra.mxu0 %v5719
  %5740 = vmatprep.subr.mxu0 0.0
  %5741 = vmatpush1.msra.mxu0 %v5720
  %5742 = vmatprep.subr.mxu0 0.0
  %5743 = vmatpush1.msra.mxu0 %v5721
  %5744 = vmatprep.subr.mxu0 0.0
  %5745 = vmatpush1.msra.mxu0 %v5722
  %5746 = vmatprep.subr.mxu0 0.0
  %5747 = vmatpush1.msra.mxu0 %v5723
  %5748 = vmatprep.subr.mxu0 0.0
  %5749 = vmatpush1.msra.mxu0 %v5724
  %5750 = vmatprep.subr.mxu0 0.0
  %5751 = vmatpush1.msra.mxu0 %v5725
  %5752 = vmatprep.subr.mxu0 0.0
  %5753 = vmatpush1.msra.mxu0 %v5726
  %5754 = vmatprep.subr.mxu0 0.0
  %5755 = vmatpush1.msra.mxu0 %v5727
  %5756 = vmatprep.subr.mxu0 0.0
  %5757 = vmatpush1.msra.mxu0 0.0
  %5758 = vmatprep.subr.mxu0 0.0
  %5759 = vmatpush1.msra.mxu0 0.0
  %5760 = vmatprep.subr.mxu0 0.0
  %5761 = vmatpush1.msra.mxu0 0.0
  %5762 = vmatprep.subr.mxu0 0.0
  %5763 = vmatpush1.msra.mxu0 0.0
  %5764 = vmatprep.subr.mxu0 0.0
  %5765 = vmatpush1.msra.mxu0 0.0
  %5766 = vmatprep.subr.mxu0 0.0
  %5767 = vmatpush1.msra.mxu0 0.0
  %5768 = vmatprep.subr.mxu0 0.0
  %5769 = vmatpush1.msra.mxu0 0.0
  %5770 = vmatprep.subr.mxu0 0.0
  %5771 = vmatpush1.msra.mxu0 0.0
  %5772 = vmatprep.subr.mxu0 0.0
  %5773 = vmatpush1.msra.mxu0 0.0
  %5774 = vmatprep.subr.mxu0 0.0
  %5775 = vmatpush1.msra.mxu0 0.0
  %5776 = vmatprep.subr.mxu0 0.0
  %5777 = vmatpush1.msra.mxu0 0.0
  %5778 = vmatprep.subr.mxu0 0.0
  %5779 = vmatpush1.msra.mxu0 0.0
  %5780 = vmatprep.subr.mxu0 0.0
  %5781 = vmatpush1.msra.mxu0 0.0
  %5782 = vmatprep.subr.mxu0 0.0
  %5783 = vmatpush1.msra.mxu0 0.0
  %5784 = vmatprep.subr.mxu0 0.0
  %5785 = vmatpush1.msra.mxu0 0.0
  %5786 = vmatprep.subr.mxu0 0.0
  %5787 = vmatpush1.msra.mxu0 0.0
  %5788 = vmatprep.subr.mxu0 0.0
  %5789 = vmatpush1.msra.mxu0 0.0
  %5790 = vmatprep.subr.mxu0 0.0
  %5791 = vmatpush1.msra.mxu0 0.0
  %5792 = vmatprep.subr.mxu0 0.0
  %5793 = vmatpush1.msra.mxu0 0.0
  %5794 = vmatprep.subr.mxu0 0.0
  %5795 = vmatpush1.msra.mxu0 0.0
  %5796 = vmatprep.mubr.f32.mxu0 0.0
  %5797 = vmatmul.mubr.f32.gmra.mrb[0].mxu0 %v5730
  %v5798 = vpop.f32.mrb[0].mxu0
  %v5799 = vadd.f32 0.0, %v5798
  %v5800 = vpop.f32.mrb[0].mxu0
  %5801 = vdwg.mxu0
  %v5802 = vld [vmem:[%s15] sm:$0xff]
  %v5803 = vld [vmem:[%s15 + $0x8] sm:$0xff]
  %v5804 = vld [vmem:[%s15 + $0x10] sm:$0xff]
  %v5805 = vld [vmem:[%s15 + $0x18] sm:$0xff]
  %v5806 = vld [vmem:[%s16] sm:$0x1]
  %v5808 = vlaneseq
  %v5809 = vshrl.u32 %v5808, 7
  %v5810 = vsub.s32 0, %v5809
  %v5811 = vrot.slane %v5806, %v5810
  %vm5813 = vcmask 261120
  %v5815 = vsel %vm5813, %v5799, 0
  %5817 = vmatprep.subr.mxu0 0.0
  %5818 = vmatpush1.msra.mxu0 %v5802
  %5819 = vmatprep.subr.mxu0 0.0
  %5820 = vmatpush1.msra.mxu0 %v5803
  %5821 = vmatprep.subr.mxu0 0.0
  %5822 = vmatpush1.msra.mxu0 %v5804
  %5823 = vmatprep.subr.mxu0 0.0
  %5824 = vmatpush1.msra.mxu0 %v5805
  %5825 = vmatprep.subr.mxu0 0.0
  %5826 = vmatpush1.msra.mxu0 0.0
  %5827 = vmatprep.subr.mxu0 0.0
  %5828 = vmatpush1.msra.mxu0 0.0
  %5829 = vmatprep.subr.mxu0 0.0
  %5830 = vmatpush1.msra.mxu0 0.0
  %5831 = vmatprep.subr.mxu0 0.0
  %5832 = vmatpush1.msra.mxu0 0.0
  %5833 = vmatprep.subr.mxu0 0.0
  %5834 = vmatpush1.msra.mxu0 0.0
  %5835 = vmatprep.subr.mxu0 0.0
  %5836 = vmatpush1.msra.mxu0 0.0
  %5837 = vmatprep.subr.mxu0 0.0
  %5838 = vmatpush1.msra.mxu0 0.0
  %5839 = vmatprep.subr.mxu0 0.0
  %5840 = vmatpush1.msra.mxu0 0.0
  %5841 = vmatprep.subr.mxu0 0.0
  %5842 = vmatpush1.msra.mxu0 0.0
  %5843 = vmatprep.subr.mxu0 0.0
  %5844 = vmatpush1.msra.mxu0 0.0
  %5845 = vmatprep.subr.mxu0 0.0
  %5846 = vmatpush1.msra.mxu0 0.0
  %5847 = vmatprep.subr.mxu0 0.0
  %5848 = vmatpush1.msra.mxu0 0.0
  %5849 = vmatprep.subr.mxu0 0.0
  %5850 = vmatpush1.msra.mxu0 0.0
  %5851 = vmatprep.subr.mxu0 0.0
  %5852 = vmatpush1.msra.mxu0 0.0
  %5853 = vmatprep.subr.mxu0 0.0
  %5854 = vmatpush1.msra.mxu0 0.0
  %5855 = vmatprep.subr.mxu0 0.0
  %5856 = vmatpush1.msra.mxu0 0.0
  %5857 = vmatprep.subr.mxu0 0.0
  %5858 = vmatpush1.msra.mxu0 0.0
  %5859 = vmatprep.subr.mxu0 0.0
  %5860 = vmatpush1.msra.mxu0 0.0
  %5861 = vmatprep.subr.mxu0 0.0
  %5862 = vmatpush1.msra.mxu0 0.0
  %5863 = vmatprep.subr.mxu0 0.0
  %5864 = vmatpush1.msra.mxu0 0.0
  %5865 = vmatprep.subr.mxu0 0.0
  %5866 = vmatpush1.msra.mxu0 0.0
  %5867 = vmatprep.subr.mxu0 0.0
  %5868 = vmatpush1.msra.mxu0 0.0
  %5869 = vmatprep.subr.mxu0 0.0
  %5870 = vmatpush1.msra.mxu0 0.0
  %5871 = vmatprep.subr.mxu0 0.0
  %5872 = vmatpush1.msra.mxu0 0.0
  %5873 = vmatprep.subr.mxu0 0.0
  %5874 = vmatpush1.msra.mxu0 0.0
  %5875 = vmatprep.subr.mxu0 0.0
  %5876 = vmatpush1.msra.mxu0 0.0
  %5877 = vmatprep.subr.mxu0 0.0
  %5878 = vmatpush1.msra.mxu0 0.0
  %5879 = vmatprep.subr.mxu0 0.0
  %5880 = vmatpush1.msra.mxu0 0.0
  %5881 = vmatprep.mubr.f32.mxu0 0.0
  %5882 = vmatmul.mubr.f32.gmra.mrb[0].mxu0 %v5815
  %v5883 = vpop.f32.mrb[0].mxu0
  %v5884 = vadd.f32 %v5811, %v5883
  %v5885 = vpop.f32.mrb[0].mxu0
  %5886 = vdwg.mxu0
  %v5887 = vld [vmem:[%s18] sm:$0xff]
  %v5888 = vld [vmem:[%s18 + $0x8] sm:$0xff]
  %v5889 = vld [vmem:[%s18 + $0x10] sm:$0xff]
  %v5890 = vld [vmem:[%s18 + $0x18] sm:$0xff]
  %v5891 = vld [vmem:[%s18 + $0x20] sm:$0xff]
  %v5892 = vld [vmem:[%s18 + $0x28] sm:$0xff]
  %v5893 = vld [vmem:[%s18 + $0x30] sm:$0xff]
  %v5894 = vld [vmem:[%s18 + $0x38] sm:$0xff]
  %v5895 = vld [vmem:[%s18 + $0x40] sm:$0xff]
  %v5896 = vld [vmem:[%s18 + $0x48] sm:$0xff]
  %v5897 = vld [vmem:[%s18 + $0x50] sm:$0xff]
  %v5898 = vld [vmem:[%s18 + $0x58] sm:$0xff]
  %v5899 = vld [vmem:[%s18 + $0x60] sm:$0xff]
  %v5900 = vld [vmem:[%s18 + $0x68] sm:$0xff]
  %v5901 = vld [vmem:[%s18 + $0x70] sm:$0xff]
  %v5902 = vld [vmem:[%s18 + $0x78] sm:$0xff]
  %5903 = vmatprep.subr.mxu0 0.0
  %5904 = vmatpush1.msra.mxu0 %v5887
  %5905 = vmatprep.subr.mxu0 0.0
  %5906 = vmatpush1.msra.mxu0 %v5888
  %5907 = vmatprep.subr.mxu0 0.0
  %5908 = vmatpush1.msra.mxu0 %v5889
  %5909 = vmatprep.subr.mxu0 0.0
  %5910 = vmatpush1.msra.mxu0 %v5890
  %5911 = vmatprep.subr.mxu0 0.0
  %5912 = vmatpush1.msra.mxu0 %v5891
  %5913 = vmatprep.subr.mxu0 0.0
  %5914 = vmatpush1.msra.mxu0 %v5892
  %5915 = vmatprep.subr.mxu0 0.0
  %5916 = vmatpush1.msra.mxu0 %v5893
  %5917 = vmatprep.subr.mxu0 0.0
  %5918 = vmatpush1.msra.mxu0 %v5894
  %5919 = vmatprep.subr.mxu0 0.0
  %5920 = vmatpush1.msra.mxu0 %v5895
  %5921 = vmatprep.subr.mxu0 0.0
  %5922 = vmatpush1.msra.mxu0 %v5896
  %5923 = vmatprep.subr.mxu0 0.0
  %5924 = vmatpush1.msra.mxu0 %v5897
  %5925 = vmatprep.subr.mxu0 0.0
  %5926 = vmatpush1.msra.mxu0 %v5898
  %5927 = vmatprep.subr.mxu0 0.0
  %5928 = vmatpush1.msra.mxu0 %v5899
  %5929 = vmatprep.subr.mxu0 0.0
  %5930 = vmatpush1.msra.mxu0 %v5900
  %5931 = vmatprep.subr.mxu0 0.0
  %5932 = vmatpush1.msra.mxu0 %v5901
  %5933 = vmatprep.subr.mxu0 0.0
  %5934 = vmatpush1.msra.mxu0 %v5902
  %5935 = vmatprep.subr.mxu0 0.0
  %5936 = vmatpush1.msra.mxu0 0.0
  %5937 = vmatprep.subr.mxu0 0.0
  %5938 = vmatpush1.msra.mxu0 0.0
  %5939 = vmatprep.subr.mxu0 0.0
  %5940 = vmatpush1.msra.mxu0 0.0
  %5941 = vmatprep.subr.mxu0 0.0
  %5942 = vmatpush1.msra.mxu0 0.0
  %5943 = vmatprep.subr.mxu0 0.0
  %5944 = vmatpush1.msra.mxu0 0.0
  %5945 = vmatprep.subr.mxu0 0.0
  %5946 = vmatpush1.msra.mxu0 0.0
  %5947 = vmatprep.subr.mxu0 0.0
  %5948 = vmatpush1.msra.mxu0 0.0
  %5949 = vmatprep.subr.mxu0 0.0
  %5950 = vmatpush1.msra.mxu0 0.0
  %5951 = vmatprep.subr.mxu0 0.0
  %5952 = vmatpush1.msra.mxu0 0.0
  %5953 = vmatprep.subr.mxu0 0.0
  %5954 = vmatpush1.msra.mxu0 0.0
  %5955 = vmatprep.subr.mxu0 0.0
  %5956 = vmatpush1.msra.mxu0 0.0
  %5957 = vmatprep.subr.mxu0 0.0
  %5958 = vmatpush1.msra.mxu0 0.0
  %5959 = vmatprep.subr.mxu0 0.0
  %5960 = vmatpush1.msra.mxu0 0.0
  %5961 = vmatprep.subr.mxu0 0.0
  %5962 = vmatpush1.msra.mxu0 0.0
  %5963 = vmatprep.subr.mxu0 0.0
  %5964 = vmatpush1.msra.mxu0 0.0
  %5965 = vmatprep.subr.mxu0 0.0
  %5966 = vmatpush1.msra.mxu0 0.0
  %5967 = vmatprep.mubr.f32.mxu0 0.0
  %5968 = vmatmul.mubr.f32.gmra.mrb[0].mxu0 %v5884
  %v5969 = vpop.f32.mrb[0].mxu0
  %v5970 = vadd.f32 0.0, %v5969
  %v5971 = vpop.f32.mrb[0].mxu0
  %5972 = vdwg.mxu0
  %v5973 = vld [vmem:[%s17] sm:$0xff]
  %v5974 = vld [vmem:[%s17 + $0x8] sm:$0xff]
  %v5975 = vld [vmem:[%s17 + $0x10] sm:$0xff]
  %v5976 = vld [vmem:[%s17 + $0x18] sm:$0xff]
  %5977 = vmatprep.subr.mxu0 0.0
  %5978 = vmatpush1.msra.mxu0 %v5973
  %5979 = vmatprep.subr.mxu0 0.0
  %5980 = vmatpush1.msra.mxu0 %v5974
  %5981 = vmatprep.subr.mxu0 0.0
  %5982 = vmatpush1.msra.mxu0 %v5975
  %5983 = vmatprep.subr.mxu0 0.0
  %5984 = vmatpush1.msra.mxu0 %v5976
  %5985 = vmatprep.subr.mxu0 0.0
  %5986 = vmatpush1.msra.mxu0 0.0
  %5987 = vmatprep.subr.mxu0 0.0
  %5988 = vmatpush1.msra.mxu0 0.0
  %5989 = vmatprep.subr.mxu0 0.0
  %5990 = vmatpush1.msra.mxu0 0.0
  %5991 = vmatprep.subr.mxu0 0.0
  %5992 = vmatpush1.msra.mxu0 0.0
  %5993 = vmatprep.subr.mxu0 0.0
  %5994 = vmatpush1.msra.mxu0 0.0
  %5995 = vmatprep.subr.mxu0 0.0
  %5996 = vmatpush1.msra.mxu0 0.0
  %5997 = vmatprep.subr.mxu0 0.0
  %5998 = vmatpush1.msra.mxu0 0.0
  %5999 = vmatprep.subr.mxu0 0.0
  %6000 = vmatpush1.msra.mxu0 0.0
  %6001 = vmatprep.subr.mxu0 0.0
  %6002 = vmatpush1.msra.mxu0 0.0
  %6003 = vmatprep.subr.mxu0 0.0
  %6004 = vmatpush1.msra.mxu0 0.0
  %6005 = vmatprep.subr.mxu0 0.0
  %6006 = vmatpush1.msra.mxu0 0.0
  %6007 = vmatprep.subr.mxu0 0.0
  %6008 = vmatpush1.msra.mxu0 0.0
  %6009 = vmatprep.subr.mxu0 0.0
  %6010 = vmatpush1.msra.mxu0 0.0
  %6011 = vmatprep.subr.mxu0 0.0
  %6012 = vmatpush1.msra.mxu0 0.0
  %6013 = vmatprep.subr.mxu0 0.0
  %6014 = vmatpush1.msra.mxu0 0.0
  %6015 = vmatprep.subr.mxu0 0.0
  %6016 = vmatpush1.msra.mxu0 0.0
  %6017 = vmatprep.subr.mxu0 0.0
  %6018 = vmatpush1.msra.mxu0 0.0
  %6019 = vmatprep.subr.mxu0 0.0
  %6020 = vmatpush1.msra.mxu0 0.0
  %6021 = vmatprep.subr.mxu0 0.0
  %6022 = vmatpush1.msra.mxu0 0.0
  %6023 = vmatprep.subr.mxu0 0.0
  %6024 = vmatpush1.msra.mxu0 0.0
  %6025 = vmatprep.subr.mxu0 0.0
  %6026 = vmatpush1.msra.mxu0 0.0
  %6027 = vmatprep.subr.mxu0 0.0
  %6028 = vmatpush1.msra.mxu0 0.0
  %6029 = vmatprep.subr.mxu0 0.0
  %6030 = vmatpush1.msra.mxu0 0.0
  %6031 = vmatprep.subr.mxu0 0.0
  %6032 = vmatpush1.msra.mxu0 0.0
  %6033 = vmatprep.subr.mxu0 0.0
  %6034 = vmatpush1.msra.mxu0 0.0
  %6035 = vmatprep.subr.mxu0 0.0
  %6036 = vmatpush1.msra.mxu0 0.0
  %6037 = vmatprep.subr.mxu0 0.0
  %6038 = vmatpush1.msra.mxu0 0.0
  %6039 = vmatprep.subr.mxu0 0.0
  %6040 = vmatpush1.msra.mxu0 0.0
  %6041 = vmatprep.mubr.f32.mxu0 0.0
  %6042 = vmatmul.mubr.f32.gmra.mrb[0].mxu0 %v5815
  %v6043 = vpop.f32.mrb[0].mxu0
  %v6044 = vadd.f32 0.0, %v6043
  %v6045 = vpop.f32.mrb[0].mxu0
  %6046 = vdwg.mxu0
  %v6047 = vmul.f32 %v6044, %v5970
  %v6048 = vmul.f32 %v6047, 0.17677669
  %v6049 = vld [vmem:[%s19] sm:$0xff]
  %v6050 = vld [vmem:[%s19 + $0x8] sm:$0xff]
  %v6051 = vld [vmem:[%s19 + $0x10] sm:$0xff]
  %v6052 = vld [vmem:[%s19 + $0x18] sm:$0xff]
  %v6054 = vsel %vm5813, %v6048, 0
  %6056 = vmatprep.subr.mxu0 0.0
  %6057 = vmatpush1.msra.mxu0 %v6049
  %6058 = vmatprep.subr.mxu0 0.0
  %6059 = vmatpush1.msra.mxu0 %v6050
  %6060 = vmatprep.subr.mxu0 0.0
  %6061 = vmatpush1.msra.mxu0 %v6051
  %6062 = vmatprep.subr.mxu0 0.0
  %6063 = vmatpush1.msra.mxu0 %v6052
  %6064 = vmatprep.subr.mxu0 0.0
  %6065 = vmatpush1.msra.mxu0 0.0
  %6066 = vmatprep.subr.mxu0 0.0
  %6067 = vmatpush1.msra.mxu0 0.0
  %6068 = vmatprep.subr.mxu0 0.0
  %6069 = vmatpush1.msra.mxu0 0.0
  %6070 = vmatprep.subr.mxu0 0.0
  %6071 = vmatpush1.msra.mxu0 0.0
  %6072 = vmatprep.subr.mxu0 0.0
  %6073 = vmatpush1.msra.mxu0 0.0
  %6074 = vmatprep.subr.mxu0 0.0
  %6075 = vmatpush1.msra.mxu0 0.0
  %6076 = vmatprep.subr.mxu0 0.0
  %6077 = vmatpush1.msra.mxu0 0.0
  %6078 = vmatprep.subr.mxu0 0.0
  %6079 = vmatpush1.msra.mxu0 0.0
  %6080 = vmatprep.subr.mxu0 0.0
  %6081 = vmatpush1.msra.mxu0 0.0
  %6082 = vmatprep.subr.mxu0 0.0
  %6083 = vmatpush1.msra.mxu0 0.0
  %6084 = vmatprep.subr.mxu0 0.0
  %6085 = vmatpush1.msra.mxu0 0.0
  %6086 = vmatprep.subr.mxu0 0.0
  %6087 = vmatpush1.msra.mxu0 0.0
  %6088 = vmatprep.subr.mxu0 0.0
  %6089 = vmatpush1.msra.mxu0 0.0
  %6090 = vmatprep.subr.mxu0 0.0
  %6091 = vmatpush1.msra.mxu0 0.0
  %6092 = vmatprep.subr.mxu0 0.0
  %6093 = vmatpush1.msra.mxu0 0.0
  %6094 = vmatprep.subr.mxu0 0.0
  %6095 = vmatpush1.msra.mxu0 0.0
  %6096 = vmatprep.subr.mxu0 0.0
  %6097 = vmatpush1.msra.mxu0 0.0
  %6098 = vmatprep.subr.mxu0 0.0
  %6099 = vmatpush1.msra.mxu0 0.0
  %6100 = vmatprep.subr.mxu0 0.0
  %6101 = vmatpush1.msra.mxu0 0.0
  %6102 = vmatprep.subr.mxu0 0.0
  %6103 = vmatpush1.msra.mxu0 0.0
  %6104 = vmatprep.subr.mxu0 0.0
  %6105 = vmatpush1.msra.mxu0 0.0
  %6106 = vmatprep.subr.mxu0 0.0
  %6107 = vmatpush1.msra.mxu0 0.0
  %6108 = vmatprep.subr.mxu0 0.0
  %6109 = vmatpush1.msra.mxu0 0.0
  %6110 = vmatprep.subr.mxu0 0.0
  %6111 = vmatpush1.msra.mxu0 0.0
  %6112 = vmatprep.subr.mxu0 0.0
  %6113 = vmatpush1.msra.mxu0 0.0
  %6114 = vmatprep.subr.mxu0 0.0
  %6115 = vmatpush1.msra.mxu0 0.0
  %6116 = vmatprep.subr.mxu0 0.0
  %6117 = vmatpush1.msra.mxu0 0.0
  %6118 = vmatprep.subr.mxu0 0.0
  %6119 = vmatpush1.msra.mxu0 0.0
  %6120 = vmatprep.mubr.f32.mxu0 0.0
  %6121 = vmatmul.mubr.f32.gmra.mrb[0].mxu0 %v6054
  %v6122 = vpop.f32.mrb[0].mxu0
  %v6123 = vadd.f32 0.0, %v6122
  %v6124 = vpop.f32.mrb[0].mxu0
  %6125 = vdwg.mxu0
  %v6126 = vadd.f32 %v5884, %v6123
  %v6127 = vld [vmem:[%s20] sm:$0x1]
  %v6129 = vlaneseq
  %v6130 = vshrl.u32 %v6129, 7
  %v6131 = vsub.s32 0, %v6130
  %v6132 = vrot.slane %v6127, %v6131
  %v6134 = vadd.f32 %v6126, %v6132
  %v6135 = vld [vmem:[%s21] sm:$0x7]
  %v6137 = vsel %vm5641, %v6135, 0
  %6139 = vmatprep.subr.mxu0 0.0
  %6140 = vmatpush1.msra.mxu0 %v6137
  %6141 = vmatprep.subr.mxu0 0.0
  %6142 = vmatpush1.msra.mxu0 0.0
  %6143 = vmatprep.subr.mxu0 0.0
  %6144 = vmatpush1.msra.mxu0 0.0
  %6145 = vmatprep.subr.mxu0 0.0
  %6146 = vmatpush1.msra.mxu0 0.0
  %6147 = vmatprep.subr.mxu0 0.0
  %6148 = vmatpush1.msra.mxu0 0.0
  %6149 = vmatprep.subr.mxu0 0.0
  %6150 = vmatpush1.msra.mxu0 0.0
  %6151 = vmatprep.subr.mxu0 0.0
  %6152 = vmatpush1.msra.mxu0 0.0
  %6153 = vmatprep.subr.mxu0 0.0
  %6154 = vmatpush1.msra.mxu0 0.0
  %6155 = vmatprep.subr.mxu0 0.0
  %6156 = vmatpush1.msra.mxu0 0.0
  %6157 = vmatprep.subr.mxu0 0.0
  %6158 = vmatpush1.msra.mxu0 0.0
  %6159 = vmatprep.subr.mxu0 0.0
  %6160 = vmatpush1.msra.mxu0 0.0
  %6161 = vmatprep.subr.mxu0 0.0
  %6162 = vmatpush1.msra.mxu0 0.0
  %6163 = vmatprep.subr.mxu0 0.0
  %6164 = vmatpush1.msra.mxu0 0.0
  %6165 = vmatprep.subr.mxu0 0.0
  %6166 = vmatpush1.msra.mxu0 0.0
  %6167 = vmatprep.subr.mxu0 0.0
  %6168 = vmatpush1.msra.mxu0 0.0
  %6169 = vmatprep.subr.mxu0 0.0
  %6170 = vmatpush1.msra.mxu0 0.0
  %6171 = vmatprep.subr.mxu0 0.0
  %6172 = vmatpush1.msra.mxu0 0.0
  %6173 = vmatprep.subr.mxu0 0.0
  %6174 = vmatpush1.msra.mxu0 0.0
  %6175 = vmatprep.subr.mxu0 0.0
  %6176 = vmatpush1.msra.mxu0 0.0
  %6177 = vmatprep.subr.mxu0 0.0
  %6178 = vmatpush1.msra.mxu0 0.0
  %6179 = vmatprep.subr.mxu0 0.0
  %6180 = vmatpush1.msra.mxu0 0.0
  %6181 = vmatprep.subr.mxu0 0.0
  %6182 = vmatpush1.msra.mxu0 0.0
  %6183 = vmatprep.subr.mxu0 0.0
  %6184 = vmatpush1.msra.mxu0 0.0
  %6185 = vmatprep.subr.mxu0 0.0
  %6186 = vmatpush1.msra.mxu0 0.0
  %6187 = vmatprep.subr.mxu0 0.0
  %6188 = vmatpush1.msra.mxu0 0.0
  %6189 = vmatprep.subr.mxu0 0.0
  %6190 = vmatpush1.msra.mxu0 0.0
  %6191 = vmatprep.subr.mxu0 0.0
  %6192 = vmatpush1.msra.mxu0 0.0
  %6193 = vmatprep.subr.mxu0 0.0
  %6194 = vmatpush1.msra.mxu0 0.0
  %6195 = vmatprep.subr.mxu0 0.0
  %6196 = vmatpush1.msra.mxu0 0.0
  %6197 = vmatprep.subr.mxu0 0.0
  %6198 = vmatpush1.msra.mxu0 0.0
  %6199 = vmatprep.subr.mxu0 0.0
  %6200 = vmatpush1.msra.mxu0 0.0
  %6201 = vmatprep.subr.mxu0 0.0
  %6202 = vmatpush1.msra.mxu0 0.0
  %6203 = vmatprep.mubr.f32.mxu0 0.0
  %6204 = vmatmul.mubr.f32.gmra.mrb[0].mxu0 %v5639
  %v6205 = vpop.f32.mrb[0].mxu0
  %v6206 = vadd.f32 0.0, %v6205
  %v6207 = vpop.f32.mrb[0].mxu0
  %6208 = vdwg.mxu0
  %v6209 = vadd.f32 %v6134, %v6206
  %6210 = vst [vmem:[%s23] sm:$0xff] %v6209
  // Predicated region
  $region90: #{de_fe_mmoe_dadst_mapping_forward.1} parent=0 // pred_check
    _
  $region91: #{de_fe_mmoe_dadst_mapping_forward.1} parent=0 // pred_check_branch
    %6212 = sbr.rel (0) target = $region93
  $region92: #{de_fe_mmoe_dadst_mapping_forward.1} parent=0 // pred_region
    _
  $region93: #{de_fe_mmoe_dadst_mapping_forward.1} parent=0 // pred_fallthru
    _
  // Predicated region
  $region94: #{de_fe_mmoe_dadst_mapping_forward.1} parent=0 // pred_check
    _
  $region95: #{de_fe_mmoe_dadst_mapping_forward.1} parent=0 // pred_check_branch
    %6214 = sbr.rel (0) target = $region97
  $region96: #{de_fe_mmoe_dadst_mapping_forward.1} parent=0 // pred_region
    _
  $region97: #{de_fe_mmoe_dadst_mapping_forward.1} parent=0 // pred_fallthru
    _
  // Predicated region
  $region98: #{de_fe_mmoe_dadst_mapping_forward.1} parent=0 // pred_check
    _
  $region99: #{de_fe_mmoe_dadst_mapping_forward.1} parent=0 // pred_check_branch
    %6216 = sbr.rel (0) target = $region101
  $region100: #{de_fe_mmoe_dadst_mapping_forward.1} parent=0 // pred_region
    _
  $region101: #{de_fe_mmoe_dadst_mapping_forward.1} parent=0 // pred_fallthru
    _
  // Predicated region
  $region102: #{de_fe_mmoe_dadst_mapping_forward.1} parent=0 // pred_check
    _
  $region103: #{de_fe_mmoe_dadst_mapping_forward.1} parent=0 // pred_check_branch
    %6218 = sbr.rel (0) target = $region105
  $region104: #{de_fe_mmoe_dadst_mapping_forward.1} parent=0 // pred_region
    _
  $region105: #{de_fe_mmoe_dadst_mapping_forward.1} parent=0 // pred_fallthru
    _

</llo_original>
